<compile_context>
chip_gen: v7x
topology: tpu7x:2x2x1
jax: 0.10.0
libtpu: 0.0.40
codegen_flags: <defaults>
</compile_context>

<pallas_src>
import jax
import jax.numpy as jnp
from jax import lax
from jax.experimental import pallas as pl
from jax.experimental.pallas import tpu as pltpu


# ---------------------------------------------------------------------------
# Pallas kernels
# ---------------------------------------------------------------------------
def _trunk_kernel(x_ref,
                  band1, bias1, band2, bias2, prow1, pcol1,
                  band3, bias3, band4, bias4, prow2, pcol2,
                  o_ref):
    """Fused conv1->conv2->pool->conv3->conv4->pool for one image, all in VMEM.

    Activations live as (rows, width*channels) 2-D tiles.  A 3x3 valid conv is
    3 matmuls (one per kernel row) against banded weight matrices; MaxPool2d(2)
    is 4 gather-matmuls (0/1 selection matrices) + elementwise max.
    """
    def conv3x3_relu(h, band_ref, bias_ref):
        kh = band_ref.shape[0]
        oh = h.shape[0] - kh + 1
        acc = jnp.dot(h[0:oh, :], band_ref[0], preferred_element_type=jnp.float32)
        for ky in range(1, kh):
            acc = acc + jnp.dot(h[ky:ky + oh, :], band_ref[ky],
                                preferred_element_type=jnp.float32)
        return jnp.maximum(acc + bias_ref[...], 0.0)

    def maxpool2x2(h, rsel_ref, csel_ref):
        r = jnp.maximum(
            jnp.dot(rsel_ref[0], h, preferred_element_type=jnp.float32),
            jnp.dot(rsel_ref[1], h, preferred_element_type=jnp.float32))
        return jnp.maximum(
            jnp.dot(r, csel_ref[0], preferred_element_type=jnp.float32),
            jnp.dot(r, csel_ref[1], preferred_element_type=jnp.float32))

    h = x_ref[0]                          # (H, W*C) NHWC-flattened image
    h = conv3x3_relu(h, band1, bias1)     # (H-2,  (W-2)*4)
    h = conv3x3_relu(h, band2, bias2)     # (H-4,  (W-4)*8)
    h = maxpool2x2(h, prow1, pcol1)       # (.,    .*8)
    # TODO(synk): nn.Dropout train-mode stochastic masking not implemented (inference identity).
    h = conv3x3_relu(h, band3, bias3)     # (.,    .*16)
    h = conv3x3_relu(h, band4, bias4)     # (.,    .*32)
    h = maxpool2x2(h, prow2, pcol2)       # (PH,   PW*32)
    o_ref[0] = h


def _mlp_kernel(x_ref, w1, b1, w2, b2, w3, b3, w4, b4, w5, b5, o_ref):
    """Fused 5-layer MLP head on one batch tile; all weights VMEM-resident."""
    def dense(h, w_ref, b_ref):
        return jnp.dot(h, w_ref[...], preferred_element_type=jnp.float32) + b_ref[...]

    h = x_ref[...]
    h = jnp.maximum(dense(h, w1, b1), 0.0)
    h = jnp.maximum(dense(h, w2, b2), 0.0)
    # TODO(synk): nn.Dropout train-mode stochastic masking not implemented (inference identity).
    h = jnp.maximum(dense(h, w3, b3), 0.0)
    h = jnp.maximum(dense(h, w4, b4), 0.0)
    o_ref[...] = jnp.tanh(dense(h, w5, b5))


# ---------------------------------------------------------------------------
# Host-side (one-off) weight preparation
# ---------------------------------------------------------------------------
def conv_row_bands(w, w_in):
    """Banded per-kernel-row weights for a valid 3x3 conv on (H, W*Cin) layout.

    out[ky, wx*Cin+ci, ox*Cout+co] = w[co, ci, ky, wx-ox]  if 0 <= wx-ox < KW else 0
    so  y[oy, ox*Cout+co] = sum_ky  x[oy+ky, :] @ out[ky]   (PyTorch cross-correlation).
    """
    cout, cin, kh, kw = w.shape
    ow = w_in - kw + 1
    wx = jnp.arange(w_in)[:, None]
    ox = jnp.arange(ow)[None, :]
    kx = wx - ox
    valid = (kx >= 0) & (kx < kw)
    kxc = jnp.clip(kx, 0, kw - 1)
    wt = jnp.transpose(w, (2, 3, 1, 0))            # (KH, KW, Cin, Cout)
    g = wt[:, kxc]                                 # (KH, W_in, OW, Cin, Cout)
    g = jnp.where(valid[None, :, :, None, None], g, 0.0)
    g = jnp.transpose(g, (0, 1, 3, 2, 4))          # (KH, W_in, Cin, OW, Cout)
    return g.reshape(kh, w_in * cin, ow * cout)


def pool_row_select(h_in):
    """(2, H/2, H) 0/1 matrices picking rows 2*py and 2*py+1."""
    ph = h_in // 2
    rows = jnp.arange(ph)
    r = jnp.zeros((2, ph, h_in), jnp.float32)
    r = r.at[0, rows, 2 * rows].set(1.0)
    r = r.at[1, rows, 2 * rows + 1].set(1.0)
    return r


def pool_col_select(w_in, c):
    """(2, W*C, (W/2)*C) 0/1 matrices picking cols (2pw+dx)*C+c -> pw*C+c."""
    pw = w_in // 2
    cols = jnp.arange(pw * c)
    pwi = cols // c
    ci = cols % c
    s = jnp.zeros((2, w_in * c, pw * c), jnp.float32)
    s = s.at[0, 2 * pwi * c + ci, cols].set(1.0)
    s = s.at[1, (2 * pwi + 1) * c + ci, cols].set(1.0)
    return s


def prepare_params(p, c=3, h=32, w=32):
    """Convert PyTorch-layout params into kernel-ready constants (runs once)."""
    kp = {}
    H, W = h, w
    kp["band1"] = conv_row_bands(p["cw1"], W)
    kp["bias1"] = jnp.tile(p["cb1"], W - 2)[None, :]
    H, W = H - 2, W - 2
    kp["band2"] = conv_row_bands(p["cw2"], W)
    kp["bias2"] = jnp.tile(p["cb2"], W - 2)[None, :]
    H, W = H - 2, W - 2
    assert H % 2 == 0 and W % 2 == 0, "MaxPool2d(2) needs even spatial dims"
    kp["prow1"] = pool_row_select(H)
    kp["pcol1"] = pool_col_select(W, p["cw2"].shape[0])
    H, W = H // 2, W // 2
    kp["band3"] = conv_row_bands(p["cw3"], W)
    kp["bias3"] = jnp.tile(p["cb3"], W - 2)[None, :]
    H, W = H - 2, W - 2
    kp["band4"] = conv_row_bands(p["cw4"], W)
    kp["bias4"] = jnp.tile(p["cb4"], W - 2)[None, :]
    H, W = H - 2, W - 2
    assert H % 2 == 0 and W % 2 == 0, "MaxPool2d(2) needs even spatial dims"
    kp["prow2"] = pool_row_select(H)
    kp["pcol2"] = pool_col_select(W, p["cw4"].shape[0])
    H, W = H // 2, W // 2

    # Fold the PyTorch NCHW Flatten permutation into w1's rows: the trunk emits
    # features in (h, w, c) order; w1 rows are stored in (c, h, w) order.
    c4 = p["cw4"].shape[0]
    flat = c4 * H * W
    perm = jnp.arange(flat).reshape(c4, H, W).transpose(1, 2, 0).reshape(flat)
    kp["w1"] = p["w1"][perm]
    kp["b1"] = p["b1"][None, :]
    for i in range(2, 6):
        kp[f"w{i}"] = p[f"w{i}"]
        kp[f"b{i}"] = p[f"b{i}"][None, :]
    return kp


# ---------------------------------------------------------------------------
# Full encoder forward (2 pallas_calls total)
# ---------------------------------------------------------------------------
def encoder6_forward(x_nchw, kp):
    N, C, H, W = x_nchw.shape
    # Static geometry chain.
    H1, W1 = H - 2, W - 2
    H2, W2 = H1 - 2, W1 - 2
    H3, W3 = H2 // 2, W2 // 2
    H4, W4 = H3 - 2, W3 - 2
    H5, W5 = H4 - 2, W4 - 2
    H6, W6 = H5 // 2, W5 // 2
    c1 = kp["bias1"].shape[1] // W1
    c2 = kp["bias2"].shape[1] // W2
    c3 = kp["bias3"].shape[1] // W4
    c4 = kp["bias4"].shape[1] // W5
    pooled_cols = W6 * c4
    flat = H6 * pooled_cols

    # NCHW -> per-image (H, W*C) NHWC-flattened layout (tiny one-off glue).
    x2d = jnp.transpose(x_nchw, (0, 2, 3, 1)).reshape(N, H, W * C)

    trunk_consts = (kp["band1"], kp["bias1"], kp["band2"], kp["bias2"],
                    kp["prow1"], kp["pcol1"],
                    kp["band3"], kp["bias3"], kp["band4"], kp["bias4"],
                    kp["prow2"], kp["pcol2"])

    def _const_spec(a):
        return pl.BlockSpec(a.shape, lambda i, nd=a.ndim: (0,) * nd)

    trunk_flops = 2 * N * (
        3 * H1 * (W * C) * (W1 * c1)
        + 3 * H2 * (W1 * c1) * (W2 * c2)
        + 2 * H3 * H2 * (W2 * c2) + 2 * H3 * (W2 * c2) * (W3 * c2)
        + 3 * H4 * (W3 * c2) * (W4 * c3)
        + 3 * H5 * (W4 * c3) * (W5 * c4)
        + 2 * H6 * H5 * (W5 * c4) + 2 * H6 * (W5 * c4) * pooled_cols)
    trunk_bytes = 4 * (x2d.size + sum(a.size for a in trunk_consts) + N * flat)

    pooled = pl.pallas_call(
        _trunk_kernel,
        out_shape=jax.ShapeDtypeStruct((N, H6, pooled_cols), jnp.float32),
        grid=(N,),
        in_specs=[pl.BlockSpec((1, H, W * C), lambda i: (i, 0, 0))]
                 + [_const_spec(a) for a in trunk_consts],
        out_specs=pl.BlockSpec((1, H6, pooled_cols), lambda i: (i, 0, 0)),
        compiler_params=pltpu.CompilerParams(
            dimension_semantics=("parallel",),
            vmem_limit_bytes=48 * 1024 * 1024),
        cost_estimate=pl.CostEstimate(flops=trunk_flops, transcendentals=0,
                                      bytes_accessed=trunk_bytes),
    )(x2d, *trunk_consts)

    # Contiguous flatten in (h, w, c) order; the (c, h, w) permutation is
    # already folded into kp["w1"].
    hflat = pooled.reshape(N, flat)

    mlp_consts = (kp["w1"], kp["b1"], kp["w2"], kp["b2"], kp["w3"], kp["b3"],
                  kp["w4"], kp["b4"], kp["w5"], kp["b5"])
    out_d = kp["w5"].shape[1]
    tm = N if N <= 256 else 256
    grid_m = pl.cdiv(N, tm)
    dims = [flat] + [kp[f"w{i}"].shape[1] for i in range(1, 6)]
    mlp_flops = 2 * N * sum(a * b for a, b in zip(dims[:-1], dims[1:]))
    mlp_bytes = 4 * (N * flat + N * out_d + sum(a.size for a in mlp_consts))

    out = pl.pallas_call(
        _mlp_kernel,
        out_shape=jax.ShapeDtypeStruct((N, out_d), jnp.float32),
        grid=(grid_m,),
        in_specs=[pl.BlockSpec((tm, flat), lambda i: (i, 0))]
                 + [_const_spec(a) for a in mlp_consts],
        out_specs=pl.BlockSpec((tm, out_d), lambda i: (i, 0)),
        compiler_params=pltpu.CompilerParams(
            dimension_semantics=("parallel",),
            vmem_limit_bytes=48 * 1024 * 1024),
        cost_estimate=pl.CostEstimate(flops=mlp_flops, transcendentals=N * out_d,
                                      bytes_accessed=mlp_bytes),
    )(hflat, *mlp_consts)
    return out


# ---------------------------------------------------------------------------
# Pure-JAX reference (PyTorch semantics) for correctness checking
# ---------------------------------------------------------------------------
def encoder6_reference(x, p):
    dn = ("NCHW", "OIHW", "NCHW")
    prec = lax.Precision.HIGHEST
    h = lax.conv_general_dilated(x, p["cw1"], (1, 1), "VALID",
                                 dimension_numbers=dn, precision=prec)
    h = jax.nn.relu(h + p["cb1"][None, :, None, None])
    h = lax.conv_general_dilated(h, p["cw2"], (1, 1), "VALID",
                                 dimension_numbers=dn, precision=prec)
    h = jax.nn.relu(h + p["cb2"][None, :, None, None])
    h = lax.reduce_window(h, -jnp.inf, lax.max, (1, 1, 2, 2), (1, 1, 2, 2), "VALID")
    h = lax.conv_general_dilated(h, p["cw3"], (1, 1), "VALID",
                                 dimension_numbers=dn, precision=prec)
    h = jax.nn.relu(h + p["cb3"][None, :, None, None])
    h = lax.conv_general_dilated(h, p["cw4"], (1, 1), "VALID",
                                 dimension_numbers=dn, precision=prec)
    h = jax.nn.relu(h + p["cb4"][None, :, None, None])
    h = lax.reduce_window(h, -jnp.inf, lax.max, (1, 1, 2, 2), (1, 1, 2, 2), "VALID")
    h = h.reshape(h.shape[0], -1)                                   # NCHW flatten
    h = jax.nn.relu(jnp.dot(h, p["w1"], precision=prec) + p["b1"])
    h = jax.nn.relu(jnp.dot(h, p["w2"], precision=prec) + p["b2"])
    h = jax.nn.relu(jnp.dot(h, p["w3"], precision=prec) + p["b3"])
    h = jax.nn.relu(jnp.dot(h, p["w4"], precision=prec) + p["b4"])
    return jnp.tanh(jnp.dot(h, p["w5"], precision=prec) + p["b5"])


# ---------------------------------------------------------------------------
# Deterministic parameter init (synthetic weights, PyTorch shapes)
# ---------------------------------------------------------------------------
def init_params(key, c=3, h=32, w=32):
    flat = 32 * (((h - 4) // 2 - 4) // 2) * (((w - 4) // 2 - 4) // 2)  # 800
    ks = jax.random.split(key, 20)
    ki = iter(range(20))

    def conv(co, ci):
        kw_ = jax.random.normal(ks[next(ki)], (co, ci, 3, 3), jnp.float32)
        kb_ = jax.random.normal(ks[next(ki)], (co,), jnp.float32)
        return kw_ / jnp.sqrt(ci * 9), kb_ * 0.01

    def lin(din, dout):
        kw_ = jax.random.normal(ks[next(ki)], (din, dout), jnp.float32)
        kb_ = jax.random.normal(ks[next(ki)], (dout,), jnp.float32)
        return kw_ / jnp.sqrt(din), kb_ * 0.01

    p = {}
    p["cw1"], p["cb1"] = conv(4, c)
    p["cw2"], p["cb2"] = conv(8, 4)
    p["cw3"], p["cb3"] = conv(16, 8)
    p["cw4"], p["cb4"] = conv(32, 16)
    p["w1"], p["b1"] = lin(flat, 1024)
    p["w2"], p["b2"] = lin(1024, 512)
    p["w3"], p["b3"] = lin(512, 256)
    p["w4"], p["b4"] = lin(256, 128)
    p["w5"], p["b5"] = lin(128, 100)
    return p


if __name__ == "__main__":
    c, h, w = 3, 32, 32           # CIFAR-10 geometry implied by the module
    batch = 2
    x = jax.random.normal(jax.random.PRNGKey(0), (batch, c, h, w), jnp.float32)
    params = init_params(jax.random.PRNGKey(42), c=c, h=h, w=w)
    kparams = prepare_params(params, c=c, h=h, w=w)

    fwd = jax.jit(encoder6_forward)
    out = jax.block_until_ready(fwd(x, kparams))

    assert out.shape == (batch, 100), out.shape
    assert bool(jnp.all(jnp.isfinite(out)))
    assert bool(jnp.all(jnp.abs(out) <= 1.0 + 1e-6))  # tanh range

    # Correctness vs a pure-JAX (PyTorch-semantics) reference; loose tolerance
    # covers MXU default-precision differences while catching structural bugs.
    ref = jax.block_until_ready(jax.jit(encoder6_reference)(x, params))
    max_err = float(jnp.max(jnp.abs(out - ref)))
    assert max_err < 0.1, f"kernel deviates from reference: max|diff|={max_err}"

    print("KERNEL_OK")
</pallas_src>

<mosaic_0001>
module attributes {stable_mosaic.version = 11 : i64} {
  func.func @_mlp_kernel(%arg0: i32, %arg1: memref<2x800xf32, #tpu.memory_space<vmem>>, %arg2: memref<800x1024xf32, #tpu.memory_space<vmem>>, %arg3: memref<1x1024xf32, #tpu.memory_space<vmem>>, %arg4: memref<1024x512xf32, #tpu.memory_space<vmem>>, %arg5: memref<1x512xf32, #tpu.memory_space<vmem>>, %arg6: memref<512x256xf32, #tpu.memory_space<vmem>>, %arg7: memref<1x256xf32, #tpu.memory_space<vmem>>, %arg8: memref<256x128xf32, #tpu.memory_space<vmem>>, %arg9: memref<1x128xf32, #tpu.memory_space<vmem>>, %arg10: memref<128x100xf32, #tpu.memory_space<vmem>>, %arg11: memref<1x100xf32, #tpu.memory_space<vmem>>, %arg12: memref<2x100xf32, #tpu.memory_space<vmem>>) attributes {dimension_semantics = [#tpu.dimension_semantics<parallel>], iteration_bounds = array<i64: 1>, scalar_prefetch = 0 : i64, scratch_operands = 0 : i64, tpu.core_type = #tpu.core_type<tc>, window_params = [{transform_indices = @transform_0, window_bounds = array<i64: 2, 800>}, {pipeline_mode = #tpu.pipeline_mode<synchronous>, transform_indices = @transform_1, window_bounds = array<i64: 800, 1024>}, {pipeline_mode = #tpu.pipeline_mode<synchronous>, transform_indices = @transform_2, window_bounds = array<i64: 1, 1024>}, {pipeline_mode = #tpu.pipeline_mode<synchronous>, transform_indices = @transform_3, window_bounds = array<i64: 1024, 512>}, {pipeline_mode = #tpu.pipeline_mode<synchronous>, transform_indices = @transform_4, window_bounds = array<i64: 1, 512>}, {pipeline_mode = #tpu.pipeline_mode<synchronous>, transform_indices = @transform_5, window_bounds = array<i64: 512, 256>}, {pipeline_mode = #tpu.pipeline_mode<synchronous>, transform_indices = @transform_6, window_bounds = array<i64: 1, 256>}, {pipeline_mode = #tpu.pipeline_mode<synchronous>, transform_indices = @transform_7, window_bounds = array<i64: 256, 128>}, {pipeline_mode = #tpu.pipeline_mode<synchronous>, transform_indices = @transform_8, window_bounds = array<i64: 1, 128>}, {pipeline_mode = #tpu.pipeline_mode<synchronous>, transform_indices = @transform_9, window_bounds = array<i64: 128, 100>}, {pipeline_mode = #tpu.pipeline_mode<synchronous>, transform_indices = @transform_10, window_bounds = array<i64: 1, 100>}, {transform_indices = @transform_11, window_bounds = array<i64: 2, 100>}]} {
    %c0 = arith.constant 0 : index
    %c0_0 = arith.constant 0 : index
    %0 = vector.load %arg1[%c0, %c0_0] : memref<2x800xf32, #tpu.memory_space<vmem>>, vector<2x800xf32>
    %c0_1 = arith.constant 0 : index
    %c0_2 = arith.constant 0 : index
    %1 = vector.load %arg2[%c0_1, %c0_2] : memref<800x1024xf32, #tpu.memory_space<vmem>>, vector<800x1024xf32>
    %cst = arith.constant dense<0.000000e+00> : vector<2x1024xf32>
    %2 = tpu.matmul %0, %1, %cst {dimension_numbers = #tpu.dot_dimension_numbers<[1], [0], [0], [1], [0, 0, 1, 1], [], []>} : vector<2x800xf32>, vector<800x1024xf32>, vector<2x1024xf32> -> vector<2x1024xf32>
    %c0_3 = arith.constant 0 : index
    %c0_4 = arith.constant 0 : index
    %3 = vector.load %arg3[%c0_3, %c0_4] : memref<1x1024xf32, #tpu.memory_space<vmem>>, vector<1x1024xf32>
    %4 = vector.broadcast %3 : vector<1x1024xf32> to vector<2x1024xf32>
    %5 = arith.addf %2, %4 : vector<2x1024xf32>
    %cst_5 = arith.constant 0.000000e+00 : f32
    %6 = vector.broadcast %cst_5 : f32 to vector<2x1024xf32>
    %7 = arith.maximumf %5, %6 : vector<2x1024xf32>
    %c0_6 = arith.constant 0 : index
    %c0_7 = arith.constant 0 : index
    %8 = vector.load %arg4[%c0_6, %c0_7] : memref<1024x512xf32, #tpu.memory_space<vmem>>, vector<1024x512xf32>
    %cst_8 = arith.constant dense<0.000000e+00> : vector<2x512xf32>
    %9 = tpu.matmul %7, %8, %cst_8 {dimension_numbers = #tpu.dot_dimension_numbers<[1], [0], [0], [1], [0, 0, 1, 1], [], []>} : vector<2x1024xf32>, vector<1024x512xf32>, vector<2x512xf32> -> vector<2x512xf32>
    %c0_9 = arith.constant 0 : index
    %c0_10 = arith.constant 0 : index
    %10 = vector.load %arg5[%c0_9, %c0_10] : memref<1x512xf32, #tpu.memory_space<vmem>>, vector<1x512xf32>
    %11 = vector.broadcast %10 : vector<1x512xf32> to vector<2x512xf32>
    %12 = arith.addf %9, %11 : vector<2x512xf32>
    %cst_11 = arith.constant 0.000000e+00 : f32
    %13 = vector.broadcast %cst_11 : f32 to vector<2x512xf32>
    %14 = arith.maximumf %12, %13 : vector<2x512xf32>
    %c0_12 = arith.constant 0 : index
    %c0_13 = arith.constant 0 : index
    %15 = vector.load %arg6[%c0_12, %c0_13] : memref<512x256xf32, #tpu.memory_space<vmem>>, vector<512x256xf32>
    %cst_14 = arith.constant dense<0.000000e+00> : vector<2x256xf32>
    %16 = tpu.matmul %14, %15, %cst_14 {dimension_numbers = #tpu.dot_dimension_numbers<[1], [0], [0], [1], [0, 0, 1, 1], [], []>} : vector<2x512xf32>, vector<512x256xf32>, vector<2x256xf32> -> vector<2x256xf32>
    %c0_15 = arith.constant 0 : index
    %c0_16 = arith.constant 0 : index
    %17 = vector.load %arg7[%c0_15, %c0_16] : memref<1x256xf32, #tpu.memory_space<vmem>>, vector<1x256xf32>
    %18 = vector.broadcast %17 : vector<1x256xf32> to vector<2x256xf32>
    %19 = arith.addf %16, %18 : vector<2x256xf32>
    %cst_17 = arith.constant 0.000000e+00 : f32
    %20 = vector.broadcast %cst_17 : f32 to vector<2x256xf32>
    %21 = arith.maximumf %19, %20 : vector<2x256xf32>
    %c0_18 = arith.constant 0 : index
    %c0_19 = arith.constant 0 : index
    %22 = vector.load %arg8[%c0_18, %c0_19] : memref<256x128xf32, #tpu.memory_space<vmem>>, vector<256x128xf32>
    %cst_20 = arith.constant dense<0.000000e+00> : vector<2x128xf32>
    %23 = tpu.matmul %21, %22, %cst_20 {dimension_numbers = #tpu.dot_dimension_numbers<[1], [0], [0], [1], [0, 0, 1, 1], [], []>} : vector<2x256xf32>, vector<256x128xf32>, vector<2x128xf32> -> vector<2x128xf32>
    %c0_21 = arith.constant 0 : index
    %c0_22 = arith.constant 0 : index
    %24 = vector.load %arg9[%c0_21, %c0_22] : memref<1x128xf32, #tpu.memory_space<vmem>>, vector<1x128xf32>
    %25 = vector.broadcast %24 : vector<1x128xf32> to vector<2x128xf32>
    %26 = arith.addf %23, %25 : vector<2x128xf32>
    %cst_23 = arith.constant 0.000000e+00 : f32
    %27 = vector.broadcast %cst_23 : f32 to vector<2x128xf32>
    %28 = arith.maximumf %26, %27 : vector<2x128xf32>
    %c0_24 = arith.constant 0 : index
    %c0_25 = arith.constant 0 : index
    %29 = vector.load %arg10[%c0_24, %c0_25] : memref<128x100xf32, #tpu.memory_space<vmem>>, vector<128x100xf32>
    %cst_26 = arith.constant dense<0.000000e+00> : vector<2x100xf32>
    %30 = tpu.matmul %28, %29, %cst_26 {dimension_numbers = #tpu.dot_dimension_numbers<[1], [0], [0], [1], [0, 0, 1, 1], [], []>} : vector<2x128xf32>, vector<128x100xf32>, vector<2x100xf32> -> vector<2x100xf32>
    %c0_27 = arith.constant 0 : index
    %c0_28 = arith.constant 0 : index
    %31 = vector.load %arg11[%c0_27, %c0_28] : memref<1x100xf32, #tpu.memory_space<vmem>>, vector<1x100xf32>
    %32 = vector.broadcast %31 : vector<1x100xf32> to vector<2x100xf32>
    %33 = arith.addf %30, %32 : vector<2x100xf32>
    %34 = math.tanh %33 : vector<2x100xf32>
    %c0_29 = arith.constant 0 : index
    %c0_30 = arith.constant 0 : index
    %35 = vector.load %arg12[%c0_29, %c0_30] : memref<2x100xf32, #tpu.memory_space<vmem>>, vector<2x100xf32>
    tpu.vector_store %arg12[%c0_29, %c0_30], %34 {strides = array<i32>} : memref<2x100xf32, #tpu.memory_space<vmem>>, vector<2x100xf32>,
    return
  }
  func.func @transform_0(%arg0: i32) -> (i32, i32) {
    %c0_i32 = arith.constant 0 : i32
    %c0_i32_0 = arith.constant 0 : i32
    return %arg0, %c0_i32 : i32, i32
  }
  func.func @transform_1(%arg0: i32) -> (i32, i32) {
    %c0_i32 = arith.constant 0 : i32
    %c0_i32_0 = arith.constant 0 : i32
    %c0_i32_1 = arith.constant 0 : i32
    return %c0_i32, %c0_i32_0 : i32, i32
  }
  func.func @transform_2(%arg0: i32) -> (i32, i32) {
    %c0_i32 = arith.constant 0 : i32
    %c0_i32_0 = arith.constant 0 : i32
    %c0_i32_1 = arith.constant 0 : i32
    return %c0_i32, %c0_i32_0 : i32, i32
  }
  func.func @transform_3(%arg0: i32) -> (i32, i32) {
    %c0_i32 = arith.constant 0 : i32
    %c0_i32_0 = arith.constant 0 : i32
    %c0_i32_1 = arith.constant 0 : i32
    return %c0_i32, %c0_i32_0 : i32, i32
  }
  func.func @transform_4(%arg0: i32) -> (i32, i32) {
    %c0_i32 = arith.constant 0 : i32
    %c0_i32_0 = arith.constant 0 : i32
    %c0_i32_1 = arith.constant 0 : i32
    return %c0_i32, %c0_i32_0 : i32, i32
  }
  func.func @transform_5(%arg0: i32) -> (i32, i32) {
    %c0_i32 = arith.constant 0 : i32
    %c0_i32_0 = arith.constant 0 : i32
    %c0_i32_1 = arith.constant 0 : i32
    return %c0_i32, %c0_i32_0 : i32, i32
  }
  func.func @transform_6(%arg0: i32) -> (i32, i32) {
    %c0_i32 = arith.constant 0 : i32
    %c0_i32_0 = arith.constant 0 : i32
    %c0_i32_1 = arith.constant 0 : i32
    return %c0_i32, %c0_i32_0 : i32, i32
  }
  func.func @transform_7(%arg0: i32) -> (i32, i32) {
    %c0_i32 = arith.constant 0 : i32
    %c0_i32_0 = arith.constant 0 : i32
    %c0_i32_1 = arith.constant 0 : i32
    return %c0_i32, %c0_i32_0 : i32, i32
  }
  func.func @transform_8(%arg0: i32) -> (i32, i32) {
    %c0_i32 = arith.constant 0 : i32
    %c0_i32_0 = arith.constant 0 : i32
    %c0_i32_1 = arith.constant 0 : i32
    return %c0_i32, %c0_i32_0 : i32, i32
  }
  func.func @transform_9(%arg0: i32) -> (i32, i32) {
    %c0_i32 = arith.constant 0 : i32
    %c0_i32_0 = arith.constant 0 : i32
    %c0_i32_1 = arith.constant 0 : i32
    return %c0_i32, %c0_i32_0 : i32, i32
  }
  func.func @transform_10(%arg0: i32) -> (i32, i32) {
    %c0_i32 = arith.constant 0 : i32
    %c0_i32_0 = arith.constant 0 : i32
    %c0_i32_1 = arith.constant 0 : i32
    return %c0_i32, %c0_i32_0 : i32, i32
  }
  func.func @transform_11(%arg0: i32) -> (i32, i32) {
    %c0_i32 = arith.constant 0 : i32
    %c0_i32_0 = arith.constant 0 : i32
    return %arg0, %c0_i32 : i32, i32
  }
}

module attributes {stable_mosaic.version = 11 : i64} {
  func.func @_trunk_kernel(%arg0: i32, %arg1: memref<1x32x96xf32, #tpu.memory_space<vmem>>, %arg2: memref<3x96x120xf32, #tpu.memory_space<vmem>>, %arg3: memref<1x120xf32, #tpu.memory_space<vmem>>, %arg4: memref<3x120x224xf32, #tpu.memory_space<vmem>>, %arg5: memref<1x224xf32, #tpu.memory_space<vmem>>, %arg6: memref<2x14x28xf32, #tpu.memory_space<vmem>>, %arg7: memref<2x224x112xf32, #tpu.memory_space<vmem>>, %arg8: memref<3x112x192xf32, #tpu.memory_space<vmem>>, %arg9: memref<1x192xf32, #tpu.memory_space<vmem>>, %arg10: memref<3x192x320xf32, #tpu.memory_space<vmem>>, %arg11: memref<1x320xf32, #tpu.memory_space<vmem>>, %arg12: memref<2x5x10xf32, #tpu.memory_space<vmem>>, %arg13: memref<2x320x160xf32, #tpu.memory_space<vmem>>, %arg14: memref<1x5x160xf32, #tpu.memory_space<vmem>>) attributes {dimension_semantics = [#tpu.dimension_semantics<parallel>], iteration_bounds = array<i64: 2>, scalar_prefetch = 0 : i64, scratch_operands = 0 : i64, tpu.core_type = #tpu.core_type<tc>, window_params = [{transform_indices = @transform_0, window_bounds = array<i64: 1, 32, 96>}, {pipeline_mode = #tpu.pipeline_mode<synchronous>, transform_indices = @transform_1, window_bounds = array<i64: 3, 96, 120>}, {pipeline_mode = #tpu.pipeline_mode<synchronous>, transform_indices = @transform_2, window_bounds = array<i64: 1, 120>}, {pipeline_mode = #tpu.pipeline_mode<synchronous>, transform_indices = @transform_3, window_bounds = array<i64: 3, 120, 224>}, {pipeline_mode = #tpu.pipeline_mode<synchronous>, transform_indices = @transform_4, window_bounds = array<i64: 1, 224>}, {pipeline_mode = #tpu.pipeline_mode<synchronous>, transform_indices = @transform_5, window_bounds = array<i64: 2, 14, 28>}, {pipeline_mode = #tpu.pipeline_mode<synchronous>, transform_indices = @transform_6, window_bounds = array<i64: 2, 224, 112>}, {pipeline_mode = #tpu.pipeline_mode<synchronous>, transform_indices = @transform_7, window_bounds = array<i64: 3, 112, 192>}, {pipeline_mode = #tpu.pipeline_mode<synchronous>, transform_indices = @transform_8, window_bounds = array<i64: 1, 192>}, {pipeline_mode = #tpu.pipeline_mode<synchronous>, transform_indices = @transform_9, window_bounds = array<i64: 3, 192, 320>}, {pipeline_mode = #tpu.pipeline_mode<synchronous>, transform_indices = @transform_10, window_bounds = array<i64: 1, 320>}, {pipeline_mode = #tpu.pipeline_mode<synchronous>, transform_indices = @transform_11, window_bounds = array<i64: 2, 5, 10>}, {pipeline_mode = #tpu.pipeline_mode<synchronous>, transform_indices = @transform_12, window_bounds = array<i64: 2, 320, 160>}, {transform_indices = @transform_13, window_bounds = array<i64: 1, 5, 160>}]} {
    %c0 = arith.constant 0 : index
    %c0_0 = arith.constant 0 : index
    %c0_1 = arith.constant 0 : index
    %0 = vector.load %arg1[%c0, %c0_0, %c0_1] : memref<1x32x96xf32, #tpu.memory_space<vmem>>, vector<1x32x96xf32>
    %1 = vector.shape_cast %0 : vector<1x32x96xf32> to vector<32x96xf32>
    %2 = vector.extract_strided_slice %1 {offsets = [0, 0], sizes = [30, 96], strides = [1, 1]} : vector<32x96xf32> to vector<30x96xf32>
    %c0_2 = arith.constant 0 : index
    %c0_3 = arith.constant 0 : index
    %c0_4 = arith.constant 0 : index
    %3 = vector.load %arg2[%c0_2, %c0_3, %c0_4] : memref<3x96x120xf32, #tpu.memory_space<vmem>>, vector<1x96x120xf32>
    %4 = vector.shape_cast %3 : vector<1x96x120xf32> to vector<96x120xf32>
    %cst = arith.constant dense<0.000000e+00> : vector<30x120xf32>
    %5 = tpu.matmul %2, %4, %cst {dimension_numbers = #tpu.dot_dimension_numbers<[1], [0], [0], [1], [0, 0, 1, 1], [], []>} : vector<30x96xf32>, vector<96x120xf32>, vector<30x120xf32> -> vector<30x120xf32>
    %6 = vector.extract_strided_slice %1 {offsets = [1, 0], sizes = [30, 96], strides = [1, 1]} : vector<32x96xf32> to vector<30x96xf32>
    %c1 = arith.constant 1 : index
    %c0_5 = arith.constant 0 : index
    %c0_6 = arith.constant 0 : index
    %7 = vector.load %arg2[%c1, %c0_5, %c0_6] : memref<3x96x120xf32, #tpu.memory_space<vmem>>, vector<1x96x120xf32>
    %8 = vector.shape_cast %7 : vector<1x96x120xf32> to vector<96x120xf32>
    %cst_7 = arith.constant dense<0.000000e+00> : vector<30x120xf32>
    %9 = tpu.matmul %6, %8, %cst_7 {dimension_numbers = #tpu.dot_dimension_numbers<[1], [0], [0], [1], [0, 0, 1, 1], [], []>} : vector<30x96xf32>, vector<96x120xf32>, vector<30x120xf32> -> vector<30x120xf32>
    %10 = arith.addf %5, %9 : vector<30x120xf32>
    %11 = vector.extract_strided_slice %1 {offsets = [2, 0], sizes = [30, 96], strides = [1, 1]} : vector<32x96xf32> to vector<30x96xf32>
    %c2 = arith.constant 2 : index
    %c0_8 = arith.constant 0 : index
    %c0_9 = arith.constant 0 : index
    %12 = vector.load %arg2[%c2, %c0_8, %c0_9] : memref<3x96x120xf32, #tpu.memory_space<vmem>>, vector<1x96x120xf32>
    %13 = vector.shape_cast %12 : vector<1x96x120xf32> to vector<96x120xf32>
    %cst_10 = arith.constant dense<0.000000e+00> : vector<30x120xf32>
    %14 = tpu.matmul %11, %13, %cst_10 {dimension_numbers = #tpu.dot_dimension_numbers<[1], [0], [0], [1], [0, 0, 1, 1], [], []>} : vector<30x96xf32>, vector<96x120xf32>, vector<30x120xf32> -> vector<30x120xf32>
    %15 = arith.addf %10, %14 : vector<30x120xf32>
    %c0_11 = arith.constant 0 : index
    %c0_12 = arith.constant 0 : index
    %16 = vector.load %arg3[%c0_11, %c0_12] : memref<1x120xf32, #tpu.memory_space<vmem>>, vector<1x120xf32>
    %17 = vector.broadcast %16 : vector<1x120xf32> to vector<30x120xf32>
    %18 = arith.addf %15, %17 : vector<30x120xf32>
    %cst_13 = arith.constant 0.000000e+00 : f32
    %19 = vector.broadcast %cst_13 : f32 to vector<30x120xf32>
    %20 = arith.maximumf %18, %19 : vector<30x120xf32>
    %21 = vector.extract_strided_slice %20 {offsets = [0, 0], sizes = [28, 120], strides = [1, 1]} : vector<30x120xf32> to vector<28x120xf32>
    %c0_14 = arith.constant 0 : index
    %c0_15 = arith.constant 0 : index
    %c0_16 = arith.constant 0 : index
    %22 = vector.load %arg4[%c0_14, %c0_15, %c0_16] : memref<3x120x224xf32, #tpu.memory_space<vmem>>, vector<1x120x224xf32>
    %23 = vector.shape_cast %22 : vector<1x120x224xf32> to vector<120x224xf32>
    %cst_17 = arith.constant dense<0.000000e+00> : vector<28x224xf32>
    %24 = tpu.matmul %21, %23, %cst_17 {dimension_numbers = #tpu.dot_dimension_numbers<[1], [0], [0], [1], [0, 0, 1, 1], [], []>} : vector<28x120xf32>, vector<120x224xf32>, vector<28x224xf32> -> vector<28x224xf32>
    %25 = vector.extract_strided_slice %20 {offsets = [1, 0], sizes = [28, 120], strides = [1, 1]} : vector<30x120xf32> to vector<28x120xf32>
    %c1_18 = arith.constant 1 : index
    %c0_19 = arith.constant 0 : index
    %c0_20 = arith.constant 0 : index
    %26 = vector.load %arg4[%c1_18, %c0_19, %c0_20] : memref<3x120x224xf32, #tpu.memory_space<vmem>>, vector<1x120x224xf32>
    %27 = vector.shape_cast %26 : vector<1x120x224xf32> to vector<120x224xf32>
    %cst_21 = arith.constant dense<0.000000e+00> : vector<28x224xf32>
    %28 = tpu.matmul %25, %27, %cst_21 {dimension_numbers = #tpu.dot_dimension_numbers<[1], [0], [0], [1], [0, 0, 1, 1], [], []>} : vector<28x120xf32>, vector<120x224xf32>, vector<28x224xf32> -> vector<28x224xf32>
    %29 = arith.addf %24, %28 : vector<28x224xf32>
    %30 = vector.extract_strided_slice %20 {offsets = [2, 0], sizes = [28, 120], strides = [1, 1]} : vector<30x120xf32> to vector<28x120xf32>
    %c2_22 = arith.constant 2 : index
    %c0_23 = arith.constant 0 : index
    %c0_24 = arith.constant 0 : index
    %31 = vector.load %arg4[%c2_22, %c0_23, %c0_24] : memref<3x120x224xf32, #tpu.memory_space<vmem>>, vector<1x120x224xf32>
    %32 = vector.shape_cast %31 : vector<1x120x224xf32> to vector<120x224xf32>
    %cst_25 = arith.constant dense<0.000000e+00> : vector<28x224xf32>
    %33 = tpu.matmul %30, %32, %cst_25 {dimension_numbers = #tpu.dot_dimension_numbers<[1], [0], [0], [1], [0, 0, 1, 1], [], []>} : vector<28x120xf32>, vector<120x224xf32>, vector<28x224xf32> -> vector<28x224xf32>
    %34 = arith.addf %29, %33 : vector<28x224xf32>
    %c0_26 = arith.constant 0 : index
    %c0_27 = arith.constant 0 : index
    %35 = vector.load %arg5[%c0_26, %c0_27] : memref<1x224xf32, #tpu.memory_space<vmem>>, vector<1x224xf32>
    %36 = vector.broadcast %35 : vector<1x224xf32> to vector<28x224xf32>
    %37 = arith.addf %34, %36 : vector<28x224xf32>
    %cst_28 = arith.constant 0.000000e+00 : f32
    %38 = vector.broadcast %cst_28 : f32 to vector<28x224xf32>
    %39 = arith.maximumf %37, %38 : vector<28x224xf32>
    %c0_29 = arith.constant 0 : index
    %c0_30 = arith.constant 0 : index
    %c0_31 = arith.constant 0 : index
    %40 = vector.load %arg6[%c0_29, %c0_30, %c0_31] : memref<2x14x28xf32, #tpu.memory_space<vmem>>, vector<1x14x28xf32>
    %41 = vector.shape_cast %40 : vector<1x14x28xf32> to vector<14x28xf32>
    %cst_32 = arith.constant dense<0.000000e+00> : vector<14x224xf32>
    %42 = tpu.matmul %41, %39, %cst_32 {dimension_numbers = #tpu.dot_dimension_numbers<[1], [0], [0], [1], [0, 0, 1, 1], [], []>} : vector<14x28xf32>, vector<28x224xf32>, vector<14x224xf32> -> vector<14x224xf32>
    %c1_33 = arith.constant 1 : index
    %c0_34 = arith.constant 0 : index
    %c0_35 = arith.constant 0 : index
    %43 = vector.load %arg6[%c1_33, %c0_34, %c0_35] : memref<2x14x28xf32, #tpu.memory_space<vmem>>, vector<1x14x28xf32>
    %44 = vector.shape_cast %43 : vector<1x14x28xf32> to vector<14x28xf32>
    %cst_36 = arith.constant dense<0.000000e+00> : vector<14x224xf32>
    %45 = tpu.matmul %44, %39, %cst_36 {dimension_numbers = #tpu.dot_dimension_numbers<[1], [0], [0], [1], [0, 0, 1, 1], [], []>} : vector<14x28xf32>, vector<28x224xf32>, vector<14x224xf32> -> vector<14x224xf32>
    %46 = arith.maximumf %42, %45 : vector<14x224xf32>
    %c0_37 = arith.constant 0 : index
    %c0_38 = arith.constant 0 : index
    %c0_39 = arith.constant 0 : index
    %47 = vector.load %arg7[%c0_37, %c0_38, %c0_39] : memref<2x224x112xf32, #tpu.memory_space<vmem>>, vector<1x224x112xf32>
    %48 = vector.shape_cast %47 : vector<1x224x112xf32> to vector<224x112xf32>
    %cst_40 = arith.constant dense<0.000000e+00> : vector<14x112xf32>
    %49 = tpu.matmul %46, %48, %cst_40 {dimension_numbers = #tpu.dot_dimension_numbers<[1], [0], [0], [1], [0, 0, 1, 1], [], []>} : vector<14x224xf32>, vector<224x112xf32>, vector<14x112xf32> -> vector<14x112xf32>
    %c1_41 = arith.constant 1 : index
    %c0_42 = arith.constant 0 : index
    %c0_43 = arith.constant 0 : index
    %50 = vector.load %arg7[%c1_41, %c0_42, %c0_43] : memref<2x224x112xf32, #tpu.memory_space<vmem>>, vector<1x224x112xf32>
    %51 = vector.shape_cast %50 : vector<1x224x112xf32> to vector<224x112xf32>
    %cst_44 = arith.constant dense<0.000000e+00> : vector<14x112xf32>
    %52 = tpu.matmul %46, %51, %cst_44 {dimension_numbers = #tpu.dot_dimension_numbers<[1], [0], [0], [1], [0, 0, 1, 1], [], []>} : vector<14x224xf32>, vector<224x112xf32>, vector<14x112xf32> -> vector<14x112xf32>
    %53 = arith.maximumf %49, %52 : vector<14x112xf32>
    %54 = vector.extract_strided_slice %53 {offsets = [0, 0], sizes = [12, 112], strides = [1, 1]} : vector<14x112xf32> to vector<12x112xf32>
    %c0_45 = arith.constant 0 : index
    %c0_46 = arith.constant 0 : index
    %c0_47 = arith.constant 0 : index
    %55 = vector.load %arg8[%c0_45, %c0_46, %c0_47] : memref<3x112x192xf32, #tpu.memory_space<vmem>>, vector<1x112x192xf32>
    %56 = vector.shape_cast %55 : vector<1x112x192xf32> to vector<112x192xf32>
    %cst_48 = arith.constant dense<0.000000e+00> : vector<12x192xf32>
    %57 = tpu.matmul %54, %56, %cst_48 {dimension_numbers = #tpu.dot_dimension_numbers<[1], [0], [0], [1], [0, 0, 1, 1], [], []>} : vector<12x112xf32>, vector<112x192xf32>, vector<12x192xf32> -> vector<12x192xf32>
    %58 = vector.extract_strided_slice %53 {offsets = [1, 0], sizes = [12, 112], strides = [1, 1]} : vector<14x112xf32> to vector<12x112xf32>
    %c1_49 = arith.constant 1 : index
    %c0_50 = arith.constant 0 : index
    %c0_51 = arith.constant 0 : index
    %59 = vector.load %arg8[%c1_49, %c0_50, %c0_51] : memref<3x112x192xf32, #tpu.memory_space<vmem>>, vector<1x112x192xf32>
    %60 = vector.shape_cast %59 : vector<1x112x192xf32> to vector<112x192xf32>
    %cst_52 = arith.constant dense<0.000000e+00> : vector<12x192xf32>
    %61 = tpu.matmul %58, %60, %cst_52 {dimension_numbers = #tpu.dot_dimension_numbers<[1], [0], [0], [1], [0, 0, 1, 1], [], []>} : vector<12x112xf32>, vector<112x192xf32>, vector<12x192xf32> -> vector<12x192xf32>
    %62 = arith.addf %57, %61 : vector<12x192xf32>
    %63 = vector.extract_strided_slice %53 {offsets = [2, 0], sizes = [12, 112], strides = [1, 1]} : vector<14x112xf32> to vector<12x112xf32>
    %c2_53 = arith.constant 2 : index
    %c0_54 = arith.constant 0 : index
    %c0_55 = arith.constant 0 : index
    %64 = vector.load %arg8[%c2_53, %c0_54, %c0_55] : memref<3x112x192xf32, #tpu.memory_space<vmem>>, vector<1x112x192xf32>
    %65 = vector.shape_cast %64 : vector<1x112x192xf32> to vector<112x192xf32>
    %cst_56 = arith.constant dense<0.000000e+00> : vector<12x192xf32>
    %66 = tpu.matmul %63, %65, %cst_56 {dimension_numbers = #tpu.dot_dimension_numbers<[1], [0], [0], [1], [0, 0, 1, 1], [], []>} : vector<12x112xf32>, vector<112x192xf32>, vector<12x192xf32> -> vector<12x192xf32>
    %67 = arith.addf %62, %66 : vector<12x192xf32>
    %c0_57 = arith.constant 0 : index
    %c0_58 = arith.constant 0 : index
    %68 = vector.load %arg9[%c0_57, %c0_58] : memref<1x192xf32, #tpu.memory_space<vmem>>, vector<1x192xf32>
    %69 = vector.broadcast %68 : vector<1x192xf32> to vector<12x192xf32>
    %70 = arith.addf %67, %69 : vector<12x192xf32>
    %cst_59 = arith.constant 0.000000e+00 : f32
    %71 = vector.broadcast %cst_59 : f32 to vector<12x192xf32>
    %72 = arith.maximumf %70, %71 : vector<12x192xf32>
    %73 = vector.extract_strided_slice %72 {offsets = [0, 0], sizes = [10, 192], strides = [1, 1]} : vector<12x192xf32> to vector<10x192xf32>
    %c0_60 = arith.constant 0 : index
    %c0_61 = arith.constant 0 : index
    %c0_62 = arith.constant 0 : index
    %74 = vector.load %arg10[%c0_60, %c0_61, %c0_62] : memref<3x192x320xf32, #tpu.memory_space<vmem>>, vector<1x192x320xf32>
    %75 = vector.shape_cast %74 : vector<1x192x320xf32> to vector<192x320xf32>
    %cst_63 = arith.constant dense<0.000000e+00> : vector<10x320xf32>
    %76 = tpu.matmul %73, %75, %cst_63 {dimension_numbers = #tpu.dot_dimension_numbers<[1], [0], [0], [1], [0, 0, 1, 1], [], []>} : vector<10x192xf32>, vector<192x320xf32>, vector<10x320xf32> -> vector<10x320xf32>
    %77 = vector.extract_strided_slice %72 {offsets = [1, 0], sizes = [10, 192], strides = [1, 1]} : vector<12x192xf32> to vector<10x192xf32>
    %c1_64 = arith.constant 1 : index
    %c0_65 = arith.constant 0 : index
    %c0_66 = arith.constant 0 : index
    %78 = vector.load %arg10[%c1_64, %c0_65, %c0_66] : memref<3x192x320xf32, #tpu.memory_space<vmem>>, vector<1x192x320xf32>
    %79 = vector.shape_cast %78 : vector<1x192x320xf32> to vector<192x320xf32>
    %cst_67 = arith.constant dense<0.000000e+00> : vector<10x320xf32>
    %80 = tpu.matmul %77, %79, %cst_67 {dimension_numbers = #tpu.dot_dimension_numbers<[1], [0], [0], [1], [0, 0, 1, 1], [], []>} : vector<10x192xf32>, vector<192x320xf32>, vector<10x320xf32> -> vector<10x320xf32>
    %81 = arith.addf %76, %80 : vector<10x320xf32>
    %82 = vector.extract_strided_slice %72 {offsets = [2, 0], sizes = [10, 192], strides = [1, 1]} : vector<12x192xf32> to vector<10x192xf32>
    %c2_68 = arith.constant 2 : index
    %c0_69 = arith.constant 0 : index
    %c0_70 = arith.constant 0 : index
    %83 = vector.load %arg10[%c2_68, %c0_69, %c0_70] : memref<3x192x320xf32, #tpu.memory_space<vmem>>, vector<1x192x320xf32>
    %84 = vector.shape_cast %83 : vector<1x192x320xf32> to vector<192x320xf32>
    %cst_71 = arith.constant dense<0.000000e+00> : vector<10x320xf32>
    %85 = tpu.matmul %82, %84, %cst_71 {dimension_numbers = #tpu.dot_dimension_numbers<[1], [0], [0], [1], [0, 0, 1, 1], [], []>} : vector<10x192xf32>, vector<192x320xf32>, vector<10x320xf32> -> vector<10x320xf32>
    %86 = arith.addf %81, %85 : vector<10x320xf32>
    %c0_72 = arith.constant 0 : index
    %c0_73 = arith.constant 0 : index
    %87 = vector.load %arg11[%c0_72, %c0_73] : memref<1x320xf32, #tpu.memory_space<vmem>>, vector<1x320xf32>
    %88 = vector.broadcast %87 : vector<1x320xf32> to vector<10x320xf32>
    %89 = arith.addf %86, %88 : vector<10x320xf32>
    %cst_74 = arith.constant 0.000000e+00 : f32
    %90 = vector.broadcast %cst_74 : f32 to vector<10x320xf32>
    %91 = arith.maximumf %89, %90 : vector<10x320xf32>
    %c0_75 = arith.constant 0 : index
    %c0_76 = arith.constant 0 : index
    %c0_77 = arith.constant 0 : index
    %92 = vector.load %arg12[%c0_75, %c0_76, %c0_77] : memref<2x5x10xf32, #tpu.memory_space<vmem>>, vector<1x5x10xf32>
    %93 = vector.shape_cast %92 : vector<1x5x10xf32> to vector<5x10xf32>
    %cst_78 = arith.constant dense<0.000000e+00> : vector<5x320xf32>
    %94 = tpu.matmul %93, %91, %cst_78 {dimension_numbers = #tpu.dot_dimension_numbers<[1], [0], [0], [1], [0, 0, 1, 1], [], []>} : vector<5x10xf32>, vector<10x320xf32>, vector<5x320xf32> -> vector<5x320xf32>
    %c1_79 = arith.constant 1 : index
    %c0_80 = arith.constant 0 : index
    %c0_81 = arith.constant 0 : index
    %95 = vector.load %arg12[%c1_79, %c0_80, %c0_81] : memref<2x5x10xf32, #tpu.memory_space<vmem>>, vector<1x5x10xf32>
    %96 = vector.shape_cast %95 : vector<1x5x10xf32> to vector<5x10xf32>
    %cst_82 = arith.constant dense<0.000000e+00> : vector<5x320xf32>
    %97 = tpu.matmul %96, %91, %cst_82 {dimension_numbers = #tpu.dot_dimension_numbers<[1], [0], [0], [1], [0, 0, 1, 1], [], []>} : vector<5x10xf32>, vector<10x320xf32>, vector<5x320xf32> -> vector<5x320xf32>
    %98 = arith.maximumf %94, %97 : vector<5x320xf32>
    %c0_83 = arith.constant 0 : index
    %c0_84 = arith.constant 0 : index
    %c0_85 = arith.constant 0 : index
    %99 = vector.load %arg13[%c0_83, %c0_84, %c0_85] : memref<2x320x160xf32, #tpu.memory_space<vmem>>, vector<1x320x160xf32>
    %100 = vector.shape_cast %99 : vector<1x320x160xf32> to vector<320x160xf32>
    %cst_86 = arith.constant dense<0.000000e+00> : vector<5x160xf32>
    %101 = tpu.matmul %98, %100, %cst_86 {dimension_numbers = #tpu.dot_dimension_numbers<[1], [0], [0], [1], [0, 0, 1, 1], [], []>} : vector<5x320xf32>, vector<320x160xf32>, vector<5x160xf32> -> vector<5x160xf32>
    %c1_87 = arith.constant 1 : index
    %c0_88 = arith.constant 0 : index
    %c0_89 = arith.constant 0 : index
    %102 = vector.load %arg13[%c1_87, %c0_88, %c0_89] : memref<2x320x160xf32, #tpu.memory_space<vmem>>, vector<1x320x160xf32>
    %103 = vector.shape_cast %102 : vector<1x320x160xf32> to vector<320x160xf32>
    %cst_90 = arith.constant dense<0.000000e+00> : vector<5x160xf32>
    %104 = tpu.matmul %98, %103, %cst_90 {dimension_numbers = #tpu.dot_dimension_numbers<[1], [0], [0], [1], [0, 0, 1, 1], [], []>} : vector<5x320xf32>, vector<320x160xf32>, vector<5x160xf32> -> vector<5x160xf32>
    %105 = arith.maximumf %101, %104 : vector<5x160xf32>
    %c0_91 = arith.constant 0 : index
    %c0_92 = arith.constant 0 : index
    %c0_93 = arith.constant 0 : index
    %106 = vector.load %arg14[%c0_91, %c0_92, %c0_93] : memref<1x5x160xf32, #tpu.memory_space<vmem>>, vector<1x5x160xf32>
    %107 = vector.shape_cast %106 : vector<1x5x160xf32> to vector<5x160xf32>
    %108 = vector.shape_cast %105 : vector<5x160xf32> to vector<1x5x160xf32>
    tpu.vector_store %arg14[%c0_91, %c0_92, %c0_93], %108 {strides = array<i32>} : memref<1x5x160xf32, #tpu.memory_space<vmem>>, vector<1x5x160xf32>,
    return
  }
  func.func @transform_0(%arg0: i32) -> (i32, i32, i32) {
    %c0_i32 = arith.constant 0 : i32
    %c0_i32_0 = arith.constant 0 : i32
    %c0_i32_1 = arith.constant 0 : i32
    return %arg0, %c0_i32, %c0_i32_0 : i32, i32, i32
  }
  func.func @transform_1(%arg0: i32) -> (i32, i32, i32) {
    %c0_i32 = arith.constant 0 : i32
    %c0_i32_0 = arith.constant 0 : i32
    %c0_i32_1 = arith.constant 0 : i32
    %c0_i32_2 = arith.constant 0 : i32
    return %c0_i32, %c0_i32_0, %c0_i32_1 : i32, i32, i32
  }
  func.func @transform_2(%arg0: i32) -> (i32, i32) {
    %c0_i32 = arith.constant 0 : i32
    %c0_i32_0 = arith.constant 0 : i32
    %c0_i32_1 = arith.constant 0 : i32
    return %c0_i32, %c0_i32_0 : i32, i32
  }
  func.func @transform_3(%arg0: i32) -> (i32, i32, i32) {
    %c0_i32 = arith.constant 0 : i32
    %c0_i32_0 = arith.constant 0 : i32
    %c0_i32_1 = arith.constant 0 : i32
    %c0_i32_2 = arith.constant 0 : i32
    return %c0_i32, %c0_i32_0, %c0_i32_1 : i32, i32, i32
  }
  func.func @transform_4(%arg0: i32) -> (i32, i32) {
    %c0_i32 = arith.constant 0 : i32
    %c0_i32_0 = arith.constant 0 : i32
    %c0_i32_1 = arith.constant 0 : i32
    return %c0_i32, %c0_i32_0 : i32, i32
  }
  func.func @transform_5(%arg0: i32) -> (i32, i32, i32) {
    %c0_i32 = arith.constant 0 : i32
    %c0_i32_0 = arith.constant 0 : i32
    %c0_i32_1 = arith.constant 0 : i32
    %c0_i32_2 = arith.constant 0 : i32
    return %c0_i32, %c0_i32_0, %c0_i32_1 : i32, i32, i32
  }
  func.func @transform_6(%arg0: i32) -> (i32, i32, i32) {
    %c0_i32 = arith.constant 0 : i32
    %c0_i32_0 = arith.constant 0 : i32
    %c0_i32_1 = arith.constant 0 : i32
    %c0_i32_2 = arith.constant 0 : i32
    return %c0_i32, %c0_i32_0, %c0_i32_1 : i32, i32, i32
  }
  func.func @transform_7(%arg0: i32) -> (i32, i32, i32) {
    %c0_i32 = arith.constant 0 : i32
    %c0_i32_0 = arith.constant 0 : i32
    %c0_i32_1 = arith.constant 0 : i32
    %c0_i32_2 = arith.constant 0 : i32
    return %c0_i32, %c0_i32_0, %c0_i32_1 : i32, i32, i32
  }
  func.func @transform_8(%arg0: i32) -> (i32, i32) {
    %c0_i32 = arith.constant 0 : i32
    %c0_i32_0 = arith.constant 0 : i32
    %c0_i32_1 = arith.constant 0 : i32
    return %c0_i32, %c0_i32_0 : i32, i32
  }
  func.func @transform_9(%arg0: i32) -> (i32, i32, i32) {
    %c0_i32 = arith.constant 0 : i32
    %c0_i32_0 = arith.constant 0 : i32
    %c0_i32_1 = arith.constant 0 : i32
    %c0_i32_2 = arith.constant 0 : i32
    return %c0_i32, %c0_i32_0, %c0_i32_1 : i32, i32, i32
  }
  func.func @transform_10(%arg0: i32) -> (i32, i32) {
    %c0_i32 = arith.constant 0 : i32
    %c0_i32_0 = arith.constant 0 : i32
    %c0_i32_1 = arith.constant 0 : i32
    return %c0_i32, %c0_i32_0 : i32, i32
  }
  func.func @transform_11(%arg0: i32) -> (i32, i32, i32) {
    %c0_i32 = arith.constant 0 : i32
    %c0_i32_0 = arith.constant 0 : i32
    %c0_i32_1 = arith.constant 0 : i32
    %c0_i32_2 = arith.constant 0 : i32
    return %c0_i32, %c0_i32_0, %c0_i32_1 : i32, i32, i32
  }
  func.func @transform_12(%arg0: i32) -> (i32, i32, i32) {
    %c0_i32 = arith.constant 0 : i32
    %c0_i32_0 = arith.constant 0 : i32
    %c0_i32_1 = arith.constant 0 : i32
    %c0_i32_2 = arith.constant 0 : i32
    return %c0_i32, %c0_i32_0, %c0_i32_1 : i32, i32, i32
  }
  func.func @transform_13(%arg0: i32) -> (i32, i32, i32) {
    %c0_i32 = arith.constant 0 : i32
    %c0_i32_0 = arith.constant 0 : i32
    %c0_i32_1 = arith.constant 0 : i32
    return %arg0, %c0_i32, %c0_i32_0 : i32, i32, i32
  }
}

</mosaic_0001>

<llo_original>
// kernel: encoder6_forward.2
$region0: #{encoder6_forward.2}
  #allocation0 [shape = 'u32[]', space=smem, size = 0x4, offset = 0x4, fixed_abs, tag = 'smem constant byte address 0x4 - core index']
  #allocation1 [shape = 'u32[144,128]{1,0:T(1,128)}', space=vmem, size = 0x12000, scoped, tag = 'internal scratch']
  %s0 = inlined_call_operand.vmem [shape: f32[2,32,96], index: 0, kind: input, shape index: {}]
  %s1 = inlined_call_operand.hbm [shape: f32[3,96,120], index: 1, kind: input, shape index: {}]
  %s2 = inlined_call_operand.hbm [shape: f32[1,120], index: 2, kind: input, shape index: {}]
  %s3 = inlined_call_operand.vmem [shape: f32[3,120,224], index: 3, kind: input, shape index: {}]
  %s4 = inlined_call_operand.hbm [shape: f32[1,224], index: 4, kind: input, shape index: {}]
  %s5 = inlined_call_operand.vmem [shape: f32[2,14,28], index: 5, kind: input, shape index: {}]
  %s6 = inlined_call_operand.hbm [shape: f32[2,224,112], index: 6, kind: input, shape index: {}]
  %s7 = inlined_call_operand.vmem [shape: f32[3,112,192], index: 7, kind: input, shape index: {}]
  %s8 = inlined_call_operand.hbm [shape: f32[1,192], index: 8, kind: input, shape index: {}]
  %s9 = inlined_call_operand.hbm [shape: f32[3,192,320], index: 9, kind: input, shape index: {}]
  %s10 = inlined_call_operand.hbm [shape: f32[1,320], index: 10, kind: input, shape index: {}]
  %s11 = inlined_call_operand.vmem [shape: f32[2,5,10], index: 11, kind: input, shape index: {}]
  %s12 = inlined_call_operand.vmem [shape: f32[2,320,160], index: 12, kind: input, shape index: {}]
  %s13 = inlined_call_operand.vmem [shape: f32[2,5,160], index: 13, kind: output, shape index: {}]
  %s14 = sld [smem:[#allocation0]]
  $region113: #{encoder6_forward.2} parent=0
    _
  %s16 = ssub.s32 1, %s14
  %s17 = scalar_select 0, %s16, %s14
  $region1: #{encoder6_forward.2} parent=0
    #allocation2 [shape = 'u8[147456]{0}', space=vmem, size = 0x24000, scoped, tag = 'input window, operand 1, single buffered']
    #allocation3 [shape = 's32[2]{0}', space=sflag, size = 0x8, scoped, tag = 'scoped memory for encoder6_forward.2']
    #allocation4 [shape = 'u8[512]{0}', space=vmem, size = 0x400, scoped, tag = 'input window, operand 2, single buffered']
    #allocation5 [shape = 's32[1]{0}', space=sflag, size = 0x4, scoped, tag = 'scoped memory for encoder6_forward.2']
    #allocation6 [shape = 'u8[1024]{0}', space=vmem, size = 0x400, scoped, tag = 'input window, operand 4, single buffered']
    #allocation7 [shape = 'u8[229376]{0}', space=vmem, size = 0x38000, scoped, tag = 'input window, operand 6, single buffered']
    #allocation8 [shape = 's32[1]{0}', space=sflag, size = 0x4, scoped, tag = 'scoped memory for encoder6_forward.2']
    #allocation9 [shape = 'u8[1024]{0}', space=vmem, size = 0x400, scoped, tag = 'input window, operand 8, single buffered']
    #allocation10 [shape = 'u8[884736]{0}', space=vmem, size = 0xd8000, scoped, tag = 'input window, operand 9, single buffered']
    #allocation11 [shape = 's32[1]{0}', space=sflag, size = 0x4, scoped, tag = 'scoped memory for encoder6_forward.2']
    #allocation12 [shape = 'u8[1536]{0}', space=vmem, size = 0x800, scoped, tag = 'input window, operand 10, single buffered']
    %18 = vsyncpa [#allocation3], 0
    %19 = vsyncpa [#allocation5], 0
    %20 = vsyncpa [#allocation8], 0
    %21 = vsyncpa [#allocation11], 0
    loop: start=0, step=1, limit=4
    $region2: #{encoder6_forward.2} parent=1 // loop_pre_header
      _
    $region3: #{encoder6_forward.2} parent=1 // loop_header
      %s23 = sphi 0, %s27
      %p24 = scmp.ge.s32.totalorder %s23, 4
      %s33 = sphi 0, %s35
      %s36 = sphi 0, %s33
      %s37 = sphi 0, %s36
      %s53 = sphi 0, %s37
      %s57 = sphi 0, %s57
      %s59 = sphi 0, %s57
      %s60 = sphi 0, %s59
      %s74 = sphi 0, %s60
      %s78 = sphi 0, %s78
      %s80 = sphi 0, %s78
      %s81 = sphi 0, %s80
      %s95 = sphi 0, %s81
      %s99 = sphi 0, %s99
      %s101 = sphi 0, %s99
      %s102 = sphi 0, %s101
      %s116 = sphi 0, %s102
      %s120 = sphi 0, %s120
      %s122 = sphi 0, %s120
      %s123 = sphi 0, %s122
      %s137 = sphi 0, %s123
      %s141 = sphi 0, %s141
      %s143 = sphi 0, %s141
      %s144 = sphi 0, %s143
      %s158 = sphi 0, %s144
      %s162 = sphi 0, %s162
      %s164 = sphi 0, %s162
      %s165 = sphi 0, %s164
      %s179 = sphi 0, %s165
      %s183 = sphi 0, %s183
      %s185 = sphi 0, %s183
      %s186 = sphi 0, %s185
      %s200 = sphi 0, %s186
      %s204 = sphi 0, %s204
      %s206 = sphi 0, %s204
      %s207 = sphi 0, %s206
      %s221 = sphi 0, %s207
      %s225 = sphi 0, %s225
      %s227 = sphi 0, %s225
      %s228 = sphi 0, %s227
      %s242 = sphi 0, %s228
      %s246 = sphi 0, %s246
      %s248 = sphi 0, %s246
      %s249 = sphi 0, %s248
      %s263 = sphi 0, %s249
      %s267 = sphi 0, %s267
      %s269 = sphi 0, %s267
      %s270 = sphi 0, %s269
      %s284 = sphi 0, %s270
      %s288 = sphi 0, %s288
      %s290 = sphi 0, %s288
      %s291 = sphi 0, %s290
      %s305 = sphi 0, %s291
      %s311 = sphi 0, %s313
      %s314 = sphi 0, %s311
      %s315 = sphi 0, %s314
      %s331 = sphi 0, %s315
    $region4: #{encoder6_forward.2} parent=1 // loop_header_branch
      %26 = sbr.rel (%p24) target = $region8
    $region5: #{encoder6_forward.2} parent=1 // loop_body
      %s28 = ssub.s32 %s23, 1
      %s29 = ssub.s32 %s23, 2
      %s30 = sadd.s32 %s23, 1
      %s31 = ssub.s32 %s23, %s30
      %p32 = scmp.eq.s32.totalorder %s31, 0
      %s34 = sadd.s32 %s33, 1
      %s35 = scalar_select %p32, %s33, %s34
      %p38 = pneg %p32
      %p39 = scmp.eq.s32.totalorder %s23, 1
      %p40 = por %p38, %p39
      %p41 = scmp.ne.s32.totalorder %s33, %s36
      %p42 = scmp.eq.s32.totalorder %s23, 0
      %p43 = por %p41, %p42
      %p44 = scmp.ne.s32.totalorder %s33, %s36
      %p45 = scmp.eq.s32.totalorder %s28, 1
      %p46 = por %p44, %p45
      %p47 = scmp.ne.s32.totalorder %s36, %s37
      %p48 = scmp.eq.s32.totalorder %s28, 0
      %p49 = por %p47, %p48
      %p50 = scmp.ne.s32.totalorder %s36, %s37
      %p51 = scmp.eq.s32.totalorder %s29, 1
      %p52 = por %p50, %p51
      %p54 = scmp.ne.s32.totalorder %s37, %s53
      %p55 = scmp.eq.s32.totalorder %s29, 0
      %p56 = por %p54, %p55
      %s58 = sadd.s32 %s57, 1
      %p61 = scmp.eq.s32.totalorder %s23, 1
      %p62 = scmp.ne.s32.totalorder %s57, %s59
      %p63 = scmp.eq.s32.totalorder %s23, 0
      %p64 = por %p62, %p63
      %p65 = scmp.ne.s32.totalorder %s57, %s59
      %p66 = scmp.eq.s32.totalorder %s28, 1
      %p67 = por %p65, %p66
      %p68 = scmp.ne.s32.totalorder %s59, %s60
      %p69 = scmp.eq.s32.totalorder %s28, 0
      %p70 = por %p68, %p69
      %p71 = scmp.ne.s32.totalorder %s59, %s60
      %p72 = scmp.eq.s32.totalorder %s29, 1
      %p73 = por %p71, %p72
      %p75 = scmp.ne.s32.totalorder %s60, %s74
      %p76 = scmp.eq.s32.totalorder %s29, 0
      %p77 = por %p75, %p76
      %s79 = sadd.s32 %s78, 1
      %p82 = scmp.eq.s32.totalorder %s23, 1
      %p83 = scmp.ne.s32.totalorder %s78, %s80
      %p84 = scmp.eq.s32.totalorder %s23, 0
      %p85 = por %p83, %p84
      %p86 = scmp.ne.s32.totalorder %s78, %s80
      %p87 = scmp.eq.s32.totalorder %s28, 1
      %p88 = por %p86, %p87
      %p89 = scmp.ne.s32.totalorder %s80, %s81
      %p90 = scmp.eq.s32.totalorder %s28, 0
      %p91 = por %p89, %p90
      %p92 = scmp.ne.s32.totalorder %s80, %s81
      %p93 = scmp.eq.s32.totalorder %s29, 1
      %p94 = por %p92, %p93
      %p96 = scmp.ne.s32.totalorder %s81, %s95
      %p97 = scmp.eq.s32.totalorder %s29, 0
      %p98 = por %p96, %p97
      %s100 = sadd.s32 %s99, 1
      %p103 = scmp.eq.s32.totalorder %s23, 1
      %p104 = scmp.ne.s32.totalorder %s99, %s101
      %p105 = scmp.eq.s32.totalorder %s23, 0
      %p106 = por %p104, %p105
      %p107 = scmp.ne.s32.totalorder %s99, %s101
      %p108 = scmp.eq.s32.totalorder %s28, 1
      %p109 = por %p107, %p108
      %p110 = scmp.ne.s32.totalorder %s101, %s102
      %p111 = scmp.eq.s32.totalorder %s28, 0
      %p112 = por %p110, %p111
      %p113 = scmp.ne.s32.totalorder %s101, %s102
      %p114 = scmp.eq.s32.totalorder %s29, 1
      %p115 = por %p113, %p114
      %p117 = scmp.ne.s32.totalorder %s102, %s116
      %p118 = scmp.eq.s32.totalorder %s29, 0
      %p119 = por %p117, %p118
      %s121 = sadd.s32 %s120, 1
      %p124 = scmp.eq.s32.totalorder %s23, 1
      %p125 = scmp.ne.s32.totalorder %s120, %s122
      %p126 = scmp.eq.s32.totalorder %s23, 0
      %p127 = por %p125, %p126
      %p128 = scmp.ne.s32.totalorder %s120, %s122
      %p129 = scmp.eq.s32.totalorder %s28, 1
      %p130 = por %p128, %p129
      %p131 = scmp.ne.s32.totalorder %s122, %s123
      %p132 = scmp.eq.s32.totalorder %s28, 0
      %p133 = por %p131, %p132
      %p134 = scmp.ne.s32.totalorder %s122, %s123
      %p135 = scmp.eq.s32.totalorder %s29, 1
      %p136 = por %p134, %p135
      %p138 = scmp.ne.s32.totalorder %s123, %s137
      %p139 = scmp.eq.s32.totalorder %s29, 0
      %p140 = por %p138, %p139
      %s142 = sadd.s32 %s141, 1
      %p145 = scmp.eq.s32.totalorder %s23, 1
      %p146 = scmp.ne.s32.totalorder %s141, %s143
      %p147 = scmp.eq.s32.totalorder %s23, 0
      %p148 = por %p146, %p147
      %p149 = scmp.ne.s32.totalorder %s141, %s143
      %p150 = scmp.eq.s32.totalorder %s28, 1
      %p151 = por %p149, %p150
      %p152 = scmp.ne.s32.totalorder %s143, %s144
      %p153 = scmp.eq.s32.totalorder %s28, 0
      %p154 = por %p152, %p153
      %p155 = scmp.ne.s32.totalorder %s143, %s144
      %p156 = scmp.eq.s32.totalorder %s29, 1
      %p157 = por %p155, %p156
      %p159 = scmp.ne.s32.totalorder %s144, %s158
      %p160 = scmp.eq.s32.totalorder %s29, 0
      %p161 = por %p159, %p160
      %s163 = sadd.s32 %s162, 1
      %p166 = scmp.eq.s32.totalorder %s23, 1
      %p167 = scmp.ne.s32.totalorder %s162, %s164
      %p168 = scmp.eq.s32.totalorder %s23, 0
      %p169 = por %p167, %p168
      %p170 = scmp.ne.s32.totalorder %s162, %s164
      %p171 = scmp.eq.s32.totalorder %s28, 1
      %p172 = por %p170, %p171
      %p173 = scmp.ne.s32.totalorder %s164, %s165
      %p174 = scmp.eq.s32.totalorder %s28, 0
      %p175 = por %p173, %p174
      %p176 = scmp.ne.s32.totalorder %s164, %s165
      %p177 = scmp.eq.s32.totalorder %s29, 1
      %p178 = por %p176, %p177
      %p180 = scmp.ne.s32.totalorder %s165, %s179
      %p181 = scmp.eq.s32.totalorder %s29, 0
      %p182 = por %p180, %p181
      %s184 = sadd.s32 %s183, 1
      %p187 = scmp.eq.s32.totalorder %s23, 1
      %p188 = scmp.ne.s32.totalorder %s183, %s185
      %p189 = scmp.eq.s32.totalorder %s23, 0
      %p190 = por %p188, %p189
      %p191 = scmp.ne.s32.totalorder %s183, %s185
      %p192 = scmp.eq.s32.totalorder %s28, 1
      %p193 = por %p191, %p192
      %p194 = scmp.ne.s32.totalorder %s185, %s186
      %p195 = scmp.eq.s32.totalorder %s28, 0
      %p196 = por %p194, %p195
      %p197 = scmp.ne.s32.totalorder %s185, %s186
      %p198 = scmp.eq.s32.totalorder %s29, 1
      %p199 = por %p197, %p198
      %p201 = scmp.ne.s32.totalorder %s186, %s200
      %p202 = scmp.eq.s32.totalorder %s29, 0
      %p203 = por %p201, %p202
      %s205 = sadd.s32 %s204, 1
      %p208 = scmp.eq.s32.totalorder %s23, 1
      %p209 = scmp.ne.s32.totalorder %s204, %s206
      %p210 = scmp.eq.s32.totalorder %s23, 0
      %p211 = por %p209, %p210
      %p212 = scmp.ne.s32.totalorder %s204, %s206
      %p213 = scmp.eq.s32.totalorder %s28, 1
      %p214 = por %p212, %p213
      %p215 = scmp.ne.s32.totalorder %s206, %s207
      %p216 = scmp.eq.s32.totalorder %s28, 0
      %p217 = por %p215, %p216
      %p218 = scmp.ne.s32.totalorder %s206, %s207
      %p219 = scmp.eq.s32.totalorder %s29, 1
      %p220 = por %p218, %p219
      %p222 = scmp.ne.s32.totalorder %s207, %s221
      %p223 = scmp.eq.s32.totalorder %s29, 0
      %p224 = por %p222, %p223
      %s226 = sadd.s32 %s225, 1
      %p229 = scmp.eq.s32.totalorder %s23, 1
      %p230 = scmp.ne.s32.totalorder %s225, %s227
      %p231 = scmp.eq.s32.totalorder %s23, 0
      %p232 = por %p230, %p231
      %p233 = scmp.ne.s32.totalorder %s225, %s227
      %p234 = scmp.eq.s32.totalorder %s28, 1
      %p235 = por %p233, %p234
      %p236 = scmp.ne.s32.totalorder %s227, %s228
      %p237 = scmp.eq.s32.totalorder %s28, 0
      %p238 = por %p236, %p237
      %p239 = scmp.ne.s32.totalorder %s227, %s228
      %p240 = scmp.eq.s32.totalorder %s29, 1
      %p241 = por %p239, %p240
      %p243 = scmp.ne.s32.totalorder %s228, %s242
      %p244 = scmp.eq.s32.totalorder %s29, 0
      %p245 = por %p243, %p244
      %s247 = sadd.s32 %s246, 1
      %p250 = scmp.eq.s32.totalorder %s23, 1
      %p251 = scmp.ne.s32.totalorder %s246, %s248
      %p252 = scmp.eq.s32.totalorder %s23, 0
      %p253 = por %p251, %p252
      %p254 = scmp.ne.s32.totalorder %s246, %s248
      %p255 = scmp.eq.s32.totalorder %s28, 1
      %p256 = por %p254, %p255
      %p257 = scmp.ne.s32.totalorder %s248, %s249
      %p258 = scmp.eq.s32.totalorder %s28, 0
      %p259 = por %p257, %p258
      %p260 = scmp.ne.s32.totalorder %s248, %s249
      %p261 = scmp.eq.s32.totalorder %s29, 1
      %p262 = por %p260, %p261
      %p264 = scmp.ne.s32.totalorder %s249, %s263
      %p265 = scmp.eq.s32.totalorder %s29, 0
      %p266 = por %p264, %p265
      %s268 = sadd.s32 %s267, 1
      %p271 = scmp.eq.s32.totalorder %s23, 1
      %p272 = scmp.ne.s32.totalorder %s267, %s269
      %p273 = scmp.eq.s32.totalorder %s23, 0
      %p274 = por %p272, %p273
      %p275 = scmp.ne.s32.totalorder %s267, %s269
      %p276 = scmp.eq.s32.totalorder %s28, 1
      %p277 = por %p275, %p276
      %p278 = scmp.ne.s32.totalorder %s269, %s270
      %p279 = scmp.eq.s32.totalorder %s28, 0
      %p280 = por %p278, %p279
      %p281 = scmp.ne.s32.totalorder %s269, %s270
      %p282 = scmp.eq.s32.totalorder %s29, 1
      %p283 = por %p281, %p282
      %p285 = scmp.ne.s32.totalorder %s270, %s284
      %p286 = scmp.eq.s32.totalorder %s29, 0
      %p287 = por %p285, %p286
      %s289 = sadd.s32 %s288, 1
      %p292 = scmp.eq.s32.totalorder %s23, 1
      %p293 = scmp.ne.s32.totalorder %s288, %s290
      %p294 = scmp.eq.s32.totalorder %s23, 0
      %p295 = por %p293, %p294
      %p296 = scmp.ne.s32.totalorder %s288, %s290
      %p297 = scmp.eq.s32.totalorder %s28, 1
      %p298 = por %p296, %p297
      %p299 = scmp.ne.s32.totalorder %s290, %s291
      %p300 = scmp.eq.s32.totalorder %s28, 0
      %p301 = por %p299, %p300
      %p302 = scmp.ne.s32.totalorder %s290, %s291
      %p303 = scmp.eq.s32.totalorder %s29, 1
      %p304 = por %p302, %p303
      %p306 = scmp.ne.s32.totalorder %s291, %s305
      %p307 = scmp.eq.s32.totalorder %s29, 0
      %p308 = por %p306, %p307
      %s309 = ssub.s32 %s23, %s30
      %p310 = scmp.eq.s32.totalorder %s309, 0
      %s312 = sadd.s32 %s311, 1
      %s313 = scalar_select %p310, %s311, %s312
      %p316 = pneg %p310
      %p317 = scmp.eq.s32.totalorder %s23, 1
      %p318 = por %p316, %p317
      %p319 = scmp.ne.s32.totalorder %s311, %s314
      %p320 = scmp.eq.s32.totalorder %s23, 0
      %p321 = por %p319, %p320
      %p322 = scmp.ne.s32.totalorder %s311, %s314
      %p323 = scmp.eq.s32.totalorder %s28, 1
      %p324 = por %p322, %p323
      %p325 = scmp.ne.s32.totalorder %s314, %s315
      %p326 = scmp.eq.s32.totalorder %s28, 0
      %p327 = por %p325, %p326
      %p328 = scmp.ne.s32.totalorder %s314, %s315
      %p329 = scmp.eq.s32.totalorder %s29, 1
      %p330 = por %p328, %p329
      %p332 = scmp.ne.s32.totalorder %s315, %s331
      %p333 = scmp.eq.s32.totalorder %s29, 0
      %p334 = por %p332, %p333
      %p335 = scmp.le.s32.totalorder 1, %s23
      %p336 = scmp.lt.s32.totalorder %s23, 3
      %p337 = pnand %p335, %p336
      %p338 = pneg %p337
      // Predicated region
      $region9: #{encoder6_forward.2} parent=5 // pred_check
        _
      $region10: #{encoder6_forward.2} parent=5 // pred_check_branch
        %340 = sbr.rel (%p337) target = $region12
      $region11: #{encoder6_forward.2} parent=5 // pred_region
        %s341 = ssub.s32 %s23, 1
        // Predicated region
        $region13: #{encoder6_forward.2} parent=11 // pred_check
          %p342 = pneg %p70
        $region14: #{encoder6_forward.2} parent=11 // pred_check_branch
          %344 = sbr.rel (%p342) target = $region16
        $region15: #{encoder6_forward.2} parent=11 // pred_region
          %s346 = ssub.s32 4608, 4608
          %347 = vsyncadd [#allocation3], %s346
          %s348 = sshll.u32 [#allocation2], 4
          %s349 = int_to_ptr.vmem [resolvable:$true] %s348
          %354 = dma.hbm_to_vmem [thread:$0]  %s1, 4608, %s349, [#allocation3], 128, 128, 8
        $region16: #{encoder6_forward.2} parent=11 // pred_fallthru
          _
        // Predicated region
        $region17: #{encoder6_forward.2} parent=11 // pred_check
          %p355 = pneg %p91
        $region18: #{encoder6_forward.2} parent=11 // pred_check_branch
          %357 = sbr.rel (%p355) target = $region20
        $region19: #{encoder6_forward.2} parent=11 // pred_region
          %s359 = ssub.s32 16, 16
          %360 = vsyncadd [#allocation5], %s359
          %s362 = sshll.u32 [#allocation4], 4
          %s363 = int_to_ptr.vmem [resolvable:$true] %s362
          %365 = dma.hbm_to_vmem [thread:$0]  %s2, 16, %s363, [#allocation5]
        $region20: #{encoder6_forward.2} parent=11 // pred_fallthru
          _
        // Predicated region
        $region21: #{encoder6_forward.2} parent=11 // pred_check
          %p366 = pneg %p112
        $region22: #{encoder6_forward.2} parent=11 // pred_check_branch
          %368 = sbr.rel (%p366) target = $region24
        $region23: #{encoder6_forward.2} parent=11 // pred_region
          _
        $region24: #{encoder6_forward.2} parent=11 // pred_fallthru
          _
        // Predicated region
        $region25: #{encoder6_forward.2} parent=11 // pred_check
          %p369 = pneg %p133
        $region26: #{encoder6_forward.2} parent=11 // pred_check_branch
          %371 = sbr.rel (%p369) target = $region28
        $region27: #{encoder6_forward.2} parent=11 // pred_region
          %s373 = ssub.s32 32, 32
          %374 = vsyncadd [#allocation5], %s373
          %s376 = sshll.u32 [#allocation6], 4
          %s377 = int_to_ptr.vmem [resolvable:$true] %s376
          %379 = dma.hbm_to_vmem [thread:$0]  %s4, 32, %s377, [#allocation5]
        $region28: #{encoder6_forward.2} parent=11 // pred_fallthru
          _
        // Predicated region
        $region29: #{encoder6_forward.2} parent=11 // pred_check
          %p380 = pneg %p154
        $region30: #{encoder6_forward.2} parent=11 // pred_check_branch
          %382 = sbr.rel (%p380) target = $region32
        $region31: #{encoder6_forward.2} parent=11 // pred_region
          _
        $region32: #{encoder6_forward.2} parent=11 // pred_fallthru
          _
        // Predicated region
        $region33: #{encoder6_forward.2} parent=11 // pred_check
          %p383 = pneg %p175
        $region34: #{encoder6_forward.2} parent=11 // pred_check_branch
          %385 = sbr.rel (%p383) target = $region36
        $region35: #{encoder6_forward.2} parent=11 // pred_region
          %s387 = ssub.s32 7168, 7168
          %388 = vsyncadd [#allocation8], %s387
          %s389 = sshll.u32 [#allocation7], 4
          %s390 = int_to_ptr.vmem [resolvable:$true] %s389
          %395 = dma.hbm_to_vmem [thread:$0]  %s6, 7168, %s390, [#allocation8], 128, 128, 8
        $region36: #{encoder6_forward.2} parent=11 // pred_fallthru
          _
        // Predicated region
        $region37: #{encoder6_forward.2} parent=11 // pred_check
          %p396 = pneg %p196
        $region38: #{encoder6_forward.2} parent=11 // pred_check_branch
          %398 = sbr.rel (%p396) target = $region40
        $region39: #{encoder6_forward.2} parent=11 // pred_region
          _
        $region40: #{encoder6_forward.2} parent=11 // pred_fallthru
          _
        // Predicated region
        $region41: #{encoder6_forward.2} parent=11 // pred_check
          %p399 = pneg %p217
        $region42: #{encoder6_forward.2} parent=11 // pred_check_branch
          %401 = sbr.rel (%p399) target = $region44
        $region43: #{encoder6_forward.2} parent=11 // pred_region
          %s403 = ssub.s32 32, 32
          %404 = vsyncadd [#allocation8], %s403
          %s406 = sshll.u32 [#allocation9], 4
          %s407 = int_to_ptr.vmem [resolvable:$true] %s406
          %409 = dma.hbm_to_vmem [thread:$0]  %s8, 32, %s407, [#allocation8]
        $region44: #{encoder6_forward.2} parent=11 // pred_fallthru
          _
        // Predicated region
        $region45: #{encoder6_forward.2} parent=11 // pred_check
          %p410 = pneg %p238
        $region46: #{encoder6_forward.2} parent=11 // pred_check_branch
          %412 = sbr.rel (%p410) target = $region48
        $region47: #{encoder6_forward.2} parent=11 // pred_region
          %s414 = ssub.s32 27648, 27648
          %415 = vsyncadd [#allocation11], %s414
          %s416 = sshll.u32 [#allocation10], 4
          %s417 = int_to_ptr.vmem [resolvable:$true] %s416
          %422 = dma.hbm_to_vmem [thread:$0]  %s9, 27648, %s417, [#allocation11], 384, 384, 24
        $region48: #{encoder6_forward.2} parent=11 // pred_fallthru
          _
        // Predicated region
        $region49: #{encoder6_forward.2} parent=11 // pred_check
          %p423 = pneg %p259
        $region50: #{encoder6_forward.2} parent=11 // pred_check_branch
          %425 = sbr.rel (%p423) target = $region52
        $region51: #{encoder6_forward.2} parent=11 // pred_region
          %s427 = ssub.s32 48, 48
          %428 = vsyncadd [#allocation11], %s427
          %s430 = sshll.u32 [#allocation12], 4
          %s431 = int_to_ptr.vmem [resolvable:$true] %s430
          %433 = dma.hbm_to_vmem [thread:$0]  %s10, 48, %s431, [#allocation11]
        $region52: #{encoder6_forward.2} parent=11 // pred_fallthru
          _
        // Predicated region
        $region53: #{encoder6_forward.2} parent=11 // pred_check
          %p434 = pneg %p280
        $region54: #{encoder6_forward.2} parent=11 // pred_check_branch
          %436 = sbr.rel (%p434) target = $region56
        $region55: #{encoder6_forward.2} parent=11 // pred_region
          _
        $region56: #{encoder6_forward.2} parent=11 // pred_fallthru
          _
        // Predicated region
        $region57: #{encoder6_forward.2} parent=11 // pred_check
          %p437 = pneg %p301
        $region58: #{encoder6_forward.2} parent=11 // pred_check_branch
          %439 = sbr.rel (%p437) target = $region60
        $region59: #{encoder6_forward.2} parent=11 // pred_region
          _
        $region60: #{encoder6_forward.2} parent=11 // pred_fallthru
          _
      $region12: #{encoder6_forward.2} parent=5 // pred_fallthru
        _
      %p440 = scmp.lt.s32.totalorder %s23, 2
      // Predicated region
      $region61: #{encoder6_forward.2} parent=5 // pred_check
        %p441 = pneg %p440
      $region62: #{encoder6_forward.2} parent=5 // pred_check_branch
        %443 = sbr.rel (%p441) target = $region64
      $region63: #{encoder6_forward.2} parent=5 // pred_region
        // Predicated region
        $region65: #{encoder6_forward.2} parent=63 // pred_check
          %p444 = pneg %p43
        $region66: #{encoder6_forward.2} parent=63 // pred_check_branch
          %446 = sbr.rel (%p444) target = $region68
        $region67: #{encoder6_forward.2} parent=63 // pred_region
          %p447 = scmp.lt.s32.totalorder %s23, 1
          %s448 = scalar_select %p447, %s23, 1
          %s449 = smul.addr %s448, 4
          %s450 = smul.addr %s449, 8
          %s451 = scalar_lea.vmem %s0, %s450
        $region68: #{encoder6_forward.2} parent=63 // pred_fallthru
          _
      $region64: #{encoder6_forward.2} parent=5 // pred_fallthru
        _
      %p452 = scmp.le.s32.totalorder 1, %s23
      %p453 = scmp.lt.s32.totalorder %s23, 3
      %p454 = pnand %p452, %p453
      %p455 = pneg %p454
      // Predicated region
      $region69: #{encoder6_forward.2} parent=5 // pred_check
        _
      $region70: #{encoder6_forward.2} parent=5 // pred_check_branch
        %457 = sbr.rel (%p454) target = $region72
      $region71: #{encoder6_forward.2} parent=5 // pred_region
        %s458 = ssub.s32 %s23, 1
        // Predicated region
        $region73: #{encoder6_forward.2} parent=71 // pred_check
          %p459 = pneg %p70
        $region74: #{encoder6_forward.2} parent=71 // pred_check_branch
          %461 = sbr.rel (%p459) target = $region76
        $region75: #{encoder6_forward.2} parent=71 // pred_region
          %462 = dma.done [#allocation3], 4608
        $region76: #{encoder6_forward.2} parent=71 // pred_fallthru
          _
        // Predicated region
        $region77: #{encoder6_forward.2} parent=71 // pred_check
          %p463 = pneg %p91
        $region78: #{encoder6_forward.2} parent=71 // pred_check_branch
          %465 = sbr.rel (%p463) target = $region80
        $region79: #{encoder6_forward.2} parent=71 // pred_region
          %466 = dma.done [#allocation5], 16
        $region80: #{encoder6_forward.2} parent=71 // pred_fallthru
          _
        // Predicated region
        $region81: #{encoder6_forward.2} parent=71 // pred_check
          %p467 = pneg %p133
        $region82: #{encoder6_forward.2} parent=71 // pred_check_branch
          %469 = sbr.rel (%p467) target = $region84
        $region83: #{encoder6_forward.2} parent=71 // pred_region
          %470 = dma.done [#allocation5], 32
        $region84: #{encoder6_forward.2} parent=71 // pred_fallthru
          _
        // Predicated region
        $region85: #{encoder6_forward.2} parent=71 // pred_check
          %p471 = pneg %p175
        $region86: #{encoder6_forward.2} parent=71 // pred_check_branch
          %473 = sbr.rel (%p471) target = $region88
        $region87: #{encoder6_forward.2} parent=71 // pred_region
          %474 = dma.done [#allocation8], 7168
        $region88: #{encoder6_forward.2} parent=71 // pred_fallthru
          _
        // Predicated region
        $region89: #{encoder6_forward.2} parent=71 // pred_check
          %p475 = pneg %p217
        $region90: #{encoder6_forward.2} parent=71 // pred_check_branch
          %477 = sbr.rel (%p475) target = $region92
        $region91: #{encoder6_forward.2} parent=71 // pred_region
          %478 = dma.done [#allocation8], 32
        $region92: #{encoder6_forward.2} parent=71 // pred_fallthru
          _
        // Predicated region
        $region93: #{encoder6_forward.2} parent=71 // pred_check
          %p479 = pneg %p238
        $region94: #{encoder6_forward.2} parent=71 // pred_check_branch
          %481 = sbr.rel (%p479) target = $region96
        $region95: #{encoder6_forward.2} parent=71 // pred_region
          %482 = dma.done [#allocation11], 27648
        $region96: #{encoder6_forward.2} parent=71 // pred_fallthru
          _
        // Predicated region
        $region97: #{encoder6_forward.2} parent=71 // pred_check
          %p483 = pneg %p259
        $region98: #{encoder6_forward.2} parent=71 // pred_check_branch
          %485 = sbr.rel (%p483) target = $region100
        $region99: #{encoder6_forward.2} parent=71 // pred_region
          %486 = dma.done [#allocation11], 48
        $region100: #{encoder6_forward.2} parent=71 // pred_fallthru
          _
        %p487 = scmp.lt.s32.totalorder %s28, 1
        %s488 = scalar_select %p487, %s28, 1
        %s489 = smul.addr %s488, 4
        %s490 = smul.addr %s489, 8
        %s491 = scalar_lea.vmem %s0, %s490
        %p492 = pneg %p49
        %p493 = pneg %p46
        %p494 = pneg %p70
        %p495 = pneg %p67
        %p496 = pneg %p91
        %p497 = pneg %p88
        %p498 = pneg %p112
        %p499 = pneg %p109
        %p500 = pneg %p133
        %p501 = pneg %p130
        %p502 = pneg %p154
        %p503 = pneg %p151
        %p504 = pneg %p175
        %p505 = pneg %p172
        %p506 = pneg %p196
        %p507 = pneg %p193
        %p508 = pneg %p217
        %p509 = pneg %p214
        %p510 = pneg %p238
        %p511 = pneg %p235
        %p512 = pneg %p259
        %p513 = pneg %p256
        %p514 = pneg %p280
        %p515 = pneg %p277
        %p516 = pneg %p301
        %p517 = pneg %p298
        %p518 = pneg %p327
        %p519 = pneg %p324
        %p520 = scmp.lt.s32.totalorder %s28, 1
        %s521 = scalar_select %p520, %s28, 1
        %s522 = smul.addr %s521, 2
        %s523 = smul.addr %s522, 8
        %s524 = scalar_lea.vmem %s13, %s523
        %p525 = scmp.lt.s32.totalorder %s28, 1
        %s526 = scalar_select %p525, %s28, 1
        %s527 = smul.addr %s526, 4
        %s528 = smul.addr %s527, 8
        %s529 = scalar_lea.vmem %s0, %s528
        %p530 = scmp.lt.s32.totalorder %s28, 1
        %s531 = scalar_select %p530, %s28, 1
        %s532 = smul.addr %s531, 2
        %s533 = smul.addr %s532, 8
        %s534 = scalar_lea.vmem %s13, %s533
        %v535 = vld [vmem:[%s529] sm:$0xff]
        %v536 = vld [vmem:[%s529 + $0x8] sm:$0xff]
        %v537 = vld [vmem:[%s529 + $0x10] sm:$0xff]
        %v538 = vld [vmem:[%s529 + $0x18] sm:$0xff]
        %v539 = vld [vmem:[#allocation2] sm:$0xff]
        %v540 = vld [vmem:[#allocation2 + $0x8] sm:$0xff]
        %v541 = vld [vmem:[#allocation2 + $0x10] sm:$0xff]
        %v542 = vld [vmem:[#allocation2 + $0x18] sm:$0xff]
        %v543 = vld [vmem:[#allocation2 + $0x20] sm:$0xff]
        %v544 = vld [vmem:[#allocation2 + $0x28] sm:$0xff]
        %v545 = vld [vmem:[#allocation2 + $0x30] sm:$0xff]
        %v546 = vld [vmem:[#allocation2 + $0x38] sm:$0xff]
        %v547 = vld [vmem:[#allocation2 + $0x40] sm:$0xff]
        %v548 = vld [vmem:[#allocation2 + $0x48] sm:$0xff]
        %v549 = vld [vmem:[#allocation2 + $0x50] sm:$0xff]
        %v550 = vld [vmem:[#allocation2 + $0x58] sm:$0xff]
        %s551 = scalar_lea.vmem [#allocation2], 96
        %v552 = vld [vmem:[%s551] sm:$0xff]
        %v553 = vld [vmem:[%s551 + $0x8] sm:$0xff]
        %v554 = vld [vmem:[%s551 + $0x10] sm:$0xff]
        %v555 = vld [vmem:[%s551 + $0x18] sm:$0xff]
        %v556 = vld [vmem:[%s551 + $0x20] sm:$0xff]
        %v557 = vld [vmem:[%s551 + $0x28] sm:$0xff]
        %v558 = vld [vmem:[%s551 + $0x30] sm:$0xff]
        %v559 = vld [vmem:[%s551 + $0x38] sm:$0xff]
        %v560 = vld [vmem:[%s551 + $0x40] sm:$0xff]
        %v561 = vld [vmem:[%s551 + $0x48] sm:$0xff]
        %v562 = vld [vmem:[%s551 + $0x50] sm:$0xff]
        %v563 = vld [vmem:[%s551 + $0x58] sm:$0xff]
        %vm568 = vcmask 1046528
        %v569 = vrot.slane %v535, 1
        %v570 = vrot.slane %v536, 1
        %v571 = vsel %vm568, %v569, %v570
        %v572 = vrot.slane %v537, 1
        %v573 = vsel %vm568, %v570, %v572
        %v574 = vrot.slane %v538, 1
        %v575 = vsel %vm568, %v572, %v574
        %vm576 = vcmask 785408
        %v577 = vsel %vm576, %v571, 0
        %v579 = vsel %vm576, %v573, 0
        %v581 = vsel %vm576, %v575, 0
        %v583 = vsel %vm576, %v574, 0
        %585 = vmatprep.subr.mxu0 0.0
        %586 = vmatpush1.msra.mxu0 %v552
        %587 = vmatprep.subr.mxu0 0.0
        %588 = vmatpush1.msra.mxu0 %v553
        %589 = vmatprep.subr.mxu0 0.0
        %590 = vmatpush1.msra.mxu0 %v554
        %591 = vmatprep.subr.mxu0 0.0
        %592 = vmatpush1.msra.mxu0 %v555
        %593 = vmatprep.subr.mxu0 0.0
        %594 = vmatpush1.msra.mxu0 %v556
        %595 = vmatprep.subr.mxu0 0.0
        %596 = vmatpush1.msra.mxu0 %v557
        %597 = vmatprep.subr.mxu0 0.0
        %598 = vmatpush1.msra.mxu0 %v558
        %599 = vmatprep.subr.mxu0 0.0
        %600 = vmatpush1.msra.mxu0 %v559
        %601 = vmatprep.subr.mxu0 0.0
        %602 = vmatpush1.msra.mxu0 %v560
        %603 = vmatprep.subr.mxu0 0.0
        %604 = vmatpush1.msra.mxu0 %v561
        %605 = vmatprep.subr.mxu0 0.0
        %606 = vmatpush1.msra.mxu0 %v562
        %607 = vmatprep.subr.mxu0 0.0
        %608 = vmatpush1.msra.mxu0 %v563
        %609 = vmatprep.subr.mxu0 0.0
        %610 = vmatpush1.msra.mxu0 0.0
        %611 = vmatprep.subr.mxu0 0.0
        %612 = vmatpush1.msra.mxu0 0.0
        %613 = vmatprep.subr.mxu0 0.0
        %614 = vmatpush1.msra.mxu0 0.0
        %615 = vmatprep.subr.mxu0 0.0
        %616 = vmatpush1.msra.mxu0 0.0
        %617 = vmatprep.subr.mxu0 0.0
        %618 = vmatpush1.msra.mxu0 0.0
        %619 = vmatprep.subr.mxu0 0.0
        %620 = vmatpush1.msra.mxu0 0.0
        %621 = vmatprep.subr.mxu0 0.0
        %622 = vmatpush1.msra.mxu0 0.0
        %623 = vmatprep.subr.mxu0 0.0
        %624 = vmatpush1.msra.mxu0 0.0
        %625 = vmatprep.subr.mxu0 0.0
        %626 = vmatpush1.msra.mxu0 0.0
        %627 = vmatprep.subr.mxu0 0.0
        %628 = vmatpush1.msra.mxu0 0.0
        %629 = vmatprep.subr.mxu0 0.0
        %630 = vmatpush1.msra.mxu0 0.0
        %631 = vmatprep.subr.mxu0 0.0
        %632 = vmatpush1.msra.mxu0 0.0
        %633 = vmatprep.subr.mxu0 0.0
        %634 = vmatpush1.msra.mxu0 0.0
        %635 = vmatprep.subr.mxu0 0.0
        %636 = vmatpush1.msra.mxu0 0.0
        %637 = vmatprep.subr.mxu0 0.0
        %638 = vmatpush1.msra.mxu0 0.0
        %639 = vmatprep.subr.mxu0 0.0
        %640 = vmatpush1.msra.mxu0 0.0
        %641 = vmatprep.subr.mxu0 0.0
        %642 = vmatpush1.msra.mxu0 0.0
        %643 = vmatprep.subr.mxu0 0.0
        %644 = vmatpush1.msra.mxu0 0.0
        %645 = vmatprep.subr.mxu0 0.0
        %646 = vmatpush1.msra.mxu0 0.0
        %647 = vmatprep.subr.mxu0 0.0
        %648 = vmatpush1.msra.mxu0 0.0
        %649 = vmatprep.mubr.f32.mxu0 0.0
        %650 = vmatmul.mubr.f32.gmra.mrb[0].mxu0 %v577
        %v651 = vpop.f32.mrb[0].mxu0
        %v652 = vadd.f32 0.0, %v651
        %v653 = vpop.f32.mrb[0].mxu0
        %654 = vmatprep.mubr.f32.mxu0 0.0
        %655 = vmatmul.mubr.f32.gmra.mrb[0].mxu0 %v579
        %v656 = vpop.f32.mrb[0].mxu0
        %v657 = vadd.f32 0.0, %v656
        %v658 = vpop.f32.mrb[0].mxu0
        %659 = vmatprep.mubr.f32.mxu0 0.0
        %660 = vmatmul.mubr.f32.gmra.mrb[0].mxu0 %v581
        %v661 = vpop.f32.mrb[0].mxu0
        %v662 = vadd.f32 0.0, %v661
        %v663 = vpop.f32.mrb[0].mxu0
        %664 = vmatprep.mubr.f32.mxu0 0.0
        %665 = vmatmul.mubr.f32.gmra.mrb[0].mxu0 %v583
        %v666 = vpop.f32.mrb[0].mxu0
        %v667 = vadd.f32 0.0, %v666
        %v668 = vpop.f32.mrb[0].mxu0
        %669 = vdwg.mxu0
        %v670 = vsel %vm576, %v535, 0
        %v672 = vsel %vm576, %v536, 0
        %v674 = vsel %vm576, %v537, 0
        %v676 = vsel %vm576, %v538, 0
        %678 = vmatprep.subr.mxu0 0.0
        %679 = vmatpush1.msra.mxu0 %v539
        %680 = vmatprep.subr.mxu0 0.0
        %681 = vmatpush1.msra.mxu0 %v540
        %682 = vmatprep.subr.mxu0 0.0
        %683 = vmatpush1.msra.mxu0 %v541
        %684 = vmatprep.subr.mxu0 0.0
        %685 = vmatpush1.msra.mxu0 %v542
        %686 = vmatprep.subr.mxu0 0.0
        %687 = vmatpush1.msra.mxu0 %v543
        %688 = vmatprep.subr.mxu0 0.0
        %689 = vmatpush1.msra.mxu0 %v544
        %690 = vmatprep.subr.mxu0 0.0
        %691 = vmatpush1.msra.mxu0 %v545
        %692 = vmatprep.subr.mxu0 0.0
        %693 = vmatpush1.msra.mxu0 %v546
        %694 = vmatprep.subr.mxu0 0.0
        %695 = vmatpush1.msra.mxu0 %v547
        %696 = vmatprep.subr.mxu0 0.0
        %697 = vmatpush1.msra.mxu0 %v548
        %698 = vmatprep.subr.mxu0 0.0
        %699 = vmatpush1.msra.mxu0 %v549
        %700 = vmatprep.subr.mxu0 0.0
        %701 = vmatpush1.msra.mxu0 %v550
        %702 = vmatprep.subr.mxu0 0.0
        %703 = vmatpush1.msra.mxu0 0.0
        %704 = vmatprep.subr.mxu0 0.0
        %705 = vmatpush1.msra.mxu0 0.0
        %706 = vmatprep.subr.mxu0 0.0
        %707 = vmatpush1.msra.mxu0 0.0
        %708 = vmatprep.subr.mxu0 0.0
        %709 = vmatpush1.msra.mxu0 0.0
        %710 = vmatprep.subr.mxu0 0.0
        %711 = vmatpush1.msra.mxu0 0.0
        %712 = vmatprep.subr.mxu0 0.0
        %713 = vmatpush1.msra.mxu0 0.0
        %714 = vmatprep.subr.mxu0 0.0
        %715 = vmatpush1.msra.mxu0 0.0
        %716 = vmatprep.subr.mxu0 0.0
        %717 = vmatpush1.msra.mxu0 0.0
        %718 = vmatprep.subr.mxu0 0.0
        %719 = vmatpush1.msra.mxu0 0.0
        %720 = vmatprep.subr.mxu0 0.0
        %721 = vmatpush1.msra.mxu0 0.0
        %722 = vmatprep.subr.mxu0 0.0
        %723 = vmatpush1.msra.mxu0 0.0
        %724 = vmatprep.subr.mxu0 0.0
        %725 = vmatpush1.msra.mxu0 0.0
        %726 = vmatprep.subr.mxu0 0.0
        %727 = vmatpush1.msra.mxu0 0.0
        %728 = vmatprep.subr.mxu0 0.0
        %729 = vmatpush1.msra.mxu0 0.0
        %730 = vmatprep.subr.mxu0 0.0
        %731 = vmatpush1.msra.mxu0 0.0
        %732 = vmatprep.subr.mxu0 0.0
        %733 = vmatpush1.msra.mxu0 0.0
        %734 = vmatprep.subr.mxu0 0.0
        %735 = vmatpush1.msra.mxu0 0.0
        %736 = vmatprep.subr.mxu0 0.0
        %737 = vmatpush1.msra.mxu0 0.0
        %738 = vmatprep.subr.mxu0 0.0
        %739 = vmatpush1.msra.mxu0 0.0
        %740 = vmatprep.subr.mxu0 0.0
        %741 = vmatpush1.msra.mxu0 0.0
        %742 = vmatprep.mubr.f32.mxu0 0.0
        %743 = vmatmul.mubr.f32.gmra.mrb[0].mxu0 %v670
        %v744 = vpop.f32.mrb[0].mxu0
        %v745 = vadd.f32 %v652, %v744
        %v746 = vpop.f32.mrb[0].mxu0
        %747 = vmatprep.mubr.f32.mxu0 0.0
        %748 = vmatmul.mubr.f32.gmra.mrb[0].mxu0 %v672
        %v749 = vpop.f32.mrb[0].mxu0
        %v750 = vadd.f32 %v657, %v749
        %v751 = vpop.f32.mrb[0].mxu0
        %752 = vmatprep.mubr.f32.mxu0 0.0
        %753 = vmatmul.mubr.f32.gmra.mrb[0].mxu0 %v674
        %v754 = vpop.f32.mrb[0].mxu0
        %v755 = vadd.f32 %v662, %v754
        %v756 = vpop.f32.mrb[0].mxu0
        %757 = vmatprep.mubr.f32.mxu0 0.0
        %758 = vmatmul.mubr.f32.gmra.mrb[0].mxu0 %v676
        %v759 = vpop.f32.mrb[0].mxu0
        %v760 = vadd.f32 %v667, %v759
        %v761 = vpop.f32.mrb[0].mxu0
        %762 = vdwg.mxu0
        %s763 = scalar_lea.vmem [#allocation2], 192
        %v764 = vld [vmem:[%s763] sm:$0xff]
        %v765 = vld [vmem:[%s763 + $0x8] sm:$0xff]
        %v766 = vld [vmem:[%s763 + $0x10] sm:$0xff]
        %v767 = vld [vmem:[%s763 + $0x18] sm:$0xff]
        %v768 = vld [vmem:[%s763 + $0x20] sm:$0xff]
        %v769 = vld [vmem:[%s763 + $0x28] sm:$0xff]
        %v770 = vld [vmem:[%s763 + $0x30] sm:$0xff]
        %v771 = vld [vmem:[%s763 + $0x38] sm:$0xff]
        %v772 = vld [vmem:[%s763 + $0x40] sm:$0xff]
        %v773 = vld [vmem:[%s763 + $0x48] sm:$0xff]
        %v774 = vld [vmem:[%s763 + $0x50] sm:$0xff]
        %v775 = vld [vmem:[%s763 + $0x58] sm:$0xff]
        %vm776 = vcmask 1045504
        %v777 = vrot.slane %v535, 2
        %v778 = vrot.slane %v536, 2
        %v779 = vsel %vm776, %v777, %v778
        %v780 = vrot.slane %v537, 2
        %v781 = vsel %vm776, %v778, %v780
        %v782 = vrot.slane %v538, 2
        %v783 = vsel %vm776, %v780, %v782
        %v784 = vsel %vm576, %v779, 0
        %v786 = vsel %vm576, %v781, 0
        %v788 = vsel %vm576, %v783, 0
        %v790 = vsel %vm576, %v782, 0
        %792 = vmatprep.subr.mxu0 0.0
        %793 = vmatpush1.msra.mxu0 %v764
        %794 = vmatprep.subr.mxu0 0.0
        %795 = vmatpush1.msra.mxu0 %v765
        %796 = vmatprep.subr.mxu0 0.0
        %797 = vmatpush1.msra.mxu0 %v766
        %798 = vmatprep.subr.mxu0 0.0
        %799 = vmatpush1.msra.mxu0 %v767
        %800 = vmatprep.subr.mxu0 0.0
        %801 = vmatpush1.msra.mxu0 %v768
        %802 = vmatprep.subr.mxu0 0.0
        %803 = vmatpush1.msra.mxu0 %v769
        %804 = vmatprep.subr.mxu0 0.0
        %805 = vmatpush1.msra.mxu0 %v770
        %806 = vmatprep.subr.mxu0 0.0
        %807 = vmatpush1.msra.mxu0 %v771
        %808 = vmatprep.subr.mxu0 0.0
        %809 = vmatpush1.msra.mxu0 %v772
        %810 = vmatprep.subr.mxu0 0.0
        %811 = vmatpush1.msra.mxu0 %v773
        %812 = vmatprep.subr.mxu0 0.0
        %813 = vmatpush1.msra.mxu0 %v774
        %814 = vmatprep.subr.mxu0 0.0
        %815 = vmatpush1.msra.mxu0 %v775
        %816 = vmatprep.subr.mxu0 0.0
        %817 = vmatpush1.msra.mxu0 0.0
        %818 = vmatprep.subr.mxu0 0.0
        %819 = vmatpush1.msra.mxu0 0.0
        %820 = vmatprep.subr.mxu0 0.0
        %821 = vmatpush1.msra.mxu0 0.0
        %822 = vmatprep.subr.mxu0 0.0
        %823 = vmatpush1.msra.mxu0 0.0
        %824 = vmatprep.subr.mxu0 0.0
        %825 = vmatpush1.msra.mxu0 0.0
        %826 = vmatprep.subr.mxu0 0.0
        %827 = vmatpush1.msra.mxu0 0.0
        %828 = vmatprep.subr.mxu0 0.0
        %829 = vmatpush1.msra.mxu0 0.0
        %830 = vmatprep.subr.mxu0 0.0
        %831 = vmatpush1.msra.mxu0 0.0
        %832 = vmatprep.subr.mxu0 0.0
        %833 = vmatpush1.msra.mxu0 0.0
        %834 = vmatprep.subr.mxu0 0.0
        %835 = vmatpush1.msra.mxu0 0.0
        %836 = vmatprep.subr.mxu0 0.0
        %837 = vmatpush1.msra.mxu0 0.0
        %838 = vmatprep.subr.mxu0 0.0
        %839 = vmatpush1.msra.mxu0 0.0
        %840 = vmatprep.subr.mxu0 0.0
        %841 = vmatpush1.msra.mxu0 0.0
        %842 = vmatprep.subr.mxu0 0.0
        %843 = vmatpush1.msra.mxu0 0.0
        %844 = vmatprep.subr.mxu0 0.0
        %845 = vmatpush1.msra.mxu0 0.0
        %846 = vmatprep.subr.mxu0 0.0
        %847 = vmatpush1.msra.mxu0 0.0
        %848 = vmatprep.subr.mxu0 0.0
        %849 = vmatpush1.msra.mxu0 0.0
        %850 = vmatprep.subr.mxu0 0.0
        %851 = vmatpush1.msra.mxu0 0.0
        %852 = vmatprep.subr.mxu0 0.0
        %853 = vmatpush1.msra.mxu0 0.0
        %854 = vmatprep.subr.mxu0 0.0
        %855 = vmatpush1.msra.mxu0 0.0
        %856 = vmatprep.mubr.f32.mxu0 0.0
        %857 = vmatmul.mubr.f32.gmra.mrb[0].mxu0 %v784
        %v858 = vpop.f32.mrb[0].mxu0
        %v859 = vadd.f32 0.0, %v858
        %v860 = vpop.f32.mrb[0].mxu0
        %861 = vmatprep.mubr.f32.mxu0 0.0
        %862 = vmatmul.mubr.f32.gmra.mrb[0].mxu0 %v786
        %v863 = vpop.f32.mrb[0].mxu0
        %v864 = vadd.f32 0.0, %v863
        %v865 = vpop.f32.mrb[0].mxu0
        %866 = vmatprep.mubr.f32.mxu0 0.0
        %867 = vmatmul.mubr.f32.gmra.mrb[0].mxu0 %v788
        %v868 = vpop.f32.mrb[0].mxu0
        %v869 = vadd.f32 0.0, %v868
        %v870 = vpop.f32.mrb[0].mxu0
        %871 = vmatprep.mubr.f32.mxu0 0.0
        %872 = vmatmul.mubr.f32.gmra.mrb[0].mxu0 %v790
        %v873 = vpop.f32.mrb[0].mxu0
        %v874 = vadd.f32 0.0, %v873
        %v875 = vpop.f32.mrb[0].mxu0
        %876 = vdwg.mxu0
        %v877 = vadd.f32 %v745, %v859
        %v878 = vadd.f32 %v750, %v864
        %v879 = vadd.f32 %v755, %v869
        %v880 = vadd.f32 %v760, %v874
        %v881 = vld [vmem:[#allocation4] sm:$0x1]
        %v883 = vlaneseq
        %v884 = vshrl.u32 %v883, 7
        %v885 = vsub.s32 0, %v884
        %v886 = vrot.slane %v881, %v885
        %v888 = vadd.f32 %v877, %v886
        %v889 = vadd.f32 %v878, %v886
        %v890 = vadd.f32 %v879, %v886
        %v891 = vadd.f32 %v880, %v886
        %v892 = vmax.f32 %v888, 0.0
        %v893 = vmax.f32 %v889, 0.0
        %v894 = vmax.f32 %v890, 0.0
        %v895 = vmax.f32 %v891, 0.0
        %v896 = vld [vmem:[%s3] sm:$0xff]
        %v897 = vld [vmem:[%s3 + $0x8] sm:$0xff]
        %v898 = vld [vmem:[%s3 + $0x10] sm:$0xff]
        %v899 = vld [vmem:[%s3 + $0x18] sm:$0xff]
        %v900 = vld [vmem:[%s3 + $0x20] sm:$0xff]
        %v901 = vld [vmem:[%s3 + $0x28] sm:$0xff]
        %v902 = vld [vmem:[%s3 + $0x30] sm:$0xff]
        %v903 = vld [vmem:[%s3 + $0x38] sm:$0xff]
        %v904 = vld [vmem:[%s3 + $0x40] sm:$0xff]
        %v905 = vld [vmem:[%s3 + $0x48] sm:$0xff]
        %v906 = vld [vmem:[%s3 + $0x50] sm:$0xff]
        %v907 = vld [vmem:[%s3 + $0x58] sm:$0xff]
        %v908 = vld [vmem:[%s3 + $0x60] sm:$0xff]
        %v909 = vld [vmem:[%s3 + $0x68] sm:$0xff]
        %v910 = vld [vmem:[%s3 + $0x70] sm:$0xff]
        %v911 = vld [vmem:[%s3 + $0x78] sm:$0xff]
        %v912 = vld [vmem:[%s3 + $0x80] sm:$0xff]
        %v913 = vld [vmem:[%s3 + $0x88] sm:$0xff]
        %v914 = vld [vmem:[%s3 + $0x90] sm:$0xff]
        %v915 = vld [vmem:[%s3 + $0x98] sm:$0xff]
        %v916 = vld [vmem:[%s3 + $0xa0] sm:$0xff]
        %v917 = vld [vmem:[%s3 + $0xa8] sm:$0xff]
        %v918 = vld [vmem:[%s3 + $0xb0] sm:$0xff]
        %v919 = vld [vmem:[%s3 + $0xb8] sm:$0xff]
        %v920 = vld [vmem:[%s3 + $0xc0] sm:$0xff]
        %v921 = vld [vmem:[%s3 + $0xc8] sm:$0xff]
        %v922 = vld [vmem:[%s3 + $0xd0] sm:$0xff]
        %v923 = vld [vmem:[%s3 + $0xd8] sm:$0xff]
        %v924 = vld [vmem:[%s3 + $0xe0] sm:$0xff]
        %v925 = vld [vmem:[%s3 + $0xe8] sm:$0xff]
        %s926 = scalar_lea.vmem %s3, 240
        %v927 = vld [vmem:[%s926] sm:$0xff]
        %v928 = vld [vmem:[%s926 + $0x8] sm:$0xff]
        %v929 = vld [vmem:[%s926 + $0x10] sm:$0xff]
        %v930 = vld [vmem:[%s926 + $0x18] sm:$0xff]
        %v931 = vld [vmem:[%s926 + $0x20] sm:$0xff]
        %v932 = vld [vmem:[%s926 + $0x28] sm:$0xff]
        %v933 = vld [vmem:[%s926 + $0x30] sm:$0xff]
        %v934 = vld [vmem:[%s926 + $0x38] sm:$0xff]
        %v935 = vld [vmem:[%s926 + $0x40] sm:$0xff]
        %v936 = vld [vmem:[%s926 + $0x48] sm:$0xff]
        %v937 = vld [vmem:[%s926 + $0x50] sm:$0xff]
        %v938 = vld [vmem:[%s926 + $0x58] sm:$0xff]
        %v939 = vld [vmem:[%s926 + $0x60] sm:$0xff]
        %v940 = vld [vmem:[%s926 + $0x68] sm:$0xff]
        %v941 = vld [vmem:[%s926 + $0x70] sm:$0xff]
        %v942 = vld [vmem:[%s926 + $0x78] sm:$0xff]
        %v943 = vld [vmem:[%s926 + $0x80] sm:$0xff]
        %v944 = vld [vmem:[%s926 + $0x88] sm:$0xff]
        %v945 = vld [vmem:[%s926 + $0x90] sm:$0xff]
        %v946 = vld [vmem:[%s926 + $0x98] sm:$0xff]
        %v947 = vld [vmem:[%s926 + $0xa0] sm:$0xff]
        %v948 = vld [vmem:[%s926 + $0xa8] sm:$0xff]
        %v949 = vld [vmem:[%s926 + $0xb0] sm:$0xff]
        %v950 = vld [vmem:[%s926 + $0xb8] sm:$0xff]
        %v951 = vld [vmem:[%s926 + $0xc0] sm:$0xff]
        %v952 = vld [vmem:[%s926 + $0xc8] sm:$0xff]
        %v953 = vld [vmem:[%s926 + $0xd0] sm:$0xff]
        %v954 = vld [vmem:[%s926 + $0xd8] sm:$0xff]
        %v955 = vld [vmem:[%s926 + $0xe0] sm:$0xff]
        %v956 = vld [vmem:[%s926 + $0xe8] sm:$0xff]
        %v961 = vrot.slane %v892, 1
        %v962 = vrot.slane %v893, 1
        %v963 = vsel %vm568, %v961, %v962
        %v964 = vrot.slane %v894, 1
        %v965 = vsel %vm568, %v962, %v964
        %v966 = vrot.slane %v895, 1
        %v967 = vsel %vm568, %v964, %v966
        %vm968 = vcmask 982016
        %v969 = vsel %vm968, %v963, 0
        %v971 = vsel %vm968, %v965, 0
        %v973 = vsel %vm968, %v967, 0
        %v975 = vsel %vm968, %v966, 0
        %977 = vmatprep.subr.mxu0 %v928
        %978 = vmatpush1.msra.mxu0 %v927
        %979 = vmatprep.subr.mxu0 %v930
        %980 = vmatpush1.msra.mxu0 %v929
        %981 = vmatprep.subr.mxu0 %v932
        %982 = vmatpush1.msra.mxu0 %v931
        %983 = vmatprep.subr.mxu0 %v934
        %984 = vmatpush1.msra.mxu0 %v933
        %985 = vmatprep.subr.mxu0 %v936
        %986 = vmatpush1.msra.mxu0 %v935
        %987 = vmatprep.subr.mxu0 %v938
        %988 = vmatpush1.msra.mxu0 %v937
        %989 = vmatprep.subr.mxu0 %v940
        %990 = vmatpush1.msra.mxu0 %v939
        %991 = vmatprep.subr.mxu0 %v942
        %992 = vmatpush1.msra.mxu0 %v941
        %993 = vmatprep.subr.mxu0 %v944
        %994 = vmatpush1.msra.mxu0 %v943
        %995 = vmatprep.subr.mxu0 %v946
        %996 = vmatpush1.msra.mxu0 %v945
        %997 = vmatprep.subr.mxu0 %v948
        %998 = vmatpush1.msra.mxu0 %v947
        %999 = vmatprep.subr.mxu0 %v950
        %1000 = vmatpush1.msra.mxu0 %v949
        %1001 = vmatprep.subr.mxu0 %v952
        %1002 = vmatpush1.msra.mxu0 %v951
        %1003 = vmatprep.subr.mxu0 %v954
        %1004 = vmatpush1.msra.mxu0 %v953
        %1005 = vmatprep.subr.mxu0 %v956
        %1006 = vmatpush1.msra.mxu0 %v955
        %1007 = vmatprep.subr.mxu0 0.0
        %1008 = vmatpush1.msra.mxu0 0.0
        %1009 = vmatprep.subr.mxu0 0.0
        %1010 = vmatpush1.msra.mxu0 0.0
        %1011 = vmatprep.subr.mxu0 0.0
        %1012 = vmatpush1.msra.mxu0 0.0
        %1013 = vmatprep.subr.mxu0 0.0
        %1014 = vmatpush1.msra.mxu0 0.0
        %1015 = vmatprep.subr.mxu0 0.0
        %1016 = vmatpush1.msra.mxu0 0.0
        %1017 = vmatprep.subr.mxu0 0.0
        %1018 = vmatpush1.msra.mxu0 0.0
        %1019 = vmatprep.subr.mxu0 0.0
        %1020 = vmatpush1.msra.mxu0 0.0
        %1021 = vmatprep.subr.mxu0 0.0
        %1022 = vmatpush1.msra.mxu0 0.0
        %1023 = vmatprep.subr.mxu0 0.0
        %1024 = vmatpush1.msra.mxu0 0.0
        %1025 = vmatprep.subr.mxu0 0.0
        %1026 = vmatpush1.msra.mxu0 0.0
        %1027 = vmatprep.subr.mxu0 0.0
        %1028 = vmatpush1.msra.mxu0 0.0
        %1029 = vmatprep.subr.mxu0 0.0
        %1030 = vmatpush1.msra.mxu0 0.0
        %1031 = vmatprep.subr.mxu0 0.0
        %1032 = vmatpush1.msra.mxu0 0.0
        %1033 = vmatprep.subr.mxu0 0.0
        %1034 = vmatpush1.msra.mxu0 0.0
        %1035 = vmatprep.subr.mxu0 0.0
        %1036 = vmatpush1.msra.mxu0 0.0
        %1037 = vmatprep.subr.mxu0 0.0
        %1038 = vmatpush1.msra.mxu0 0.0
        %1039 = vmatprep.subr.mxu0 0.0
        %1040 = vmatpush1.msra.mxu0 0.0
        %1041 = vmatprep.mubr.f32.mxu0 0.0
        %1042 = vmatmul.mubr.f32.gmra.mrb[0].mxu0 %v969
        %v1043 = vpop.f32.mrb[0].mxu0
        %v1044 = vadd.f32 0.0, %v1043
        %v1045 = vpop.f32.mrb[0].mxu0
        %v1046 = vadd.f32 0.0, %v1045
        %1047 = vmatprep.mubr.f32.mxu0 0.0
        %1048 = vmatmul.mubr.f32.gmra.mrb[0].mxu0 %v971
        %v1049 = vpop.f32.mrb[0].mxu0
        %v1050 = vadd.f32 0.0, %v1049
        %v1051 = vpop.f32.mrb[0].mxu0
        %v1052 = vadd.f32 0.0, %v1051
        %1053 = vmatprep.mubr.f32.mxu0 0.0
        %1054 = vmatmul.mubr.f32.gmra.mrb[0].mxu0 %v973
        %v1055 = vpop.f32.mrb[0].mxu0
        %v1056 = vadd.f32 0.0, %v1055
        %v1057 = vpop.f32.mrb[0].mxu0
        %v1058 = vadd.f32 0.0, %v1057
        %1059 = vmatprep.mubr.f32.mxu0 0.0
        %1060 = vmatmul.mubr.f32.gmra.mrb[0].mxu0 %v975
        %v1061 = vpop.f32.mrb[0].mxu0
        %v1062 = vadd.f32 0.0, %v1061
        %v1063 = vpop.f32.mrb[0].mxu0
        %v1064 = vadd.f32 0.0, %v1063
        %1065 = vdwg.mxu0
        %v1066 = vsel %vm968, %v892, 0
        %v1068 = vsel %vm968, %v893, 0
        %v1070 = vsel %vm968, %v894, 0
        %v1072 = vsel %vm968, %v895, 0
        %1074 = vmatprep.subr.mxu0 %v897
        %1075 = vmatpush1.msra.mxu0 %v896
        %1076 = vmatprep.subr.mxu0 %v899
        %1077 = vmatpush1.msra.mxu0 %v898
        %1078 = vmatprep.subr.mxu0 %v901
        %1079 = vmatpush1.msra.mxu0 %v900
        %1080 = vmatprep.subr.mxu0 %v903
        %1081 = vmatpush1.msra.mxu0 %v902
        %1082 = vmatprep.subr.mxu0 %v905
        %1083 = vmatpush1.msra.mxu0 %v904
        %1084 = vmatprep.subr.mxu0 %v907
        %1085 = vmatpush1.msra.mxu0 %v906
        %1086 = vmatprep.subr.mxu0 %v909
        %1087 = vmatpush1.msra.mxu0 %v908
        %1088 = vmatprep.subr.mxu0 %v911
        %1089 = vmatpush1.msra.mxu0 %v910
        %1090 = vmatprep.subr.mxu0 %v913
        %1091 = vmatpush1.msra.mxu0 %v912
        %1092 = vmatprep.subr.mxu0 %v915
        %1093 = vmatpush1.msra.mxu0 %v914
        %1094 = vmatprep.subr.mxu0 %v917
        %1095 = vmatpush1.msra.mxu0 %v916
        %1096 = vmatprep.subr.mxu0 %v919
        %1097 = vmatpush1.msra.mxu0 %v918
        %1098 = vmatprep.subr.mxu0 %v921
        %1099 = vmatpush1.msra.mxu0 %v920
        %1100 = vmatprep.subr.mxu0 %v923
        %1101 = vmatpush1.msra.mxu0 %v922
        %1102 = vmatprep.subr.mxu0 %v925
        %1103 = vmatpush1.msra.mxu0 %v924
        %1104 = vmatprep.subr.mxu0 0.0
        %1105 = vmatpush1.msra.mxu0 0.0
        %1106 = vmatprep.subr.mxu0 0.0
        %1107 = vmatpush1.msra.mxu0 0.0
        %1108 = vmatprep.subr.mxu0 0.0
        %1109 = vmatpush1.msra.mxu0 0.0
        %1110 = vmatprep.subr.mxu0 0.0
        %1111 = vmatpush1.msra.mxu0 0.0
        %1112 = vmatprep.subr.mxu0 0.0
        %1113 = vmatpush1.msra.mxu0 0.0
        %1114 = vmatprep.subr.mxu0 0.0
        %1115 = vmatpush1.msra.mxu0 0.0
        %1116 = vmatprep.subr.mxu0 0.0
        %1117 = vmatpush1.msra.mxu0 0.0
        %1118 = vmatprep.subr.mxu0 0.0
        %1119 = vmatpush1.msra.mxu0 0.0
        %1120 = vmatprep.subr.mxu0 0.0
        %1121 = vmatpush1.msra.mxu0 0.0
        %1122 = vmatprep.subr.mxu0 0.0
        %1123 = vmatpush1.msra.mxu0 0.0
        %1124 = vmatprep.subr.mxu0 0.0
        %1125 = vmatpush1.msra.mxu0 0.0
        %1126 = vmatprep.subr.mxu0 0.0
        %1127 = vmatpush1.msra.mxu0 0.0
        %1128 = vmatprep.subr.mxu0 0.0
        %1129 = vmatpush1.msra.mxu0 0.0
        %1130 = vmatprep.subr.mxu0 0.0
        %1131 = vmatpush1.msra.mxu0 0.0
        %1132 = vmatprep.subr.mxu0 0.0
        %1133 = vmatpush1.msra.mxu0 0.0
        %1134 = vmatprep.subr.mxu0 0.0
        %1135 = vmatpush1.msra.mxu0 0.0
        %1136 = vmatprep.subr.mxu0 0.0
        %1137 = vmatpush1.msra.mxu0 0.0
        %1138 = vmatprep.mubr.f32.mxu0 0.0
        %1139 = vmatmul.mubr.f32.gmra.mrb[0].mxu0 %v1066
        %v1140 = vpop.f32.mrb[0].mxu0
        %v1141 = vadd.f32 %v1044, %v1140
        %v1142 = vpop.f32.mrb[0].mxu0
        %v1143 = vadd.f32 %v1046, %v1142
        %1144 = vmatprep.mubr.f32.mxu0 0.0
        %1145 = vmatmul.mubr.f32.gmra.mrb[0].mxu0 %v1068
        %v1146 = vpop.f32.mrb[0].mxu0
        %v1147 = vadd.f32 %v1050, %v1146
        %v1148 = vpop.f32.mrb[0].mxu0
        %v1149 = vadd.f32 %v1052, %v1148
        %1150 = vmatprep.mubr.f32.mxu0 0.0
        %1151 = vmatmul.mubr.f32.gmra.mrb[0].mxu0 %v1070
        %v1152 = vpop.f32.mrb[0].mxu0
        %v1153 = vadd.f32 %v1056, %v1152
        %v1154 = vpop.f32.mrb[0].mxu0
        %v1155 = vadd.f32 %v1058, %v1154
        %1156 = vmatprep.mubr.f32.mxu0 0.0
        %1157 = vmatmul.mubr.f32.gmra.mrb[0].mxu0 %v1072
        %v1158 = vpop.f32.mrb[0].mxu0
        %v1159 = vadd.f32 %v1062, %v1158
        %v1160 = vpop.f32.mrb[0].mxu0
        %v1161 = vadd.f32 %v1064, %v1160
        %1162 = vdwg.mxu0
        %s1163 = scalar_lea.vmem %s3, 480
        %v1164 = vld [vmem:[%s1163] sm:$0xff]
        %v1165 = vld [vmem:[%s1163 + $0x8] sm:$0xff]
        %v1166 = vld [vmem:[%s1163 + $0x10] sm:$0xff]
        %v1167 = vld [vmem:[%s1163 + $0x18] sm:$0xff]
        %v1168 = vld [vmem:[%s1163 + $0x20] sm:$0xff]
        %v1169 = vld [vmem:[%s1163 + $0x28] sm:$0xff]
        %v1170 = vld [vmem:[%s1163 + $0x30] sm:$0xff]
        %v1171 = vld [vmem:[%s1163 + $0x38] sm:$0xff]
        %v1172 = vld [vmem:[%s1163 + $0x40] sm:$0xff]
        %v1173 = vld [vmem:[%s1163 + $0x48] sm:$0xff]
        %v1174 = vld [vmem:[%s1163 + $0x50] sm:$0xff]
        %v1175 = vld [vmem:[%s1163 + $0x58] sm:$0xff]
        %v1176 = vld [vmem:[%s1163 + $0x60] sm:$0xff]
        %v1177 = vld [vmem:[%s1163 + $0x68] sm:$0xff]
        %v1178 = vld [vmem:[%s1163 + $0x70] sm:$0xff]
        %v1179 = vld [vmem:[%s1163 + $0x78] sm:$0xff]
        %v1180 = vld [vmem:[%s1163 + $0x80] sm:$0xff]
        %v1181 = vld [vmem:[%s1163 + $0x88] sm:$0xff]
        %v1182 = vld [vmem:[%s1163 + $0x90] sm:$0xff]
        %v1183 = vld [vmem:[%s1163 + $0x98] sm:$0xff]
        %v1184 = vld [vmem:[%s1163 + $0xa0] sm:$0xff]
        %v1185 = vld [vmem:[%s1163 + $0xa8] sm:$0xff]
        %v1186 = vld [vmem:[%s1163 + $0xb0] sm:$0xff]
        %v1187 = vld [vmem:[%s1163 + $0xb8] sm:$0xff]
        %v1188 = vld [vmem:[%s1163 + $0xc0] sm:$0xff]
        %v1189 = vld [vmem:[%s1163 + $0xc8] sm:$0xff]
        %v1190 = vld [vmem:[%s1163 + $0xd0] sm:$0xff]
        %v1191 = vld [vmem:[%s1163 + $0xd8] sm:$0xff]
        %v1192 = vld [vmem:[%s1163 + $0xe0] sm:$0xff]
        %v1193 = vld [vmem:[%s1163 + $0xe8] sm:$0xff]
        %v1194 = vrot.slane %v892, 2
        %v1195 = vrot.slane %v893, 2
        %v1196 = vsel %vm776, %v1194, %v1195
        %v1197 = vrot.slane %v894, 2
        %v1198 = vsel %vm776, %v1195, %v1197
        %v1199 = vrot.slane %v895, 2
        %v1200 = vsel %vm776, %v1197, %v1199
        %v1201 = vsel %vm968, %v1196, 0
        %v1203 = vsel %vm968, %v1198, 0
        %v1205 = vsel %vm968, %v1200, 0
        %v1207 = vsel %vm968, %v1199, 0
        %1209 = vmatprep.subr.mxu0 %v1165
        %1210 = vmatpush1.msra.mxu0 %v1164
        %1211 = vmatprep.subr.mxu0 %v1167
        %1212 = vmatpush1.msra.mxu0 %v1166
        %1213 = vmatprep.subr.mxu0 %v1169
        %1214 = vmatpush1.msra.mxu0 %v1168
        %1215 = vmatprep.subr.mxu0 %v1171
        %1216 = vmatpush1.msra.mxu0 %v1170
        %1217 = vmatprep.subr.mxu0 %v1173
        %1218 = vmatpush1.msra.mxu0 %v1172
        %1219 = vmatprep.subr.mxu0 %v1175
        %1220 = vmatpush1.msra.mxu0 %v1174
        %1221 = vmatprep.subr.mxu0 %v1177
        %1222 = vmatpush1.msra.mxu0 %v1176
        %1223 = vmatprep.subr.mxu0 %v1179
        %1224 = vmatpush1.msra.mxu0 %v1178
        %1225 = vmatprep.subr.mxu0 %v1181
        %1226 = vmatpush1.msra.mxu0 %v1180
        %1227 = vmatprep.subr.mxu0 %v1183
        %1228 = vmatpush1.msra.mxu0 %v1182
        %1229 = vmatprep.subr.mxu0 %v1185
        %1230 = vmatpush1.msra.mxu0 %v1184
        %1231 = vmatprep.subr.mxu0 %v1187
        %1232 = vmatpush1.msra.mxu0 %v1186
        %1233 = vmatprep.subr.mxu0 %v1189
        %1234 = vmatpush1.msra.mxu0 %v1188
        %1235 = vmatprep.subr.mxu0 %v1191
        %1236 = vmatpush1.msra.mxu0 %v1190
        %1237 = vmatprep.subr.mxu0 %v1193
        %1238 = vmatpush1.msra.mxu0 %v1192
        %1239 = vmatprep.subr.mxu0 0.0
        %1240 = vmatpush1.msra.mxu0 0.0
        %1241 = vmatprep.subr.mxu0 0.0
        %1242 = vmatpush1.msra.mxu0 0.0
        %1243 = vmatprep.subr.mxu0 0.0
        %1244 = vmatpush1.msra.mxu0 0.0
        %1245 = vmatprep.subr.mxu0 0.0
        %1246 = vmatpush1.msra.mxu0 0.0
        %1247 = vmatprep.subr.mxu0 0.0
        %1248 = vmatpush1.msra.mxu0 0.0
        %1249 = vmatprep.subr.mxu0 0.0
        %1250 = vmatpush1.msra.mxu0 0.0
        %1251 = vmatprep.subr.mxu0 0.0
        %1252 = vmatpush1.msra.mxu0 0.0
        %1253 = vmatprep.subr.mxu0 0.0
        %1254 = vmatpush1.msra.mxu0 0.0
        %1255 = vmatprep.subr.mxu0 0.0
        %1256 = vmatpush1.msra.mxu0 0.0
        %1257 = vmatprep.subr.mxu0 0.0
        %1258 = vmatpush1.msra.mxu0 0.0
        %1259 = vmatprep.subr.mxu0 0.0
        %1260 = vmatpush1.msra.mxu0 0.0
        %1261 = vmatprep.subr.mxu0 0.0
        %1262 = vmatpush1.msra.mxu0 0.0
        %1263 = vmatprep.subr.mxu0 0.0
        %1264 = vmatpush1.msra.mxu0 0.0
        %1265 = vmatprep.subr.mxu0 0.0
        %1266 = vmatpush1.msra.mxu0 0.0
        %1267 = vmatprep.subr.mxu0 0.0
        %1268 = vmatpush1.msra.mxu0 0.0
        %1269 = vmatprep.subr.mxu0 0.0
        %1270 = vmatpush1.msra.mxu0 0.0
        %1271 = vmatprep.subr.mxu0 0.0
        %1272 = vmatpush1.msra.mxu0 0.0
        %1273 = vmatprep.mubr.f32.mxu0 0.0
        %1274 = vmatmul.mubr.f32.gmra.mrb[0].mxu0 %v1201
        %v1275 = vpop.f32.mrb[0].mxu0
        %v1276 = vadd.f32 0.0, %v1275
        %v1277 = vpop.f32.mrb[0].mxu0
        %v1278 = vadd.f32 0.0, %v1277
        %1279 = vmatprep.mubr.f32.mxu0 0.0
        %1280 = vmatmul.mubr.f32.gmra.mrb[0].mxu0 %v1203
        %v1281 = vpop.f32.mrb[0].mxu0
        %v1282 = vadd.f32 0.0, %v1281
        %v1283 = vpop.f32.mrb[0].mxu0
        %v1284 = vadd.f32 0.0, %v1283
        %1285 = vmatprep.mubr.f32.mxu0 0.0
        %1286 = vmatmul.mubr.f32.gmra.mrb[0].mxu0 %v1205
        %v1287 = vpop.f32.mrb[0].mxu0
        %v1288 = vadd.f32 0.0, %v1287
        %v1289 = vpop.f32.mrb[0].mxu0
        %v1290 = vadd.f32 0.0, %v1289
        %1291 = vmatprep.mubr.f32.mxu0 0.0
        %1292 = vmatmul.mubr.f32.gmra.mrb[0].mxu0 %v1207
        %v1293 = vpop.f32.mrb[0].mxu0
        %v1294 = vadd.f32 0.0, %v1293
        %v1295 = vpop.f32.mrb[0].mxu0
        %v1296 = vadd.f32 0.0, %v1295
        %1297 = vdwg.mxu0
        %v1298 = vadd.f32 %v1141, %v1276
        %v1299 = vadd.f32 %v1143, %v1278
        %v1300 = vadd.f32 %v1147, %v1282
        %v1301 = vadd.f32 %v1149, %v1284
        %v1302 = vadd.f32 %v1153, %v1288
        %v1303 = vadd.f32 %v1155, %v1290
        %v1304 = vadd.f32 %v1159, %v1294
        %v1305 = vadd.f32 %v1161, %v1296
        %v1306 = vld [vmem:[#allocation6] sm:$0x3]
        %v1308 = vlaneseq
        %v1309 = vshrl.u32 %v1308, 7
        %v1310 = vsub.s32 0, %v1309
        %v1311 = vrot.slane %v1306, %v1310
        %v1312 = vlaneseq
        %v1313 = vshrl.u32 %v1312, 7
        %v1314 = vsub.s32 1, %v1313
        %v1315 = vrot.slane %v1306, %v1314
        %v1318 = vadd.f32 %v1298, %v1311
        %v1319 = vadd.f32 %v1299, %v1315
        %v1320 = vadd.f32 %v1300, %v1311
        %v1321 = vadd.f32 %v1301, %v1315
        %v1322 = vadd.f32 %v1302, %v1311
        %v1323 = vadd.f32 %v1303, %v1315
        %v1324 = vadd.f32 %v1304, %v1311
        %v1325 = vadd.f32 %v1305, %v1315
        %v1326 = vmax.f32 %v1318, 0.0
        %v1327 = vmax.f32 %v1319, 0.0
        %v1328 = vmax.f32 %v1320, 0.0
        %v1329 = vmax.f32 %v1321, 0.0
        %v1330 = vmax.f32 %v1322, 0.0
        %v1331 = vmax.f32 %v1323, 0.0
        %v1332 = vmax.f32 %v1324, 0.0
        %v1333 = vmax.f32 %v1325, 0.0
        %v1334 = vld [vmem:[%s5] sm:$0xff]
        %v1335 = vld [vmem:[%s5 + $0x8] sm:$0x3f]
        %vm1336 = vcmask 228352
        %v1338 = vsel %vm1336, %v1334, 0
        %v1341 = vsel %vm1336, %v1335, 0
        %vm1343 = vcmask 1043456
        %v1345 = vsel %vm1343, %v1332, 0
        %v1348 = vsel %vm1343, %v1333, 0
        %1350 = vmatprep.subr.mxu0 %v1327
        %1351 = vmatpush1.msra.mxu0 %v1326
        %1352 = vmatprep.subr.mxu0 %v1329
        %1353 = vmatpush1.msra.mxu0 %v1328
        %1354 = vmatprep.subr.mxu0 %v1331
        %1355 = vmatpush1.msra.mxu0 %v1330
        %1356 = vmatprep.subr.mxu0 %v1348
        %1357 = vmatpush1.msra.mxu0 %v1345
        %1358 = vmatprep.subr.mxu0 0.0
        %1359 = vmatpush1.msra.mxu0 0.0
        %1360 = vmatprep.subr.mxu0 0.0
        %1361 = vmatpush1.msra.mxu0 0.0
        %1362 = vmatprep.subr.mxu0 0.0
        %1363 = vmatpush1.msra.mxu0 0.0
        %1364 = vmatprep.subr.mxu0 0.0
        %1365 = vmatpush1.msra.mxu0 0.0
        %1366 = vmatprep.subr.mxu0 0.0
        %1367 = vmatpush1.msra.mxu0 0.0
        %1368 = vmatprep.subr.mxu0 0.0
        %1369 = vmatpush1.msra.mxu0 0.0
        %1370 = vmatprep.subr.mxu0 0.0
        %1371 = vmatpush1.msra.mxu0 0.0
        %1372 = vmatprep.subr.mxu0 0.0
        %1373 = vmatpush1.msra.mxu0 0.0
        %1374 = vmatprep.subr.mxu0 0.0
        %1375 = vmatpush1.msra.mxu0 0.0
        %1376 = vmatprep.subr.mxu0 0.0
        %1377 = vmatpush1.msra.mxu0 0.0
        %1378 = vmatprep.subr.mxu0 0.0
        %1379 = vmatpush1.msra.mxu0 0.0
        %1380 = vmatprep.subr.mxu0 0.0
        %1381 = vmatpush1.msra.mxu0 0.0
        %1382 = vmatprep.subr.mxu0 0.0
        %1383 = vmatpush1.msra.mxu0 0.0
        %1384 = vmatprep.subr.mxu0 0.0
        %1385 = vmatpush1.msra.mxu0 0.0
        %1386 = vmatprep.subr.mxu0 0.0
        %1387 = vmatpush1.msra.mxu0 0.0
        %1388 = vmatprep.subr.mxu0 0.0
        %1389 = vmatpush1.msra.mxu0 0.0
        %1390 = vmatprep.subr.mxu0 0.0
        %1391 = vmatpush1.msra.mxu0 0.0
        %1392 = vmatprep.subr.mxu0 0.0
        %1393 = vmatpush1.msra.mxu0 0.0
        %1394 = vmatprep.subr.mxu0 0.0
        %1395 = vmatpush1.msra.mxu0 0.0
        %1396 = vmatprep.subr.mxu0 0.0
        %1397 = vmatpush1.msra.mxu0 0.0
        %1398 = vmatprep.subr.mxu0 0.0
        %1399 = vmatpush1.msra.mxu0 0.0
        %1400 = vmatprep.subr.mxu0 0.0
        %1401 = vmatpush1.msra.mxu0 0.0
        %1402 = vmatprep.subr.mxu0 0.0
        %1403 = vmatpush1.msra.mxu0 0.0
        %1404 = vmatprep.subr.mxu0 0.0
        %1405 = vmatpush1.msra.mxu0 0.0
        %1406 = vmatprep.subr.mxu0 0.0
        %1407 = vmatpush1.msra.mxu0 0.0
        %1408 = vmatprep.subr.mxu0 0.0
        %1409 = vmatpush1.msra.mxu0 0.0
        %1410 = vmatprep.subr.mxu0 0.0
        %1411 = vmatpush1.msra.mxu0 0.0
        %1412 = vmatprep.subr.mxu0 0.0
        %1413 = vmatpush1.msra.mxu0 0.0
        %1414 = vmatprep.mubr.f32.mxu0 0.0
        %1415 = vmatmul.mubr.f32.gmra.mrb[0].mxu0 %v1338
        %v1416 = vpop.f32.mrb[0].mxu0
        %v1417 = vadd.f32 0.0, %v1416
        %v1418 = vpop.f32.mrb[0].mxu0
        %v1419 = vadd.f32 0.0, %v1418
        %1420 = vmatprep.mubr.f32.mxu0 0.0
        %1421 = vmatmul.mubr.f32.gmra.mrb[0].mxu0 %v1341
        %v1422 = vpop.f32.mrb[0].mxu0
        %v1423 = vadd.f32 0.0, %v1422
        %v1424 = vpop.f32.mrb[0].mxu0
        %v1425 = vadd.f32 0.0, %v1424
        %1426 = vdwg.mxu0
        %s1427 = scalar_lea.vmem %s5, 16
        %v1428 = vld [vmem:[%s1427] sm:$0xff]
        %v1429 = vld [vmem:[%s1427 + $0x8] sm:$0x3f]
        %v1431 = vsel %vm1336, %v1428, 0
        %v1434 = vsel %vm1336, %v1429, 0
        %1436 = vmatprep.subr.mxu0 %v1327
        %1437 = vmatpush1.msra.mxu0 %v1326
        %1438 = vmatprep.subr.mxu0 %v1329
        %1439 = vmatpush1.msra.mxu0 %v1328
        %1440 = vmatprep.subr.mxu0 %v1331
        %1441 = vmatpush1.msra.mxu0 %v1330
        %1442 = vmatprep.subr.mxu0 %v1348
        %1443 = vmatpush1.msra.mxu0 %v1345
        %1444 = vmatprep.subr.mxu0 0.0
        %1445 = vmatpush1.msra.mxu0 0.0
        %1446 = vmatprep.subr.mxu0 0.0
        %1447 = vmatpush1.msra.mxu0 0.0
        %1448 = vmatprep.subr.mxu0 0.0
        %1449 = vmatpush1.msra.mxu0 0.0
        %1450 = vmatprep.subr.mxu0 0.0
        %1451 = vmatpush1.msra.mxu0 0.0
        %1452 = vmatprep.subr.mxu0 0.0
        %1453 = vmatpush1.msra.mxu0 0.0
        %1454 = vmatprep.subr.mxu0 0.0
        %1455 = vmatpush1.msra.mxu0 0.0
        %1456 = vmatprep.subr.mxu0 0.0
        %1457 = vmatpush1.msra.mxu0 0.0
        %1458 = vmatprep.subr.mxu0 0.0
        %1459 = vmatpush1.msra.mxu0 0.0
        %1460 = vmatprep.subr.mxu0 0.0
        %1461 = vmatpush1.msra.mxu0 0.0
        %1462 = vmatprep.subr.mxu0 0.0
        %1463 = vmatpush1.msra.mxu0 0.0
        %1464 = vmatprep.subr.mxu0 0.0
        %1465 = vmatpush1.msra.mxu0 0.0
        %1466 = vmatprep.subr.mxu0 0.0
        %1467 = vmatpush1.msra.mxu0 0.0
        %1468 = vmatprep.subr.mxu0 0.0
        %1469 = vmatpush1.msra.mxu0 0.0
        %1470 = vmatprep.subr.mxu0 0.0
        %1471 = vmatpush1.msra.mxu0 0.0
        %1472 = vmatprep.subr.mxu0 0.0
        %1473 = vmatpush1.msra.mxu0 0.0
        %1474 = vmatprep.subr.mxu0 0.0
        %1475 = vmatpush1.msra.mxu0 0.0
        %1476 = vmatprep.subr.mxu0 0.0
        %1477 = vmatpush1.msra.mxu0 0.0
        %1478 = vmatprep.subr.mxu0 0.0
        %1479 = vmatpush1.msra.mxu0 0.0
        %1480 = vmatprep.subr.mxu0 0.0
        %1481 = vmatpush1.msra.mxu0 0.0
        %1482 = vmatprep.subr.mxu0 0.0
        %1483 = vmatpush1.msra.mxu0 0.0
        %1484 = vmatprep.subr.mxu0 0.0
        %1485 = vmatpush1.msra.mxu0 0.0
        %1486 = vmatprep.subr.mxu0 0.0
        %1487 = vmatpush1.msra.mxu0 0.0
        %1488 = vmatprep.subr.mxu0 0.0
        %1489 = vmatpush1.msra.mxu0 0.0
        %1490 = vmatprep.subr.mxu0 0.0
        %1491 = vmatpush1.msra.mxu0 0.0
        %1492 = vmatprep.subr.mxu0 0.0
        %1493 = vmatpush1.msra.mxu0 0.0
        %1494 = vmatprep.subr.mxu0 0.0
        %1495 = vmatpush1.msra.mxu0 0.0
        %1496 = vmatprep.subr.mxu0 0.0
        %1497 = vmatpush1.msra.mxu0 0.0
        %1498 = vmatprep.subr.mxu0 0.0
        %1499 = vmatpush1.msra.mxu0 0.0
        %1500 = vmatprep.mubr.f32.mxu0 0.0
        %1501 = vmatmul.mubr.f32.gmra.mrb[0].mxu0 %v1431
        %v1502 = vpop.f32.mrb[0].mxu0
        %v1503 = vadd.f32 0.0, %v1502
        %v1504 = vpop.f32.mrb[0].mxu0
        %v1505 = vadd.f32 0.0, %v1504
        %1506 = vmatprep.mubr.f32.mxu0 0.0
        %1507 = vmatmul.mubr.f32.gmra.mrb[0].mxu0 %v1434
        %v1508 = vpop.f32.mrb[0].mxu0
        %v1509 = vadd.f32 0.0, %v1508
        %v1510 = vpop.f32.mrb[0].mxu0
        %v1511 = vadd.f32 0.0, %v1510
        %1512 = vdwg.mxu0
        %v1513 = vmax.f32 %v1417, %v1503
        %v1514 = vmax.f32 %v1419, %v1505
        %v1515 = vmax.f32 %v1423, %v1509
        %v1516 = vmax.f32 %v1425, %v1511
        %v1517 = vld [vmem:[#allocation7] sm:$0xff]
        %v1518 = vld [vmem:[#allocation7 + $0x8] sm:$0xff]
        %v1519 = vld [vmem:[#allocation7 + $0x10] sm:$0xff]
        %v1520 = vld [vmem:[#allocation7 + $0x18] sm:$0xff]
        %v1521 = vld [vmem:[#allocation7 + $0x20] sm:$0xff]
        %v1522 = vld [vmem:[#allocation7 + $0x28] sm:$0xff]
        %v1523 = vld [vmem:[#allocation7 + $0x30] sm:$0xff]
        %v1524 = vld [vmem:[#allocation7 + $0x38] sm:$0xff]
        %v1525 = vld [vmem:[#allocation7 + $0x40] sm:$0xff]
        %v1526 = vld [vmem:[#allocation7 + $0x48] sm:$0xff]
        %v1527 = vld [vmem:[#allocation7 + $0x50] sm:$0xff]
        %v1528 = vld [vmem:[#allocation7 + $0x58] sm:$0xff]
        %v1529 = vld [vmem:[#allocation7 + $0x60] sm:$0xff]
        %v1530 = vld [vmem:[#allocation7 + $0x68] sm:$0xff]
        %v1531 = vld [vmem:[#allocation7 + $0x70] sm:$0xff]
        %v1532 = vld [vmem:[#allocation7 + $0x78] sm:$0xff]
        %v1533 = vld [vmem:[#allocation7 + $0x80] sm:$0xff]
        %v1534 = vld [vmem:[#allocation7 + $0x88] sm:$0xff]
        %v1535 = vld [vmem:[#allocation7 + $0x90] sm:$0xff]
        %v1536 = vld [vmem:[#allocation7 + $0x98] sm:$0xff]
        %v1537 = vld [vmem:[#allocation7 + $0xa0] sm:$0xff]
        %v1538 = vld [vmem:[#allocation7 + $0xa8] sm:$0xff]
        %v1539 = vld [vmem:[#allocation7 + $0xb0] sm:$0xff]
        %v1540 = vld [vmem:[#allocation7 + $0xb8] sm:$0xff]
        %v1541 = vld [vmem:[#allocation7 + $0xc0] sm:$0xff]
        %v1542 = vld [vmem:[#allocation7 + $0xc8] sm:$0xff]
        %v1543 = vld [vmem:[#allocation7 + $0xd0] sm:$0xff]
        %v1544 = vld [vmem:[#allocation7 + $0xd8] sm:$0xff]
        %v1546 = vsel %vm576, %v1514, 0
        %v1549 = vsel %vm576, %v1516, 0
        %1551 = vmatprep.subr.mxu0 0.0
        %1552 = vmatpush1.msra.mxu0 %v1517
        %1553 = vmatprep.subr.mxu0 0.0
        %1554 = vmatpush1.msra.mxu0 %v1518
        %1555 = vmatprep.subr.mxu0 0.0
        %1556 = vmatpush1.msra.mxu0 %v1519
        %1557 = vmatprep.subr.mxu0 0.0
        %1558 = vmatpush1.msra.mxu0 %v1520
        %1559 = vmatprep.subr.mxu0 0.0
        %1560 = vmatpush1.msra.mxu0 %v1521
        %1561 = vmatprep.subr.mxu0 0.0
        %1562 = vmatpush1.msra.mxu0 %v1522
        %1563 = vmatprep.subr.mxu0 0.0
        %1564 = vmatpush1.msra.mxu0 %v1523
        %1565 = vmatprep.subr.mxu0 0.0
        %1566 = vmatpush1.msra.mxu0 %v1524
        %1567 = vmatprep.subr.mxu0 0.0
        %1568 = vmatpush1.msra.mxu0 %v1525
        %1569 = vmatprep.subr.mxu0 0.0
        %1570 = vmatpush1.msra.mxu0 %v1526
        %1571 = vmatprep.subr.mxu0 0.0
        %1572 = vmatpush1.msra.mxu0 %v1527
        %1573 = vmatprep.subr.mxu0 0.0
        %1574 = vmatpush1.msra.mxu0 %v1528
        %1575 = vmatprep.subr.mxu0 0.0
        %1576 = vmatpush1.msra.mxu0 %v1529
        %1577 = vmatprep.subr.mxu0 0.0
        %1578 = vmatpush1.msra.mxu0 %v1530
        %1579 = vmatprep.subr.mxu0 0.0
        %1580 = vmatpush1.msra.mxu0 %v1531
        %1581 = vmatprep.subr.mxu0 0.0
        %1582 = vmatpush1.msra.mxu0 %v1532
        %1583 = vmatprep.subr.mxu0 0.0
        %1584 = vmatpush1.msra.mxu0 %v1533
        %1585 = vmatprep.subr.mxu0 0.0
        %1586 = vmatpush1.msra.mxu0 %v1534
        %1587 = vmatprep.subr.mxu0 0.0
        %1588 = vmatpush1.msra.mxu0 %v1535
        %1589 = vmatprep.subr.mxu0 0.0
        %1590 = vmatpush1.msra.mxu0 %v1536
        %1591 = vmatprep.subr.mxu0 0.0
        %1592 = vmatpush1.msra.mxu0 %v1537
        %1593 = vmatprep.subr.mxu0 0.0
        %1594 = vmatpush1.msra.mxu0 %v1538
        %1595 = vmatprep.subr.mxu0 0.0
        %1596 = vmatpush1.msra.mxu0 %v1539
        %1597 = vmatprep.subr.mxu0 0.0
        %1598 = vmatpush1.msra.mxu0 %v1540
        %1599 = vmatprep.subr.mxu0 0.0
        %1600 = vmatpush1.msra.mxu0 %v1541
        %1601 = vmatprep.subr.mxu0 0.0
        %1602 = vmatpush1.msra.mxu0 %v1542
        %1603 = vmatprep.subr.mxu0 0.0
        %1604 = vmatpush1.msra.mxu0 %v1543
        %1605 = vmatprep.subr.mxu0 0.0
        %1606 = vmatpush1.msra.mxu0 %v1544
        %1607 = vmatprep.subr.mxu0 0.0
        %1608 = vmatpush1.msra.mxu0 0.0
        %1609 = vmatprep.subr.mxu0 0.0
        %1610 = vmatpush1.msra.mxu0 0.0
        %1611 = vmatprep.subr.mxu0 0.0
        %1612 = vmatpush1.msra.mxu0 0.0
        %1613 = vmatprep.subr.mxu0 0.0
        %1614 = vmatpush1.msra.mxu0 0.0
        %1615 = vmatprep.mubr.f32.mxu0 %v1546
        %1616 = vmatmul.mubr.f32.gmra.mrb[0].mxu0 %v1513
        %v1617 = vpop.f32.mrb[0].mxu0
        %v1618 = vadd.f32 0.0, %v1617
        %v1619 = vpop.f32.mrb[0].mxu0
        %1620 = vmatprep.mubr.f32.mxu0 %v1549
        %1621 = vmatmul.mubr.f32.gmra.mrb[0].mxu0 %v1515
        %v1622 = vpop.f32.mrb[0].mxu0
        %v1623 = vadd.f32 0.0, %v1622
        %v1624 = vpop.f32.mrb[0].mxu0
        %1625 = vdwg.mxu0
        %s1626 = scalar_lea.vmem [#allocation7], 224
        %v1627 = vld [vmem:[%s1626] sm:$0xff]
        %v1628 = vld [vmem:[%s1626 + $0x8] sm:$0xff]
        %v1629 = vld [vmem:[%s1626 + $0x10] sm:$0xff]
        %v1630 = vld [vmem:[%s1626 + $0x18] sm:$0xff]
        %v1631 = vld [vmem:[%s1626 + $0x20] sm:$0xff]
        %v1632 = vld [vmem:[%s1626 + $0x28] sm:$0xff]
        %v1633 = vld [vmem:[%s1626 + $0x30] sm:$0xff]
        %v1634 = vld [vmem:[%s1626 + $0x38] sm:$0xff]
        %v1635 = vld [vmem:[%s1626 + $0x40] sm:$0xff]
        %v1636 = vld [vmem:[%s1626 + $0x48] sm:$0xff]
        %v1637 = vld [vmem:[%s1626 + $0x50] sm:$0xff]
        %v1638 = vld [vmem:[%s1626 + $0x58] sm:$0xff]
        %v1639 = vld [vmem:[%s1626 + $0x60] sm:$0xff]
        %v1640 = vld [vmem:[%s1626 + $0x68] sm:$0xff]
        %v1641 = vld [vmem:[%s1626 + $0x70] sm:$0xff]
        %v1642 = vld [vmem:[%s1626 + $0x78] sm:$0xff]
        %v1643 = vld [vmem:[%s1626 + $0x80] sm:$0xff]
        %v1644 = vld [vmem:[%s1626 + $0x88] sm:$0xff]
        %v1645 = vld [vmem:[%s1626 + $0x90] sm:$0xff]
        %v1646 = vld [vmem:[%s1626 + $0x98] sm:$0xff]
        %v1647 = vld [vmem:[%s1626 + $0xa0] sm:$0xff]
        %v1648 = vld [vmem:[%s1626 + $0xa8] sm:$0xff]
        %v1649 = vld [vmem:[%s1626 + $0xb0] sm:$0xff]
        %v1650 = vld [vmem:[%s1626 + $0xb8] sm:$0xff]
        %v1651 = vld [vmem:[%s1626 + $0xc0] sm:$0xff]
        %v1652 = vld [vmem:[%s1626 + $0xc8] sm:$0xff]
        %v1653 = vld [vmem:[%s1626 + $0xd0] sm:$0xff]
        %v1654 = vld [vmem:[%s1626 + $0xd8] sm:$0xff]
        %1655 = vmatprep.subr.mxu0 0.0
        %1656 = vmatpush1.msra.mxu0 %v1627
        %1657 = vmatprep.subr.mxu0 0.0
        %1658 = vmatpush1.msra.mxu0 %v1628
        %1659 = vmatprep.subr.mxu0 0.0
        %1660 = vmatpush1.msra.mxu0 %v1629
        %1661 = vmatprep.subr.mxu0 0.0
        %1662 = vmatpush1.msra.mxu0 %v1630
        %1663 = vmatprep.subr.mxu0 0.0
        %1664 = vmatpush1.msra.mxu0 %v1631
        %1665 = vmatprep.subr.mxu0 0.0
        %1666 = vmatpush1.msra.mxu0 %v1632
        %1667 = vmatprep.subr.mxu0 0.0
        %1668 = vmatpush1.msra.mxu0 %v1633
        %1669 = vmatprep.subr.mxu0 0.0
        %1670 = vmatpush1.msra.mxu0 %v1634
        %1671 = vmatprep.subr.mxu0 0.0
        %1672 = vmatpush1.msra.mxu0 %v1635
        %1673 = vmatprep.subr.mxu0 0.0
        %1674 = vmatpush1.msra.mxu0 %v1636
        %1675 = vmatprep.subr.mxu0 0.0
        %1676 = vmatpush1.msra.mxu0 %v1637
        %1677 = vmatprep.subr.mxu0 0.0
        %1678 = vmatpush1.msra.mxu0 %v1638
        %1679 = vmatprep.subr.mxu0 0.0
        %1680 = vmatpush1.msra.mxu0 %v1639
        %1681 = vmatprep.subr.mxu0 0.0
        %1682 = vmatpush1.msra.mxu0 %v1640
        %1683 = vmatprep.subr.mxu0 0.0
        %1684 = vmatpush1.msra.mxu0 %v1641
        %1685 = vmatprep.subr.mxu0 0.0
        %1686 = vmatpush1.msra.mxu0 %v1642
        %1687 = vmatprep.subr.mxu0 0.0
        %1688 = vmatpush1.msra.mxu0 %v1643
        %1689 = vmatprep.subr.mxu0 0.0
        %1690 = vmatpush1.msra.mxu0 %v1644
        %1691 = vmatprep.subr.mxu0 0.0
        %1692 = vmatpush1.msra.mxu0 %v1645
        %1693 = vmatprep.subr.mxu0 0.0
        %1694 = vmatpush1.msra.mxu0 %v1646
        %1695 = vmatprep.subr.mxu0 0.0
        %1696 = vmatpush1.msra.mxu0 %v1647
        %1697 = vmatprep.subr.mxu0 0.0
        %1698 = vmatpush1.msra.mxu0 %v1648
        %1699 = vmatprep.subr.mxu0 0.0
        %1700 = vmatpush1.msra.mxu0 %v1649
        %1701 = vmatprep.subr.mxu0 0.0
        %1702 = vmatpush1.msra.mxu0 %v1650
        %1703 = vmatprep.subr.mxu0 0.0
        %1704 = vmatpush1.msra.mxu0 %v1651
        %1705 = vmatprep.subr.mxu0 0.0
        %1706 = vmatpush1.msra.mxu0 %v1652
        %1707 = vmatprep.subr.mxu0 0.0
        %1708 = vmatpush1.msra.mxu0 %v1653
        %1709 = vmatprep.subr.mxu0 0.0
        %1710 = vmatpush1.msra.mxu0 %v1654
        %1711 = vmatprep.subr.mxu0 0.0
        %1712 = vmatpush1.msra.mxu0 0.0
        %1713 = vmatprep.subr.mxu0 0.0
        %1714 = vmatpush1.msra.mxu0 0.0
        %1715 = vmatprep.subr.mxu0 0.0
        %1716 = vmatpush1.msra.mxu0 0.0
        %1717 = vmatprep.subr.mxu0 0.0
        %1718 = vmatpush1.msra.mxu0 0.0
        %1719 = vmatprep.mubr.f32.mxu0 %v1546
        %1720 = vmatmul.mubr.f32.gmra.mrb[0].mxu0 %v1513
        %v1721 = vpop.f32.mrb[0].mxu0
        %v1722 = vadd.f32 0.0, %v1721
        %v1723 = vpop.f32.mrb[0].mxu0
        %1724 = vmatprep.mubr.f32.mxu0 %v1549
        %1725 = vmatmul.mubr.f32.gmra.mrb[0].mxu0 %v1515
        %v1726 = vpop.f32.mrb[0].mxu0
        %v1727 = vadd.f32 0.0, %v1726
        %v1728 = vpop.f32.mrb[0].mxu0
        %1729 = vdwg.mxu0
        %v1730 = vmax.f32 %v1618, %v1722
        %v1731 = vmax.f32 %v1623, %v1727
        %v1732 = vld [vmem:[%s7] sm:$0xff]
        %v1733 = vld [vmem:[%s7 + $0x8] sm:$0xff]
        %v1734 = vld [vmem:[%s7 + $0x10] sm:$0xff]
        %v1735 = vld [vmem:[%s7 + $0x18] sm:$0xff]
        %v1736 = vld [vmem:[%s7 + $0x20] sm:$0xff]
        %v1737 = vld [vmem:[%s7 + $0x28] sm:$0xff]
        %v1738 = vld [vmem:[%s7 + $0x30] sm:$0xff]
        %v1739 = vld [vmem:[%s7 + $0x38] sm:$0xff]
        %v1740 = vld [vmem:[%s7 + $0x40] sm:$0xff]
        %v1741 = vld [vmem:[%s7 + $0x48] sm:$0xff]
        %v1742 = vld [vmem:[%s7 + $0x50] sm:$0xff]
        %v1743 = vld [vmem:[%s7 + $0x58] sm:$0xff]
        %v1744 = vld [vmem:[%s7 + $0x60] sm:$0xff]
        %v1745 = vld [vmem:[%s7 + $0x68] sm:$0xff]
        %v1746 = vld [vmem:[%s7 + $0x70] sm:$0xff]
        %v1747 = vld [vmem:[%s7 + $0x78] sm:$0xff]
        %v1748 = vld [vmem:[%s7 + $0x80] sm:$0xff]
        %v1749 = vld [vmem:[%s7 + $0x88] sm:$0xff]
        %v1750 = vld [vmem:[%s7 + $0x90] sm:$0xff]
        %v1751 = vld [vmem:[%s7 + $0x98] sm:$0xff]
        %v1752 = vld [vmem:[%s7 + $0xa0] sm:$0xff]
        %v1753 = vld [vmem:[%s7 + $0xa8] sm:$0xff]
        %v1754 = vld [vmem:[%s7 + $0xb0] sm:$0xff]
        %v1755 = vld [vmem:[%s7 + $0xb8] sm:$0xff]
        %v1756 = vld [vmem:[%s7 + $0xc0] sm:$0xff]
        %v1757 = vld [vmem:[%s7 + $0xc8] sm:$0xff]
        %v1758 = vld [vmem:[%s7 + $0xd0] sm:$0xff]
        %v1759 = vld [vmem:[%s7 + $0xd8] sm:$0xff]
        %s1760 = scalar_lea.vmem %s7, 224
        %v1761 = vld [vmem:[%s1760] sm:$0xff]
        %v1762 = vld [vmem:[%s1760 + $0x8] sm:$0xff]
        %v1763 = vld [vmem:[%s1760 + $0x10] sm:$0xff]
        %v1764 = vld [vmem:[%s1760 + $0x18] sm:$0xff]
        %v1765 = vld [vmem:[%s1760 + $0x20] sm:$0xff]
        %v1766 = vld [vmem:[%s1760 + $0x28] sm:$0xff]
        %v1767 = vld [vmem:[%s1760 + $0x30] sm:$0xff]
        %v1768 = vld [vmem:[%s1760 + $0x38] sm:$0xff]
        %v1769 = vld [vmem:[%s1760 + $0x40] sm:$0xff]
        %v1770 = vld [vmem:[%s1760 + $0x48] sm:$0xff]
        %v1771 = vld [vmem:[%s1760 + $0x50] sm:$0xff]
        %v1772 = vld [vmem:[%s1760 + $0x58] sm:$0xff]
        %v1773 = vld [vmem:[%s1760 + $0x60] sm:$0xff]
        %v1774 = vld [vmem:[%s1760 + $0x68] sm:$0xff]
        %v1775 = vld [vmem:[%s1760 + $0x70] sm:$0xff]
        %v1776 = vld [vmem:[%s1760 + $0x78] sm:$0xff]
        %v1777 = vld [vmem:[%s1760 + $0x80] sm:$0xff]
        %v1778 = vld [vmem:[%s1760 + $0x88] sm:$0xff]
        %v1779 = vld [vmem:[%s1760 + $0x90] sm:$0xff]
        %v1780 = vld [vmem:[%s1760 + $0x98] sm:$0xff]
        %v1781 = vld [vmem:[%s1760 + $0xa0] sm:$0xff]
        %v1782 = vld [vmem:[%s1760 + $0xa8] sm:$0xff]
        %v1783 = vld [vmem:[%s1760 + $0xb0] sm:$0xff]
        %v1784 = vld [vmem:[%s1760 + $0xb8] sm:$0xff]
        %v1785 = vld [vmem:[%s1760 + $0xc0] sm:$0xff]
        %v1786 = vld [vmem:[%s1760 + $0xc8] sm:$0xff]
        %v1787 = vld [vmem:[%s1760 + $0xd0] sm:$0xff]
        %v1788 = vld [vmem:[%s1760 + $0xd8] sm:$0xff]
        %v1791 = vrot.slane %v1730, 1
        %v1792 = vrot.slane %v1731, 1
        %v1793 = vsel %vm568, %v1791, %v1792
        %vm1794 = vcmask 916480
        %v1795 = vsel %vm1794, %v1793, 0
        %v1797 = vsel %vm1794, %v1792, 0
        %1799 = vmatprep.subr.mxu0 %v1762
        %1800 = vmatpush1.msra.mxu0 %v1761
        %1801 = vmatprep.subr.mxu0 %v1764
        %1802 = vmatpush1.msra.mxu0 %v1763
        %1803 = vmatprep.subr.mxu0 %v1766
        %1804 = vmatpush1.msra.mxu0 %v1765
        %1805 = vmatprep.subr.mxu0 %v1768
        %1806 = vmatpush1.msra.mxu0 %v1767
        %1807 = vmatprep.subr.mxu0 %v1770
        %1808 = vmatpush1.msra.mxu0 %v1769
        %1809 = vmatprep.subr.mxu0 %v1772
        %1810 = vmatpush1.msra.mxu0 %v1771
        %1811 = vmatprep.subr.mxu0 %v1774
        %1812 = vmatpush1.msra.mxu0 %v1773
        %1813 = vmatprep.subr.mxu0 %v1776
        %1814 = vmatpush1.msra.mxu0 %v1775
        %1815 = vmatprep.subr.mxu0 %v1778
        %1816 = vmatpush1.msra.mxu0 %v1777
        %1817 = vmatprep.subr.mxu0 %v1780
        %1818 = vmatpush1.msra.mxu0 %v1779
        %1819 = vmatprep.subr.mxu0 %v1782
        %1820 = vmatpush1.msra.mxu0 %v1781
        %1821 = vmatprep.subr.mxu0 %v1784
        %1822 = vmatpush1.msra.mxu0 %v1783
        %1823 = vmatprep.subr.mxu0 %v1786
        %1824 = vmatpush1.msra.mxu0 %v1785
        %1825 = vmatprep.subr.mxu0 %v1788
        %1826 = vmatpush1.msra.mxu0 %v1787
        %1827 = vmatprep.subr.mxu0 0.0
        %1828 = vmatpush1.msra.mxu0 0.0
        %1829 = vmatprep.subr.mxu0 0.0
        %1830 = vmatpush1.msra.mxu0 0.0
        %1831 = vmatprep.subr.mxu0 0.0
        %1832 = vmatpush1.msra.mxu0 0.0
        %1833 = vmatprep.subr.mxu0 0.0
        %1834 = vmatpush1.msra.mxu0 0.0
        %1835 = vmatprep.subr.mxu0 0.0
        %1836 = vmatpush1.msra.mxu0 0.0
        %1837 = vmatprep.subr.mxu0 0.0
        %1838 = vmatpush1.msra.mxu0 0.0
        %1839 = vmatprep.subr.mxu0 0.0
        %1840 = vmatpush1.msra.mxu0 0.0
        %1841 = vmatprep.subr.mxu0 0.0
        %1842 = vmatpush1.msra.mxu0 0.0
        %1843 = vmatprep.subr.mxu0 0.0
        %1844 = vmatpush1.msra.mxu0 0.0
        %1845 = vmatprep.subr.mxu0 0.0
        %1846 = vmatpush1.msra.mxu0 0.0
        %1847 = vmatprep.subr.mxu0 0.0
        %1848 = vmatpush1.msra.mxu0 0.0
        %1849 = vmatprep.subr.mxu0 0.0
        %1850 = vmatpush1.msra.mxu0 0.0
        %1851 = vmatprep.subr.mxu0 0.0
        %1852 = vmatpush1.msra.mxu0 0.0
        %1853 = vmatprep.subr.mxu0 0.0
        %1854 = vmatpush1.msra.mxu0 0.0
        %1855 = vmatprep.subr.mxu0 0.0
        %1856 = vmatpush1.msra.mxu0 0.0
        %1857 = vmatprep.subr.mxu0 0.0
        %1858 = vmatpush1.msra.mxu0 0.0
        %1859 = vmatprep.subr.mxu0 0.0
        %1860 = vmatpush1.msra.mxu0 0.0
        %1861 = vmatprep.subr.mxu0 0.0
        %1862 = vmatpush1.msra.mxu0 0.0
        %1863 = vmatprep.mubr.f32.mxu0 0.0
        %1864 = vmatmul.mubr.f32.gmra.mrb[0].mxu0 %v1795
        %v1865 = vpop.f32.mrb[0].mxu0
        %v1866 = vadd.f32 0.0, %v1865
        %v1867 = vpop.f32.mrb[0].mxu0
        %v1868 = vadd.f32 0.0, %v1867
        %1869 = vmatprep.mubr.f32.mxu0 0.0
        %1870 = vmatmul.mubr.f32.gmra.mrb[0].mxu0 %v1797
        %v1871 = vpop.f32.mrb[0].mxu0
        %v1872 = vadd.f32 0.0, %v1871
        %v1873 = vpop.f32.mrb[0].mxu0
        %v1874 = vadd.f32 0.0, %v1873
        %1875 = vdwg.mxu0
        %v1876 = vsel %vm1794, %v1730, 0
        %v1878 = vsel %vm1794, %v1731, 0
        %1880 = vmatprep.subr.mxu0 %v1733
        %1881 = vmatpush1.msra.mxu0 %v1732
        %1882 = vmatprep.subr.mxu0 %v1735
        %1883 = vmatpush1.msra.mxu0 %v1734
        %1884 = vmatprep.subr.mxu0 %v1737
        %1885 = vmatpush1.msra.mxu0 %v1736
        %1886 = vmatprep.subr.mxu0 %v1739
        %1887 = vmatpush1.msra.mxu0 %v1738
        %1888 = vmatprep.subr.mxu0 %v1741
        %1889 = vmatpush1.msra.mxu0 %v1740
        %1890 = vmatprep.subr.mxu0 %v1743
        %1891 = vmatpush1.msra.mxu0 %v1742
        %1892 = vmatprep.subr.mxu0 %v1745
        %1893 = vmatpush1.msra.mxu0 %v1744
        %1894 = vmatprep.subr.mxu0 %v1747
        %1895 = vmatpush1.msra.mxu0 %v1746
        %1896 = vmatprep.subr.mxu0 %v1749
        %1897 = vmatpush1.msra.mxu0 %v1748
        %1898 = vmatprep.subr.mxu0 %v1751
        %1899 = vmatpush1.msra.mxu0 %v1750
        %1900 = vmatprep.subr.mxu0 %v1753
        %1901 = vmatpush1.msra.mxu0 %v1752
        %1902 = vmatprep.subr.mxu0 %v1755
        %1903 = vmatpush1.msra.mxu0 %v1754
        %1904 = vmatprep.subr.mxu0 %v1757
        %1905 = vmatpush1.msra.mxu0 %v1756
        %1906 = vmatprep.subr.mxu0 %v1759
        %1907 = vmatpush1.msra.mxu0 %v1758
        %1908 = vmatprep.subr.mxu0 0.0
        %1909 = vmatpush1.msra.mxu0 0.0
        %1910 = vmatprep.subr.mxu0 0.0
        %1911 = vmatpush1.msra.mxu0 0.0
        %1912 = vmatprep.subr.mxu0 0.0
        %1913 = vmatpush1.msra.mxu0 0.0
        %1914 = vmatprep.subr.mxu0 0.0
        %1915 = vmatpush1.msra.mxu0 0.0
        %1916 = vmatprep.subr.mxu0 0.0
        %1917 = vmatpush1.msra.mxu0 0.0
        %1918 = vmatprep.subr.mxu0 0.0
        %1919 = vmatpush1.msra.mxu0 0.0
        %1920 = vmatprep.subr.mxu0 0.0
        %1921 = vmatpush1.msra.mxu0 0.0
        %1922 = vmatprep.subr.mxu0 0.0
        %1923 = vmatpush1.msra.mxu0 0.0
        %1924 = vmatprep.subr.mxu0 0.0
        %1925 = vmatpush1.msra.mxu0 0.0
        %1926 = vmatprep.subr.mxu0 0.0
        %1927 = vmatpush1.msra.mxu0 0.0
        %1928 = vmatprep.subr.mxu0 0.0
        %1929 = vmatpush1.msra.mxu0 0.0
        %1930 = vmatprep.subr.mxu0 0.0
        %1931 = vmatpush1.msra.mxu0 0.0
        %1932 = vmatprep.subr.mxu0 0.0
        %1933 = vmatpush1.msra.mxu0 0.0
        %1934 = vmatprep.subr.mxu0 0.0
        %1935 = vmatpush1.msra.mxu0 0.0
        %1936 = vmatprep.subr.mxu0 0.0
        %1937 = vmatpush1.msra.mxu0 0.0
        %1938 = vmatprep.subr.mxu0 0.0
        %1939 = vmatpush1.msra.mxu0 0.0
        %1940 = vmatprep.subr.mxu0 0.0
        %1941 = vmatpush1.msra.mxu0 0.0
        %1942 = vmatprep.subr.mxu0 0.0
        %1943 = vmatpush1.msra.mxu0 0.0
        %1944 = vmatprep.mubr.f32.mxu0 0.0
        %1945 = vmatmul.mubr.f32.gmra.mrb[0].mxu0 %v1876
        %v1946 = vpop.f32.mrb[0].mxu0
        %v1947 = vadd.f32 %v1866, %v1946
        %v1948 = vpop.f32.mrb[0].mxu0
        %v1949 = vadd.f32 %v1868, %v1948
        %1950 = vmatprep.mubr.f32.mxu0 0.0
        %1951 = vmatmul.mubr.f32.gmra.mrb[0].mxu0 %v1878
        %v1952 = vpop.f32.mrb[0].mxu0
        %v1953 = vadd.f32 %v1872, %v1952
        %v1954 = vpop.f32.mrb[0].mxu0
        %v1955 = vadd.f32 %v1874, %v1954
        %1956 = vdwg.mxu0
        %s1957 = scalar_lea.vmem %s7, 448
        %v1958 = vld [vmem:[%s1957] sm:$0xff]
        %v1959 = vld [vmem:[%s1957 + $0x8] sm:$0xff]
        %v1960 = vld [vmem:[%s1957 + $0x10] sm:$0xff]
        %v1961 = vld [vmem:[%s1957 + $0x18] sm:$0xff]
        %v1962 = vld [vmem:[%s1957 + $0x20] sm:$0xff]
        %v1963 = vld [vmem:[%s1957 + $0x28] sm:$0xff]
        %v1964 = vld [vmem:[%s1957 + $0x30] sm:$0xff]
        %v1965 = vld [vmem:[%s1957 + $0x38] sm:$0xff]
        %v1966 = vld [vmem:[%s1957 + $0x40] sm:$0xff]
        %v1967 = vld [vmem:[%s1957 + $0x48] sm:$0xff]
        %v1968 = vld [vmem:[%s1957 + $0x50] sm:$0xff]
        %v1969 = vld [vmem:[%s1957 + $0x58] sm:$0xff]
        %v1970 = vld [vmem:[%s1957 + $0x60] sm:$0xff]
        %v1971 = vld [vmem:[%s1957 + $0x68] sm:$0xff]
        %v1972 = vld [vmem:[%s1957 + $0x70] sm:$0xff]
        %v1973 = vld [vmem:[%s1957 + $0x78] sm:$0xff]
        %v1974 = vld [vmem:[%s1957 + $0x80] sm:$0xff]
        %v1975 = vld [vmem:[%s1957 + $0x88] sm:$0xff]
        %v1976 = vld [vmem:[%s1957 + $0x90] sm:$0xff]
        %v1977 = vld [vmem:[%s1957 + $0x98] sm:$0xff]
        %v1978 = vld [vmem:[%s1957 + $0xa0] sm:$0xff]
        %v1979 = vld [vmem:[%s1957 + $0xa8] sm:$0xff]
        %v1980 = vld [vmem:[%s1957 + $0xb0] sm:$0xff]
        %v1981 = vld [vmem:[%s1957 + $0xb8] sm:$0xff]
        %v1982 = vld [vmem:[%s1957 + $0xc0] sm:$0xff]
        %v1983 = vld [vmem:[%s1957 + $0xc8] sm:$0xff]
        %v1984 = vld [vmem:[%s1957 + $0xd0] sm:$0xff]
        %v1985 = vld [vmem:[%s1957 + $0xd8] sm:$0xff]
        %v1986 = vrot.slane %v1730, 2
        %v1987 = vrot.slane %v1731, 2
        %v1988 = vsel %vm776, %v1986, %v1987
        %v1989 = vsel %vm1794, %v1988, 0
        %v1991 = vsel %vm1794, %v1987, 0
        %1993 = vmatprep.subr.mxu0 %v1959
        %1994 = vmatpush1.msra.mxu0 %v1958
        %1995 = vmatprep.subr.mxu0 %v1961
        %1996 = vmatpush1.msra.mxu0 %v1960
        %1997 = vmatprep.subr.mxu0 %v1963
        %1998 = vmatpush1.msra.mxu0 %v1962
        %1999 = vmatprep.subr.mxu0 %v1965
        %2000 = vmatpush1.msra.mxu0 %v1964
        %2001 = vmatprep.subr.mxu0 %v1967
        %2002 = vmatpush1.msra.mxu0 %v1966
        %2003 = vmatprep.subr.mxu0 %v1969
        %2004 = vmatpush1.msra.mxu0 %v1968
        %2005 = vmatprep.subr.mxu0 %v1971
        %2006 = vmatpush1.msra.mxu0 %v1970
        %2007 = vmatprep.subr.mxu0 %v1973
        %2008 = vmatpush1.msra.mxu0 %v1972
        %2009 = vmatprep.subr.mxu0 %v1975
        %2010 = vmatpush1.msra.mxu0 %v1974
        %2011 = vmatprep.subr.mxu0 %v1977
        %2012 = vmatpush1.msra.mxu0 %v1976
        %2013 = vmatprep.subr.mxu0 %v1979
        %2014 = vmatpush1.msra.mxu0 %v1978
        %2015 = vmatprep.subr.mxu0 %v1981
        %2016 = vmatpush1.msra.mxu0 %v1980
        %2017 = vmatprep.subr.mxu0 %v1983
        %2018 = vmatpush1.msra.mxu0 %v1982
        %2019 = vmatprep.subr.mxu0 %v1985
        %2020 = vmatpush1.msra.mxu0 %v1984
        %2021 = vmatprep.subr.mxu0 0.0
        %2022 = vmatpush1.msra.mxu0 0.0
        %2023 = vmatprep.subr.mxu0 0.0
        %2024 = vmatpush1.msra.mxu0 0.0
        %2025 = vmatprep.subr.mxu0 0.0
        %2026 = vmatpush1.msra.mxu0 0.0
        %2027 = vmatprep.subr.mxu0 0.0
        %2028 = vmatpush1.msra.mxu0 0.0
        %2029 = vmatprep.subr.mxu0 0.0
        %2030 = vmatpush1.msra.mxu0 0.0
        %2031 = vmatprep.subr.mxu0 0.0
        %2032 = vmatpush1.msra.mxu0 0.0
        %2033 = vmatprep.subr.mxu0 0.0
        %2034 = vmatpush1.msra.mxu0 0.0
        %2035 = vmatprep.subr.mxu0 0.0
        %2036 = vmatpush1.msra.mxu0 0.0
        %2037 = vmatprep.subr.mxu0 0.0
        %2038 = vmatpush1.msra.mxu0 0.0
        %2039 = vmatprep.subr.mxu0 0.0
        %2040 = vmatpush1.msra.mxu0 0.0
        %2041 = vmatprep.subr.mxu0 0.0
        %2042 = vmatpush1.msra.mxu0 0.0
        %2043 = vmatprep.subr.mxu0 0.0
        %2044 = vmatpush1.msra.mxu0 0.0
        %2045 = vmatprep.subr.mxu0 0.0
        %2046 = vmatpush1.msra.mxu0 0.0
        %2047 = vmatprep.subr.mxu0 0.0
        %2048 = vmatpush1.msra.mxu0 0.0
        %2049 = vmatprep.subr.mxu0 0.0
        %2050 = vmatpush1.msra.mxu0 0.0
        %2051 = vmatprep.subr.mxu0 0.0
        %2052 = vmatpush1.msra.mxu0 0.0
        %2053 = vmatprep.subr.mxu0 0.0
        %2054 = vmatpush1.msra.mxu0 0.0
        %2055 = vmatprep.subr.mxu0 0.0
        %2056 = vmatpush1.msra.mxu0 0.0
        %2057 = vmatprep.mubr.f32.mxu0 0.0
        %2058 = vmatmul.mubr.f32.gmra.mrb[0].mxu0 %v1989
        %v2059 = vpop.f32.mrb[0].mxu0
        %v2060 = vadd.f32 0.0, %v2059
        %v2061 = vpop.f32.mrb[0].mxu0
        %v2062 = vadd.f32 0.0, %v2061
        %2063 = vmatprep.mubr.f32.mxu0 0.0
        %2064 = vmatmul.mubr.f32.gmra.mrb[0].mxu0 %v1991
        %v2065 = vpop.f32.mrb[0].mxu0
        %v2066 = vadd.f32 0.0, %v2065
        %v2067 = vpop.f32.mrb[0].mxu0
        %v2068 = vadd.f32 0.0, %v2067
        %2069 = vdwg.mxu0
        %v2070 = vadd.f32 %v1947, %v2060
        %v2071 = vadd.f32 %v1949, %v2062
        %v2072 = vadd.f32 %v1953, %v2066
        %v2073 = vadd.f32 %v1955, %v2068
        %v2074 = vld [vmem:[#allocation9] sm:$0x3]
        %v2076 = vlaneseq
        %v2077 = vshrl.u32 %v2076, 7
        %v2078 = vsub.s32 0, %v2077
        %v2079 = vrot.slane %v2074, %v2078
        %v2080 = vlaneseq
        %v2081 = vshrl.u32 %v2080, 7
        %v2082 = vsub.s32 1, %v2081
        %v2083 = vrot.slane %v2074, %v2082
        %v2086 = vadd.f32 %v2070, %v2079
        %v2087 = vadd.f32 %v2071, %v2083
        %v2088 = vadd.f32 %v2072, %v2079
        %v2089 = vadd.f32 %v2073, %v2083
        %v2090 = vmax.f32 %v2086, 0.0
        %v2091 = vmax.f32 %v2087, 0.0
        %v2092 = vmax.f32 %v2088, 0.0
        %v2093 = vmax.f32 %v2089, 0.0
        %v2094 = vld [vmem:[#allocation10] sm:$0xff]
        %v2095 = vld [vmem:[#allocation10 + $0x8] sm:$0xff]
        %v2096 = vld [vmem:[#allocation10 + $0x10] sm:$0xff]
        %v2097 = vld [vmem:[#allocation10 + $0x18] sm:$0xff]
        %v2098 = vld [vmem:[#allocation10 + $0x20] sm:$0xff]
        %v2099 = vld [vmem:[#allocation10 + $0x28] sm:$0xff]
        %v2100 = vld [vmem:[#allocation10 + $0x30] sm:$0xff]
        %v2101 = vld [vmem:[#allocation10 + $0x38] sm:$0xff]
        %v2102 = vld [vmem:[#allocation10 + $0x40] sm:$0xff]
        %v2103 = vld [vmem:[#allocation10 + $0x48] sm:$0xff]
        %v2104 = vld [vmem:[#allocation10 + $0x50] sm:$0xff]
        %v2105 = vld [vmem:[#allocation10 + $0x58] sm:$0xff]
        %v2106 = vld [vmem:[#allocation10 + $0x60] sm:$0xff]
        %v2107 = vld [vmem:[#allocation10 + $0x68] sm:$0xff]
        %v2108 = vld [vmem:[#allocation10 + $0x70] sm:$0xff]
        %v2109 = vld [vmem:[#allocation10 + $0x78] sm:$0xff]
        %v2110 = vld [vmem:[#allocation10 + $0x80] sm:$0xff]
        %v2111 = vld [vmem:[#allocation10 + $0x88] sm:$0xff]
        %v2112 = vld [vmem:[#allocation10 + $0x90] sm:$0xff]
        %v2113 = vld [vmem:[#allocation10 + $0x98] sm:$0xff]
        %v2114 = vld [vmem:[#allocation10 + $0xa0] sm:$0xff]
        %v2115 = vld [vmem:[#allocation10 + $0xa8] sm:$0xff]
        %v2116 = vld [vmem:[#allocation10 + $0xb0] sm:$0xff]
        %v2117 = vld [vmem:[#allocation10 + $0xb8] sm:$0xff]
        %v2118 = vld [vmem:[#allocation10 + $0xc0] sm:$0xff]
        %v2119 = vld [vmem:[#allocation10 + $0xc8] sm:$0xff]
        %v2120 = vld [vmem:[#allocation10 + $0xd0] sm:$0xff]
        %v2121 = vld [vmem:[#allocation10 + $0xd8] sm:$0xff]
        %v2122 = vld [vmem:[#allocation10 + $0xe0] sm:$0xff]
        %v2123 = vld [vmem:[#allocation10 + $0xe8] sm:$0xff]
        %v2124 = vld [vmem:[#allocation10 + $0xf0] sm:$0xff]
        %v2125 = vld [vmem:[#allocation10 + $0xf8] sm:$0xff]
        %v2126 = vld [vmem:[#allocation10 + $0x100] sm:$0xff]
        %v2127 = vld [vmem:[#allocation10 + $0x108] sm:$0xff]
        %v2128 = vld [vmem:[#allocation10 + $0x110] sm:$0xff]
        %v2129 = vld [vmem:[#allocation10 + $0x118] sm:$0xff]
        %v2130 = vld [vmem:[#allocation10 + $0x120] sm:$0xff]
        %v2131 = vld [vmem:[#allocation10 + $0x128] sm:$0xff]
        %v2132 = vld [vmem:[#allocation10 + $0x130] sm:$0xff]
        %v2133 = vld [vmem:[#allocation10 + $0x138] sm:$0xff]
        %v2134 = vld [vmem:[#allocation10 + $0x140] sm:$0xff]
        %v2135 = vld [vmem:[#allocation10 + $0x148] sm:$0xff]
        %v2136 = vld [vmem:[#allocation10 + $0x150] sm:$0xff]
        %v2137 = vld [vmem:[#allocation10 + $0x158] sm:$0xff]
        %v2138 = vld [vmem:[#allocation10 + $0x160] sm:$0xff]
        %v2139 = vld [vmem:[#allocation10 + $0x168] sm:$0xff]
        %v2140 = vld [vmem:[#allocation10 + $0x170] sm:$0xff]
        %v2141 = vld [vmem:[#allocation10 + $0x178] sm:$0xff]
        %v2142 = vld [vmem:[#allocation10 + $0x180] sm:$0xff]
        %v2143 = vld [vmem:[#allocation10 + $0x188] sm:$0xff]
        %v2144 = vld [vmem:[#allocation10 + $0x190] sm:$0xff]
        %v2145 = vld [vmem:[#allocation10 + $0x198] sm:$0xff]
        %v2146 = vld [vmem:[#allocation10 + $0x1a0] sm:$0xff]
        %v2147 = vld [vmem:[#allocation10 + $0x1a8] sm:$0xff]
        %v2148 = vld [vmem:[#allocation10 + $0x1b0] sm:$0xff]
        %v2149 = vld [vmem:[#allocation10 + $0x1b8] sm:$0xff]
        %v2150 = vld [vmem:[#allocation10 + $0x1c0] sm:$0xff]
        %v2151 = vld [vmem:[#allocation10 + $0x1c8] sm:$0xff]
        %v2152 = vld [vmem:[#allocation10 + $0x1d0] sm:$0xff]
        %v2153 = vld [vmem:[#allocation10 + $0x1d8] sm:$0xff]
        %v2154 = vld [vmem:[#allocation10 + $0x1e0] sm:$0xff]
        %v2155 = vld [vmem:[#allocation10 + $0x1e8] sm:$0xff]
        %v2156 = vld [vmem:[#allocation10 + $0x1f0] sm:$0xff]
        %v2157 = vld [vmem:[#allocation10 + $0x1f8] sm:$0xff]
        %v2158 = vld [vmem:[#allocation10 + $0x200] sm:$0xff]
        %v2159 = vld [vmem:[#allocation10 + $0x208] sm:$0xff]
        %v2160 = vld [vmem:[#allocation10 + $0x210] sm:$0xff]
        %v2161 = vld [vmem:[#allocation10 + $0x218] sm:$0xff]
        %v2162 = vld [vmem:[#allocation10 + $0x220] sm:$0xff]
        %v2163 = vld [vmem:[#allocation10 + $0x228] sm:$0xff]
        %v2164 = vld [vmem:[#allocation10 + $0x230] sm:$0xff]
        %v2165 = vld [vmem:[#allocation10 + $0x238] sm:$0xff]
        %s2166 = scalar_lea.vmem [#allocation10], 576
        %v2167 = vld [vmem:[%s2166] sm:$0xff]
        %v2168 = vld [vmem:[%s2166 + $0x8] sm:$0xff]
        %v2169 = vld [vmem:[%s2166 + $0x10] sm:$0xff]
        %v2170 = vld [vmem:[%s2166 + $0x18] sm:$0xff]
        %v2171 = vld [vmem:[%s2166 + $0x20] sm:$0xff]
        %v2172 = vld [vmem:[%s2166 + $0x28] sm:$0xff]
        %v2173 = vld [vmem:[%s2166 + $0x30] sm:$0xff]
        %v2174 = vld [vmem:[%s2166 + $0x38] sm:$0xff]
        %v2175 = vld [vmem:[%s2166 + $0x40] sm:$0xff]
        %v2176 = vld [vmem:[%s2166 + $0x48] sm:$0xff]
        %v2177 = vld [vmem:[%s2166 + $0x50] sm:$0xff]
        %v2178 = vld [vmem:[%s2166 + $0x58] sm:$0xff]
        %v2179 = vld [vmem:[%s2166 + $0x60] sm:$0xff]
        %v2180 = vld [vmem:[%s2166 + $0x68] sm:$0xff]
        %v2181 = vld [vmem:[%s2166 + $0x70] sm:$0xff]
        %v2182 = vld [vmem:[%s2166 + $0x78] sm:$0xff]
        %v2183 = vld [vmem:[%s2166 + $0x80] sm:$0xff]
        %v2184 = vld [vmem:[%s2166 + $0x88] sm:$0xff]
        %v2185 = vld [vmem:[%s2166 + $0x90] sm:$0xff]
        %v2186 = vld [vmem:[%s2166 + $0x98] sm:$0xff]
        %v2187 = vld [vmem:[%s2166 + $0xa0] sm:$0xff]
        %v2188 = vld [vmem:[%s2166 + $0xa8] sm:$0xff]
        %v2189 = vld [vmem:[%s2166 + $0xb0] sm:$0xff]
        %v2190 = vld [vmem:[%s2166 + $0xb8] sm:$0xff]
        %v2191 = vld [vmem:[%s2166 + $0xc0] sm:$0xff]
        %v2192 = vld [vmem:[%s2166 + $0xc8] sm:$0xff]
        %v2193 = vld [vmem:[%s2166 + $0xd0] sm:$0xff]
        %v2194 = vld [vmem:[%s2166 + $0xd8] sm:$0xff]
        %v2195 = vld [vmem:[%s2166 + $0xe0] sm:$0xff]
        %v2196 = vld [vmem:[%s2166 + $0xe8] sm:$0xff]
        %v2197 = vld [vmem:[%s2166 + $0xf0] sm:$0xff]
        %v2198 = vld [vmem:[%s2166 + $0xf8] sm:$0xff]
        %v2199 = vld [vmem:[%s2166 + $0x100] sm:$0xff]
        %v2200 = vld [vmem:[%s2166 + $0x108] sm:$0xff]
        %v2201 = vld [vmem:[%s2166 + $0x110] sm:$0xff]
        %v2202 = vld [vmem:[%s2166 + $0x118] sm:$0xff]
        %v2203 = vld [vmem:[%s2166 + $0x120] sm:$0xff]
        %v2204 = vld [vmem:[%s2166 + $0x128] sm:$0xff]
        %v2205 = vld [vmem:[%s2166 + $0x130] sm:$0xff]
        %v2206 = vld [vmem:[%s2166 + $0x138] sm:$0xff]
        %v2207 = vld [vmem:[%s2166 + $0x140] sm:$0xff]
        %v2208 = vld [vmem:[%s2166 + $0x148] sm:$0xff]
        %v2209 = vld [vmem:[%s2166 + $0x150] sm:$0xff]
        %v2210 = vld [vmem:[%s2166 + $0x158] sm:$0xff]
        %v2211 = vld [vmem:[%s2166 + $0x160] sm:$0xff]
        %v2212 = vld [vmem:[%s2166 + $0x168] sm:$0xff]
        %v2213 = vld [vmem:[%s2166 + $0x170] sm:$0xff]
        %v2214 = vld [vmem:[%s2166 + $0x178] sm:$0xff]
        %v2215 = vld [vmem:[%s2166 + $0x180] sm:$0xff]
        %v2216 = vld [vmem:[%s2166 + $0x188] sm:$0xff]
        %v2217 = vld [vmem:[%s2166 + $0x190] sm:$0xff]
        %v2218 = vld [vmem:[%s2166 + $0x198] sm:$0xff]
        %v2219 = vld [vmem:[%s2166 + $0x1a0] sm:$0xff]
        %v2220 = vld [vmem:[%s2166 + $0x1a8] sm:$0xff]
        %v2221 = vld [vmem:[%s2166 + $0x1b0] sm:$0xff]
        %v2222 = vld [vmem:[%s2166 + $0x1b8] sm:$0xff]
        %v2223 = vld [vmem:[%s2166 + $0x1c0] sm:$0xff]
        %v2224 = vld [vmem:[%s2166 + $0x1c8] sm:$0xff]
        %v2225 = vld [vmem:[%s2166 + $0x1d0] sm:$0xff]
        %v2226 = vld [vmem:[%s2166 + $0x1d8] sm:$0xff]
        %v2227 = vld [vmem:[%s2166 + $0x1e0] sm:$0xff]
        %v2228 = vld [vmem:[%s2166 + $0x1e8] sm:$0xff]
        %v2229 = vld [vmem:[%s2166 + $0x1f0] sm:$0xff]
        %v2230 = vld [vmem:[%s2166 + $0x1f8] sm:$0xff]
        %v2231 = vld [vmem:[%s2166 + $0x200] sm:$0xff]
        %v2232 = vld [vmem:[%s2166 + $0x208] sm:$0xff]
        %v2233 = vld [vmem:[%s2166 + $0x210] sm:$0xff]
        %v2234 = vld [vmem:[%s2166 + $0x218] sm:$0xff]
        %v2235 = vld [vmem:[%s2166 + $0x220] sm:$0xff]
        %v2236 = vld [vmem:[%s2166 + $0x228] sm:$0xff]
        %v2237 = vld [vmem:[%s2166 + $0x230] sm:$0xff]
        %v2238 = vld [vmem:[%s2166 + $0x238] sm:$0xff]
        %v2243 = vrot.slane %v2090, 1
        %v2244 = vrot.slane %v2092, 1
        %v2245 = vsel %vm568, %v2243, %v2244
        %v2246 = vrot.slane %v2091, 1
        %v2247 = vrot.slane %v2093, 1
        %v2248 = vsel %vm568, %v2246, %v2247
        %vm2251 = vcmask 523264
        %v2252 = vsel %vm2251, %v2248, 0
        %v2254 = vsel %vm2251, %v2247, 0
        %2256 = vmatprep.subr.mxu0 %v2168
        %2257 = vmatpush1.msra.mxu0 %v2167
        %2258 = vmatprep.subr.mxu0 %v2171
        %2259 = vmatpush1.msra.mxu0 %v2170
        %2260 = vmatprep.subr.mxu0 %v2174
        %2261 = vmatpush1.msra.mxu0 %v2173
        %2262 = vmatprep.subr.mxu0 %v2177
        %2263 = vmatpush1.msra.mxu0 %v2176
        %2264 = vmatprep.subr.mxu0 %v2180
        %2265 = vmatpush1.msra.mxu0 %v2179
        %2266 = vmatprep.subr.mxu0 %v2183
        %2267 = vmatpush1.msra.mxu0 %v2182
        %2268 = vmatprep.subr.mxu0 %v2186
        %2269 = vmatpush1.msra.mxu0 %v2185
        %2270 = vmatprep.subr.mxu0 %v2189
        %2271 = vmatpush1.msra.mxu0 %v2188
        %2272 = vmatprep.subr.mxu0 %v2192
        %2273 = vmatpush1.msra.mxu0 %v2191
        %2274 = vmatprep.subr.mxu0 %v2195
        %2275 = vmatpush1.msra.mxu0 %v2194
        %2276 = vmatprep.subr.mxu0 %v2198
        %2277 = vmatpush1.msra.mxu0 %v2197
        %2278 = vmatprep.subr.mxu0 %v2201
        %2279 = vmatpush1.msra.mxu0 %v2200
        %2280 = vmatprep.subr.mxu0 %v2204
        %2281 = vmatpush1.msra.mxu0 %v2203
        %2282 = vmatprep.subr.mxu0 %v2207
        %2283 = vmatpush1.msra.mxu0 %v2206
        %2284 = vmatprep.subr.mxu0 %v2210
        %2285 = vmatpush1.msra.mxu0 %v2209
        %2286 = vmatprep.subr.mxu0 %v2213
        %2287 = vmatpush1.msra.mxu0 %v2212
        %2288 = vmatprep.subr.mxu0 %v2216
        %2289 = vmatpush1.msra.mxu0 %v2215
        %2290 = vmatprep.subr.mxu0 %v2219
        %2291 = vmatpush1.msra.mxu0 %v2218
        %2292 = vmatprep.subr.mxu0 %v2222
        %2293 = vmatpush1.msra.mxu0 %v2221
        %2294 = vmatprep.subr.mxu0 %v2225
        %2295 = vmatpush1.msra.mxu0 %v2224
        %2296 = vmatprep.subr.mxu0 %v2228
        %2297 = vmatpush1.msra.mxu0 %v2227
        %2298 = vmatprep.subr.mxu0 %v2231
        %2299 = vmatpush1.msra.mxu0 %v2230
        %2300 = vmatprep.subr.mxu0 %v2234
        %2301 = vmatpush1.msra.mxu0 %v2233
        %2302 = vmatprep.subr.mxu0 %v2237
        %2303 = vmatpush1.msra.mxu0 %v2236
        %2304 = vmatprep.subr.mxu0 0.0
        %2305 = vmatpush1.msra.mxu0 0.0
        %2306 = vmatprep.subr.mxu0 0.0
        %2307 = vmatpush1.msra.mxu0 0.0
        %2308 = vmatprep.subr.mxu0 0.0
        %2309 = vmatpush1.msra.mxu0 0.0
        %2310 = vmatprep.subr.mxu0 0.0
        %2311 = vmatpush1.msra.mxu0 0.0
        %2312 = vmatprep.subr.mxu0 0.0
        %2313 = vmatpush1.msra.mxu0 0.0
        %2314 = vmatprep.subr.mxu0 0.0
        %2315 = vmatpush1.msra.mxu0 0.0
        %2316 = vmatprep.subr.mxu0 0.0
        %2317 = vmatpush1.msra.mxu0 0.0
        %2318 = vmatprep.subr.mxu0 0.0
        %2319 = vmatpush1.msra.mxu0 0.0
        %2320 = vmatprep.mubr.f32.mxu0 %v2252
        %2321 = vmatmul.mubr.f32.gmra.mrb[0].mxu0 %v2245
        %v2322 = vpop.f32.mrb[0].mxu0
        %v2323 = vadd.f32 0.0, %v2322
        %v2324 = vpop.f32.mrb[0].mxu0
        %v2325 = vadd.f32 0.0, %v2324
        %2326 = vmatprep.mubr.f32.mxu0 %v2254
        %2327 = vmatmul.mubr.f32.gmra.mrb[0].mxu0 %v2244
        %v2328 = vpop.f32.mrb[0].mxu0
        %v2329 = vadd.f32 0.0, %v2328
        %v2330 = vpop.f32.mrb[0].mxu0
        %v2331 = vadd.f32 0.0, %v2330
        %2332 = vdwg.mxu0
        %2333 = vmatprep.subr.mxu0 0.0
        %2334 = vmatpush1.msra.mxu0 %v2169
        %2335 = vmatprep.subr.mxu0 0.0
        %2336 = vmatpush1.msra.mxu0 %v2172
        %2337 = vmatprep.subr.mxu0 0.0
        %2338 = vmatpush1.msra.mxu0 %v2175
        %2339 = vmatprep.subr.mxu0 0.0
        %2340 = vmatpush1.msra.mxu0 %v2178
        %2341 = vmatprep.subr.mxu0 0.0
        %2342 = vmatpush1.msra.mxu0 %v2181
        %2343 = vmatprep.subr.mxu0 0.0
        %2344 = vmatpush1.msra.mxu0 %v2184
        %2345 = vmatprep.subr.mxu0 0.0
        %2346 = vmatpush1.msra.mxu0 %v2187
        %2347 = vmatprep.subr.mxu0 0.0
        %2348 = vmatpush1.msra.mxu0 %v2190
        %2349 = vmatprep.subr.mxu0 0.0
        %2350 = vmatpush1.msra.mxu0 %v2193
        %2351 = vmatprep.subr.mxu0 0.0
        %2352 = vmatpush1.msra.mxu0 %v2196
        %2353 = vmatprep.subr.mxu0 0.0
        %2354 = vmatpush1.msra.mxu0 %v2199
        %2355 = vmatprep.subr.mxu0 0.0
        %2356 = vmatpush1.msra.mxu0 %v2202
        %2357 = vmatprep.subr.mxu0 0.0
        %2358 = vmatpush1.msra.mxu0 %v2205
        %2359 = vmatprep.subr.mxu0 0.0
        %2360 = vmatpush1.msra.mxu0 %v2208
        %2361 = vmatprep.subr.mxu0 0.0
        %2362 = vmatpush1.msra.mxu0 %v2211
        %2363 = vmatprep.subr.mxu0 0.0
        %2364 = vmatpush1.msra.mxu0 %v2214
        %2365 = vmatprep.subr.mxu0 0.0
        %2366 = vmatpush1.msra.mxu0 %v2217
        %2367 = vmatprep.subr.mxu0 0.0
        %2368 = vmatpush1.msra.mxu0 %v2220
        %2369 = vmatprep.subr.mxu0 0.0
        %2370 = vmatpush1.msra.mxu0 %v2223
        %2371 = vmatprep.subr.mxu0 0.0
        %2372 = vmatpush1.msra.mxu0 %v2226
        %2373 = vmatprep.subr.mxu0 0.0
        %2374 = vmatpush1.msra.mxu0 %v2229
        %2375 = vmatprep.subr.mxu0 0.0
        %2376 = vmatpush1.msra.mxu0 %v2232
        %2377 = vmatprep.subr.mxu0 0.0
        %2378 = vmatpush1.msra.mxu0 %v2235
        %2379 = vmatprep.subr.mxu0 0.0
        %2380 = vmatpush1.msra.mxu0 %v2238
        %2381 = vmatprep.subr.mxu0 0.0
        %2382 = vmatpush1.msra.mxu0 0.0
        %2383 = vmatprep.subr.mxu0 0.0
        %2384 = vmatpush1.msra.mxu0 0.0
        %2385 = vmatprep.subr.mxu0 0.0
        %2386 = vmatpush1.msra.mxu0 0.0
        %2387 = vmatprep.subr.mxu0 0.0
        %2388 = vmatpush1.msra.mxu0 0.0
        %2389 = vmatprep.subr.mxu0 0.0
        %2390 = vmatpush1.msra.mxu0 0.0
        %2391 = vmatprep.subr.mxu0 0.0
        %2392 = vmatpush1.msra.mxu0 0.0
        %2393 = vmatprep.subr.mxu0 0.0
        %2394 = vmatpush1.msra.mxu0 0.0
        %2395 = vmatprep.subr.mxu0 0.0
        %2396 = vmatpush1.msra.mxu0 0.0
        %2397 = vmatprep.mubr.f32.mxu0 %v2252
        %2398 = vmatmul.mubr.f32.gmra.mrb[0].mxu0 %v2245
        %v2399 = vpop.f32.mrb[0].mxu0
        %v2400 = vadd.f32 0.0, %v2399
        %v2401 = vpop.f32.mrb[0].mxu0
        %2402 = vmatprep.mubr.f32.mxu0 %v2254
        %2403 = vmatmul.mubr.f32.gmra.mrb[0].mxu0 %v2244
        %v2404 = vpop.f32.mrb[0].mxu0
        %v2405 = vadd.f32 0.0, %v2404
        %v2406 = vpop.f32.mrb[0].mxu0
        %2407 = vdwg.mxu0
        %v2408 = vsel %vm2251, %v2091, 0
        %v2410 = vsel %vm2251, %v2093, 0
        %2412 = vmatprep.subr.mxu0 %v2095
        %2413 = vmatpush1.msra.mxu0 %v2094
        %2414 = vmatprep.subr.mxu0 %v2098
        %2415 = vmatpush1.msra.mxu0 %v2097
        %2416 = vmatprep.subr.mxu0 %v2101
        %2417 = vmatpush1.msra.mxu0 %v2100
        %2418 = vmatprep.subr.mxu0 %v2104
        %2419 = vmatpush1.msra.mxu0 %v2103
        %2420 = vmatprep.subr.mxu0 %v2107
        %2421 = vmatpush1.msra.mxu0 %v2106
        %2422 = vmatprep.subr.mxu0 %v2110
        %2423 = vmatpush1.msra.mxu0 %v2109
        %2424 = vmatprep.subr.mxu0 %v2113
        %2425 = vmatpush1.msra.mxu0 %v2112
        %2426 = vmatprep.subr.mxu0 %v2116
        %2427 = vmatpush1.msra.mxu0 %v2115
        %2428 = vmatprep.subr.mxu0 %v2119
        %2429 = vmatpush1.msra.mxu0 %v2118
        %2430 = vmatprep.subr.mxu0 %v2122
        %2431 = vmatpush1.msra.mxu0 %v2121
        %2432 = vmatprep.subr.mxu0 %v2125
        %2433 = vmatpush1.msra.mxu0 %v2124
        %2434 = vmatprep.subr.mxu0 %v2128
        %2435 = vmatpush1.msra.mxu0 %v2127
        %2436 = vmatprep.subr.mxu0 %v2131
        %2437 = vmatpush1.msra.mxu0 %v2130
        %2438 = vmatprep.subr.mxu0 %v2134
        %2439 = vmatpush1.msra.mxu0 %v2133
        %2440 = vmatprep.subr.mxu0 %v2137
        %2441 = vmatpush1.msra.mxu0 %v2136
        %2442 = vmatprep.subr.mxu0 %v2140
        %2443 = vmatpush1.msra.mxu0 %v2139
        %2444 = vmatprep.subr.mxu0 %v2143
        %2445 = vmatpush1.msra.mxu0 %v2142
        %2446 = vmatprep.subr.mxu0 %v2146
        %2447 = vmatpush1.msra.mxu0 %v2145
        %2448 = vmatprep.subr.mxu0 %v2149
        %2449 = vmatpush1.msra.mxu0 %v2148
        %2450 = vmatprep.subr.mxu0 %v2152
        %2451 = vmatpush1.msra.mxu0 %v2151
        %2452 = vmatprep.subr.mxu0 %v2155
        %2453 = vmatpush1.msra.mxu0 %v2154
        %2454 = vmatprep.subr.mxu0 %v2158
        %2455 = vmatpush1.msra.mxu0 %v2157
        %2456 = vmatprep.subr.mxu0 %v2161
        %2457 = vmatpush1.msra.mxu0 %v2160
        %2458 = vmatprep.subr.mxu0 %v2164
        %2459 = vmatpush1.msra.mxu0 %v2163
        %2460 = vmatprep.subr.mxu0 0.0
        %2461 = vmatpush1.msra.mxu0 0.0
        %2462 = vmatprep.subr.mxu0 0.0
        %2463 = vmatpush1.msra.mxu0 0.0
        %2464 = vmatprep.subr.mxu0 0.0
        %2465 = vmatpush1.msra.mxu0 0.0
        %2466 = vmatprep.subr.mxu0 0.0
        %2467 = vmatpush1.msra.mxu0 0.0
        %2468 = vmatprep.subr.mxu0 0.0
        %2469 = vmatpush1.msra.mxu0 0.0
        %2470 = vmatprep.subr.mxu0 0.0
        %2471 = vmatpush1.msra.mxu0 0.0
        %2472 = vmatprep.subr.mxu0 0.0
        %2473 = vmatpush1.msra.mxu0 0.0
        %2474 = vmatprep.subr.mxu0 0.0
        %2475 = vmatpush1.msra.mxu0 0.0
        %2476 = vmatprep.mubr.f32.mxu0 %v2408
        %2477 = vmatmul.mubr.f32.gmra.mrb[0].mxu0 %v2090
        %v2478 = vpop.f32.mrb[0].mxu0
        %v2479 = vadd.f32 %v2323, %v2478
        %v2480 = vpop.f32.mrb[0].mxu0
        %v2481 = vadd.f32 %v2325, %v2480
        %2482 = vmatprep.mubr.f32.mxu0 %v2410
        %2483 = vmatmul.mubr.f32.gmra.mrb[0].mxu0 %v2092
        %v2484 = vpop.f32.mrb[0].mxu0
        %v2485 = vadd.f32 %v2329, %v2484
        %v2486 = vpop.f32.mrb[0].mxu0
        %v2487 = vadd.f32 %v2331, %v2486
        %2488 = vdwg.mxu0
        %2489 = vmatprep.subr.mxu0 0.0
        %2490 = vmatpush1.msra.mxu0 %v2096
        %2491 = vmatprep.subr.mxu0 0.0
        %2492 = vmatpush1.msra.mxu0 %v2099
        %2493 = vmatprep.subr.mxu0 0.0
        %2494 = vmatpush1.msra.mxu0 %v2102
        %2495 = vmatprep.subr.mxu0 0.0
        %2496 = vmatpush1.msra.mxu0 %v2105
        %2497 = vmatprep.subr.mxu0 0.0
        %2498 = vmatpush1.msra.mxu0 %v2108
        %2499 = vmatprep.subr.mxu0 0.0
        %2500 = vmatpush1.msra.mxu0 %v2111
        %2501 = vmatprep.subr.mxu0 0.0
        %2502 = vmatpush1.msra.mxu0 %v2114
        %2503 = vmatprep.subr.mxu0 0.0
        %2504 = vmatpush1.msra.mxu0 %v2117
        %2505 = vmatprep.subr.mxu0 0.0
        %2506 = vmatpush1.msra.mxu0 %v2120
        %2507 = vmatprep.subr.mxu0 0.0
        %2508 = vmatpush1.msra.mxu0 %v2123
        %2509 = vmatprep.subr.mxu0 0.0
        %2510 = vmatpush1.msra.mxu0 %v2126
        %2511 = vmatprep.subr.mxu0 0.0
        %2512 = vmatpush1.msra.mxu0 %v2129
        %2513 = vmatprep.subr.mxu0 0.0
        %2514 = vmatpush1.msra.mxu0 %v2132
        %2515 = vmatprep.subr.mxu0 0.0
        %2516 = vmatpush1.msra.mxu0 %v2135
        %2517 = vmatprep.subr.mxu0 0.0
        %2518 = vmatpush1.msra.mxu0 %v2138
        %2519 = vmatprep.subr.mxu0 0.0
        %2520 = vmatpush1.msra.mxu0 %v2141
        %2521 = vmatprep.subr.mxu0 0.0
        %2522 = vmatpush1.msra.mxu0 %v2144
        %2523 = vmatprep.subr.mxu0 0.0
        %2524 = vmatpush1.msra.mxu0 %v2147
        %2525 = vmatprep.subr.mxu0 0.0
        %2526 = vmatpush1.msra.mxu0 %v2150
        %2527 = vmatprep.subr.mxu0 0.0
        %2528 = vmatpush1.msra.mxu0 %v2153
        %2529 = vmatprep.subr.mxu0 0.0
        %2530 = vmatpush1.msra.mxu0 %v2156
        %2531 = vmatprep.subr.mxu0 0.0
        %2532 = vmatpush1.msra.mxu0 %v2159
        %2533 = vmatprep.subr.mxu0 0.0
        %2534 = vmatpush1.msra.mxu0 %v2162
        %2535 = vmatprep.subr.mxu0 0.0
        %2536 = vmatpush1.msra.mxu0 %v2165
        %2537 = vmatprep.subr.mxu0 0.0
        %2538 = vmatpush1.msra.mxu0 0.0
        %2539 = vmatprep.subr.mxu0 0.0
        %2540 = vmatpush1.msra.mxu0 0.0
        %2541 = vmatprep.subr.mxu0 0.0
        %2542 = vmatpush1.msra.mxu0 0.0
        %2543 = vmatprep.subr.mxu0 0.0
        %2544 = vmatpush1.msra.mxu0 0.0
        %2545 = vmatprep.subr.mxu0 0.0
        %2546 = vmatpush1.msra.mxu0 0.0
        %2547 = vmatprep.subr.mxu0 0.0
        %2548 = vmatpush1.msra.mxu0 0.0
        %2549 = vmatprep.subr.mxu0 0.0
        %2550 = vmatpush1.msra.mxu0 0.0
        %2551 = vmatprep.subr.mxu0 0.0
        %2552 = vmatpush1.msra.mxu0 0.0
        %2553 = vmatprep.mubr.f32.mxu0 %v2408
        %2554 = vmatmul.mubr.f32.gmra.mrb[0].mxu0 %v2090
        %v2555 = vpop.f32.mrb[0].mxu0
        %v2556 = vadd.f32 %v2400, %v2555
        %v2557 = vpop.f32.mrb[0].mxu0
        %2558 = vmatprep.mubr.f32.mxu0 %v2410
        %2559 = vmatmul.mubr.f32.gmra.mrb[0].mxu0 %v2092
        %v2560 = vpop.f32.mrb[0].mxu0
        %v2561 = vadd.f32 %v2405, %v2560
        %v2562 = vpop.f32.mrb[0].mxu0
        %2563 = vdwg.mxu0
        %s2564 = scalar_lea.vmem [#allocation10], 1152
        %v2565 = vld [vmem:[%s2564] sm:$0xff]
        %v2566 = vld [vmem:[%s2564 + $0x8] sm:$0xff]
        %v2567 = vld [vmem:[%s2564 + $0x10] sm:$0xff]
        %v2568 = vld [vmem:[%s2564 + $0x18] sm:$0xff]
        %v2569 = vld [vmem:[%s2564 + $0x20] sm:$0xff]
        %v2570 = vld [vmem:[%s2564 + $0x28] sm:$0xff]
        %v2571 = vld [vmem:[%s2564 + $0x30] sm:$0xff]
        %v2572 = vld [vmem:[%s2564 + $0x38] sm:$0xff]
        %v2573 = vld [vmem:[%s2564 + $0x40] sm:$0xff]
        %v2574 = vld [vmem:[%s2564 + $0x48] sm:$0xff]
        %v2575 = vld [vmem:[%s2564 + $0x50] sm:$0xff]
        %v2576 = vld [vmem:[%s2564 + $0x58] sm:$0xff]
        %v2577 = vld [vmem:[%s2564 + $0x60] sm:$0xff]
        %v2578 = vld [vmem:[%s2564 + $0x68] sm:$0xff]
        %v2579 = vld [vmem:[%s2564 + $0x70] sm:$0xff]
        %v2580 = vld [vmem:[%s2564 + $0x78] sm:$0xff]
        %v2581 = vld [vmem:[%s2564 + $0x80] sm:$0xff]
        %v2582 = vld [vmem:[%s2564 + $0x88] sm:$0xff]
        %v2583 = vld [vmem:[%s2564 + $0x90] sm:$0xff]
        %v2584 = vld [vmem:[%s2564 + $0x98] sm:$0xff]
        %v2585 = vld [vmem:[%s2564 + $0xa0] sm:$0xff]
        %v2586 = vld [vmem:[%s2564 + $0xa8] sm:$0xff]
        %v2587 = vld [vmem:[%s2564 + $0xb0] sm:$0xff]
        %v2588 = vld [vmem:[%s2564 + $0xb8] sm:$0xff]
        %v2589 = vld [vmem:[%s2564 + $0xc0] sm:$0xff]
        %v2590 = vld [vmem:[%s2564 + $0xc8] sm:$0xff]
        %v2591 = vld [vmem:[%s2564 + $0xd0] sm:$0xff]
        %v2592 = vld [vmem:[%s2564 + $0xd8] sm:$0xff]
        %v2593 = vld [vmem:[%s2564 + $0xe0] sm:$0xff]
        %v2594 = vld [vmem:[%s2564 + $0xe8] sm:$0xff]
        %v2595 = vld [vmem:[%s2564 + $0xf0] sm:$0xff]
        %v2596 = vld [vmem:[%s2564 + $0xf8] sm:$0xff]
        %v2597 = vld [vmem:[%s2564 + $0x100] sm:$0xff]
        %v2598 = vld [vmem:[%s2564 + $0x108] sm:$0xff]
        %v2599 = vld [vmem:[%s2564 + $0x110] sm:$0xff]
        %v2600 = vld [vmem:[%s2564 + $0x118] sm:$0xff]
        %v2601 = vld [vmem:[%s2564 + $0x120] sm:$0xff]
        %v2602 = vld [vmem:[%s2564 + $0x128] sm:$0xff]
        %v2603 = vld [vmem:[%s2564 + $0x130] sm:$0xff]
        %v2604 = vld [vmem:[%s2564 + $0x138] sm:$0xff]
        %v2605 = vld [vmem:[%s2564 + $0x140] sm:$0xff]
        %v2606 = vld [vmem:[%s2564 + $0x148] sm:$0xff]
        %v2607 = vld [vmem:[%s2564 + $0x150] sm:$0xff]
        %v2608 = vld [vmem:[%s2564 + $0x158] sm:$0xff]
        %v2609 = vld [vmem:[%s2564 + $0x160] sm:$0xff]
        %v2610 = vld [vmem:[%s2564 + $0x168] sm:$0xff]
        %v2611 = vld [vmem:[%s2564 + $0x170] sm:$0xff]
        %v2612 = vld [vmem:[%s2564 + $0x178] sm:$0xff]
        %v2613 = vld [vmem:[%s2564 + $0x180] sm:$0xff]
        %v2614 = vld [vmem:[%s2564 + $0x188] sm:$0xff]
        %v2615 = vld [vmem:[%s2564 + $0x190] sm:$0xff]
        %v2616 = vld [vmem:[%s2564 + $0x198] sm:$0xff]
        %v2617 = vld [vmem:[%s2564 + $0x1a0] sm:$0xff]
        %v2618 = vld [vmem:[%s2564 + $0x1a8] sm:$0xff]
        %v2619 = vld [vmem:[%s2564 + $0x1b0] sm:$0xff]
        %v2620 = vld [vmem:[%s2564 + $0x1b8] sm:$0xff]
        %v2621 = vld [vmem:[%s2564 + $0x1c0] sm:$0xff]
        %v2622 = vld [vmem:[%s2564 + $0x1c8] sm:$0xff]
        %v2623 = vld [vmem:[%s2564 + $0x1d0] sm:$0xff]
        %v2624 = vld [vmem:[%s2564 + $0x1d8] sm:$0xff]
        %v2625 = vld [vmem:[%s2564 + $0x1e0] sm:$0xff]
        %v2626 = vld [vmem:[%s2564 + $0x1e8] sm:$0xff]
        %v2627 = vld [vmem:[%s2564 + $0x1f0] sm:$0xff]
        %v2628 = vld [vmem:[%s2564 + $0x1f8] sm:$0xff]
        %v2629 = vld [vmem:[%s2564 + $0x200] sm:$0xff]
        %v2630 = vld [vmem:[%s2564 + $0x208] sm:$0xff]
        %v2631 = vld [vmem:[%s2564 + $0x210] sm:$0xff]
        %v2632 = vld [vmem:[%s2564 + $0x218] sm:$0xff]
        %v2633 = vld [vmem:[%s2564 + $0x220] sm:$0xff]
        %v2634 = vld [vmem:[%s2564 + $0x228] sm:$0xff]
        %v2635 = vld [vmem:[%s2564 + $0x230] sm:$0xff]
        %v2636 = vld [vmem:[%s2564 + $0x238] sm:$0xff]
        %v2637 = vrot.slane %v2090, 2
        %v2638 = vrot.slane %v2092, 2
        %v2639 = vsel %vm776, %v2637, %v2638
        %v2640 = vrot.slane %v2091, 2
        %v2641 = vrot.slane %v2093, 2
        %v2642 = vsel %vm776, %v2640, %v2641
        %v2645 = vsel %vm2251, %v2642, 0
        %v2647 = vsel %vm2251, %v2641, 0
        %2649 = vmatprep.subr.mxu0 %v2566
        %2650 = vmatpush1.msra.mxu0 %v2565
        %2651 = vmatprep.subr.mxu0 %v2569
        %2652 = vmatpush1.msra.mxu0 %v2568
        %2653 = vmatprep.subr.mxu0 %v2572
        %2654 = vmatpush1.msra.mxu0 %v2571
        %2655 = vmatprep.subr.mxu0 %v2575
        %2656 = vmatpush1.msra.mxu0 %v2574
        %2657 = vmatprep.subr.mxu0 %v2578
        %2658 = vmatpush1.msra.mxu0 %v2577
        %2659 = vmatprep.subr.mxu0 %v2581
        %2660 = vmatpush1.msra.mxu0 %v2580
        %2661 = vmatprep.subr.mxu0 %v2584
        %2662 = vmatpush1.msra.mxu0 %v2583
        %2663 = vmatprep.subr.mxu0 %v2587
        %2664 = vmatpush1.msra.mxu0 %v2586
        %2665 = vmatprep.subr.mxu0 %v2590
        %2666 = vmatpush1.msra.mxu0 %v2589
        %2667 = vmatprep.subr.mxu0 %v2593
        %2668 = vmatpush1.msra.mxu0 %v2592
        %2669 = vmatprep.subr.mxu0 %v2596
        %2670 = vmatpush1.msra.mxu0 %v2595
        %2671 = vmatprep.subr.mxu0 %v2599
        %2672 = vmatpush1.msra.mxu0 %v2598
        %2673 = vmatprep.subr.mxu0 %v2602
        %2674 = vmatpush1.msra.mxu0 %v2601
        %2675 = vmatprep.subr.mxu0 %v2605
        %2676 = vmatpush1.msra.mxu0 %v2604
        %2677 = vmatprep.subr.mxu0 %v2608
        %2678 = vmatpush1.msra.mxu0 %v2607
        %2679 = vmatprep.subr.mxu0 %v2611
        %2680 = vmatpush1.msra.mxu0 %v2610
        %2681 = vmatprep.subr.mxu0 %v2614
        %2682 = vmatpush1.msra.mxu0 %v2613
        %2683 = vmatprep.subr.mxu0 %v2617
        %2684 = vmatpush1.msra.mxu0 %v2616
        %2685 = vmatprep.subr.mxu0 %v2620
        %2686 = vmatpush1.msra.mxu0 %v2619
        %2687 = vmatprep.subr.mxu0 %v2623
        %2688 = vmatpush1.msra.mxu0 %v2622
        %2689 = vmatprep.subr.mxu0 %v2626
        %2690 = vmatpush1.msra.mxu0 %v2625
        %2691 = vmatprep.subr.mxu0 %v2629
        %2692 = vmatpush1.msra.mxu0 %v2628
        %2693 = vmatprep.subr.mxu0 %v2632
        %2694 = vmatpush1.msra.mxu0 %v2631
        %2695 = vmatprep.subr.mxu0 %v2635
        %2696 = vmatpush1.msra.mxu0 %v2634
        %2697 = vmatprep.subr.mxu0 0.0
        %2698 = vmatpush1.msra.mxu0 0.0
        %2699 = vmatprep.subr.mxu0 0.0
        %2700 = vmatpush1.msra.mxu0 0.0
        %2701 = vmatprep.subr.mxu0 0.0
        %2702 = vmatpush1.msra.mxu0 0.0
        %2703 = vmatprep.subr.mxu0 0.0
        %2704 = vmatpush1.msra.mxu0 0.0
        %2705 = vmatprep.subr.mxu0 0.0
        %2706 = vmatpush1.msra.mxu0 0.0
        %2707 = vmatprep.subr.mxu0 0.0
        %2708 = vmatpush1.msra.mxu0 0.0
        %2709 = vmatprep.subr.mxu0 0.0
        %2710 = vmatpush1.msra.mxu0 0.0
        %2711 = vmatprep.subr.mxu0 0.0
        %2712 = vmatpush1.msra.mxu0 0.0
        %2713 = vmatprep.mubr.f32.mxu0 %v2645
        %2714 = vmatmul.mubr.f32.gmra.mrb[0].mxu0 %v2639
        %v2715 = vpop.f32.mrb[0].mxu0
        %v2716 = vadd.f32 0.0, %v2715
        %v2717 = vpop.f32.mrb[0].mxu0
        %v2718 = vadd.f32 0.0, %v2717
        %2719 = vmatprep.mubr.f32.mxu0 %v2647
        %2720 = vmatmul.mubr.f32.gmra.mrb[0].mxu0 %v2638
        %v2721 = vpop.f32.mrb[0].mxu0
        %v2722 = vadd.f32 0.0, %v2721
        %v2723 = vpop.f32.mrb[0].mxu0
        %v2724 = vadd.f32 0.0, %v2723
        %2725 = vdwg.mxu0
        %2726 = vmatprep.subr.mxu0 0.0
        %2727 = vmatpush1.msra.mxu0 %v2567
        %2728 = vmatprep.subr.mxu0 0.0
        %2729 = vmatpush1.msra.mxu0 %v2570
        %2730 = vmatprep.subr.mxu0 0.0
        %2731 = vmatpush1.msra.mxu0 %v2573
        %2732 = vmatprep.subr.mxu0 0.0
        %2733 = vmatpush1.msra.mxu0 %v2576
        %2734 = vmatprep.subr.mxu0 0.0
        %2735 = vmatpush1.msra.mxu0 %v2579
        %2736 = vmatprep.subr.mxu0 0.0
        %2737 = vmatpush1.msra.mxu0 %v2582
        %2738 = vmatprep.subr.mxu0 0.0
        %2739 = vmatpush1.msra.mxu0 %v2585
        %2740 = vmatprep.subr.mxu0 0.0
        %2741 = vmatpush1.msra.mxu0 %v2588
        %2742 = vmatprep.subr.mxu0 0.0
        %2743 = vmatpush1.msra.mxu0 %v2591
        %2744 = vmatprep.subr.mxu0 0.0
        %2745 = vmatpush1.msra.mxu0 %v2594
        %2746 = vmatprep.subr.mxu0 0.0
        %2747 = vmatpush1.msra.mxu0 %v2597
        %2748 = vmatprep.subr.mxu0 0.0
        %2749 = vmatpush1.msra.mxu0 %v2600
        %2750 = vmatprep.subr.mxu0 0.0
        %2751 = vmatpush1.msra.mxu0 %v2603
        %2752 = vmatprep.subr.mxu0 0.0
        %2753 = vmatpush1.msra.mxu0 %v2606
        %2754 = vmatprep.subr.mxu0 0.0
        %2755 = vmatpush1.msra.mxu0 %v2609
        %2756 = vmatprep.subr.mxu0 0.0
        %2757 = vmatpush1.msra.mxu0 %v2612
        %2758 = vmatprep.subr.mxu0 0.0
        %2759 = vmatpush1.msra.mxu0 %v2615
        %2760 = vmatprep.subr.mxu0 0.0
        %2761 = vmatpush1.msra.mxu0 %v2618
        %2762 = vmatprep.subr.mxu0 0.0
        %2763 = vmatpush1.msra.mxu0 %v2621
        %2764 = vmatprep.subr.mxu0 0.0
        %2765 = vmatpush1.msra.mxu0 %v2624
        %2766 = vmatprep.subr.mxu0 0.0
        %2767 = vmatpush1.msra.mxu0 %v2627
        %2768 = vmatprep.subr.mxu0 0.0
        %2769 = vmatpush1.msra.mxu0 %v2630
        %2770 = vmatprep.subr.mxu0 0.0
        %2771 = vmatpush1.msra.mxu0 %v2633
        %2772 = vmatprep.subr.mxu0 0.0
        %2773 = vmatpush1.msra.mxu0 %v2636
        %2774 = vmatprep.subr.mxu0 0.0
        %2775 = vmatpush1.msra.mxu0 0.0
        %2776 = vmatprep.subr.mxu0 0.0
        %2777 = vmatpush1.msra.mxu0 0.0
        %2778 = vmatprep.subr.mxu0 0.0
        %2779 = vmatpush1.msra.mxu0 0.0
        %2780 = vmatprep.subr.mxu0 0.0
        %2781 = vmatpush1.msra.mxu0 0.0
        %2782 = vmatprep.subr.mxu0 0.0
        %2783 = vmatpush1.msra.mxu0 0.0
        %2784 = vmatprep.subr.mxu0 0.0
        %2785 = vmatpush1.msra.mxu0 0.0
        %2786 = vmatprep.subr.mxu0 0.0
        %2787 = vmatpush1.msra.mxu0 0.0
        %2788 = vmatprep.subr.mxu0 0.0
        %2789 = vmatpush1.msra.mxu0 0.0
        %2790 = vmatprep.mubr.f32.mxu0 %v2645
        %2791 = vmatmul.mubr.f32.gmra.mrb[0].mxu0 %v2639
        %v2792 = vpop.f32.mrb[0].mxu0
        %v2793 = vadd.f32 0.0, %v2792
        %v2794 = vpop.f32.mrb[0].mxu0
        %2795 = vmatprep.mubr.f32.mxu0 %v2647
        %2796 = vmatmul.mubr.f32.gmra.mrb[0].mxu0 %v2638
        %v2797 = vpop.f32.mrb[0].mxu0
        %v2798 = vadd.f32 0.0, %v2797
        %v2799 = vpop.f32.mrb[0].mxu0
        %2800 = vdwg.mxu0
        %v2801 = vadd.f32 %v2479, %v2716
        %v2802 = vadd.f32 %v2481, %v2718
        %v2803 = vadd.f32 %v2556, %v2793
        %v2804 = vadd.f32 %v2485, %v2722
        %v2805 = vadd.f32 %v2487, %v2724
        %v2806 = vadd.f32 %v2561, %v2798
        %v2807 = vld [vmem:[#allocation12] sm:$0x7]
        %v2809 = vlaneseq
        %v2810 = vshrl.u32 %v2809, 7
        %v2811 = vsub.s32 0, %v2810
        %v2812 = vrot.slane %v2807, %v2811
        %v2813 = vlaneseq
        %v2814 = vshrl.u32 %v2813, 7
        %v2815 = vsub.s32 1, %v2814
        %v2816 = vrot.slane %v2807, %v2815
        %v2817 = vlaneseq
        %v2818 = vshrl.u32 %v2817, 7
        %v2819 = vsub.s32 2, %v2818
        %v2820 = vrot.slane %v2807, %v2819
        %v2824 = vadd.f32 %v2801, %v2812
        %v2825 = vadd.f32 %v2802, %v2816
        %v2826 = vadd.f32 %v2803, %v2820
        %v2827 = vadd.f32 %v2804, %v2812
        %v2828 = vadd.f32 %v2805, %v2816
        %v2829 = vadd.f32 %v2806, %v2820
        %v2830 = vmax.f32 %v2824, 0.0
        %v2831 = vmax.f32 %v2825, 0.0
        %v2832 = vmax.f32 %v2826, 0.0
        %v2833 = vmax.f32 %v2827, 0.0
        %v2834 = vmax.f32 %v2828, 0.0
        %v2835 = vmax.f32 %v2829, 0.0
        %v2836 = vld [vmem:[%s11] sm:$0x1f]
        %vm2837 = vcmask 80896
        %v2839 = vsel %vm2837, %v2836, 0
        %vm2841 = vcmask 1041408
        %v2843 = vsel %vm2841, %v2833, 0
        %v2846 = vsel %vm2841, %v2834, 0
        %v2849 = vsel %vm2841, %v2835, 0
        %2851 = vmatprep.subr.mxu0 %v2831
        %2852 = vmatpush1.msra.mxu0 %v2830
        %2853 = vmatprep.subr.mxu0 %v2846
        %2854 = vmatpush1.msra.mxu0 %v2843
        %2855 = vmatprep.subr.mxu0 0.0
        %2856 = vmatpush1.msra.mxu0 0.0
        %2857 = vmatprep.subr.mxu0 0.0
        %2858 = vmatpush1.msra.mxu0 0.0
        %2859 = vmatprep.subr.mxu0 0.0
        %2860 = vmatpush1.msra.mxu0 0.0
        %2861 = vmatprep.subr.mxu0 0.0
        %2862 = vmatpush1.msra.mxu0 0.0
        %2863 = vmatprep.subr.mxu0 0.0
        %2864 = vmatpush1.msra.mxu0 0.0
        %2865 = vmatprep.subr.mxu0 0.0
        %2866 = vmatpush1.msra.mxu0 0.0
        %2867 = vmatprep.subr.mxu0 0.0
        %2868 = vmatpush1.msra.mxu0 0.0
        %2869 = vmatprep.subr.mxu0 0.0
        %2870 = vmatpush1.msra.mxu0 0.0
        %2871 = vmatprep.subr.mxu0 0.0
        %2872 = vmatpush1.msra.mxu0 0.0
        %2873 = vmatprep.subr.mxu0 0.0
        %2874 = vmatpush1.msra.mxu0 0.0
        %2875 = vmatprep.subr.mxu0 0.0
        %2876 = vmatpush1.msra.mxu0 0.0
        %2877 = vmatprep.subr.mxu0 0.0
        %2878 = vmatpush1.msra.mxu0 0.0
        %2879 = vmatprep.subr.mxu0 0.0
        %2880 = vmatpush1.msra.mxu0 0.0
        %2881 = vmatprep.subr.mxu0 0.0
        %2882 = vmatpush1.msra.mxu0 0.0
        %2883 = vmatprep.subr.mxu0 0.0
        %2884 = vmatpush1.msra.mxu0 0.0
        %2885 = vmatprep.subr.mxu0 0.0
        %2886 = vmatpush1.msra.mxu0 0.0
        %2887 = vmatprep.subr.mxu0 0.0
        %2888 = vmatpush1.msra.mxu0 0.0
        %2889 = vmatprep.subr.mxu0 0.0
        %2890 = vmatpush1.msra.mxu0 0.0
        %2891 = vmatprep.subr.mxu0 0.0
        %2892 = vmatpush1.msra.mxu0 0.0
        %2893 = vmatprep.subr.mxu0 0.0
        %2894 = vmatpush1.msra.mxu0 0.0
        %2895 = vmatprep.subr.mxu0 0.0
        %2896 = vmatpush1.msra.mxu0 0.0
        %2897 = vmatprep.subr.mxu0 0.0
        %2898 = vmatpush1.msra.mxu0 0.0
        %2899 = vmatprep.subr.mxu0 0.0
        %2900 = vmatpush1.msra.mxu0 0.0
        %2901 = vmatprep.subr.mxu0 0.0
        %2902 = vmatpush1.msra.mxu0 0.0
        %2903 = vmatprep.subr.mxu0 0.0
        %2904 = vmatpush1.msra.mxu0 0.0
        %2905 = vmatprep.subr.mxu0 0.0
        %2906 = vmatpush1.msra.mxu0 0.0
        %2907 = vmatprep.subr.mxu0 0.0
        %2908 = vmatpush1.msra.mxu0 0.0
        %2909 = vmatprep.subr.mxu0 0.0
        %2910 = vmatpush1.msra.mxu0 0.0
        %2911 = vmatprep.subr.mxu0 0.0
        %2912 = vmatpush1.msra.mxu0 0.0
        %2913 = vmatprep.subr.mxu0 0.0
        %2914 = vmatpush1.msra.mxu0 0.0
        %2915 = vmatprep.mubr.f32.mxu0 0.0
        %2916 = vmatmul.mubr.f32.gmra.mrb[0].mxu0 %v2839
        %v2917 = vpop.f32.mrb[0].mxu0
        %v2918 = vadd.f32 0.0, %v2917
        %v2919 = vpop.f32.mrb[0].mxu0
        %v2920 = vadd.f32 0.0, %v2919
        %2921 = vdwg.mxu0
        %2922 = vmatprep.subr.mxu0 0.0
        %2923 = vmatpush1.msra.mxu0 %v2832
        %2924 = vmatprep.subr.mxu0 0.0
        %2925 = vmatpush1.msra.mxu0 %v2849
        %2926 = vmatprep.subr.mxu0 0.0
        %2927 = vmatpush1.msra.mxu0 0.0
        %2928 = vmatprep.subr.mxu0 0.0
        %2929 = vmatpush1.msra.mxu0 0.0
        %2930 = vmatprep.subr.mxu0 0.0
        %2931 = vmatpush1.msra.mxu0 0.0
        %2932 = vmatprep.subr.mxu0 0.0
        %2933 = vmatpush1.msra.mxu0 0.0
        %2934 = vmatprep.subr.mxu0 0.0
        %2935 = vmatpush1.msra.mxu0 0.0
        %2936 = vmatprep.subr.mxu0 0.0
        %2937 = vmatpush1.msra.mxu0 0.0
        %2938 = vmatprep.subr.mxu0 0.0
        %2939 = vmatpush1.msra.mxu0 0.0
        %2940 = vmatprep.subr.mxu0 0.0
        %2941 = vmatpush1.msra.mxu0 0.0
        %2942 = vmatprep.subr.mxu0 0.0
        %2943 = vmatpush1.msra.mxu0 0.0
        %2944 = vmatprep.subr.mxu0 0.0
        %2945 = vmatpush1.msra.mxu0 0.0
        %2946 = vmatprep.subr.mxu0 0.0
        %2947 = vmatpush1.msra.mxu0 0.0
        %2948 = vmatprep.subr.mxu0 0.0
        %2949 = vmatpush1.msra.mxu0 0.0
        %2950 = vmatprep.subr.mxu0 0.0
        %2951 = vmatpush1.msra.mxu0 0.0
        %2952 = vmatprep.subr.mxu0 0.0
        %2953 = vmatpush1.msra.mxu0 0.0
        %2954 = vmatprep.subr.mxu0 0.0
        %2955 = vmatpush1.msra.mxu0 0.0
        %2956 = vmatprep.subr.mxu0 0.0
        %2957 = vmatpush1.msra.mxu0 0.0
        %2958 = vmatprep.subr.mxu0 0.0
        %2959 = vmatpush1.msra.mxu0 0.0
        %2960 = vmatprep.subr.mxu0 0.0
        %2961 = vmatpush1.msra.mxu0 0.0
        %2962 = vmatprep.subr.mxu0 0.0
        %2963 = vmatpush1.msra.mxu0 0.0
        %2964 = vmatprep.subr.mxu0 0.0
        %2965 = vmatpush1.msra.mxu0 0.0
        %2966 = vmatprep.subr.mxu0 0.0
        %2967 = vmatpush1.msra.mxu0 0.0
        %2968 = vmatprep.subr.mxu0 0.0
        %2969 = vmatpush1.msra.mxu0 0.0
        %2970 = vmatprep.subr.mxu0 0.0
        %2971 = vmatpush1.msra.mxu0 0.0
        %2972 = vmatprep.subr.mxu0 0.0
        %2973 = vmatpush1.msra.mxu0 0.0
        %2974 = vmatprep.subr.mxu0 0.0
        %2975 = vmatpush1.msra.mxu0 0.0
        %2976 = vmatprep.subr.mxu0 0.0
        %2977 = vmatpush1.msra.mxu0 0.0
        %2978 = vmatprep.subr.mxu0 0.0
        %2979 = vmatpush1.msra.mxu0 0.0
        %2980 = vmatprep.subr.mxu0 0.0
        %2981 = vmatpush1.msra.mxu0 0.0
        %2982 = vmatprep.subr.mxu0 0.0
        %2983 = vmatpush1.msra.mxu0 0.0
        %2984 = vmatprep.subr.mxu0 0.0
        %2985 = vmatpush1.msra.mxu0 0.0
        %2986 = vmatprep.mubr.f32.mxu0 0.0
        %2987 = vmatmul.mubr.f32.gmra.mrb[0].mxu0 %v2839
        %v2988 = vpop.f32.mrb[0].mxu0
        %v2989 = vadd.f32 0.0, %v2988
        %v2990 = vpop.f32.mrb[0].mxu0
        %2991 = vdwg.mxu0
        %s2992 = scalar_lea.vmem %s11, 8
        %v2993 = vld [vmem:[%s2992] sm:$0x1f]
        %v2995 = vsel %vm2837, %v2993, 0
        %2997 = vmatprep.subr.mxu0 %v2831
        %2998 = vmatpush1.msra.mxu0 %v2830
        %2999 = vmatprep.subr.mxu0 %v2846
        %3000 = vmatpush1.msra.mxu0 %v2843
        %3001 = vmatprep.subr.mxu0 0.0
        %3002 = vmatpush1.msra.mxu0 0.0
        %3003 = vmatprep.subr.mxu0 0.0
        %3004 = vmatpush1.msra.mxu0 0.0
        %3005 = vmatprep.subr.mxu0 0.0
        %3006 = vmatpush1.msra.mxu0 0.0
        %3007 = vmatprep.subr.mxu0 0.0
        %3008 = vmatpush1.msra.mxu0 0.0
        %3009 = vmatprep.subr.mxu0 0.0
        %3010 = vmatpush1.msra.mxu0 0.0
        %3011 = vmatprep.subr.mxu0 0.0
        %3012 = vmatpush1.msra.mxu0 0.0
        %3013 = vmatprep.subr.mxu0 0.0
        %3014 = vmatpush1.msra.mxu0 0.0
        %3015 = vmatprep.subr.mxu0 0.0
        %3016 = vmatpush1.msra.mxu0 0.0
        %3017 = vmatprep.subr.mxu0 0.0
        %3018 = vmatpush1.msra.mxu0 0.0
        %3019 = vmatprep.subr.mxu0 0.0
        %3020 = vmatpush1.msra.mxu0 0.0
        %3021 = vmatprep.subr.mxu0 0.0
        %3022 = vmatpush1.msra.mxu0 0.0
        %3023 = vmatprep.subr.mxu0 0.0
        %3024 = vmatpush1.msra.mxu0 0.0
        %3025 = vmatprep.subr.mxu0 0.0
        %3026 = vmatpush1.msra.mxu0 0.0
        %3027 = vmatprep.subr.mxu0 0.0
        %3028 = vmatpush1.msra.mxu0 0.0
        %3029 = vmatprep.subr.mxu0 0.0
        %3030 = vmatpush1.msra.mxu0 0.0
        %3031 = vmatprep.subr.mxu0 0.0
        %3032 = vmatpush1.msra.mxu0 0.0
        %3033 = vmatprep.subr.mxu0 0.0
        %3034 = vmatpush1.msra.mxu0 0.0
        %3035 = vmatprep.subr.mxu0 0.0
        %3036 = vmatpush1.msra.mxu0 0.0
        %3037 = vmatprep.subr.mxu0 0.0
        %3038 = vmatpush1.msra.mxu0 0.0
        %3039 = vmatprep.subr.mxu0 0.0
        %3040 = vmatpush1.msra.mxu0 0.0
        %3041 = vmatprep.subr.mxu0 0.0
        %3042 = vmatpush1.msra.mxu0 0.0
        %3043 = vmatprep.subr.mxu0 0.0
        %3044 = vmatpush1.msra.mxu0 0.0
        %3045 = vmatprep.subr.mxu0 0.0
        %3046 = vmatpush1.msra.mxu0 0.0
        %3047 = vmatprep.subr.mxu0 0.0
        %3048 = vmatpush1.msra.mxu0 0.0
        %3049 = vmatprep.subr.mxu0 0.0
        %3050 = vmatpush1.msra.mxu0 0.0
        %3051 = vmatprep.subr.mxu0 0.0
        %3052 = vmatpush1.msra.mxu0 0.0
        %3053 = vmatprep.subr.mxu0 0.0
        %3054 = vmatpush1.msra.mxu0 0.0
        %3055 = vmatprep.subr.mxu0 0.0
        %3056 = vmatpush1.msra.mxu0 0.0
        %3057 = vmatprep.subr.mxu0 0.0
        %3058 = vmatpush1.msra.mxu0 0.0
        %3059 = vmatprep.subr.mxu0 0.0
        %3060 = vmatpush1.msra.mxu0 0.0
        %3061 = vmatprep.mubr.f32.mxu0 0.0
        %3062 = vmatmul.mubr.f32.gmra.mrb[0].mxu0 %v2995
        %v3063 = vpop.f32.mrb[0].mxu0
        %v3064 = vadd.f32 0.0, %v3063
        %v3065 = vpop.f32.mrb[0].mxu0
        %v3066 = vadd.f32 0.0, %v3065
        %3067 = vdwg.mxu0
        %3068 = vmatprep.subr.mxu0 0.0
        %3069 = vmatpush1.msra.mxu0 %v2832
        %3070 = vmatprep.subr.mxu0 0.0
        %3071 = vmatpush1.msra.mxu0 %v2849
        %3072 = vmatprep.subr.mxu0 0.0
        %3073 = vmatpush1.msra.mxu0 0.0
        %3074 = vmatprep.subr.mxu0 0.0
        %3075 = vmatpush1.msra.mxu0 0.0
        %3076 = vmatprep.subr.mxu0 0.0
        %3077 = vmatpush1.msra.mxu0 0.0
        %3078 = vmatprep.subr.mxu0 0.0
        %3079 = vmatpush1.msra.mxu0 0.0
        %3080 = vmatprep.subr.mxu0 0.0
        %3081 = vmatpush1.msra.mxu0 0.0
        %3082 = vmatprep.subr.mxu0 0.0
        %3083 = vmatpush1.msra.mxu0 0.0
        %3084 = vmatprep.subr.mxu0 0.0
        %3085 = vmatpush1.msra.mxu0 0.0
        %3086 = vmatprep.subr.mxu0 0.0
        %3087 = vmatpush1.msra.mxu0 0.0
        %3088 = vmatprep.subr.mxu0 0.0
        %3089 = vmatpush1.msra.mxu0 0.0
        %3090 = vmatprep.subr.mxu0 0.0
        %3091 = vmatpush1.msra.mxu0 0.0
        %3092 = vmatprep.subr.mxu0 0.0
        %3093 = vmatpush1.msra.mxu0 0.0
        %3094 = vmatprep.subr.mxu0 0.0
        %3095 = vmatpush1.msra.mxu0 0.0
        %3096 = vmatprep.subr.mxu0 0.0
        %3097 = vmatpush1.msra.mxu0 0.0
        %3098 = vmatprep.subr.mxu0 0.0
        %3099 = vmatpush1.msra.mxu0 0.0
        %3100 = vmatprep.subr.mxu0 0.0
        %3101 = vmatpush1.msra.mxu0 0.0
        %3102 = vmatprep.subr.mxu0 0.0
        %3103 = vmatpush1.msra.mxu0 0.0
        %3104 = vmatprep.subr.mxu0 0.0
        %3105 = vmatpush1.msra.mxu0 0.0
        %3106 = vmatprep.subr.mxu0 0.0
        %3107 = vmatpush1.msra.mxu0 0.0
        %3108 = vmatprep.subr.mxu0 0.0
        %3109 = vmatpush1.msra.mxu0 0.0
        %3110 = vmatprep.subr.mxu0 0.0
        %3111 = vmatpush1.msra.mxu0 0.0
        %3112 = vmatprep.subr.mxu0 0.0
        %3113 = vmatpush1.msra.mxu0 0.0
        %3114 = vmatprep.subr.mxu0 0.0
        %3115 = vmatpush1.msra.mxu0 0.0
        %3116 = vmatprep.subr.mxu0 0.0
        %3117 = vmatpush1.msra.mxu0 0.0
        %3118 = vmatprep.subr.mxu0 0.0
        %3119 = vmatpush1.msra.mxu0 0.0
        %3120 = vmatprep.subr.mxu0 0.0
        %3121 = vmatpush1.msra.mxu0 0.0
        %3122 = vmatprep.subr.mxu0 0.0
        %3123 = vmatpush1.msra.mxu0 0.0
        %3124 = vmatprep.subr.mxu0 0.0
        %3125 = vmatpush1.msra.mxu0 0.0
        %3126 = vmatprep.subr.mxu0 0.0
        %3127 = vmatpush1.msra.mxu0 0.0
        %3128 = vmatprep.subr.mxu0 0.0
        %3129 = vmatpush1.msra.mxu0 0.0
        %3130 = vmatprep.subr.mxu0 0.0
        %3131 = vmatpush1.msra.mxu0 0.0
        %3132 = vmatprep.mubr.f32.mxu0 0.0
        %3133 = vmatmul.mubr.f32.gmra.mrb[0].mxu0 %v2995
        %v3134 = vpop.f32.mrb[0].mxu0
        %v3135 = vadd.f32 0.0, %v3134
        %v3136 = vpop.f32.mrb[0].mxu0
        %3137 = vdwg.mxu0
        %v3138 = vmax.f32 %v2918, %v3064
        %v3139 = vmax.f32 %v2920, %v3066
        %v3140 = vmax.f32 %v2989, %v3135
        %v3141 = vld [vmem:[%s12] sm:$0xff]
        %v3142 = vld [vmem:[%s12 + $0x8] sm:$0xff]
        %v3143 = vld [vmem:[%s12 + $0x10] sm:$0xff]
        %v3144 = vld [vmem:[%s12 + $0x18] sm:$0xff]
        %v3145 = vld [vmem:[%s12 + $0x20] sm:$0xff]
        %v3146 = vld [vmem:[%s12 + $0x28] sm:$0xff]
        %v3147 = vld [vmem:[%s12 + $0x30] sm:$0xff]
        %v3148 = vld [vmem:[%s12 + $0x38] sm:$0xff]
        %v3149 = vld [vmem:[%s12 + $0x40] sm:$0xff]
        %v3150 = vld [vmem:[%s12 + $0x48] sm:$0xff]
        %v3151 = vld [vmem:[%s12 + $0x50] sm:$0xff]
        %v3152 = vld [vmem:[%s12 + $0x58] sm:$0xff]
        %v3153 = vld [vmem:[%s12 + $0x60] sm:$0xff]
        %v3154 = vld [vmem:[%s12 + $0x68] sm:$0xff]
        %v3155 = vld [vmem:[%s12 + $0x70] sm:$0xff]
        %v3156 = vld [vmem:[%s12 + $0x78] sm:$0xff]
        %v3157 = vld [vmem:[%s12 + $0x80] sm:$0xff]
        %v3158 = vld [vmem:[%s12 + $0x88] sm:$0xff]
        %v3159 = vld [vmem:[%s12 + $0x90] sm:$0xff]
        %v3160 = vld [vmem:[%s12 + $0x98] sm:$0xff]
        %v3161 = vld [vmem:[%s12 + $0xa0] sm:$0xff]
        %v3162 = vld [vmem:[%s12 + $0xa8] sm:$0xff]
        %v3163 = vld [vmem:[%s12 + $0xb0] sm:$0xff]
        %v3164 = vld [vmem:[%s12 + $0xb8] sm:$0xff]
        %v3165 = vld [vmem:[%s12 + $0xc0] sm:$0xff]
        %v3166 = vld [vmem:[%s12 + $0xc8] sm:$0xff]
        %v3167 = vld [vmem:[%s12 + $0xd0] sm:$0xff]
        %v3168 = vld [vmem:[%s12 + $0xd8] sm:$0xff]
        %v3169 = vld [vmem:[%s12 + $0xe0] sm:$0xff]
        %v3170 = vld [vmem:[%s12 + $0xe8] sm:$0xff]
        %v3171 = vld [vmem:[%s12 + $0xf0] sm:$0xff]
        %v3172 = vld [vmem:[%s12 + $0xf8] sm:$0xff]
        %v3173 = vld [vmem:[%s12 + $0x100] sm:$0xff]
        %v3174 = vld [vmem:[%s12 + $0x108] sm:$0xff]
        %v3175 = vld [vmem:[%s12 + $0x110] sm:$0xff]
        %v3176 = vld [vmem:[%s12 + $0x118] sm:$0xff]
        %v3177 = vld [vmem:[%s12 + $0x120] sm:$0xff]
        %v3178 = vld [vmem:[%s12 + $0x128] sm:$0xff]
        %v3179 = vld [vmem:[%s12 + $0x130] sm:$0xff]
        %v3180 = vld [vmem:[%s12 + $0x138] sm:$0xff]
        %v3181 = vld [vmem:[%s12 + $0x140] sm:$0xff]
        %v3182 = vld [vmem:[%s12 + $0x148] sm:$0xff]
        %v3183 = vld [vmem:[%s12 + $0x150] sm:$0xff]
        %v3184 = vld [vmem:[%s12 + $0x158] sm:$0xff]
        %v3185 = vld [vmem:[%s12 + $0x160] sm:$0xff]
        %v3186 = vld [vmem:[%s12 + $0x168] sm:$0xff]
        %v3187 = vld [vmem:[%s12 + $0x170] sm:$0xff]
        %v3188 = vld [vmem:[%s12 + $0x178] sm:$0xff]
        %v3189 = vld [vmem:[%s12 + $0x180] sm:$0xff]
        %v3190 = vld [vmem:[%s12 + $0x188] sm:$0xff]
        %v3191 = vld [vmem:[%s12 + $0x190] sm:$0xff]
        %v3192 = vld [vmem:[%s12 + $0x198] sm:$0xff]
        %v3193 = vld [vmem:[%s12 + $0x1a0] sm:$0xff]
        %v3194 = vld [vmem:[%s12 + $0x1a8] sm:$0xff]
        %v3195 = vld [vmem:[%s12 + $0x1b0] sm:$0xff]
        %v3196 = vld [vmem:[%s12 + $0x1b8] sm:$0xff]
        %v3197 = vld [vmem:[%s12 + $0x1c0] sm:$0xff]
        %v3198 = vld [vmem:[%s12 + $0x1c8] sm:$0xff]
        %v3199 = vld [vmem:[%s12 + $0x1d0] sm:$0xff]
        %v3200 = vld [vmem:[%s12 + $0x1d8] sm:$0xff]
        %v3201 = vld [vmem:[%s12 + $0x1e0] sm:$0xff]
        %v3202 = vld [vmem:[%s12 + $0x1e8] sm:$0xff]
        %v3203 = vld [vmem:[%s12 + $0x1f0] sm:$0xff]
        %v3204 = vld [vmem:[%s12 + $0x1f8] sm:$0xff]
        %v3205 = vld [vmem:[%s12 + $0x200] sm:$0xff]
        %v3206 = vld [vmem:[%s12 + $0x208] sm:$0xff]
        %v3207 = vld [vmem:[%s12 + $0x210] sm:$0xff]
        %v3208 = vld [vmem:[%s12 + $0x218] sm:$0xff]
        %v3209 = vld [vmem:[%s12 + $0x220] sm:$0xff]
        %v3210 = vld [vmem:[%s12 + $0x228] sm:$0xff]
        %v3211 = vld [vmem:[%s12 + $0x230] sm:$0xff]
        %v3212 = vld [vmem:[%s12 + $0x238] sm:$0xff]
        %v3213 = vld [vmem:[%s12 + $0x240] sm:$0xff]
        %v3214 = vld [vmem:[%s12 + $0x248] sm:$0xff]
        %v3215 = vld [vmem:[%s12 + $0x250] sm:$0xff]
        %v3216 = vld [vmem:[%s12 + $0x258] sm:$0xff]
        %v3217 = vld [vmem:[%s12 + $0x260] sm:$0xff]
        %v3218 = vld [vmem:[%s12 + $0x268] sm:$0xff]
        %v3219 = vld [vmem:[%s12 + $0x270] sm:$0xff]
        %v3220 = vld [vmem:[%s12 + $0x278] sm:$0xff]
        %v3222 = vsel %vm2251, %v3140, 0
        %3224 = vmatprep.subr.mxu0 %v3142
        %3225 = vmatpush1.msra.mxu0 %v3141
        %3226 = vmatprep.subr.mxu0 %v3144
        %3227 = vmatpush1.msra.mxu0 %v3143
        %3228 = vmatprep.subr.mxu0 %v3146
        %3229 = vmatpush1.msra.mxu0 %v3145
        %3230 = vmatprep.subr.mxu0 %v3148
        %3231 = vmatpush1.msra.mxu0 %v3147
        %3232 = vmatprep.subr.mxu0 %v3150
        %3233 = vmatpush1.msra.mxu0 %v3149
        %3234 = vmatprep.subr.mxu0 %v3152
        %3235 = vmatpush1.msra.mxu0 %v3151
        %3236 = vmatprep.subr.mxu0 %v3154
        %3237 = vmatpush1.msra.mxu0 %v3153
        %3238 = vmatprep.subr.mxu0 %v3156
        %3239 = vmatpush1.msra.mxu0 %v3155
        %3240 = vmatprep.subr.mxu0 %v3158
        %3241 = vmatpush1.msra.mxu0 %v3157
        %3242 = vmatprep.subr.mxu0 %v3160
        %3243 = vmatpush1.msra.mxu0 %v3159
        %3244 = vmatprep.subr.mxu0 %v3162
        %3245 = vmatpush1.msra.mxu0 %v3161
        %3246 = vmatprep.subr.mxu0 %v3164
        %3247 = vmatpush1.msra.mxu0 %v3163
        %3248 = vmatprep.subr.mxu0 %v3166
        %3249 = vmatpush1.msra.mxu0 %v3165
        %3250 = vmatprep.subr.mxu0 %v3168
        %3251 = vmatpush1.msra.mxu0 %v3167
        %3252 = vmatprep.subr.mxu0 %v3170
        %3253 = vmatpush1.msra.mxu0 %v3169
        %3254 = vmatprep.subr.mxu0 %v3172
        %3255 = vmatpush1.msra.mxu0 %v3171
        %3256 = vmatprep.subr.mxu0 %v3174
        %3257 = vmatpush1.msra.mxu0 %v3173
        %3258 = vmatprep.subr.mxu0 %v3176
        %3259 = vmatpush1.msra.mxu0 %v3175
        %3260 = vmatprep.subr.mxu0 %v3178
        %3261 = vmatpush1.msra.mxu0 %v3177
        %3262 = vmatprep.subr.mxu0 %v3180
        %3263 = vmatpush1.msra.mxu0 %v3179
        %3264 = vmatprep.subr.mxu0 %v3182
        %3265 = vmatpush1.msra.mxu0 %v3181
        %3266 = vmatprep.subr.mxu0 %v3184
        %3267 = vmatpush1.msra.mxu0 %v3183
        %3268 = vmatprep.subr.mxu0 %v3186
        %3269 = vmatpush1.msra.mxu0 %v3185
        %3270 = vmatprep.subr.mxu0 %v3188
        %3271 = vmatpush1.msra.mxu0 %v3187
        %3272 = vmatprep.subr.mxu0 %v3190
        %3273 = vmatpush1.msra.mxu0 %v3189
        %3274 = vmatprep.subr.mxu0 %v3192
        %3275 = vmatpush1.msra.mxu0 %v3191
        %3276 = vmatprep.subr.mxu0 %v3194
        %3277 = vmatpush1.msra.mxu0 %v3193
        %3278 = vmatprep.subr.mxu0 %v3196
        %3279 = vmatpush1.msra.mxu0 %v3195
        %3280 = vmatprep.subr.mxu0 %v3198
        %3281 = vmatpush1.msra.mxu0 %v3197
        %3282 = vmatprep.subr.mxu0 %v3200
        %3283 = vmatpush1.msra.mxu0 %v3199
        %3284 = vmatprep.subr.mxu0 %v3202
        %3285 = vmatpush1.msra.mxu0 %v3201
        %3286 = vmatprep.subr.mxu0 %v3204
        %3287 = vmatpush1.msra.mxu0 %v3203
        %3288 = vmatprep.mubr.f32.mxu0 %v3139
        %3289 = vmatmul.mubr.f32.gmra.mrb[0].mxu0 %v3138
        %v3290 = vpop.f32.mrb[0].mxu0
        %v3291 = vadd.f32 0.0, %v3290
        %v3292 = vpop.f32.mrb[0].mxu0
        %v3293 = vadd.f32 0.0, %v3292
        %3294 = vdwg.mxu0
        %3295 = vmatprep.subr.mxu0 %v3206
        %3296 = vmatpush1.msra.mxu0 %v3205
        %3297 = vmatprep.subr.mxu0 %v3208
        %3298 = vmatpush1.msra.mxu0 %v3207
        %3299 = vmatprep.subr.mxu0 %v3210
        %3300 = vmatpush1.msra.mxu0 %v3209
        %3301 = vmatprep.subr.mxu0 %v3212
        %3302 = vmatpush1.msra.mxu0 %v3211
        %3303 = vmatprep.subr.mxu0 %v3214
        %3304 = vmatpush1.msra.mxu0 %v3213
        %3305 = vmatprep.subr.mxu0 %v3216
        %3306 = vmatpush1.msra.mxu0 %v3215
        %3307 = vmatprep.subr.mxu0 %v3218
        %3308 = vmatpush1.msra.mxu0 %v3217
        %3309 = vmatprep.subr.mxu0 %v3220
        %3310 = vmatpush1.msra.mxu0 %v3219
        %3311 = vmatprep.subr.mxu0 0.0
        %3312 = vmatpush1.msra.mxu0 0.0
        %3313 = vmatprep.subr.mxu0 0.0
        %3314 = vmatpush1.msra.mxu0 0.0
        %3315 = vmatprep.subr.mxu0 0.0
        %3316 = vmatpush1.msra.mxu0 0.0
        %3317 = vmatprep.subr.mxu0 0.0
        %3318 = vmatpush1.msra.mxu0 0.0
        %3319 = vmatprep.subr.mxu0 0.0
        %3320 = vmatpush1.msra.mxu0 0.0
        %3321 = vmatprep.subr.mxu0 0.0
        %3322 = vmatpush1.msra.mxu0 0.0
        %3323 = vmatprep.subr.mxu0 0.0
        %3324 = vmatpush1.msra.mxu0 0.0
        %3325 = vmatprep.subr.mxu0 0.0
        %3326 = vmatpush1.msra.mxu0 0.0
        %3327 = vmatprep.subr.mxu0 0.0
        %3328 = vmatpush1.msra.mxu0 0.0
        %3329 = vmatprep.subr.mxu0 0.0
        %3330 = vmatpush1.msra.mxu0 0.0
        %3331 = vmatprep.subr.mxu0 0.0
        %3332 = vmatpush1.msra.mxu0 0.0
        %3333 = vmatprep.subr.mxu0 0.0
        %3334 = vmatpush1.msra.mxu0 0.0
        %3335 = vmatprep.subr.mxu0 0.0
        %3336 = vmatpush1.msra.mxu0 0.0
        %3337 = vmatprep.subr.mxu0 0.0
        %3338 = vmatpush1.msra.mxu0 0.0
        %3339 = vmatprep.subr.mxu0 0.0
        %3340 = vmatpush1.msra.mxu0 0.0
        %3341 = vmatprep.subr.mxu0 0.0
        %3342 = vmatpush1.msra.mxu0 0.0
        %3343 = vmatprep.subr.mxu0 0.0
        %3344 = vmatpush1.msra.mxu0 0.0
        %3345 = vmatprep.subr.mxu0 0.0
        %3346 = vmatpush1.msra.mxu0 0.0
        %3347 = vmatprep.subr.mxu0 0.0
        %3348 = vmatpush1.msra.mxu0 0.0
        %3349 = vmatprep.subr.mxu0 0.0
        %3350 = vmatpush1.msra.mxu0 0.0
        %3351 = vmatprep.subr.mxu0 0.0
        %3352 = vmatpush1.msra.mxu0 0.0
        %3353 = vmatprep.subr.mxu0 0.0
        %3354 = vmatpush1.msra.mxu0 0.0
        %3355 = vmatprep.subr.mxu0 0.0
        %3356 = vmatpush1.msra.mxu0 0.0
        %3357 = vmatprep.subr.mxu0 0.0
        %3358 = vmatpush1.msra.mxu0 0.0
        %3359 = vmatprep.mubr.f32.mxu0 0.0
        %3360 = vmatmul.mubr.f32.gmra.mrb[0].mxu0 %v3222
        %v3361 = vpop.f32.mrb[0].mxu0
        %v3362 = vadd.f32 %v3291, %v3361
        %v3363 = vpop.f32.mrb[0].mxu0
        %v3364 = vadd.f32 %v3293, %v3363
        %3365 = vdwg.mxu0
        %s3366 = scalar_lea.vmem %s12, 640
        %v3367 = vld [vmem:[%s3366] sm:$0xff]
        %v3368 = vld [vmem:[%s3366 + $0x8] sm:$0xff]
        %v3369 = vld [vmem:[%s3366 + $0x10] sm:$0xff]
        %v3370 = vld [vmem:[%s3366 + $0x18] sm:$0xff]
        %v3371 = vld [vmem:[%s3366 + $0x20] sm:$0xff]
        %v3372 = vld [vmem:[%s3366 + $0x28] sm:$0xff]
        %v3373 = vld [vmem:[%s3366 + $0x30] sm:$0xff]
        %v3374 = vld [vmem:[%s3366 + $0x38] sm:$0xff]
        %v3375 = vld [vmem:[%s3366 + $0x40] sm:$0xff]
        %v3376 = vld [vmem:[%s3366 + $0x48] sm:$0xff]
        %v3377 = vld [vmem:[%s3366 + $0x50] sm:$0xff]
        %v3378 = vld [vmem:[%s3366 + $0x58] sm:$0xff]
        %v3379 = vld [vmem:[%s3366 + $0x60] sm:$0xff]
        %v3380 = vld [vmem:[%s3366 + $0x68] sm:$0xff]
        %v3381 = vld [vmem:[%s3366 + $0x70] sm:$0xff]
        %v3382 = vld [vmem:[%s3366 + $0x78] sm:$0xff]
        %v3383 = vld [vmem:[%s3366 + $0x80] sm:$0xff]
        %v3384 = vld [vmem:[%s3366 + $0x88] sm:$0xff]
        %v3385 = vld [vmem:[%s3366 + $0x90] sm:$0xff]
        %v3386 = vld [vmem:[%s3366 + $0x98] sm:$0xff]
        %v3387 = vld [vmem:[%s3366 + $0xa0] sm:$0xff]
        %v3388 = vld [vmem:[%s3366 + $0xa8] sm:$0xff]
        %v3389 = vld [vmem:[%s3366 + $0xb0] sm:$0xff]
        %v3390 = vld [vmem:[%s3366 + $0xb8] sm:$0xff]
        %v3391 = vld [vmem:[%s3366 + $0xc0] sm:$0xff]
        %v3392 = vld [vmem:[%s3366 + $0xc8] sm:$0xff]
        %v3393 = vld [vmem:[%s3366 + $0xd0] sm:$0xff]
        %v3394 = vld [vmem:[%s3366 + $0xd8] sm:$0xff]
        %v3395 = vld [vmem:[%s3366 + $0xe0] sm:$0xff]
        %v3396 = vld [vmem:[%s3366 + $0xe8] sm:$0xff]
        %v3397 = vld [vmem:[%s3366 + $0xf0] sm:$0xff]
        %v3398 = vld [vmem:[%s3366 + $0xf8] sm:$0xff]
        %v3399 = vld [vmem:[%s3366 + $0x100] sm:$0xff]
        %v3400 = vld [vmem:[%s3366 + $0x108] sm:$0xff]
        %v3401 = vld [vmem:[%s3366 + $0x110] sm:$0xff]
        %v3402 = vld [vmem:[%s3366 + $0x118] sm:$0xff]
        %v3403 = vld [vmem:[%s3366 + $0x120] sm:$0xff]
        %v3404 = vld [vmem:[%s3366 + $0x128] sm:$0xff]
        %v3405 = vld [vmem:[%s3366 + $0x130] sm:$0xff]
        %v3406 = vld [vmem:[%s3366 + $0x138] sm:$0xff]
        %v3407 = vld [vmem:[%s3366 + $0x140] sm:$0xff]
        %v3408 = vld [vmem:[%s3366 + $0x148] sm:$0xff]
        %v3409 = vld [vmem:[%s3366 + $0x150] sm:$0xff]
        %v3410 = vld [vmem:[%s3366 + $0x158] sm:$0xff]
        %v3411 = vld [vmem:[%s3366 + $0x160] sm:$0xff]
        %v3412 = vld [vmem:[%s3366 + $0x168] sm:$0xff]
        %v3413 = vld [vmem:[%s3366 + $0x170] sm:$0xff]
        %v3414 = vld [vmem:[%s3366 + $0x178] sm:$0xff]
        %v3415 = vld [vmem:[%s3366 + $0x180] sm:$0xff]
        %v3416 = vld [vmem:[%s3366 + $0x188] sm:$0xff]
        %v3417 = vld [vmem:[%s3366 + $0x190] sm:$0xff]
        %v3418 = vld [vmem:[%s3366 + $0x198] sm:$0xff]
        %v3419 = vld [vmem:[%s3366 + $0x1a0] sm:$0xff]
        %v3420 = vld [vmem:[%s3366 + $0x1a8] sm:$0xff]
        %v3421 = vld [vmem:[%s3366 + $0x1b0] sm:$0xff]
        %v3422 = vld [vmem:[%s3366 + $0x1b8] sm:$0xff]
        %v3423 = vld [vmem:[%s3366 + $0x1c0] sm:$0xff]
        %v3424 = vld [vmem:[%s3366 + $0x1c8] sm:$0xff]
        %v3425 = vld [vmem:[%s3366 + $0x1d0] sm:$0xff]
        %v3426 = vld [vmem:[%s3366 + $0x1d8] sm:$0xff]
        %v3427 = vld [vmem:[%s3366 + $0x1e0] sm:$0xff]
        %v3428 = vld [vmem:[%s3366 + $0x1e8] sm:$0xff]
        %v3429 = vld [vmem:[%s3366 + $0x1f0] sm:$0xff]
        %v3430 = vld [vmem:[%s3366 + $0x1f8] sm:$0xff]
        %v3431 = vld [vmem:[%s3366 + $0x200] sm:$0xff]
        %v3432 = vld [vmem:[%s3366 + $0x208] sm:$0xff]
        %v3433 = vld [vmem:[%s3366 + $0x210] sm:$0xff]
        %v3434 = vld [vmem:[%s3366 + $0x218] sm:$0xff]
        %v3435 = vld [vmem:[%s3366 + $0x220] sm:$0xff]
        %v3436 = vld [vmem:[%s3366 + $0x228] sm:$0xff]
        %v3437 = vld [vmem:[%s3366 + $0x230] sm:$0xff]
        %v3438 = vld [vmem:[%s3366 + $0x238] sm:$0xff]
        %v3439 = vld [vmem:[%s3366 + $0x240] sm:$0xff]
        %v3440 = vld [vmem:[%s3366 + $0x248] sm:$0xff]
        %v3441 = vld [vmem:[%s3366 + $0x250] sm:$0xff]
        %v3442 = vld [vmem:[%s3366 + $0x258] sm:$0xff]
        %v3443 = vld [vmem:[%s3366 + $0x260] sm:$0xff]
        %v3444 = vld [vmem:[%s3366 + $0x268] sm:$0xff]
        %v3445 = vld [vmem:[%s3366 + $0x270] sm:$0xff]
        %v3446 = vld [vmem:[%s3366 + $0x278] sm:$0xff]
        %3447 = vmatprep.subr.mxu0 %v3368
        %3448 = vmatpush1.msra.mxu0 %v3367
        %3449 = vmatprep.subr.mxu0 %v3370
        %3450 = vmatpush1.msra.mxu0 %v3369
        %3451 = vmatprep.subr.mxu0 %v3372
        %3452 = vmatpush1.msra.mxu0 %v3371
        %3453 = vmatprep.subr.mxu0 %v3374
        %3454 = vmatpush1.msra.mxu0 %v3373
        %3455 = vmatprep.subr.mxu0 %v3376
        %3456 = vmatpush1.msra.mxu0 %v3375
        %3457 = vmatprep.subr.mxu0 %v3378
        %3458 = vmatpush1.msra.mxu0 %v3377
        %3459 = vmatprep.subr.mxu0 %v3380
        %3460 = vmatpush1.msra.mxu0 %v3379
        %3461 = vmatprep.subr.mxu0 %v3382
        %3462 = vmatpush1.msra.mxu0 %v3381
        %3463 = vmatprep.subr.mxu0 %v3384
        %3464 = vmatpush1.msra.mxu0 %v3383
        %3465 = vmatprep.subr.mxu0 %v3386
        %3466 = vmatpush1.msra.mxu0 %v3385
        %3467 = vmatprep.subr.mxu0 %v3388
        %3468 = vmatpush1.msra.mxu0 %v3387
        %3469 = vmatprep.subr.mxu0 %v3390
        %3470 = vmatpush1.msra.mxu0 %v3389
        %3471 = vmatprep.subr.mxu0 %v3392
        %3472 = vmatpush1.msra.mxu0 %v3391
        %3473 = vmatprep.subr.mxu0 %v3394
        %3474 = vmatpush1.msra.mxu0 %v3393
        %3475 = vmatprep.subr.mxu0 %v3396
        %3476 = vmatpush1.msra.mxu0 %v3395
        %3477 = vmatprep.subr.mxu0 %v3398
        %3478 = vmatpush1.msra.mxu0 %v3397
        %3479 = vmatprep.subr.mxu0 %v3400
        %3480 = vmatpush1.msra.mxu0 %v3399
        %3481 = vmatprep.subr.mxu0 %v3402
        %3482 = vmatpush1.msra.mxu0 %v3401
        %3483 = vmatprep.subr.mxu0 %v3404
        %3484 = vmatpush1.msra.mxu0 %v3403
        %3485 = vmatprep.subr.mxu0 %v3406
        %3486 = vmatpush1.msra.mxu0 %v3405
        %3487 = vmatprep.subr.mxu0 %v3408
        %3488 = vmatpush1.msra.mxu0 %v3407
        %3489 = vmatprep.subr.mxu0 %v3410
        %3490 = vmatpush1.msra.mxu0 %v3409
        %3491 = vmatprep.subr.mxu0 %v3412
        %3492 = vmatpush1.msra.mxu0 %v3411
        %3493 = vmatprep.subr.mxu0 %v3414
        %3494 = vmatpush1.msra.mxu0 %v3413
        %3495 = vmatprep.subr.mxu0 %v3416
        %3496 = vmatpush1.msra.mxu0 %v3415
        %3497 = vmatprep.subr.mxu0 %v3418
        %3498 = vmatpush1.msra.mxu0 %v3417
        %3499 = vmatprep.subr.mxu0 %v3420
        %3500 = vmatpush1.msra.mxu0 %v3419
        %3501 = vmatprep.subr.mxu0 %v3422
        %3502 = vmatpush1.msra.mxu0 %v3421
        %3503 = vmatprep.subr.mxu0 %v3424
        %3504 = vmatpush1.msra.mxu0 %v3423
        %3505 = vmatprep.subr.mxu0 %v3426
        %3506 = vmatpush1.msra.mxu0 %v3425
        %3507 = vmatprep.subr.mxu0 %v3428
        %3508 = vmatpush1.msra.mxu0 %v3427
        %3509 = vmatprep.subr.mxu0 %v3430
        %3510 = vmatpush1.msra.mxu0 %v3429
        %3511 = vmatprep.mubr.f32.mxu0 %v3139
        %3512 = vmatmul.mubr.f32.gmra.mrb[0].mxu0 %v3138
        %v3513 = vpop.f32.mrb[0].mxu0
        %v3514 = vadd.f32 0.0, %v3513
        %v3515 = vpop.f32.mrb[0].mxu0
        %v3516 = vadd.f32 0.0, %v3515
        %3517 = vdwg.mxu0
        %3518 = vmatprep.subr.mxu0 %v3432
        %3519 = vmatpush1.msra.mxu0 %v3431
        %3520 = vmatprep.subr.mxu0 %v3434
        %3521 = vmatpush1.msra.mxu0 %v3433
        %3522 = vmatprep.subr.mxu0 %v3436
        %3523 = vmatpush1.msra.mxu0 %v3435
        %3524 = vmatprep.subr.mxu0 %v3438
        %3525 = vmatpush1.msra.mxu0 %v3437
        %3526 = vmatprep.subr.mxu0 %v3440
        %3527 = vmatpush1.msra.mxu0 %v3439
        %3528 = vmatprep.subr.mxu0 %v3442
        %3529 = vmatpush1.msra.mxu0 %v3441
        %3530 = vmatprep.subr.mxu0 %v3444
        %3531 = vmatpush1.msra.mxu0 %v3443
        %3532 = vmatprep.subr.mxu0 %v3446
        %3533 = vmatpush1.msra.mxu0 %v3445
        %3534 = vmatprep.subr.mxu0 0.0
        %3535 = vmatpush1.msra.mxu0 0.0
        %3536 = vmatprep.subr.mxu0 0.0
        %3537 = vmatpush1.msra.mxu0 0.0
        %3538 = vmatprep.subr.mxu0 0.0
        %3539 = vmatpush1.msra.mxu0 0.0
        %3540 = vmatprep.subr.mxu0 0.0
        %3541 = vmatpush1.msra.mxu0 0.0
        %3542 = vmatprep.subr.mxu0 0.0
        %3543 = vmatpush1.msra.mxu0 0.0
        %3544 = vmatprep.subr.mxu0 0.0
        %3545 = vmatpush1.msra.mxu0 0.0
        %3546 = vmatprep.subr.mxu0 0.0
        %3547 = vmatpush1.msra.mxu0 0.0
        %3548 = vmatprep.subr.mxu0 0.0
        %3549 = vmatpush1.msra.mxu0 0.0
        %3550 = vmatprep.subr.mxu0 0.0
        %3551 = vmatpush1.msra.mxu0 0.0
        %3552 = vmatprep.subr.mxu0 0.0
        %3553 = vmatpush1.msra.mxu0 0.0
        %3554 = vmatprep.subr.mxu0 0.0
        %3555 = vmatpush1.msra.mxu0 0.0
        %3556 = vmatprep.subr.mxu0 0.0
        %3557 = vmatpush1.msra.mxu0 0.0
        %3558 = vmatprep.subr.mxu0 0.0
        %3559 = vmatpush1.msra.mxu0 0.0
        %3560 = vmatprep.subr.mxu0 0.0
        %3561 = vmatpush1.msra.mxu0 0.0
        %3562 = vmatprep.subr.mxu0 0.0
        %3563 = vmatpush1.msra.mxu0 0.0
        %3564 = vmatprep.subr.mxu0 0.0
        %3565 = vmatpush1.msra.mxu0 0.0
        %3566 = vmatprep.subr.mxu0 0.0
        %3567 = vmatpush1.msra.mxu0 0.0
        %3568 = vmatprep.subr.mxu0 0.0
        %3569 = vmatpush1.msra.mxu0 0.0
        %3570 = vmatprep.subr.mxu0 0.0
        %3571 = vmatpush1.msra.mxu0 0.0
        %3572 = vmatprep.subr.mxu0 0.0
        %3573 = vmatpush1.msra.mxu0 0.0
        %3574 = vmatprep.subr.mxu0 0.0
        %3575 = vmatpush1.msra.mxu0 0.0
        %3576 = vmatprep.subr.mxu0 0.0
        %3577 = vmatpush1.msra.mxu0 0.0
        %3578 = vmatprep.subr.mxu0 0.0
        %3579 = vmatpush1.msra.mxu0 0.0
        %3580 = vmatprep.subr.mxu0 0.0
        %3581 = vmatpush1.msra.mxu0 0.0
        %3582 = vmatprep.mubr.f32.mxu0 0.0
        %3583 = vmatmul.mubr.f32.gmra.mrb[0].mxu0 %v3222
        %v3584 = vpop.f32.mrb[0].mxu0
        %v3585 = vadd.f32 %v3514, %v3584
        %v3586 = vpop.f32.mrb[0].mxu0
        %v3587 = vadd.f32 %v3516, %v3586
        %3588 = vdwg.mxu0
        %v3589 = vmax.f32 %v3362, %v3585
        %v3590 = vmax.f32 %v3364, %v3587
        %3591 = vst [vmem:[%s534] sm:$0x1f] %v3589
        %vm3592 = vcmask 258048
        %3593 = vst.msk [vmem:[%s534 + $0x8] sm:$0x1f] %vm3592, %v3590
        %p3594 = scmp.lt.s32.totalorder %s28, 1
        %s3595 = scalar_select %p3594, %s28, 1
        %s3596 = smul.addr %s3595, 2
        %s3597 = smul.addr %s3596, 8
        %s3598 = scalar_lea.vmem %s13, %s3597
        // Predicated region
        $region101: #{encoder6_forward.2} parent=71 // pred_check
          %p3599 = pneg %p324
        $region102: #{encoder6_forward.2} parent=71 // pred_check_branch
          %3601 = sbr.rel (%p3599) target = $region104
        $region103: #{encoder6_forward.2} parent=71 // pred_region
          _
        $region104: #{encoder6_forward.2} parent=71 // pred_fallthru
          _
      $region72: #{encoder6_forward.2} parent=5 // pred_fallthru
        _
      %p3602 = scmp.le.s32.totalorder 2, %s23
      // Predicated region
      $region105: #{encoder6_forward.2} parent=5 // pred_check
        %p3603 = pneg %p3602
      $region106: #{encoder6_forward.2} parent=5 // pred_check_branch
        %3605 = sbr.rel (%p3603) target = $region108
      $region107: #{encoder6_forward.2} parent=5 // pred_region
        %s3606 = ssub.s32 %s23, 2
        // Predicated region
        $region109: #{encoder6_forward.2} parent=107 // pred_check
          %p3607 = pneg %p330
        $region110: #{encoder6_forward.2} parent=107 // pred_check_branch
          %3609 = sbr.rel (%p3607) target = $region112
        $region111: #{encoder6_forward.2} parent=107 // pred_region
          %p3610 = scmp.lt.s32.totalorder %s29, 1
          %s3611 = scalar_select %p3610, %s29, 1
          %s3612 = smul.addr %s3611, 2
          %s3613 = smul.addr %s3612, 8
          %s3614 = scalar_lea.vmem %s13, %s3613
        $region112: #{encoder6_forward.2} parent=107 // pred_fallthru
          _
      $region108: #{encoder6_forward.2} parent=5 // pred_fallthru
        _
    $region6: #{encoder6_forward.2} parent=1 // loop_footer
      %s27 = sadd.s32 1, %s23
    $region7: #{encoder6_forward.2} parent=1 // loop_footer_branch
      %22 = sbr.rel target = $region3
    $region8: #{encoder6_forward.2} parent=1 // loop_exit
      _
    %3615 = vsyncpa [#allocation3], 1
    %s3616 = scalar_lea.sflag [#allocation3], 1
    %3617 = vsyncpa %s3616, 1
    %3618 = vsyncpa [#allocation5], 1
    %3619 = vsyncpa [#allocation8], 1
    %3620 = vsyncpa [#allocation11], 1

// kernel: encoder6_forward.3
$region0: #{encoder6_forward.3}
  #allocation0 [shape = 'u32[]', space=smem, size = 0x4, offset = 0x4, fixed_abs, tag = 'smem constant byte address 0x4 - core index']
  #allocation1 [shape = 'u32[144,128]{1,0:T(1,128)}', space=vmem, size = 0x12000, scoped, tag = 'internal scratch']
  %s0 = inlined_call_operand.vmem [shape: f32[2,800], index: 0, kind: input, shape index: {}]
  %s1 = inlined_call_operand.vmem [shape: f32[800,1024], index: 1, kind: input, shape index: {}]
  %s2 = inlined_call_operand.vmem [shape: f32[1,1024], index: 2, kind: input, shape index: {}]
  %s3 = inlined_call_operand.vmem [shape: f32[1024,512], index: 3, kind: input, shape index: {}]
  %s4 = inlined_call_operand.vmem [shape: f32[1,512], index: 4, kind: input, shape index: {}]
  %s5 = inlined_call_operand.hbm [shape: f32[512,256], index: 5, kind: input, shape index: {}]
  %s6 = inlined_call_operand.vmem [shape: f32[1,256], index: 6, kind: input, shape index: {}]
  %s7 = inlined_call_operand.vmem [shape: f32[256,128], index: 7, kind: input, shape index: {}]
  %s8 = inlined_call_operand.vmem [shape: f32[1,128], index: 8, kind: input, shape index: {}]
  %s9 = inlined_call_operand.vmem [shape: f32[128,100], index: 9, kind: input, shape index: {}]
  %s10 = inlined_call_operand.vmem [shape: f32[1,100], index: 10, kind: input, shape index: {}]
  %s11 = inlined_call_operand.hbm [shape: f32[2,100], index: 11, kind: output, shape index: {}]
  %s12 = sld [smem:[#allocation0]]
  $region58: #{encoder6_forward.3} parent=0
    _
  %s14 = ssub.s32 1, %s12
  %s15 = scalar_select 0, %s14, %s12
  $region1: #{encoder6_forward.3} parent=0
    #allocation2 [shape = 'u8[524288]{0}', space=vmem, size = 0x80000, scoped, tag = 'input window, operand 5, single buffered']
    #allocation3 [shape = 's32[1]{0}', space=sflag, size = 0x4, scoped, tag = 'scoped memory for encoder6_forward.3']
    #allocation4 [shape = 's32[1]{0}', space=sflag, size = 0x4, scoped, tag = 'scoped memory for encoder6_forward.3']
    #allocation5 [shape = 'u8[1024]{0}', space=vmem, size = 0x400, scoped, tag = 'output window, operand 0, single buffered']
    %16 = vsyncpa [#allocation3], 0
    %17 = vsyncpa [#allocation4], 0
    // Predicated region
    $region2: #{encoder6_forward.3} parent=1 // pred_check
      _
    $region3: #{encoder6_forward.3} parent=1 // pred_check_branch
      %19 = sbr.rel (0) target = $region5
    $region4: #{encoder6_forward.3} parent=1 // pred_region
      _
    $region5: #{encoder6_forward.3} parent=1 // pred_fallthru
      _
    // Predicated region
    $region6: #{encoder6_forward.3} parent=1 // pred_check
      _
    $region7: #{encoder6_forward.3} parent=1 // pred_check_branch
      %21 = sbr.rel (0) target = $region9
    $region8: #{encoder6_forward.3} parent=1 // pred_region
      _
    $region9: #{encoder6_forward.3} parent=1 // pred_fallthru
      _
    // Predicated region
    $region10: #{encoder6_forward.3} parent=1 // pred_check
      _
    $region11: #{encoder6_forward.3} parent=1 // pred_check_branch
      %23 = sbr.rel (0) target = $region13
    $region12: #{encoder6_forward.3} parent=1 // pred_region
      _
    $region13: #{encoder6_forward.3} parent=1 // pred_fallthru
      _
    // Predicated region
    $region14: #{encoder6_forward.3} parent=1 // pred_check
      _
    $region15: #{encoder6_forward.3} parent=1 // pred_check_branch
      %25 = sbr.rel (0) target = $region17
    $region16: #{encoder6_forward.3} parent=1 // pred_region
      _
    $region17: #{encoder6_forward.3} parent=1 // pred_fallthru
      _
    // Predicated region
    $region18: #{encoder6_forward.3} parent=1 // pred_check
      _
    $region19: #{encoder6_forward.3} parent=1 // pred_check_branch
      %27 = sbr.rel (0) target = $region21
    $region20: #{encoder6_forward.3} parent=1 // pred_region
      _
    $region21: #{encoder6_forward.3} parent=1 // pred_fallthru
      _
    // Predicated region
    $region22: #{encoder6_forward.3} parent=1 // pred_check
      _
    $region23: #{encoder6_forward.3} parent=1 // pred_check_branch
      %29 = sbr.rel (0) target = $region25
    $region24: #{encoder6_forward.3} parent=1 // pred_region
      %s31 = ssub.s32 16384, 16384
      %32 = vsyncadd [#allocation3], %s31
      %s33 = sshll.u32 [#allocation2], 4
      %s34 = int_to_ptr.vmem [resolvable:$true] %s33
      %39 = dma.hbm_to_vmem [thread:$0]  %s5, 16384, %s34, [#allocation3], 256, 256, 16
    $region25: #{encoder6_forward.3} parent=1 // pred_fallthru
      _
    // Predicated region
    $region26: #{encoder6_forward.3} parent=1 // pred_check
      _
    $region27: #{encoder6_forward.3} parent=1 // pred_check_branch
      %41 = sbr.rel (0) target = $region29
    $region28: #{encoder6_forward.3} parent=1 // pred_region
      _
    $region29: #{encoder6_forward.3} parent=1 // pred_fallthru
      _
    // Predicated region
    $region30: #{encoder6_forward.3} parent=1 // pred_check
      _
    $region31: #{encoder6_forward.3} parent=1 // pred_check_branch
      %43 = sbr.rel (0) target = $region33
    $region32: #{encoder6_forward.3} parent=1 // pred_region
      _
    $region33: #{encoder6_forward.3} parent=1 // pred_fallthru
      _
    // Predicated region
    $region34: #{encoder6_forward.3} parent=1 // pred_check
      _
    $region35: #{encoder6_forward.3} parent=1 // pred_check_branch
      %45 = sbr.rel (0) target = $region37
    $region36: #{encoder6_forward.3} parent=1 // pred_region
      _
    $region37: #{encoder6_forward.3} parent=1 // pred_fallthru
      _
    // Predicated region
    $region38: #{encoder6_forward.3} parent=1 // pred_check
      _
    $region39: #{encoder6_forward.3} parent=1 // pred_check_branch
      %47 = sbr.rel (0) target = $region41
    $region40: #{encoder6_forward.3} parent=1 // pred_region
      _
    $region41: #{encoder6_forward.3} parent=1 // pred_fallthru
      _
    // Predicated region
    $region42: #{encoder6_forward.3} parent=1 // pred_check
      _
    $region43: #{encoder6_forward.3} parent=1 // pred_check_branch
      %49 = sbr.rel (0) target = $region45
    $region44: #{encoder6_forward.3} parent=1 // pred_region
      _
    $region45: #{encoder6_forward.3} parent=1 // pred_fallthru
      _
    // Predicated region
    $region46: #{encoder6_forward.3} parent=1 // pred_check
      _
    $region47: #{encoder6_forward.3} parent=1 // pred_check_branch
      %51 = sbr.rel (0) target = $region49
    $region48: #{encoder6_forward.3} parent=1 // pred_region
      %52 = dma.done [#allocation3], 16384
    $region49: #{encoder6_forward.3} parent=1 // pred_fallthru
      _
    %v53 = vld [vmem:[%s0] sm:$0xff]
    %v54 = vld [vmem:[%s0 + $0x8] sm:$0x3f]
    %v55 = vld [vmem:[%s1] sm:$0xff]
    %v56 = vld [vmem:[%s1 + $0x8] sm:$0xff]
    %v57 = vld [vmem:[%s1 + $0x10] sm:$0xff]
    %v58 = vld [vmem:[%s1 + $0x18] sm:$0xff]
    %v59 = vld [vmem:[%s1 + $0x20] sm:$0xff]
    %v60 = vld [vmem:[%s1 + $0x28] sm:$0xff]
    %v61 = vld [vmem:[%s1 + $0x30] sm:$0xff]
    %v62 = vld [vmem:[%s1 + $0x38] sm:$0xff]
    %v63 = vld [vmem:[%s1 + $0x40] sm:$0xff]
    %v64 = vld [vmem:[%s1 + $0x48] sm:$0xff]
    %v65 = vld [vmem:[%s1 + $0x50] sm:$0xff]
    %v66 = vld [vmem:[%s1 + $0x58] sm:$0xff]
    %v67 = vld [vmem:[%s1 + $0x60] sm:$0xff]
    %v68 = vld [vmem:[%s1 + $0x68] sm:$0xff]
    %v69 = vld [vmem:[%s1 + $0x70] sm:$0xff]
    %v70 = vld [vmem:[%s1 + $0x78] sm:$0xff]
    %v71 = vld [vmem:[%s1 + $0x80] sm:$0xff]
    %v72 = vld [vmem:[%s1 + $0x88] sm:$0xff]
    %v73 = vld [vmem:[%s1 + $0x90] sm:$0xff]
    %v74 = vld [vmem:[%s1 + $0x98] sm:$0xff]
    %v75 = vld [vmem:[%s1 + $0xa0] sm:$0xff]
    %v76 = vld [vmem:[%s1 + $0xa8] sm:$0xff]
    %v77 = vld [vmem:[%s1 + $0xb0] sm:$0xff]
    %v78 = vld [vmem:[%s1 + $0xb8] sm:$0xff]
    %v79 = vld [vmem:[%s1 + $0xc0] sm:$0xff]
    %v80 = vld [vmem:[%s1 + $0xc8] sm:$0xff]
    %v81 = vld [vmem:[%s1 + $0xd0] sm:$0xff]
    %v82 = vld [vmem:[%s1 + $0xd8] sm:$0xff]
    %v83 = vld [vmem:[%s1 + $0xe0] sm:$0xff]
    %v84 = vld [vmem:[%s1 + $0xe8] sm:$0xff]
    %v85 = vld [vmem:[%s1 + $0xf0] sm:$0xff]
    %v86 = vld [vmem:[%s1 + $0xf8] sm:$0xff]
    %v87 = vld [vmem:[%s1 + $0x100] sm:$0xff]
    %v88 = vld [vmem:[%s1 + $0x108] sm:$0xff]
    %v89 = vld [vmem:[%s1 + $0x110] sm:$0xff]
    %v90 = vld [vmem:[%s1 + $0x118] sm:$0xff]
    %v91 = vld [vmem:[%s1 + $0x120] sm:$0xff]
    %v92 = vld [vmem:[%s1 + $0x128] sm:$0xff]
    %v93 = vld [vmem:[%s1 + $0x130] sm:$0xff]
    %v94 = vld [vmem:[%s1 + $0x138] sm:$0xff]
    %v95 = vld [vmem:[%s1 + $0x140] sm:$0xff]
    %v96 = vld [vmem:[%s1 + $0x148] sm:$0xff]
    %v97 = vld [vmem:[%s1 + $0x150] sm:$0xff]
    %v98 = vld [vmem:[%s1 + $0x158] sm:$0xff]
    %v99 = vld [vmem:[%s1 + $0x160] sm:$0xff]
    %v100 = vld [vmem:[%s1 + $0x168] sm:$0xff]
    %v101 = vld [vmem:[%s1 + $0x170] sm:$0xff]
    %v102 = vld [vmem:[%s1 + $0x178] sm:$0xff]
    %v103 = vld [vmem:[%s1 + $0x180] sm:$0xff]
    %v104 = vld [vmem:[%s1 + $0x188] sm:$0xff]
    %v105 = vld [vmem:[%s1 + $0x190] sm:$0xff]
    %v106 = vld [vmem:[%s1 + $0x198] sm:$0xff]
    %v107 = vld [vmem:[%s1 + $0x1a0] sm:$0xff]
    %v108 = vld [vmem:[%s1 + $0x1a8] sm:$0xff]
    %v109 = vld [vmem:[%s1 + $0x1b0] sm:$0xff]
    %v110 = vld [vmem:[%s1 + $0x1b8] sm:$0xff]
    %v111 = vld [vmem:[%s1 + $0x1c0] sm:$0xff]
    %v112 = vld [vmem:[%s1 + $0x1c8] sm:$0xff]
    %v113 = vld [vmem:[%s1 + $0x1d0] sm:$0xff]
    %v114 = vld [vmem:[%s1 + $0x1d8] sm:$0xff]
    %v115 = vld [vmem:[%s1 + $0x1e0] sm:$0xff]
    %v116 = vld [vmem:[%s1 + $0x1e8] sm:$0xff]
    %v117 = vld [vmem:[%s1 + $0x1f0] sm:$0xff]
    %v118 = vld [vmem:[%s1 + $0x1f8] sm:$0xff]
    %v119 = vld [vmem:[%s1 + $0x200] sm:$0xff]
    %v120 = vld [vmem:[%s1 + $0x208] sm:$0xff]
    %v121 = vld [vmem:[%s1 + $0x210] sm:$0xff]
    %v122 = vld [vmem:[%s1 + $0x218] sm:$0xff]
    %v123 = vld [vmem:[%s1 + $0x220] sm:$0xff]
    %v124 = vld [vmem:[%s1 + $0x228] sm:$0xff]
    %v125 = vld [vmem:[%s1 + $0x230] sm:$0xff]
    %v126 = vld [vmem:[%s1 + $0x238] sm:$0xff]
    %v127 = vld [vmem:[%s1 + $0x240] sm:$0xff]
    %v128 = vld [vmem:[%s1 + $0x248] sm:$0xff]
    %v129 = vld [vmem:[%s1 + $0x250] sm:$0xff]
    %v130 = vld [vmem:[%s1 + $0x258] sm:$0xff]
    %v131 = vld [vmem:[%s1 + $0x260] sm:$0xff]
    %v132 = vld [vmem:[%s1 + $0x268] sm:$0xff]
    %v133 = vld [vmem:[%s1 + $0x270] sm:$0xff]
    %v134 = vld [vmem:[%s1 + $0x278] sm:$0xff]
    %v135 = vld [vmem:[%s1 + $0x280] sm:$0xff]
    %v136 = vld [vmem:[%s1 + $0x288] sm:$0xff]
    %v137 = vld [vmem:[%s1 + $0x290] sm:$0xff]
    %v138 = vld [vmem:[%s1 + $0x298] sm:$0xff]
    %v139 = vld [vmem:[%s1 + $0x2a0] sm:$0xff]
    %v140 = vld [vmem:[%s1 + $0x2a8] sm:$0xff]
    %v141 = vld [vmem:[%s1 + $0x2b0] sm:$0xff]
    %v142 = vld [vmem:[%s1 + $0x2b8] sm:$0xff]
    %v143 = vld [vmem:[%s1 + $0x2c0] sm:$0xff]
    %v144 = vld [vmem:[%s1 + $0x2c8] sm:$0xff]
    %v145 = vld [vmem:[%s1 + $0x2d0] sm:$0xff]
    %v146 = vld [vmem:[%s1 + $0x2d8] sm:$0xff]
    %v147 = vld [vmem:[%s1 + $0x2e0] sm:$0xff]
    %v148 = vld [vmem:[%s1 + $0x2e8] sm:$0xff]
    %v149 = vld [vmem:[%s1 + $0x2f0] sm:$0xff]
    %v150 = vld [vmem:[%s1 + $0x2f8] sm:$0xff]
    %v151 = vld [vmem:[%s1 + $0x300] sm:$0xff]
    %v152 = vld [vmem:[%s1 + $0x308] sm:$0xff]
    %v153 = vld [vmem:[%s1 + $0x310] sm:$0xff]
    %v154 = vld [vmem:[%s1 + $0x318] sm:$0xff]
    %v155 = vld [vmem:[%s1 + $0x320] sm:$0xff]
    %v156 = vld [vmem:[%s1 + $0x328] sm:$0xff]
    %v157 = vld [vmem:[%s1 + $0x330] sm:$0xff]
    %v158 = vld [vmem:[%s1 + $0x338] sm:$0xff]
    %v159 = vld [vmem:[%s1 + $0x340] sm:$0xff]
    %v160 = vld [vmem:[%s1 + $0x348] sm:$0xff]
    %v161 = vld [vmem:[%s1 + $0x350] sm:$0xff]
    %v162 = vld [vmem:[%s1 + $0x358] sm:$0xff]
    %v163 = vld [vmem:[%s1 + $0x360] sm:$0xff]
    %v164 = vld [vmem:[%s1 + $0x368] sm:$0xff]
    %v165 = vld [vmem:[%s1 + $0x370] sm:$0xff]
    %v166 = vld [vmem:[%s1 + $0x378] sm:$0xff]
    %v167 = vld [vmem:[%s1 + $0x380] sm:$0xff]
    %v168 = vld [vmem:[%s1 + $0x388] sm:$0xff]
    %v169 = vld [vmem:[%s1 + $0x390] sm:$0xff]
    %v170 = vld [vmem:[%s1 + $0x398] sm:$0xff]
    %v171 = vld [vmem:[%s1 + $0x3a0] sm:$0xff]
    %v172 = vld [vmem:[%s1 + $0x3a8] sm:$0xff]
    %v173 = vld [vmem:[%s1 + $0x3b0] sm:$0xff]
    %v174 = vld [vmem:[%s1 + $0x3b8] sm:$0xff]
    %v175 = vld [vmem:[%s1 + $0x3c0] sm:$0xff]
    %v176 = vld [vmem:[%s1 + $0x3c8] sm:$0xff]
    %v177 = vld [vmem:[%s1 + $0x3d0] sm:$0xff]
    %v178 = vld [vmem:[%s1 + $0x3d8] sm:$0xff]
    %v179 = vld [vmem:[%s1 + $0x3e0] sm:$0xff]
    %v180 = vld [vmem:[%s1 + $0x3e8] sm:$0xff]
    %v181 = vld [vmem:[%s1 + $0x3f0] sm:$0xff]
    %v182 = vld [vmem:[%s1 + $0x3f8] sm:$0xff]
    %v183 = vld [vmem:[%s1 + $0x400] sm:$0xff]
    %v184 = vld [vmem:[%s1 + $0x408] sm:$0xff]
    %v185 = vld [vmem:[%s1 + $0x410] sm:$0xff]
    %v186 = vld [vmem:[%s1 + $0x418] sm:$0xff]
    %v187 = vld [vmem:[%s1 + $0x420] sm:$0xff]
    %v188 = vld [vmem:[%s1 + $0x428] sm:$0xff]
    %v189 = vld [vmem:[%s1 + $0x430] sm:$0xff]
    %v190 = vld [vmem:[%s1 + $0x438] sm:$0xff]
    %v191 = vld [vmem:[%s1 + $0x440] sm:$0xff]
    %v192 = vld [vmem:[%s1 + $0x448] sm:$0xff]
    %v193 = vld [vmem:[%s1 + $0x450] sm:$0xff]
    %v194 = vld [vmem:[%s1 + $0x458] sm:$0xff]
    %v195 = vld [vmem:[%s1 + $0x460] sm:$0xff]
    %v196 = vld [vmem:[%s1 + $0x468] sm:$0xff]
    %v197 = vld [vmem:[%s1 + $0x470] sm:$0xff]
    %v198 = vld [vmem:[%s1 + $0x478] sm:$0xff]
    %v199 = vld [vmem:[%s1 + $0x480] sm:$0xff]
    %v200 = vld [vmem:[%s1 + $0x488] sm:$0xff]
    %v201 = vld [vmem:[%s1 + $0x490] sm:$0xff]
    %v202 = vld [vmem:[%s1 + $0x498] sm:$0xff]
    %v203 = vld [vmem:[%s1 + $0x4a0] sm:$0xff]
    %v204 = vld [vmem:[%s1 + $0x4a8] sm:$0xff]
    %v205 = vld [vmem:[%s1 + $0x4b0] sm:$0xff]
    %v206 = vld [vmem:[%s1 + $0x4b8] sm:$0xff]
    %v207 = vld [vmem:[%s1 + $0x4c0] sm:$0xff]
    %v208 = vld [vmem:[%s1 + $0x4c8] sm:$0xff]
    %v209 = vld [vmem:[%s1 + $0x4d0] sm:$0xff]
    %v210 = vld [vmem:[%s1 + $0x4d8] sm:$0xff]
    %v211 = vld [vmem:[%s1 + $0x4e0] sm:$0xff]
    %v212 = vld [vmem:[%s1 + $0x4e8] sm:$0xff]
    %v213 = vld [vmem:[%s1 + $0x4f0] sm:$0xff]
    %v214 = vld [vmem:[%s1 + $0x4f8] sm:$0xff]
    %v215 = vld [vmem:[%s1 + $0x500] sm:$0xff]
    %v216 = vld [vmem:[%s1 + $0x508] sm:$0xff]
    %v217 = vld [vmem:[%s1 + $0x510] sm:$0xff]
    %v218 = vld [vmem:[%s1 + $0x518] sm:$0xff]
    %v219 = vld [vmem:[%s1 + $0x520] sm:$0xff]
    %v220 = vld [vmem:[%s1 + $0x528] sm:$0xff]
    %v221 = vld [vmem:[%s1 + $0x530] sm:$0xff]
    %v222 = vld [vmem:[%s1 + $0x538] sm:$0xff]
    %v223 = vld [vmem:[%s1 + $0x540] sm:$0xff]
    %v224 = vld [vmem:[%s1 + $0x548] sm:$0xff]
    %v225 = vld [vmem:[%s1 + $0x550] sm:$0xff]
    %v226 = vld [vmem:[%s1 + $0x558] sm:$0xff]
    %v227 = vld [vmem:[%s1 + $0x560] sm:$0xff]
    %v228 = vld [vmem:[%s1 + $0x568] sm:$0xff]
    %v229 = vld [vmem:[%s1 + $0x570] sm:$0xff]
    %v230 = vld [vmem:[%s1 + $0x578] sm:$0xff]
    %v231 = vld [vmem:[%s1 + $0x580] sm:$0xff]
    %v232 = vld [vmem:[%s1 + $0x588] sm:$0xff]
    %v233 = vld [vmem:[%s1 + $0x590] sm:$0xff]
    %v234 = vld [vmem:[%s1 + $0x598] sm:$0xff]
    %v235 = vld [vmem:[%s1 + $0x5a0] sm:$0xff]
    %v236 = vld [vmem:[%s1 + $0x5a8] sm:$0xff]
    %v237 = vld [vmem:[%s1 + $0x5b0] sm:$0xff]
    %v238 = vld [vmem:[%s1 + $0x5b8] sm:$0xff]
    %v239 = vld [vmem:[%s1 + $0x5c0] sm:$0xff]
    %v240 = vld [vmem:[%s1 + $0x5c8] sm:$0xff]
    %v241 = vld [vmem:[%s1 + $0x5d0] sm:$0xff]
    %v242 = vld [vmem:[%s1 + $0x5d8] sm:$0xff]
    %v243 = vld [vmem:[%s1 + $0x5e0] sm:$0xff]
    %v244 = vld [vmem:[%s1 + $0x5e8] sm:$0xff]
    %v245 = vld [vmem:[%s1 + $0x5f0] sm:$0xff]
    %v246 = vld [vmem:[%s1 + $0x5f8] sm:$0xff]
    %v247 = vld [vmem:[%s1 + $0x600] sm:$0xff]
    %v248 = vld [vmem:[%s1 + $0x608] sm:$0xff]
    %v249 = vld [vmem:[%s1 + $0x610] sm:$0xff]
    %v250 = vld [vmem:[%s1 + $0x618] sm:$0xff]
    %v251 = vld [vmem:[%s1 + $0x620] sm:$0xff]
    %v252 = vld [vmem:[%s1 + $0x628] sm:$0xff]
    %v253 = vld [vmem:[%s1 + $0x630] sm:$0xff]
    %v254 = vld [vmem:[%s1 + $0x638] sm:$0xff]
    %v255 = vld [vmem:[%s1 + $0x640] sm:$0xff]
    %v256 = vld [vmem:[%s1 + $0x648] sm:$0xff]
    %v257 = vld [vmem:[%s1 + $0x650] sm:$0xff]
    %v258 = vld [vmem:[%s1 + $0x658] sm:$0xff]
    %v259 = vld [vmem:[%s1 + $0x660] sm:$0xff]
    %v260 = vld [vmem:[%s1 + $0x668] sm:$0xff]
    %v261 = vld [vmem:[%s1 + $0x670] sm:$0xff]
    %v262 = vld [vmem:[%s1 + $0x678] sm:$0xff]
    %v263 = vld [vmem:[%s1 + $0x680] sm:$0xff]
    %v264 = vld [vmem:[%s1 + $0x688] sm:$0xff]
    %v265 = vld [vmem:[%s1 + $0x690] sm:$0xff]
    %v266 = vld [vmem:[%s1 + $0x698] sm:$0xff]
    %v267 = vld [vmem:[%s1 + $0x6a0] sm:$0xff]
    %v268 = vld [vmem:[%s1 + $0x6a8] sm:$0xff]
    %v269 = vld [vmem:[%s1 + $0x6b0] sm:$0xff]
    %v270 = vld [vmem:[%s1 + $0x6b8] sm:$0xff]
    %v271 = vld [vmem:[%s1 + $0x6c0] sm:$0xff]
    %v272 = vld [vmem:[%s1 + $0x6c8] sm:$0xff]
    %v273 = vld [vmem:[%s1 + $0x6d0] sm:$0xff]
    %v274 = vld [vmem:[%s1 + $0x6d8] sm:$0xff]
    %v275 = vld [vmem:[%s1 + $0x6e0] sm:$0xff]
    %v276 = vld [vmem:[%s1 + $0x6e8] sm:$0xff]
    %v277 = vld [vmem:[%s1 + $0x6f0] sm:$0xff]
    %v278 = vld [vmem:[%s1 + $0x6f8] sm:$0xff]
    %v279 = vld [vmem:[%s1 + $0x700] sm:$0xff]
    %v280 = vld [vmem:[%s1 + $0x708] sm:$0xff]
    %v281 = vld [vmem:[%s1 + $0x710] sm:$0xff]
    %v282 = vld [vmem:[%s1 + $0x718] sm:$0xff]
    %v283 = vld [vmem:[%s1 + $0x720] sm:$0xff]
    %v284 = vld [vmem:[%s1 + $0x728] sm:$0xff]
    %v285 = vld [vmem:[%s1 + $0x730] sm:$0xff]
    %v286 = vld [vmem:[%s1 + $0x738] sm:$0xff]
    %v287 = vld [vmem:[%s1 + $0x740] sm:$0xff]
    %v288 = vld [vmem:[%s1 + $0x748] sm:$0xff]
    %v289 = vld [vmem:[%s1 + $0x750] sm:$0xff]
    %v290 = vld [vmem:[%s1 + $0x758] sm:$0xff]
    %v291 = vld [vmem:[%s1 + $0x760] sm:$0xff]
    %v292 = vld [vmem:[%s1 + $0x768] sm:$0xff]
    %v293 = vld [vmem:[%s1 + $0x770] sm:$0xff]
    %v294 = vld [vmem:[%s1 + $0x778] sm:$0xff]
    %v295 = vld [vmem:[%s1 + $0x780] sm:$0xff]
    %v296 = vld [vmem:[%s1 + $0x788] sm:$0xff]
    %v297 = vld [vmem:[%s1 + $0x790] sm:$0xff]
    %v298 = vld [vmem:[%s1 + $0x798] sm:$0xff]
    %v299 = vld [vmem:[%s1 + $0x7a0] sm:$0xff]
    %v300 = vld [vmem:[%s1 + $0x7a8] sm:$0xff]
    %v301 = vld [vmem:[%s1 + $0x7b0] sm:$0xff]
    %v302 = vld [vmem:[%s1 + $0x7b8] sm:$0xff]
    %v303 = vld [vmem:[%s1 + $0x7c0] sm:$0xff]
    %v304 = vld [vmem:[%s1 + $0x7c8] sm:$0xff]
    %v305 = vld [vmem:[%s1 + $0x7d0] sm:$0xff]
    %v306 = vld [vmem:[%s1 + $0x7d8] sm:$0xff]
    %v307 = vld [vmem:[%s1 + $0x7e0] sm:$0xff]
    %v308 = vld [vmem:[%s1 + $0x7e8] sm:$0xff]
    %v309 = vld [vmem:[%s1 + $0x7f0] sm:$0xff]
    %v310 = vld [vmem:[%s1 + $0x7f8] sm:$0xff]
    %v311 = vld [vmem:[%s1 + $0x800] sm:$0xff]
    %v312 = vld [vmem:[%s1 + $0x808] sm:$0xff]
    %v313 = vld [vmem:[%s1 + $0x810] sm:$0xff]
    %v314 = vld [vmem:[%s1 + $0x818] sm:$0xff]
    %v315 = vld [vmem:[%s1 + $0x820] sm:$0xff]
    %v316 = vld [vmem:[%s1 + $0x828] sm:$0xff]
    %v317 = vld [vmem:[%s1 + $0x830] sm:$0xff]
    %v318 = vld [vmem:[%s1 + $0x838] sm:$0xff]
    %v319 = vld [vmem:[%s1 + $0x840] sm:$0xff]
    %v320 = vld [vmem:[%s1 + $0x848] sm:$0xff]
    %v321 = vld [vmem:[%s1 + $0x850] sm:$0xff]
    %v322 = vld [vmem:[%s1 + $0x858] sm:$0xff]
    %v323 = vld [vmem:[%s1 + $0x860] sm:$0xff]
    %v324 = vld [vmem:[%s1 + $0x868] sm:$0xff]
    %v325 = vld [vmem:[%s1 + $0x870] sm:$0xff]
    %v326 = vld [vmem:[%s1 + $0x878] sm:$0xff]
    %v327 = vld [vmem:[%s1 + $0x880] sm:$0xff]
    %v328 = vld [vmem:[%s1 + $0x888] sm:$0xff]
    %v329 = vld [vmem:[%s1 + $0x890] sm:$0xff]
    %v330 = vld [vmem:[%s1 + $0x898] sm:$0xff]
    %v331 = vld [vmem:[%s1 + $0x8a0] sm:$0xff]
    %v332 = vld [vmem:[%s1 + $0x8a8] sm:$0xff]
    %v333 = vld [vmem:[%s1 + $0x8b0] sm:$0xff]
    %v334 = vld [vmem:[%s1 + $0x8b8] sm:$0xff]
    %v335 = vld [vmem:[%s1 + $0x8c0] sm:$0xff]
    %v336 = vld [vmem:[%s1 + $0x8c8] sm:$0xff]
    %v337 = vld [vmem:[%s1 + $0x8d0] sm:$0xff]
    %v338 = vld [vmem:[%s1 + $0x8d8] sm:$0xff]
    %v339 = vld [vmem:[%s1 + $0x8e0] sm:$0xff]
    %v340 = vld [vmem:[%s1 + $0x8e8] sm:$0xff]
    %v341 = vld [vmem:[%s1 + $0x8f0] sm:$0xff]
    %v342 = vld [vmem:[%s1 + $0x8f8] sm:$0xff]
    %v343 = vld [vmem:[%s1 + $0x900] sm:$0xff]
    %v344 = vld [vmem:[%s1 + $0x908] sm:$0xff]
    %v345 = vld [vmem:[%s1 + $0x910] sm:$0xff]
    %v346 = vld [vmem:[%s1 + $0x918] sm:$0xff]
    %v347 = vld [vmem:[%s1 + $0x920] sm:$0xff]
    %v348 = vld [vmem:[%s1 + $0x928] sm:$0xff]
    %v349 = vld [vmem:[%s1 + $0x930] sm:$0xff]
    %v350 = vld [vmem:[%s1 + $0x938] sm:$0xff]
    %v351 = vld [vmem:[%s1 + $0x940] sm:$0xff]
    %v352 = vld [vmem:[%s1 + $0x948] sm:$0xff]
    %v353 = vld [vmem:[%s1 + $0x950] sm:$0xff]
    %v354 = vld [vmem:[%s1 + $0x958] sm:$0xff]
    %v355 = vld [vmem:[%s1 + $0x960] sm:$0xff]
    %v356 = vld [vmem:[%s1 + $0x968] sm:$0xff]
    %v357 = vld [vmem:[%s1 + $0x970] sm:$0xff]
    %v358 = vld [vmem:[%s1 + $0x978] sm:$0xff]
    %v359 = vld [vmem:[%s1 + $0x980] sm:$0xff]
    %v360 = vld [vmem:[%s1 + $0x988] sm:$0xff]
    %v361 = vld [vmem:[%s1 + $0x990] sm:$0xff]
    %v362 = vld [vmem:[%s1 + $0x998] sm:$0xff]
    %v363 = vld [vmem:[%s1 + $0x9a0] sm:$0xff]
    %v364 = vld [vmem:[%s1 + $0x9a8] sm:$0xff]
    %v365 = vld [vmem:[%s1 + $0x9b0] sm:$0xff]
    %v366 = vld [vmem:[%s1 + $0x9b8] sm:$0xff]
    %v367 = vld [vmem:[%s1 + $0x9c0] sm:$0xff]
    %v368 = vld [vmem:[%s1 + $0x9c8] sm:$0xff]
    %v369 = vld [vmem:[%s1 + $0x9d0] sm:$0xff]
    %v370 = vld [vmem:[%s1 + $0x9d8] sm:$0xff]
    %v371 = vld [vmem:[%s1 + $0x9e0] sm:$0xff]
    %v372 = vld [vmem:[%s1 + $0x9e8] sm:$0xff]
    %v373 = vld [vmem:[%s1 + $0x9f0] sm:$0xff]
    %v374 = vld [vmem:[%s1 + $0x9f8] sm:$0xff]
    %v375 = vld [vmem:[%s1 + $0xa00] sm:$0xff]
    %v376 = vld [vmem:[%s1 + $0xa08] sm:$0xff]
    %v377 = vld [vmem:[%s1 + $0xa10] sm:$0xff]
    %v378 = vld [vmem:[%s1 + $0xa18] sm:$0xff]
    %v379 = vld [vmem:[%s1 + $0xa20] sm:$0xff]
    %v380 = vld [vmem:[%s1 + $0xa28] sm:$0xff]
    %v381 = vld [vmem:[%s1 + $0xa30] sm:$0xff]
    %v382 = vld [vmem:[%s1 + $0xa38] sm:$0xff]
    %v383 = vld [vmem:[%s1 + $0xa40] sm:$0xff]
    %v384 = vld [vmem:[%s1 + $0xa48] sm:$0xff]
    %v385 = vld [vmem:[%s1 + $0xa50] sm:$0xff]
    %v386 = vld [vmem:[%s1 + $0xa58] sm:$0xff]
    %v387 = vld [vmem:[%s1 + $0xa60] sm:$0xff]
    %v388 = vld [vmem:[%s1 + $0xa68] sm:$0xff]
    %v389 = vld [vmem:[%s1 + $0xa70] sm:$0xff]
    %v390 = vld [vmem:[%s1 + $0xa78] sm:$0xff]
    %v391 = vld [vmem:[%s1 + $0xa80] sm:$0xff]
    %v392 = vld [vmem:[%s1 + $0xa88] sm:$0xff]
    %v393 = vld [vmem:[%s1 + $0xa90] sm:$0xff]
    %v394 = vld [vmem:[%s1 + $0xa98] sm:$0xff]
    %v395 = vld [vmem:[%s1 + $0xaa0] sm:$0xff]
    %v396 = vld [vmem:[%s1 + $0xaa8] sm:$0xff]
    %v397 = vld [vmem:[%s1 + $0xab0] sm:$0xff]
    %v398 = vld [vmem:[%s1 + $0xab8] sm:$0xff]
    %v399 = vld [vmem:[%s1 + $0xac0] sm:$0xff]
    %v400 = vld [vmem:[%s1 + $0xac8] sm:$0xff]
    %v401 = vld [vmem:[%s1 + $0xad0] sm:$0xff]
    %v402 = vld [vmem:[%s1 + $0xad8] sm:$0xff]
    %v403 = vld [vmem:[%s1 + $0xae0] sm:$0xff]
    %v404 = vld [vmem:[%s1 + $0xae8] sm:$0xff]
    %v405 = vld [vmem:[%s1 + $0xaf0] sm:$0xff]
    %v406 = vld [vmem:[%s1 + $0xaf8] sm:$0xff]
    %v407 = vld [vmem:[%s1 + $0xb00] sm:$0xff]
    %v408 = vld [vmem:[%s1 + $0xb08] sm:$0xff]
    %v409 = vld [vmem:[%s1 + $0xb10] sm:$0xff]
    %v410 = vld [vmem:[%s1 + $0xb18] sm:$0xff]
    %v411 = vld [vmem:[%s1 + $0xb20] sm:$0xff]
    %v412 = vld [vmem:[%s1 + $0xb28] sm:$0xff]
    %v413 = vld [vmem:[%s1 + $0xb30] sm:$0xff]
    %v414 = vld [vmem:[%s1 + $0xb38] sm:$0xff]
    %v415 = vld [vmem:[%s1 + $0xb40] sm:$0xff]
    %v416 = vld [vmem:[%s1 + $0xb48] sm:$0xff]
    %v417 = vld [vmem:[%s1 + $0xb50] sm:$0xff]
    %v418 = vld [vmem:[%s1 + $0xb58] sm:$0xff]
    %v419 = vld [vmem:[%s1 + $0xb60] sm:$0xff]
    %v420 = vld [vmem:[%s1 + $0xb68] sm:$0xff]
    %v421 = vld [vmem:[%s1 + $0xb70] sm:$0xff]
    %v422 = vld [vmem:[%s1 + $0xb78] sm:$0xff]
    %v423 = vld [vmem:[%s1 + $0xb80] sm:$0xff]
    %v424 = vld [vmem:[%s1 + $0xb88] sm:$0xff]
    %v425 = vld [vmem:[%s1 + $0xb90] sm:$0xff]
    %v426 = vld [vmem:[%s1 + $0xb98] sm:$0xff]
    %v427 = vld [vmem:[%s1 + $0xba0] sm:$0xff]
    %v428 = vld [vmem:[%s1 + $0xba8] sm:$0xff]
    %v429 = vld [vmem:[%s1 + $0xbb0] sm:$0xff]
    %v430 = vld [vmem:[%s1 + $0xbb8] sm:$0xff]
    %v431 = vld [vmem:[%s1 + $0xbc0] sm:$0xff]
    %v432 = vld [vmem:[%s1 + $0xbc8] sm:$0xff]
    %v433 = vld [vmem:[%s1 + $0xbd0] sm:$0xff]
    %v434 = vld [vmem:[%s1 + $0xbd8] sm:$0xff]
    %v435 = vld [vmem:[%s1 + $0xbe0] sm:$0xff]
    %v436 = vld [vmem:[%s1 + $0xbe8] sm:$0xff]
    %v437 = vld [vmem:[%s1 + $0xbf0] sm:$0xff]
    %v438 = vld [vmem:[%s1 + $0xbf8] sm:$0xff]
    %v439 = vld [vmem:[%s1 + $0xc00] sm:$0xff]
    %v440 = vld [vmem:[%s1 + $0xc08] sm:$0xff]
    %v441 = vld [vmem:[%s1 + $0xc10] sm:$0xff]
    %v442 = vld [vmem:[%s1 + $0xc18] sm:$0xff]
    %v443 = vld [vmem:[%s1 + $0xc20] sm:$0xff]
    %v444 = vld [vmem:[%s1 + $0xc28] sm:$0xff]
    %v445 = vld [vmem:[%s1 + $0xc30] sm:$0xff]
    %v446 = vld [vmem:[%s1 + $0xc38] sm:$0xff]
    %v447 = vld [vmem:[%s1 + $0xc40] sm:$0xff]
    %v448 = vld [vmem:[%s1 + $0xc48] sm:$0xff]
    %v449 = vld [vmem:[%s1 + $0xc50] sm:$0xff]
    %v450 = vld [vmem:[%s1 + $0xc58] sm:$0xff]
    %v451 = vld [vmem:[%s1 + $0xc60] sm:$0xff]
    %v452 = vld [vmem:[%s1 + $0xc68] sm:$0xff]
    %v453 = vld [vmem:[%s1 + $0xc70] sm:$0xff]
    %v454 = vld [vmem:[%s1 + $0xc78] sm:$0xff]
    %v455 = vld [vmem:[%s1 + $0xc80] sm:$0xff]
    %v456 = vld [vmem:[%s1 + $0xc88] sm:$0xff]
    %v457 = vld [vmem:[%s1 + $0xc90] sm:$0xff]
    %v458 = vld [vmem:[%s1 + $0xc98] sm:$0xff]
    %v459 = vld [vmem:[%s1 + $0xca0] sm:$0xff]
    %v460 = vld [vmem:[%s1 + $0xca8] sm:$0xff]
    %v461 = vld [vmem:[%s1 + $0xcb0] sm:$0xff]
    %v462 = vld [vmem:[%s1 + $0xcb8] sm:$0xff]
    %v463 = vld [vmem:[%s1 + $0xcc0] sm:$0xff]
    %v464 = vld [vmem:[%s1 + $0xcc8] sm:$0xff]
    %v465 = vld [vmem:[%s1 + $0xcd0] sm:$0xff]
    %v466 = vld [vmem:[%s1 + $0xcd8] sm:$0xff]
    %v467 = vld [vmem:[%s1 + $0xce0] sm:$0xff]
    %v468 = vld [vmem:[%s1 + $0xce8] sm:$0xff]
    %v469 = vld [vmem:[%s1 + $0xcf0] sm:$0xff]
    %v470 = vld [vmem:[%s1 + $0xcf8] sm:$0xff]
    %v471 = vld [vmem:[%s1 + $0xd00] sm:$0xff]
    %v472 = vld [vmem:[%s1 + $0xd08] sm:$0xff]
    %v473 = vld [vmem:[%s1 + $0xd10] sm:$0xff]
    %v474 = vld [vmem:[%s1 + $0xd18] sm:$0xff]
    %v475 = vld [vmem:[%s1 + $0xd20] sm:$0xff]
    %v476 = vld [vmem:[%s1 + $0xd28] sm:$0xff]
    %v477 = vld [vmem:[%s1 + $0xd30] sm:$0xff]
    %v478 = vld [vmem:[%s1 + $0xd38] sm:$0xff]
    %v479 = vld [vmem:[%s1 + $0xd40] sm:$0xff]
    %v480 = vld [vmem:[%s1 + $0xd48] sm:$0xff]
    %v481 = vld [vmem:[%s1 + $0xd50] sm:$0xff]
    %v482 = vld [vmem:[%s1 + $0xd58] sm:$0xff]
    %v483 = vld [vmem:[%s1 + $0xd60] sm:$0xff]
    %v484 = vld [vmem:[%s1 + $0xd68] sm:$0xff]
    %v485 = vld [vmem:[%s1 + $0xd70] sm:$0xff]
    %v486 = vld [vmem:[%s1 + $0xd78] sm:$0xff]
    %v487 = vld [vmem:[%s1 + $0xd80] sm:$0xff]
    %v488 = vld [vmem:[%s1 + $0xd88] sm:$0xff]
    %v489 = vld [vmem:[%s1 + $0xd90] sm:$0xff]
    %v490 = vld [vmem:[%s1 + $0xd98] sm:$0xff]
    %v491 = vld [vmem:[%s1 + $0xda0] sm:$0xff]
    %v492 = vld [vmem:[%s1 + $0xda8] sm:$0xff]
    %v493 = vld [vmem:[%s1 + $0xdb0] sm:$0xff]
    %v494 = vld [vmem:[%s1 + $0xdb8] sm:$0xff]
    %v495 = vld [vmem:[%s1 + $0xdc0] sm:$0xff]
    %v496 = vld [vmem:[%s1 + $0xdc8] sm:$0xff]
    %v497 = vld [vmem:[%s1 + $0xdd0] sm:$0xff]
    %v498 = vld [vmem:[%s1 + $0xdd8] sm:$0xff]
    %v499 = vld [vmem:[%s1 + $0xde0] sm:$0xff]
    %v500 = vld [vmem:[%s1 + $0xde8] sm:$0xff]
    %v501 = vld [vmem:[%s1 + $0xdf0] sm:$0xff]
    %v502 = vld [vmem:[%s1 + $0xdf8] sm:$0xff]
    %v503 = vld [vmem:[%s1 + $0xe00] sm:$0xff]
    %v504 = vld [vmem:[%s1 + $0xe08] sm:$0xff]
    %v505 = vld [vmem:[%s1 + $0xe10] sm:$0xff]
    %v506 = vld [vmem:[%s1 + $0xe18] sm:$0xff]
    %v507 = vld [vmem:[%s1 + $0xe20] sm:$0xff]
    %v508 = vld [vmem:[%s1 + $0xe28] sm:$0xff]
    %v509 = vld [vmem:[%s1 + $0xe30] sm:$0xff]
    %v510 = vld [vmem:[%s1 + $0xe38] sm:$0xff]
    %v511 = vld [vmem:[%s1 + $0xe40] sm:$0xff]
    %v512 = vld [vmem:[%s1 + $0xe48] sm:$0xff]
    %v513 = vld [vmem:[%s1 + $0xe50] sm:$0xff]
    %v514 = vld [vmem:[%s1 + $0xe58] sm:$0xff]
    %v515 = vld [vmem:[%s1 + $0xe60] sm:$0xff]
    %v516 = vld [vmem:[%s1 + $0xe68] sm:$0xff]
    %v517 = vld [vmem:[%s1 + $0xe70] sm:$0xff]
    %v518 = vld [vmem:[%s1 + $0xe78] sm:$0xff]
    %v519 = vld [vmem:[%s1 + $0xe80] sm:$0xff]
    %v520 = vld [vmem:[%s1 + $0xe88] sm:$0xff]
    %v521 = vld [vmem:[%s1 + $0xe90] sm:$0xff]
    %v522 = vld [vmem:[%s1 + $0xe98] sm:$0xff]
    %v523 = vld [vmem:[%s1 + $0xea0] sm:$0xff]
    %v524 = vld [vmem:[%s1 + $0xea8] sm:$0xff]
    %v525 = vld [vmem:[%s1 + $0xeb0] sm:$0xff]
    %v526 = vld [vmem:[%s1 + $0xeb8] sm:$0xff]
    %v527 = vld [vmem:[%s1 + $0xec0] sm:$0xff]
    %v528 = vld [vmem:[%s1 + $0xec8] sm:$0xff]
    %v529 = vld [vmem:[%s1 + $0xed0] sm:$0xff]
    %v530 = vld [vmem:[%s1 + $0xed8] sm:$0xff]
    %v531 = vld [vmem:[%s1 + $0xee0] sm:$0xff]
    %v532 = vld [vmem:[%s1 + $0xee8] sm:$0xff]
    %v533 = vld [vmem:[%s1 + $0xef0] sm:$0xff]
    %v534 = vld [vmem:[%s1 + $0xef8] sm:$0xff]
    %v535 = vld [vmem:[%s1 + $0xf00] sm:$0xff]
    %v536 = vld [vmem:[%s1 + $0xf08] sm:$0xff]
    %v537 = vld [vmem:[%s1 + $0xf10] sm:$0xff]
    %v538 = vld [vmem:[%s1 + $0xf18] sm:$0xff]
    %v539 = vld [vmem:[%s1 + $0xf20] sm:$0xff]
    %v540 = vld [vmem:[%s1 + $0xf28] sm:$0xff]
    %v541 = vld [vmem:[%s1 + $0xf30] sm:$0xff]
    %v542 = vld [vmem:[%s1 + $0xf38] sm:$0xff]
    %v543 = vld [vmem:[%s1 + $0xf40] sm:$0xff]
    %v544 = vld [vmem:[%s1 + $0xf48] sm:$0xff]
    %v545 = vld [vmem:[%s1 + $0xf50] sm:$0xff]
    %v546 = vld [vmem:[%s1 + $0xf58] sm:$0xff]
    %v547 = vld [vmem:[%s1 + $0xf60] sm:$0xff]
    %v548 = vld [vmem:[%s1 + $0xf68] sm:$0xff]
    %v549 = vld [vmem:[%s1 + $0xf70] sm:$0xff]
    %v550 = vld [vmem:[%s1 + $0xf78] sm:$0xff]
    %v551 = vld [vmem:[%s1 + $0xf80] sm:$0xff]
    %v552 = vld [vmem:[%s1 + $0xf88] sm:$0xff]
    %v553 = vld [vmem:[%s1 + $0xf90] sm:$0xff]
    %v554 = vld [vmem:[%s1 + $0xf98] sm:$0xff]
    %v555 = vld [vmem:[%s1 + $0xfa0] sm:$0xff]
    %v556 = vld [vmem:[%s1 + $0xfa8] sm:$0xff]
    %v557 = vld [vmem:[%s1 + $0xfb0] sm:$0xff]
    %v558 = vld [vmem:[%s1 + $0xfb8] sm:$0xff]
    %v559 = vld [vmem:[%s1 + $0xfc0] sm:$0xff]
    %v560 = vld [vmem:[%s1 + $0xfc8] sm:$0xff]
    %v561 = vld [vmem:[%s1 + $0xfd0] sm:$0xff]
    %v562 = vld [vmem:[%s1 + $0xfd8] sm:$0xff]
    %v563 = vld [vmem:[%s1 + $0xfe0] sm:$0xff]
    %v564 = vld [vmem:[%s1 + $0xfe8] sm:$0xff]
    %v565 = vld [vmem:[%s1 + $0xff0] sm:$0xff]
    %v566 = vld [vmem:[%s1 + $0xff8] sm:$0xff]
    %v567 = vld [vmem:[%s1 + $0x1000] sm:$0xff]
    %v568 = vld [vmem:[%s1 + $0x1008] sm:$0xff]
    %v569 = vld [vmem:[%s1 + $0x1010] sm:$0xff]
    %v570 = vld [vmem:[%s1 + $0x1018] sm:$0xff]
    %v571 = vld [vmem:[%s1 + $0x1020] sm:$0xff]
    %v572 = vld [vmem:[%s1 + $0x1028] sm:$0xff]
    %v573 = vld [vmem:[%s1 + $0x1030] sm:$0xff]
    %v574 = vld [vmem:[%s1 + $0x1038] sm:$0xff]
    %v575 = vld [vmem:[%s1 + $0x1040] sm:$0xff]
    %v576 = vld [vmem:[%s1 + $0x1048] sm:$0xff]
    %v577 = vld [vmem:[%s1 + $0x1050] sm:$0xff]
    %v578 = vld [vmem:[%s1 + $0x1058] sm:$0xff]
    %v579 = vld [vmem:[%s1 + $0x1060] sm:$0xff]
    %v580 = vld [vmem:[%s1 + $0x1068] sm:$0xff]
    %v581 = vld [vmem:[%s1 + $0x1070] sm:$0xff]
    %v582 = vld [vmem:[%s1 + $0x1078] sm:$0xff]
    %v583 = vld [vmem:[%s1 + $0x1080] sm:$0xff]
    %v584 = vld [vmem:[%s1 + $0x1088] sm:$0xff]
    %v585 = vld [vmem:[%s1 + $0x1090] sm:$0xff]
    %v586 = vld [vmem:[%s1 + $0x1098] sm:$0xff]
    %v587 = vld [vmem:[%s1 + $0x10a0] sm:$0xff]
    %v588 = vld [vmem:[%s1 + $0x10a8] sm:$0xff]
    %v589 = vld [vmem:[%s1 + $0x10b0] sm:$0xff]
    %v590 = vld [vmem:[%s1 + $0x10b8] sm:$0xff]
    %v591 = vld [vmem:[%s1 + $0x10c0] sm:$0xff]
    %v592 = vld [vmem:[%s1 + $0x10c8] sm:$0xff]
    %v593 = vld [vmem:[%s1 + $0x10d0] sm:$0xff]
    %v594 = vld [vmem:[%s1 + $0x10d8] sm:$0xff]
    %v595 = vld [vmem:[%s1 + $0x10e0] sm:$0xff]
    %v596 = vld [vmem:[%s1 + $0x10e8] sm:$0xff]
    %v597 = vld [vmem:[%s1 + $0x10f0] sm:$0xff]
    %v598 = vld [vmem:[%s1 + $0x10f8] sm:$0xff]
    %v599 = vld [vmem:[%s1 + $0x1100] sm:$0xff]
    %v600 = vld [vmem:[%s1 + $0x1108] sm:$0xff]
    %v601 = vld [vmem:[%s1 + $0x1110] sm:$0xff]
    %v602 = vld [vmem:[%s1 + $0x1118] sm:$0xff]
    %v603 = vld [vmem:[%s1 + $0x1120] sm:$0xff]
    %v604 = vld [vmem:[%s1 + $0x1128] sm:$0xff]
    %v605 = vld [vmem:[%s1 + $0x1130] sm:$0xff]
    %v606 = vld [vmem:[%s1 + $0x1138] sm:$0xff]
    %v607 = vld [vmem:[%s1 + $0x1140] sm:$0xff]
    %v608 = vld [vmem:[%s1 + $0x1148] sm:$0xff]
    %v609 = vld [vmem:[%s1 + $0x1150] sm:$0xff]
    %v610 = vld [vmem:[%s1 + $0x1158] sm:$0xff]
    %v611 = vld [vmem:[%s1 + $0x1160] sm:$0xff]
    %v612 = vld [vmem:[%s1 + $0x1168] sm:$0xff]
    %v613 = vld [vmem:[%s1 + $0x1170] sm:$0xff]
    %v614 = vld [vmem:[%s1 + $0x1178] sm:$0xff]
    %v615 = vld [vmem:[%s1 + $0x1180] sm:$0xff]
    %v616 = vld [vmem:[%s1 + $0x1188] sm:$0xff]
    %v617 = vld [vmem:[%s1 + $0x1190] sm:$0xff]
    %v618 = vld [vmem:[%s1 + $0x1198] sm:$0xff]
    %v619 = vld [vmem:[%s1 + $0x11a0] sm:$0xff]
    %v620 = vld [vmem:[%s1 + $0x11a8] sm:$0xff]
    %v621 = vld [vmem:[%s1 + $0x11b0] sm:$0xff]
    %v622 = vld [vmem:[%s1 + $0x11b8] sm:$0xff]
    %v623 = vld [vmem:[%s1 + $0x11c0] sm:$0xff]
    %v624 = vld [vmem:[%s1 + $0x11c8] sm:$0xff]
    %v625 = vld [vmem:[%s1 + $0x11d0] sm:$0xff]
    %v626 = vld [vmem:[%s1 + $0x11d8] sm:$0xff]
    %v627 = vld [vmem:[%s1 + $0x11e0] sm:$0xff]
    %v628 = vld [vmem:[%s1 + $0x11e8] sm:$0xff]
    %v629 = vld [vmem:[%s1 + $0x11f0] sm:$0xff]
    %v630 = vld [vmem:[%s1 + $0x11f8] sm:$0xff]
    %v631 = vld [vmem:[%s1 + $0x1200] sm:$0xff]
    %v632 = vld [vmem:[%s1 + $0x1208] sm:$0xff]
    %v633 = vld [vmem:[%s1 + $0x1210] sm:$0xff]
    %v634 = vld [vmem:[%s1 + $0x1218] sm:$0xff]
    %v635 = vld [vmem:[%s1 + $0x1220] sm:$0xff]
    %v636 = vld [vmem:[%s1 + $0x1228] sm:$0xff]
    %v637 = vld [vmem:[%s1 + $0x1230] sm:$0xff]
    %v638 = vld [vmem:[%s1 + $0x1238] sm:$0xff]
    %v639 = vld [vmem:[%s1 + $0x1240] sm:$0xff]
    %v640 = vld [vmem:[%s1 + $0x1248] sm:$0xff]
    %v641 = vld [vmem:[%s1 + $0x1250] sm:$0xff]
    %v642 = vld [vmem:[%s1 + $0x1258] sm:$0xff]
    %v643 = vld [vmem:[%s1 + $0x1260] sm:$0xff]
    %v644 = vld [vmem:[%s1 + $0x1268] sm:$0xff]
    %v645 = vld [vmem:[%s1 + $0x1270] sm:$0xff]
    %v646 = vld [vmem:[%s1 + $0x1278] sm:$0xff]
    %v647 = vld [vmem:[%s1 + $0x1280] sm:$0xff]
    %v648 = vld [vmem:[%s1 + $0x1288] sm:$0xff]
    %v649 = vld [vmem:[%s1 + $0x1290] sm:$0xff]
    %v650 = vld [vmem:[%s1 + $0x1298] sm:$0xff]
    %v651 = vld [vmem:[%s1 + $0x12a0] sm:$0xff]
    %v652 = vld [vmem:[%s1 + $0x12a8] sm:$0xff]
    %v653 = vld [vmem:[%s1 + $0x12b0] sm:$0xff]
    %v654 = vld [vmem:[%s1 + $0x12b8] sm:$0xff]
    %v655 = vld [vmem:[%s1 + $0x12c0] sm:$0xff]
    %v656 = vld [vmem:[%s1 + $0x12c8] sm:$0xff]
    %v657 = vld [vmem:[%s1 + $0x12d0] sm:$0xff]
    %v658 = vld [vmem:[%s1 + $0x12d8] sm:$0xff]
    %v659 = vld [vmem:[%s1 + $0x12e0] sm:$0xff]
    %v660 = vld [vmem:[%s1 + $0x12e8] sm:$0xff]
    %v661 = vld [vmem:[%s1 + $0x12f0] sm:$0xff]
    %v662 = vld [vmem:[%s1 + $0x12f8] sm:$0xff]
    %v663 = vld [vmem:[%s1 + $0x1300] sm:$0xff]
    %v664 = vld [vmem:[%s1 + $0x1308] sm:$0xff]
    %v665 = vld [vmem:[%s1 + $0x1310] sm:$0xff]
    %v666 = vld [vmem:[%s1 + $0x1318] sm:$0xff]
    %v667 = vld [vmem:[%s1 + $0x1320] sm:$0xff]
    %v668 = vld [vmem:[%s1 + $0x1328] sm:$0xff]
    %v669 = vld [vmem:[%s1 + $0x1330] sm:$0xff]
    %v670 = vld [vmem:[%s1 + $0x1338] sm:$0xff]
    %v671 = vld [vmem:[%s1 + $0x1340] sm:$0xff]
    %v672 = vld [vmem:[%s1 + $0x1348] sm:$0xff]
    %v673 = vld [vmem:[%s1 + $0x1350] sm:$0xff]
    %v674 = vld [vmem:[%s1 + $0x1358] sm:$0xff]
    %v675 = vld [vmem:[%s1 + $0x1360] sm:$0xff]
    %v676 = vld [vmem:[%s1 + $0x1368] sm:$0xff]
    %v677 = vld [vmem:[%s1 + $0x1370] sm:$0xff]
    %v678 = vld [vmem:[%s1 + $0x1378] sm:$0xff]
    %v679 = vld [vmem:[%s1 + $0x1380] sm:$0xff]
    %v680 = vld [vmem:[%s1 + $0x1388] sm:$0xff]
    %v681 = vld [vmem:[%s1 + $0x1390] sm:$0xff]
    %v682 = vld [vmem:[%s1 + $0x1398] sm:$0xff]
    %v683 = vld [vmem:[%s1 + $0x13a0] sm:$0xff]
    %v684 = vld [vmem:[%s1 + $0x13a8] sm:$0xff]
    %v685 = vld [vmem:[%s1 + $0x13b0] sm:$0xff]
    %v686 = vld [vmem:[%s1 + $0x13b8] sm:$0xff]
    %v687 = vld [vmem:[%s1 + $0x13c0] sm:$0xff]
    %v688 = vld [vmem:[%s1 + $0x13c8] sm:$0xff]
    %v689 = vld [vmem:[%s1 + $0x13d0] sm:$0xff]
    %v690 = vld [vmem:[%s1 + $0x13d8] sm:$0xff]
    %v691 = vld [vmem:[%s1 + $0x13e0] sm:$0xff]
    %v692 = vld [vmem:[%s1 + $0x13e8] sm:$0xff]
    %v693 = vld [vmem:[%s1 + $0x13f0] sm:$0xff]
    %v694 = vld [vmem:[%s1 + $0x13f8] sm:$0xff]
    %v695 = vld [vmem:[%s1 + $0x1400] sm:$0xff]
    %v696 = vld [vmem:[%s1 + $0x1408] sm:$0xff]
    %v697 = vld [vmem:[%s1 + $0x1410] sm:$0xff]
    %v698 = vld [vmem:[%s1 + $0x1418] sm:$0xff]
    %v699 = vld [vmem:[%s1 + $0x1420] sm:$0xff]
    %v700 = vld [vmem:[%s1 + $0x1428] sm:$0xff]
    %v701 = vld [vmem:[%s1 + $0x1430] sm:$0xff]
    %v702 = vld [vmem:[%s1 + $0x1438] sm:$0xff]
    %v703 = vld [vmem:[%s1 + $0x1440] sm:$0xff]
    %v704 = vld [vmem:[%s1 + $0x1448] sm:$0xff]
    %v705 = vld [vmem:[%s1 + $0x1450] sm:$0xff]
    %v706 = vld [vmem:[%s1 + $0x1458] sm:$0xff]
    %v707 = vld [vmem:[%s1 + $0x1460] sm:$0xff]
    %v708 = vld [vmem:[%s1 + $0x1468] sm:$0xff]
    %v709 = vld [vmem:[%s1 + $0x1470] sm:$0xff]
    %v710 = vld [vmem:[%s1 + $0x1478] sm:$0xff]
    %v711 = vld [vmem:[%s1 + $0x1480] sm:$0xff]
    %v712 = vld [vmem:[%s1 + $0x1488] sm:$0xff]
    %v713 = vld [vmem:[%s1 + $0x1490] sm:$0xff]
    %v714 = vld [vmem:[%s1 + $0x1498] sm:$0xff]
    %v715 = vld [vmem:[%s1 + $0x14a0] sm:$0xff]
    %v716 = vld [vmem:[%s1 + $0x14a8] sm:$0xff]
    %v717 = vld [vmem:[%s1 + $0x14b0] sm:$0xff]
    %v718 = vld [vmem:[%s1 + $0x14b8] sm:$0xff]
    %v719 = vld [vmem:[%s1 + $0x14c0] sm:$0xff]
    %v720 = vld [vmem:[%s1 + $0x14c8] sm:$0xff]
    %v721 = vld [vmem:[%s1 + $0x14d0] sm:$0xff]
    %v722 = vld [vmem:[%s1 + $0x14d8] sm:$0xff]
    %v723 = vld [vmem:[%s1 + $0x14e0] sm:$0xff]
    %v724 = vld [vmem:[%s1 + $0x14e8] sm:$0xff]
    %v725 = vld [vmem:[%s1 + $0x14f0] sm:$0xff]
    %v726 = vld [vmem:[%s1 + $0x14f8] sm:$0xff]
    %v727 = vld [vmem:[%s1 + $0x1500] sm:$0xff]
    %v728 = vld [vmem:[%s1 + $0x1508] sm:$0xff]
    %v729 = vld [vmem:[%s1 + $0x1510] sm:$0xff]
    %v730 = vld [vmem:[%s1 + $0x1518] sm:$0xff]
    %v731 = vld [vmem:[%s1 + $0x1520] sm:$0xff]
    %v732 = vld [vmem:[%s1 + $0x1528] sm:$0xff]
    %v733 = vld [vmem:[%s1 + $0x1530] sm:$0xff]
    %v734 = vld [vmem:[%s1 + $0x1538] sm:$0xff]
    %v735 = vld [vmem:[%s1 + $0x1540] sm:$0xff]
    %v736 = vld [vmem:[%s1 + $0x1548] sm:$0xff]
    %v737 = vld [vmem:[%s1 + $0x1550] sm:$0xff]
    %v738 = vld [vmem:[%s1 + $0x1558] sm:$0xff]
    %v739 = vld [vmem:[%s1 + $0x1560] sm:$0xff]
    %v740 = vld [vmem:[%s1 + $0x1568] sm:$0xff]
    %v741 = vld [vmem:[%s1 + $0x1570] sm:$0xff]
    %v742 = vld [vmem:[%s1 + $0x1578] sm:$0xff]
    %v743 = vld [vmem:[%s1 + $0x1580] sm:$0xff]
    %v744 = vld [vmem:[%s1 + $0x1588] sm:$0xff]
    %v745 = vld [vmem:[%s1 + $0x1590] sm:$0xff]
    %v746 = vld [vmem:[%s1 + $0x1598] sm:$0xff]
    %v747 = vld [vmem:[%s1 + $0x15a0] sm:$0xff]
    %v748 = vld [vmem:[%s1 + $0x15a8] sm:$0xff]
    %v749 = vld [vmem:[%s1 + $0x15b0] sm:$0xff]
    %v750 = vld [vmem:[%s1 + $0x15b8] sm:$0xff]
    %v751 = vld [vmem:[%s1 + $0x15c0] sm:$0xff]
    %v752 = vld [vmem:[%s1 + $0x15c8] sm:$0xff]
    %v753 = vld [vmem:[%s1 + $0x15d0] sm:$0xff]
    %v754 = vld [vmem:[%s1 + $0x15d8] sm:$0xff]
    %v755 = vld [vmem:[%s1 + $0x15e0] sm:$0xff]
    %v756 = vld [vmem:[%s1 + $0x15e8] sm:$0xff]
    %v757 = vld [vmem:[%s1 + $0x15f0] sm:$0xff]
    %v758 = vld [vmem:[%s1 + $0x15f8] sm:$0xff]
    %v759 = vld [vmem:[%s1 + $0x1600] sm:$0xff]
    %v760 = vld [vmem:[%s1 + $0x1608] sm:$0xff]
    %v761 = vld [vmem:[%s1 + $0x1610] sm:$0xff]
    %v762 = vld [vmem:[%s1 + $0x1618] sm:$0xff]
    %v763 = vld [vmem:[%s1 + $0x1620] sm:$0xff]
    %v764 = vld [vmem:[%s1 + $0x1628] sm:$0xff]
    %v765 = vld [vmem:[%s1 + $0x1630] sm:$0xff]
    %v766 = vld [vmem:[%s1 + $0x1638] sm:$0xff]
    %v767 = vld [vmem:[%s1 + $0x1640] sm:$0xff]
    %v768 = vld [vmem:[%s1 + $0x1648] sm:$0xff]
    %v769 = vld [vmem:[%s1 + $0x1650] sm:$0xff]
    %v770 = vld [vmem:[%s1 + $0x1658] sm:$0xff]
    %v771 = vld [vmem:[%s1 + $0x1660] sm:$0xff]
    %v772 = vld [vmem:[%s1 + $0x1668] sm:$0xff]
    %v773 = vld [vmem:[%s1 + $0x1670] sm:$0xff]
    %v774 = vld [vmem:[%s1 + $0x1678] sm:$0xff]
    %v775 = vld [vmem:[%s1 + $0x1680] sm:$0xff]
    %v776 = vld [vmem:[%s1 + $0x1688] sm:$0xff]
    %v777 = vld [vmem:[%s1 + $0x1690] sm:$0xff]
    %v778 = vld [vmem:[%s1 + $0x1698] sm:$0xff]
    %v779 = vld [vmem:[%s1 + $0x16a0] sm:$0xff]
    %v780 = vld [vmem:[%s1 + $0x16a8] sm:$0xff]
    %v781 = vld [vmem:[%s1 + $0x16b0] sm:$0xff]
    %v782 = vld [vmem:[%s1 + $0x16b8] sm:$0xff]
    %v783 = vld [vmem:[%s1 + $0x16c0] sm:$0xff]
    %v784 = vld [vmem:[%s1 + $0x16c8] sm:$0xff]
    %v785 = vld [vmem:[%s1 + $0x16d0] sm:$0xff]
    %v786 = vld [vmem:[%s1 + $0x16d8] sm:$0xff]
    %v787 = vld [vmem:[%s1 + $0x16e0] sm:$0xff]
    %v788 = vld [vmem:[%s1 + $0x16e8] sm:$0xff]
    %v789 = vld [vmem:[%s1 + $0x16f0] sm:$0xff]
    %v790 = vld [vmem:[%s1 + $0x16f8] sm:$0xff]
    %v791 = vld [vmem:[%s1 + $0x1700] sm:$0xff]
    %v792 = vld [vmem:[%s1 + $0x1708] sm:$0xff]
    %v793 = vld [vmem:[%s1 + $0x1710] sm:$0xff]
    %v794 = vld [vmem:[%s1 + $0x1718] sm:$0xff]
    %v795 = vld [vmem:[%s1 + $0x1720] sm:$0xff]
    %v796 = vld [vmem:[%s1 + $0x1728] sm:$0xff]
    %v797 = vld [vmem:[%s1 + $0x1730] sm:$0xff]
    %v798 = vld [vmem:[%s1 + $0x1738] sm:$0xff]
    %v799 = vld [vmem:[%s1 + $0x1740] sm:$0xff]
    %v800 = vld [vmem:[%s1 + $0x1748] sm:$0xff]
    %v801 = vld [vmem:[%s1 + $0x1750] sm:$0xff]
    %v802 = vld [vmem:[%s1 + $0x1758] sm:$0xff]
    %v803 = vld [vmem:[%s1 + $0x1760] sm:$0xff]
    %v804 = vld [vmem:[%s1 + $0x1768] sm:$0xff]
    %v805 = vld [vmem:[%s1 + $0x1770] sm:$0xff]
    %v806 = vld [vmem:[%s1 + $0x1778] sm:$0xff]
    %v807 = vld [vmem:[%s1 + $0x1780] sm:$0xff]
    %v808 = vld [vmem:[%s1 + $0x1788] sm:$0xff]
    %v809 = vld [vmem:[%s1 + $0x1790] sm:$0xff]
    %v810 = vld [vmem:[%s1 + $0x1798] sm:$0xff]
    %v811 = vld [vmem:[%s1 + $0x17a0] sm:$0xff]
    %v812 = vld [vmem:[%s1 + $0x17a8] sm:$0xff]
    %v813 = vld [vmem:[%s1 + $0x17b0] sm:$0xff]
    %v814 = vld [vmem:[%s1 + $0x17b8] sm:$0xff]
    %v815 = vld [vmem:[%s1 + $0x17c0] sm:$0xff]
    %v816 = vld [vmem:[%s1 + $0x17c8] sm:$0xff]
    %v817 = vld [vmem:[%s1 + $0x17d0] sm:$0xff]
    %v818 = vld [vmem:[%s1 + $0x17d8] sm:$0xff]
    %v819 = vld [vmem:[%s1 + $0x17e0] sm:$0xff]
    %v820 = vld [vmem:[%s1 + $0x17e8] sm:$0xff]
    %v821 = vld [vmem:[%s1 + $0x17f0] sm:$0xff]
    %v822 = vld [vmem:[%s1 + $0x17f8] sm:$0xff]
    %v823 = vld [vmem:[%s1 + $0x1800] sm:$0xff]
    %v824 = vld [vmem:[%s1 + $0x1808] sm:$0xff]
    %v825 = vld [vmem:[%s1 + $0x1810] sm:$0xff]
    %v826 = vld [vmem:[%s1 + $0x1818] sm:$0xff]
    %v827 = vld [vmem:[%s1 + $0x1820] sm:$0xff]
    %v828 = vld [vmem:[%s1 + $0x1828] sm:$0xff]
    %v829 = vld [vmem:[%s1 + $0x1830] sm:$0xff]
    %v830 = vld [vmem:[%s1 + $0x1838] sm:$0xff]
    %v831 = vld [vmem:[%s1 + $0x1840] sm:$0xff]
    %v832 = vld [vmem:[%s1 + $0x1848] sm:$0xff]
    %v833 = vld [vmem:[%s1 + $0x1850] sm:$0xff]
    %v834 = vld [vmem:[%s1 + $0x1858] sm:$0xff]
    %v835 = vld [vmem:[%s1 + $0x1860] sm:$0xff]
    %v836 = vld [vmem:[%s1 + $0x1868] sm:$0xff]
    %v837 = vld [vmem:[%s1 + $0x1870] sm:$0xff]
    %v838 = vld [vmem:[%s1 + $0x1878] sm:$0xff]
    %v839 = vld [vmem:[%s1 + $0x1880] sm:$0xff]
    %v840 = vld [vmem:[%s1 + $0x1888] sm:$0xff]
    %v841 = vld [vmem:[%s1 + $0x1890] sm:$0xff]
    %v842 = vld [vmem:[%s1 + $0x1898] sm:$0xff]
    %v843 = vld [vmem:[%s1 + $0x18a0] sm:$0xff]
    %v844 = vld [vmem:[%s1 + $0x18a8] sm:$0xff]
    %v845 = vld [vmem:[%s1 + $0x18b0] sm:$0xff]
    %v846 = vld [vmem:[%s1 + $0x18b8] sm:$0xff]
    %v847 = vld [vmem:[%s1 + $0x18c0] sm:$0xff]
    %v848 = vld [vmem:[%s1 + $0x18c8] sm:$0xff]
    %v849 = vld [vmem:[%s1 + $0x18d0] sm:$0xff]
    %v850 = vld [vmem:[%s1 + $0x18d8] sm:$0xff]
    %v851 = vld [vmem:[%s1 + $0x18e0] sm:$0xff]
    %v852 = vld [vmem:[%s1 + $0x18e8] sm:$0xff]
    %v853 = vld [vmem:[%s1 + $0x18f0] sm:$0xff]
    %v854 = vld [vmem:[%s1 + $0x18f8] sm:$0xff]
    %v855 = vld [vmem:[%s2] sm:$0xff]
    %v857 = vlaneseq
    %v858 = vshrl.u32 %v857, 7
    %v859 = vsub.s32 0, %v858
    %v860 = vrot.slane %v855, %v859
    %v861 = vlaneseq
    %v862 = vshrl.u32 %v861, 7
    %v863 = vsub.s32 1, %v862
    %v864 = vrot.slane %v855, %v863
    %v865 = vlaneseq
    %v866 = vshrl.u32 %v865, 7
    %v867 = vsub.s32 2, %v866
    %v868 = vrot.slane %v855, %v867
    %v869 = vlaneseq
    %v870 = vshrl.u32 %v869, 7
    %v871 = vsub.s32 3, %v870
    %v872 = vrot.slane %v855, %v871
    %v873 = vlaneseq
    %v874 = vshrl.u32 %v873, 7
    %v875 = vsub.s32 4, %v874
    %v876 = vrot.slane %v855, %v875
    %v877 = vlaneseq
    %v878 = vshrl.u32 %v877, 7
    %v879 = vsub.s32 5, %v878
    %v880 = vrot.slane %v855, %v879
    %v881 = vlaneseq
    %v882 = vshrl.u32 %v881, 7
    %v883 = vsub.s32 6, %v882
    %v884 = vrot.slane %v855, %v883
    %v885 = vlaneseq
    %v886 = vshrl.u32 %v885, 7
    %v887 = vsub.s32 7, %v886
    %v888 = vrot.slane %v855, %v887
    %v899 = vcombine.high %v53, %v53
    %v901 = vunpack.c.l.s4 1983009808
    %v902 = vunpack.c.0.s8 %v901
    %v903 = vlaneseq
    %v904 = vshrl.u32 %v903, 7
    %v905 = vsub.s32 %v902, %v904
    %v906 = vrot.slane %v53, %v905
    %v908 = vunpack.c.l.s4 1983009808
    %v909 = vunpack.c.0.s8 %v908
    %v910 = vlaneseq
    %v911 = vshrl.u32 %v910, 7
    %v912 = vsub.s32 %v909, %v911
    %v913 = vrot.slane %v899, %v912
    %v914 = vcombine.high %v906, %v906
    %v915 = vcombine.high %v913, %v913
    %v916 = vcombine.high %v54, %v54
    %v918 = vunpack.c.l.s4 1983009808
    %v919 = vunpack.c.0.s8 %v918
    %v920 = vlaneseq
    %v921 = vshrl.u32 %v920, 7
    %v922 = vsub.s32 %v919, %v921
    %v923 = vrot.slane %v54, %v922
    %v925 = vunpack.c.l.s4 1983009808
    %v926 = vunpack.c.0.s8 %v925
    %v927 = vlaneseq
    %v928 = vshrl.u32 %v927, 7
    %v929 = vsub.s32 %v926, %v928
    %v930 = vrot.slane %v916, %v929
    %v931 = vcombine.high %v923, %v923
    %vm938 = vcmask 261120
    %v939 = vsel %vm938, %v930, 0
    %941 = vmatprep.subr.mxu0 %v56
    %942 = vmatpush1.msra.mxu0 %v55
    %943 = vmatprep.subr.mxu0 %v64
    %944 = vmatpush1.msra.mxu0 %v63
    %945 = vmatprep.subr.mxu0 %v72
    %946 = vmatpush1.msra.mxu0 %v71
    %947 = vmatprep.subr.mxu0 %v80
    %948 = vmatpush1.msra.mxu0 %v79
    %949 = vmatprep.subr.mxu0 %v88
    %950 = vmatpush1.msra.mxu0 %v87
    %951 = vmatprep.subr.mxu0 %v96
    %952 = vmatpush1.msra.mxu0 %v95
    %953 = vmatprep.subr.mxu0 %v104
    %954 = vmatpush1.msra.mxu0 %v103
    %955 = vmatprep.subr.mxu0 %v112
    %956 = vmatpush1.msra.mxu0 %v111
    %957 = vmatprep.subr.mxu0 %v120
    %958 = vmatpush1.msra.mxu0 %v119
    %959 = vmatprep.subr.mxu0 %v128
    %960 = vmatpush1.msra.mxu0 %v127
    %961 = vmatprep.subr.mxu0 %v136
    %962 = vmatpush1.msra.mxu0 %v135
    %963 = vmatprep.subr.mxu0 %v144
    %964 = vmatpush1.msra.mxu0 %v143
    %965 = vmatprep.subr.mxu0 %v152
    %966 = vmatpush1.msra.mxu0 %v151
    %967 = vmatprep.subr.mxu0 %v160
    %968 = vmatpush1.msra.mxu0 %v159
    %969 = vmatprep.subr.mxu0 %v168
    %970 = vmatpush1.msra.mxu0 %v167
    %971 = vmatprep.subr.mxu0 %v176
    %972 = vmatpush1.msra.mxu0 %v175
    %973 = vmatprep.subr.mxu0 %v184
    %974 = vmatpush1.msra.mxu0 %v183
    %975 = vmatprep.subr.mxu0 %v192
    %976 = vmatpush1.msra.mxu0 %v191
    %977 = vmatprep.subr.mxu0 %v200
    %978 = vmatpush1.msra.mxu0 %v199
    %979 = vmatprep.subr.mxu0 %v208
    %980 = vmatpush1.msra.mxu0 %v207
    %981 = vmatprep.subr.mxu0 %v216
    %982 = vmatpush1.msra.mxu0 %v215
    %983 = vmatprep.subr.mxu0 %v224
    %984 = vmatpush1.msra.mxu0 %v223
    %985 = vmatprep.subr.mxu0 %v232
    %986 = vmatpush1.msra.mxu0 %v231
    %987 = vmatprep.subr.mxu0 %v240
    %988 = vmatpush1.msra.mxu0 %v239
    %989 = vmatprep.subr.mxu0 %v248
    %990 = vmatpush1.msra.mxu0 %v247
    %991 = vmatprep.subr.mxu0 %v256
    %992 = vmatpush1.msra.mxu0 %v255
    %993 = vmatprep.subr.mxu0 %v264
    %994 = vmatpush1.msra.mxu0 %v263
    %995 = vmatprep.subr.mxu0 %v272
    %996 = vmatpush1.msra.mxu0 %v271
    %997 = vmatprep.subr.mxu0 %v280
    %998 = vmatpush1.msra.mxu0 %v279
    %999 = vmatprep.subr.mxu0 %v288
    %1000 = vmatpush1.msra.mxu0 %v287
    %1001 = vmatprep.subr.mxu0 %v296
    %1002 = vmatpush1.msra.mxu0 %v295
    %1003 = vmatprep.subr.mxu0 %v304
    %1004 = vmatpush1.msra.mxu0 %v303
    %1005 = vmatprep.mubr.f32.mxu0 %v914
    %1006 = vmatmul.mubr.f32.gmra.mrb[0].mxu0 %v906
    %v1007 = vpop.f32.mrb[0].mxu0
    %v1008 = vadd.f32 %v860, %v1007
    %v1009 = vpop.f32.mrb[0].mxu0
    %v1010 = vadd.f32 %v864, %v1009
    %1011 = vdwg.mxu0
    %1012 = vmatprep.subr.mxu0 %v312
    %1013 = vmatpush1.msra.mxu0 %v311
    %1014 = vmatprep.subr.mxu0 %v320
    %1015 = vmatpush1.msra.mxu0 %v319
    %1016 = vmatprep.subr.mxu0 %v328
    %1017 = vmatpush1.msra.mxu0 %v327
    %1018 = vmatprep.subr.mxu0 %v336
    %1019 = vmatpush1.msra.mxu0 %v335
    %1020 = vmatprep.subr.mxu0 %v344
    %1021 = vmatpush1.msra.mxu0 %v343
    %1022 = vmatprep.subr.mxu0 %v352
    %1023 = vmatpush1.msra.mxu0 %v351
    %1024 = vmatprep.subr.mxu0 %v360
    %1025 = vmatpush1.msra.mxu0 %v359
    %1026 = vmatprep.subr.mxu0 %v368
    %1027 = vmatpush1.msra.mxu0 %v367
    %1028 = vmatprep.subr.mxu0 %v376
    %1029 = vmatpush1.msra.mxu0 %v375
    %1030 = vmatprep.subr.mxu0 %v384
    %1031 = vmatpush1.msra.mxu0 %v383
    %1032 = vmatprep.subr.mxu0 %v392
    %1033 = vmatpush1.msra.mxu0 %v391
    %1034 = vmatprep.subr.mxu0 %v400
    %1035 = vmatpush1.msra.mxu0 %v399
    %1036 = vmatprep.subr.mxu0 %v408
    %1037 = vmatpush1.msra.mxu0 %v407
    %1038 = vmatprep.subr.mxu0 %v416
    %1039 = vmatpush1.msra.mxu0 %v415
    %1040 = vmatprep.subr.mxu0 %v424
    %1041 = vmatpush1.msra.mxu0 %v423
    %1042 = vmatprep.subr.mxu0 %v432
    %1043 = vmatpush1.msra.mxu0 %v431
    %1044 = vmatprep.subr.mxu0 %v440
    %1045 = vmatpush1.msra.mxu0 %v439
    %1046 = vmatprep.subr.mxu0 %v448
    %1047 = vmatpush1.msra.mxu0 %v447
    %1048 = vmatprep.subr.mxu0 %v456
    %1049 = vmatpush1.msra.mxu0 %v455
    %1050 = vmatprep.subr.mxu0 %v464
    %1051 = vmatpush1.msra.mxu0 %v463
    %1052 = vmatprep.subr.mxu0 %v472
    %1053 = vmatpush1.msra.mxu0 %v471
    %1054 = vmatprep.subr.mxu0 %v480
    %1055 = vmatpush1.msra.mxu0 %v479
    %1056 = vmatprep.subr.mxu0 %v488
    %1057 = vmatpush1.msra.mxu0 %v487
    %1058 = vmatprep.subr.mxu0 %v496
    %1059 = vmatpush1.msra.mxu0 %v495
    %1060 = vmatprep.subr.mxu0 %v504
    %1061 = vmatpush1.msra.mxu0 %v503
    %1062 = vmatprep.subr.mxu0 %v512
    %1063 = vmatpush1.msra.mxu0 %v511
    %1064 = vmatprep.subr.mxu0 %v520
    %1065 = vmatpush1.msra.mxu0 %v519
    %1066 = vmatprep.subr.mxu0 %v528
    %1067 = vmatpush1.msra.mxu0 %v527
    %1068 = vmatprep.subr.mxu0 %v536
    %1069 = vmatpush1.msra.mxu0 %v535
    %1070 = vmatprep.subr.mxu0 %v544
    %1071 = vmatpush1.msra.mxu0 %v543
    %1072 = vmatprep.subr.mxu0 %v552
    %1073 = vmatpush1.msra.mxu0 %v551
    %1074 = vmatprep.subr.mxu0 %v560
    %1075 = vmatpush1.msra.mxu0 %v559
    %1076 = vmatprep.mubr.f32.mxu0 %v915
    %1077 = vmatmul.mubr.f32.gmra.mrb[0].mxu0 %v913
    %v1078 = vpop.f32.mrb[0].mxu0
    %v1079 = vadd.f32 %v1008, %v1078
    %v1080 = vpop.f32.mrb[0].mxu0
    %v1081 = vadd.f32 %v1010, %v1080
    %1082 = vdwg.mxu0
    %1083 = vmatprep.subr.mxu0 %v568
    %1084 = vmatpush1.msra.mxu0 %v567
    %1085 = vmatprep.subr.mxu0 %v576
    %1086 = vmatpush1.msra.mxu0 %v575
    %1087 = vmatprep.subr.mxu0 %v584
    %1088 = vmatpush1.msra.mxu0 %v583
    %1089 = vmatprep.subr.mxu0 %v592
    %1090 = vmatpush1.msra.mxu0 %v591
    %1091 = vmatprep.subr.mxu0 %v600
    %1092 = vmatpush1.msra.mxu0 %v599
    %1093 = vmatprep.subr.mxu0 %v608
    %1094 = vmatpush1.msra.mxu0 %v607
    %1095 = vmatprep.subr.mxu0 %v616
    %1096 = vmatpush1.msra.mxu0 %v615
    %1097 = vmatprep.subr.mxu0 %v624
    %1098 = vmatpush1.msra.mxu0 %v623
    %1099 = vmatprep.subr.mxu0 %v632
    %1100 = vmatpush1.msra.mxu0 %v631
    %1101 = vmatprep.subr.mxu0 %v640
    %1102 = vmatpush1.msra.mxu0 %v639
    %1103 = vmatprep.subr.mxu0 %v648
    %1104 = vmatpush1.msra.mxu0 %v647
    %1105 = vmatprep.subr.mxu0 %v656
    %1106 = vmatpush1.msra.mxu0 %v655
    %1107 = vmatprep.subr.mxu0 %v664
    %1108 = vmatpush1.msra.mxu0 %v663
    %1109 = vmatprep.subr.mxu0 %v672
    %1110 = vmatpush1.msra.mxu0 %v671
    %1111 = vmatprep.subr.mxu0 %v680
    %1112 = vmatpush1.msra.mxu0 %v679
    %1113 = vmatprep.subr.mxu0 %v688
    %1114 = vmatpush1.msra.mxu0 %v687
    %1115 = vmatprep.subr.mxu0 %v696
    %1116 = vmatpush1.msra.mxu0 %v695
    %1117 = vmatprep.subr.mxu0 %v704
    %1118 = vmatpush1.msra.mxu0 %v703
    %1119 = vmatprep.subr.mxu0 %v712
    %1120 = vmatpush1.msra.mxu0 %v711
    %1121 = vmatprep.subr.mxu0 %v720
    %1122 = vmatpush1.msra.mxu0 %v719
    %1123 = vmatprep.subr.mxu0 %v728
    %1124 = vmatpush1.msra.mxu0 %v727
    %1125 = vmatprep.subr.mxu0 %v736
    %1126 = vmatpush1.msra.mxu0 %v735
    %1127 = vmatprep.subr.mxu0 %v744
    %1128 = vmatpush1.msra.mxu0 %v743
    %1129 = vmatprep.subr.mxu0 %v752
    %1130 = vmatpush1.msra.mxu0 %v751
    %1131 = vmatprep.subr.mxu0 %v760
    %1132 = vmatpush1.msra.mxu0 %v759
    %1133 = vmatprep.subr.mxu0 %v768
    %1134 = vmatpush1.msra.mxu0 %v767
    %1135 = vmatprep.subr.mxu0 %v776
    %1136 = vmatpush1.msra.mxu0 %v775
    %1137 = vmatprep.subr.mxu0 %v784
    %1138 = vmatpush1.msra.mxu0 %v783
    %1139 = vmatprep.subr.mxu0 %v792
    %1140 = vmatpush1.msra.mxu0 %v791
    %1141 = vmatprep.subr.mxu0 %v800
    %1142 = vmatpush1.msra.mxu0 %v799
    %1143 = vmatprep.subr.mxu0 %v808
    %1144 = vmatpush1.msra.mxu0 %v807
    %1145 = vmatprep.subr.mxu0 %v816
    %1146 = vmatpush1.msra.mxu0 %v815
    %1147 = vmatprep.mubr.f32.mxu0 %v931
    %1148 = vmatmul.mubr.f32.gmra.mrb[0].mxu0 %v923
    %v1149 = vpop.f32.mrb[0].mxu0
    %v1150 = vadd.f32 %v1079, %v1149
    %v1151 = vpop.f32.mrb[0].mxu0
    %v1152 = vadd.f32 %v1081, %v1151
    %1153 = vdwg.mxu0
    %1154 = vmatprep.subr.mxu0 %v824
    %1155 = vmatpush1.msra.mxu0 %v823
    %1156 = vmatprep.subr.mxu0 %v832
    %1157 = vmatpush1.msra.mxu0 %v831
    %1158 = vmatprep.subr.mxu0 %v840
    %1159 = vmatpush1.msra.mxu0 %v839
    %1160 = vmatprep.subr.mxu0 %v848
    %1161 = vmatpush1.msra.mxu0 %v847
    %1162 = vmatprep.subr.mxu0 0.0
    %1163 = vmatpush1.msra.mxu0 0.0
    %1164 = vmatprep.subr.mxu0 0.0
    %1165 = vmatpush1.msra.mxu0 0.0
    %1166 = vmatprep.subr.mxu0 0.0
    %1167 = vmatpush1.msra.mxu0 0.0
    %1168 = vmatprep.subr.mxu0 0.0
    %1169 = vmatpush1.msra.mxu0 0.0
    %1170 = vmatprep.subr.mxu0 0.0
    %1171 = vmatpush1.msra.mxu0 0.0
    %1172 = vmatprep.subr.mxu0 0.0
    %1173 = vmatpush1.msra.mxu0 0.0
    %1174 = vmatprep.subr.mxu0 0.0
    %1175 = vmatpush1.msra.mxu0 0.0
    %1176 = vmatprep.subr.mxu0 0.0
    %1177 = vmatpush1.msra.mxu0 0.0
    %1178 = vmatprep.subr.mxu0 0.0
    %1179 = vmatpush1.msra.mxu0 0.0
    %1180 = vmatprep.subr.mxu0 0.0
    %1181 = vmatpush1.msra.mxu0 0.0
    %1182 = vmatprep.subr.mxu0 0.0
    %1183 = vmatpush1.msra.mxu0 0.0
    %1184 = vmatprep.subr.mxu0 0.0
    %1185 = vmatpush1.msra.mxu0 0.0
    %1186 = vmatprep.subr.mxu0 0.0
    %1187 = vmatpush1.msra.mxu0 0.0
    %1188 = vmatprep.subr.mxu0 0.0
    %1189 = vmatpush1.msra.mxu0 0.0
    %1190 = vmatprep.subr.mxu0 0.0
    %1191 = vmatpush1.msra.mxu0 0.0
    %1192 = vmatprep.subr.mxu0 0.0
    %1193 = vmatpush1.msra.mxu0 0.0
    %1194 = vmatprep.subr.mxu0 0.0
    %1195 = vmatpush1.msra.mxu0 0.0
    %1196 = vmatprep.subr.mxu0 0.0
    %1197 = vmatpush1.msra.mxu0 0.0
    %1198 = vmatprep.subr.mxu0 0.0
    %1199 = vmatpush1.msra.mxu0 0.0
    %1200 = vmatprep.subr.mxu0 0.0
    %1201 = vmatpush1.msra.mxu0 0.0
    %1202 = vmatprep.subr.mxu0 0.0
    %1203 = vmatpush1.msra.mxu0 0.0
    %1204 = vmatprep.subr.mxu0 0.0
    %1205 = vmatpush1.msra.mxu0 0.0
    %1206 = vmatprep.subr.mxu0 0.0
    %1207 = vmatpush1.msra.mxu0 0.0
    %1208 = vmatprep.subr.mxu0 0.0
    %1209 = vmatpush1.msra.mxu0 0.0
    %1210 = vmatprep.subr.mxu0 0.0
    %1211 = vmatpush1.msra.mxu0 0.0
    %1212 = vmatprep.subr.mxu0 0.0
    %1213 = vmatpush1.msra.mxu0 0.0
    %1214 = vmatprep.subr.mxu0 0.0
    %1215 = vmatpush1.msra.mxu0 0.0
    %1216 = vmatprep.subr.mxu0 0.0
    %1217 = vmatpush1.msra.mxu0 0.0
    %1218 = vmatprep.mubr.f32.mxu0 0.0
    %1219 = vmatmul.mubr.f32.gmra.mrb[0].mxu0 %v939
    %v1220 = vpop.f32.mrb[0].mxu0
    %v1221 = vadd.f32 %v1150, %v1220
    %v1222 = vpop.f32.mrb[0].mxu0
    %v1223 = vadd.f32 %v1152, %v1222
    %1224 = vdwg.mxu0
    %1225 = vmatprep.subr.mxu0 %v58
    %1226 = vmatpush1.msra.mxu0 %v57
    %1227 = vmatprep.subr.mxu0 %v66
    %1228 = vmatpush1.msra.mxu0 %v65
    %1229 = vmatprep.subr.mxu0 %v74
    %1230 = vmatpush1.msra.mxu0 %v73
    %1231 = vmatprep.subr.mxu0 %v82
    %1232 = vmatpush1.msra.mxu0 %v81
    %1233 = vmatprep.subr.mxu0 %v90
    %1234 = vmatpush1.msra.mxu0 %v89
    %1235 = vmatprep.subr.mxu0 %v98
    %1236 = vmatpush1.msra.mxu0 %v97
    %1237 = vmatprep.subr.mxu0 %v106
    %1238 = vmatpush1.msra.mxu0 %v105
    %1239 = vmatprep.subr.mxu0 %v114
    %1240 = vmatpush1.msra.mxu0 %v113
    %1241 = vmatprep.subr.mxu0 %v122
    %1242 = vmatpush1.msra.mxu0 %v121
    %1243 = vmatprep.subr.mxu0 %v130
    %1244 = vmatpush1.msra.mxu0 %v129
    %1245 = vmatprep.subr.mxu0 %v138
    %1246 = vmatpush1.msra.mxu0 %v137
    %1247 = vmatprep.subr.mxu0 %v146
    %1248 = vmatpush1.msra.mxu0 %v145
    %1249 = vmatprep.subr.mxu0 %v154
    %1250 = vmatpush1.msra.mxu0 %v153
    %1251 = vmatprep.subr.mxu0 %v162
    %1252 = vmatpush1.msra.mxu0 %v161
    %1253 = vmatprep.subr.mxu0 %v170
    %1254 = vmatpush1.msra.mxu0 %v169
    %1255 = vmatprep.subr.mxu0 %v178
    %1256 = vmatpush1.msra.mxu0 %v177
    %1257 = vmatprep.subr.mxu0 %v186
    %1258 = vmatpush1.msra.mxu0 %v185
    %1259 = vmatprep.subr.mxu0 %v194
    %1260 = vmatpush1.msra.mxu0 %v193
    %1261 = vmatprep.subr.mxu0 %v202
    %1262 = vmatpush1.msra.mxu0 %v201
    %1263 = vmatprep.subr.mxu0 %v210
    %1264 = vmatpush1.msra.mxu0 %v209
    %1265 = vmatprep.subr.mxu0 %v218
    %1266 = vmatpush1.msra.mxu0 %v217
    %1267 = vmatprep.subr.mxu0 %v226
    %1268 = vmatpush1.msra.mxu0 %v225
    %1269 = vmatprep.subr.mxu0 %v234
    %1270 = vmatpush1.msra.mxu0 %v233
    %1271 = vmatprep.subr.mxu0 %v242
    %1272 = vmatpush1.msra.mxu0 %v241
    %1273 = vmatprep.subr.mxu0 %v250
    %1274 = vmatpush1.msra.mxu0 %v249
    %1275 = vmatprep.subr.mxu0 %v258
    %1276 = vmatpush1.msra.mxu0 %v257
    %1277 = vmatprep.subr.mxu0 %v266
    %1278 = vmatpush1.msra.mxu0 %v265
    %1279 = vmatprep.subr.mxu0 %v274
    %1280 = vmatpush1.msra.mxu0 %v273
    %1281 = vmatprep.subr.mxu0 %v282
    %1282 = vmatpush1.msra.mxu0 %v281
    %1283 = vmatprep.subr.mxu0 %v290
    %1284 = vmatpush1.msra.mxu0 %v289
    %1285 = vmatprep.subr.mxu0 %v298
    %1286 = vmatpush1.msra.mxu0 %v297
    %1287 = vmatprep.subr.mxu0 %v306
    %1288 = vmatpush1.msra.mxu0 %v305
    %1289 = vmatprep.mubr.f32.mxu0 %v914
    %1290 = vmatmul.mubr.f32.gmra.mrb[0].mxu0 %v906
    %v1291 = vpop.f32.mrb[0].mxu0
    %v1292 = vadd.f32 %v868, %v1291
    %v1293 = vpop.f32.mrb[0].mxu0
    %v1294 = vadd.f32 %v872, %v1293
    %1295 = vdwg.mxu0
    %1296 = vmatprep.subr.mxu0 %v314
    %1297 = vmatpush1.msra.mxu0 %v313
    %1298 = vmatprep.subr.mxu0 %v322
    %1299 = vmatpush1.msra.mxu0 %v321
    %1300 = vmatprep.subr.mxu0 %v330
    %1301 = vmatpush1.msra.mxu0 %v329
    %1302 = vmatprep.subr.mxu0 %v338
    %1303 = vmatpush1.msra.mxu0 %v337
    %1304 = vmatprep.subr.mxu0 %v346
    %1305 = vmatpush1.msra.mxu0 %v345
    %1306 = vmatprep.subr.mxu0 %v354
    %1307 = vmatpush1.msra.mxu0 %v353
    %1308 = vmatprep.subr.mxu0 %v362
    %1309 = vmatpush1.msra.mxu0 %v361
    %1310 = vmatprep.subr.mxu0 %v370
    %1311 = vmatpush1.msra.mxu0 %v369
    %1312 = vmatprep.subr.mxu0 %v378
    %1313 = vmatpush1.msra.mxu0 %v377
    %1314 = vmatprep.subr.mxu0 %v386
    %1315 = vmatpush1.msra.mxu0 %v385
    %1316 = vmatprep.subr.mxu0 %v394
    %1317 = vmatpush1.msra.mxu0 %v393
    %1318 = vmatprep.subr.mxu0 %v402
    %1319 = vmatpush1.msra.mxu0 %v401
    %1320 = vmatprep.subr.mxu0 %v410
    %1321 = vmatpush1.msra.mxu0 %v409
    %1322 = vmatprep.subr.mxu0 %v418
    %1323 = vmatpush1.msra.mxu0 %v417
    %1324 = vmatprep.subr.mxu0 %v426
    %1325 = vmatpush1.msra.mxu0 %v425
    %1326 = vmatprep.subr.mxu0 %v434
    %1327 = vmatpush1.msra.mxu0 %v433
    %1328 = vmatprep.subr.mxu0 %v442
    %1329 = vmatpush1.msra.mxu0 %v441
    %1330 = vmatprep.subr.mxu0 %v450
    %1331 = vmatpush1.msra.mxu0 %v449
    %1332 = vmatprep.subr.mxu0 %v458
    %1333 = vmatpush1.msra.mxu0 %v457
    %1334 = vmatprep.subr.mxu0 %v466
    %1335 = vmatpush1.msra.mxu0 %v465
    %1336 = vmatprep.subr.mxu0 %v474
    %1337 = vmatpush1.msra.mxu0 %v473
    %1338 = vmatprep.subr.mxu0 %v482
    %1339 = vmatpush1.msra.mxu0 %v481
    %1340 = vmatprep.subr.mxu0 %v490
    %1341 = vmatpush1.msra.mxu0 %v489
    %1342 = vmatprep.subr.mxu0 %v498
    %1343 = vmatpush1.msra.mxu0 %v497
    %1344 = vmatprep.subr.mxu0 %v506
    %1345 = vmatpush1.msra.mxu0 %v505
    %1346 = vmatprep.subr.mxu0 %v514
    %1347 = vmatpush1.msra.mxu0 %v513
    %1348 = vmatprep.subr.mxu0 %v522
    %1349 = vmatpush1.msra.mxu0 %v521
    %1350 = vmatprep.subr.mxu0 %v530
    %1351 = vmatpush1.msra.mxu0 %v529
    %1352 = vmatprep.subr.mxu0 %v538
    %1353 = vmatpush1.msra.mxu0 %v537
    %1354 = vmatprep.subr.mxu0 %v546
    %1355 = vmatpush1.msra.mxu0 %v545
    %1356 = vmatprep.subr.mxu0 %v554
    %1357 = vmatpush1.msra.mxu0 %v553
    %1358 = vmatprep.subr.mxu0 %v562
    %1359 = vmatpush1.msra.mxu0 %v561
    %1360 = vmatprep.mubr.f32.mxu0 %v915
    %1361 = vmatmul.mubr.f32.gmra.mrb[0].mxu0 %v913
    %v1362 = vpop.f32.mrb[0].mxu0
    %v1363 = vadd.f32 %v1292, %v1362
    %v1364 = vpop.f32.mrb[0].mxu0
    %v1365 = vadd.f32 %v1294, %v1364
    %1366 = vdwg.mxu0
    %1367 = vmatprep.subr.mxu0 %v570
    %1368 = vmatpush1.msra.mxu0 %v569
    %1369 = vmatprep.subr.mxu0 %v578
    %1370 = vmatpush1.msra.mxu0 %v577
    %1371 = vmatprep.subr.mxu0 %v586
    %1372 = vmatpush1.msra.mxu0 %v585
    %1373 = vmatprep.subr.mxu0 %v594
    %1374 = vmatpush1.msra.mxu0 %v593
    %1375 = vmatprep.subr.mxu0 %v602
    %1376 = vmatpush1.msra.mxu0 %v601
    %1377 = vmatprep.subr.mxu0 %v610
    %1378 = vmatpush1.msra.mxu0 %v609
    %1379 = vmatprep.subr.mxu0 %v618
    %1380 = vmatpush1.msra.mxu0 %v617
    %1381 = vmatprep.subr.mxu0 %v626
    %1382 = vmatpush1.msra.mxu0 %v625
    %1383 = vmatprep.subr.mxu0 %v634
    %1384 = vmatpush1.msra.mxu0 %v633
    %1385 = vmatprep.subr.mxu0 %v642
    %1386 = vmatpush1.msra.mxu0 %v641
    %1387 = vmatprep.subr.mxu0 %v650
    %1388 = vmatpush1.msra.mxu0 %v649
    %1389 = vmatprep.subr.mxu0 %v658
    %1390 = vmatpush1.msra.mxu0 %v657
    %1391 = vmatprep.subr.mxu0 %v666
    %1392 = vmatpush1.msra.mxu0 %v665
    %1393 = vmatprep.subr.mxu0 %v674
    %1394 = vmatpush1.msra.mxu0 %v673
    %1395 = vmatprep.subr.mxu0 %v682
    %1396 = vmatpush1.msra.mxu0 %v681
    %1397 = vmatprep.subr.mxu0 %v690
    %1398 = vmatpush1.msra.mxu0 %v689
    %1399 = vmatprep.subr.mxu0 %v698
    %1400 = vmatpush1.msra.mxu0 %v697
    %1401 = vmatprep.subr.mxu0 %v706
    %1402 = vmatpush1.msra.mxu0 %v705
    %1403 = vmatprep.subr.mxu0 %v714
    %1404 = vmatpush1.msra.mxu0 %v713
    %1405 = vmatprep.subr.mxu0 %v722
    %1406 = vmatpush1.msra.mxu0 %v721
    %1407 = vmatprep.subr.mxu0 %v730
    %1408 = vmatpush1.msra.mxu0 %v729
    %1409 = vmatprep.subr.mxu0 %v738
    %1410 = vmatpush1.msra.mxu0 %v737
    %1411 = vmatprep.subr.mxu0 %v746
    %1412 = vmatpush1.msra.mxu0 %v745
    %1413 = vmatprep.subr.mxu0 %v754
    %1414 = vmatpush1.msra.mxu0 %v753
    %1415 = vmatprep.subr.mxu0 %v762
    %1416 = vmatpush1.msra.mxu0 %v761
    %1417 = vmatprep.subr.mxu0 %v770
    %1418 = vmatpush1.msra.mxu0 %v769
    %1419 = vmatprep.subr.mxu0 %v778
    %1420 = vmatpush1.msra.mxu0 %v777
    %1421 = vmatprep.subr.mxu0 %v786
    %1422 = vmatpush1.msra.mxu0 %v785
    %1423 = vmatprep.subr.mxu0 %v794
    %1424 = vmatpush1.msra.mxu0 %v793
    %1425 = vmatprep.subr.mxu0 %v802
    %1426 = vmatpush1.msra.mxu0 %v801
    %1427 = vmatprep.subr.mxu0 %v810
    %1428 = vmatpush1.msra.mxu0 %v809
    %1429 = vmatprep.subr.mxu0 %v818
    %1430 = vmatpush1.msra.mxu0 %v817
    %1431 = vmatprep.mubr.f32.mxu0 %v931
    %1432 = vmatmul.mubr.f32.gmra.mrb[0].mxu0 %v923
    %v1433 = vpop.f32.mrb[0].mxu0
    %v1434 = vadd.f32 %v1363, %v1433
    %v1435 = vpop.f32.mrb[0].mxu0
    %v1436 = vadd.f32 %v1365, %v1435
    %1437 = vdwg.mxu0
    %1438 = vmatprep.subr.mxu0 %v826
    %1439 = vmatpush1.msra.mxu0 %v825
    %1440 = vmatprep.subr.mxu0 %v834
    %1441 = vmatpush1.msra.mxu0 %v833
    %1442 = vmatprep.subr.mxu0 %v842
    %1443 = vmatpush1.msra.mxu0 %v841
    %1444 = vmatprep.subr.mxu0 %v850
    %1445 = vmatpush1.msra.mxu0 %v849
    %1446 = vmatprep.subr.mxu0 0.0
    %1447 = vmatpush1.msra.mxu0 0.0
    %1448 = vmatprep.subr.mxu0 0.0
    %1449 = vmatpush1.msra.mxu0 0.0
    %1450 = vmatprep.subr.mxu0 0.0
    %1451 = vmatpush1.msra.mxu0 0.0
    %1452 = vmatprep.subr.mxu0 0.0
    %1453 = vmatpush1.msra.mxu0 0.0
    %1454 = vmatprep.subr.mxu0 0.0
    %1455 = vmatpush1.msra.mxu0 0.0
    %1456 = vmatprep.subr.mxu0 0.0
    %1457 = vmatpush1.msra.mxu0 0.0
    %1458 = vmatprep.subr.mxu0 0.0
    %1459 = vmatpush1.msra.mxu0 0.0
    %1460 = vmatprep.subr.mxu0 0.0
    %1461 = vmatpush1.msra.mxu0 0.0
    %1462 = vmatprep.subr.mxu0 0.0
    %1463 = vmatpush1.msra.mxu0 0.0
    %1464 = vmatprep.subr.mxu0 0.0
    %1465 = vmatpush1.msra.mxu0 0.0
    %1466 = vmatprep.subr.mxu0 0.0
    %1467 = vmatpush1.msra.mxu0 0.0
    %1468 = vmatprep.subr.mxu0 0.0
    %1469 = vmatpush1.msra.mxu0 0.0
    %1470 = vmatprep.subr.mxu0 0.0
    %1471 = vmatpush1.msra.mxu0 0.0
    %1472 = vmatprep.subr.mxu0 0.0
    %1473 = vmatpush1.msra.mxu0 0.0
    %1474 = vmatprep.subr.mxu0 0.0
    %1475 = vmatpush1.msra.mxu0 0.0
    %1476 = vmatprep.subr.mxu0 0.0
    %1477 = vmatpush1.msra.mxu0 0.0
    %1478 = vmatprep.subr.mxu0 0.0
    %1479 = vmatpush1.msra.mxu0 0.0
    %1480 = vmatprep.subr.mxu0 0.0
    %1481 = vmatpush1.msra.mxu0 0.0
    %1482 = vmatprep.subr.mxu0 0.0
    %1483 = vmatpush1.msra.mxu0 0.0
    %1484 = vmatprep.subr.mxu0 0.0
    %1485 = vmatpush1.msra.mxu0 0.0
    %1486 = vmatprep.subr.mxu0 0.0
    %1487 = vmatpush1.msra.mxu0 0.0
    %1488 = vmatprep.subr.mxu0 0.0
    %1489 = vmatpush1.msra.mxu0 0.0
    %1490 = vmatprep.subr.mxu0 0.0
    %1491 = vmatpush1.msra.mxu0 0.0
    %1492 = vmatprep.subr.mxu0 0.0
    %1493 = vmatpush1.msra.mxu0 0.0
    %1494 = vmatprep.subr.mxu0 0.0
    %1495 = vmatpush1.msra.mxu0 0.0
    %1496 = vmatprep.subr.mxu0 0.0
    %1497 = vmatpush1.msra.mxu0 0.0
    %1498 = vmatprep.subr.mxu0 0.0
    %1499 = vmatpush1.msra.mxu0 0.0
    %1500 = vmatprep.subr.mxu0 0.0
    %1501 = vmatpush1.msra.mxu0 0.0
    %1502 = vmatprep.mubr.f32.mxu0 0.0
    %1503 = vmatmul.mubr.f32.gmra.mrb[0].mxu0 %v939
    %v1504 = vpop.f32.mrb[0].mxu0
    %v1505 = vadd.f32 %v1434, %v1504
    %v1506 = vpop.f32.mrb[0].mxu0
    %v1507 = vadd.f32 %v1436, %v1506
    %1508 = vdwg.mxu0
    %1509 = vmatprep.subr.mxu0 %v60
    %1510 = vmatpush1.msra.mxu0 %v59
    %1511 = vmatprep.subr.mxu0 %v68
    %1512 = vmatpush1.msra.mxu0 %v67
    %1513 = vmatprep.subr.mxu0 %v76
    %1514 = vmatpush1.msra.mxu0 %v75
    %1515 = vmatprep.subr.mxu0 %v84
    %1516 = vmatpush1.msra.mxu0 %v83
    %1517 = vmatprep.subr.mxu0 %v92
    %1518 = vmatpush1.msra.mxu0 %v91
    %1519 = vmatprep.subr.mxu0 %v100
    %1520 = vmatpush1.msra.mxu0 %v99
    %1521 = vmatprep.subr.mxu0 %v108
    %1522 = vmatpush1.msra.mxu0 %v107
    %1523 = vmatprep.subr.mxu0 %v116
    %1524 = vmatpush1.msra.mxu0 %v115
    %1525 = vmatprep.subr.mxu0 %v124
    %1526 = vmatpush1.msra.mxu0 %v123
    %1527 = vmatprep.subr.mxu0 %v132
    %1528 = vmatpush1.msra.mxu0 %v131
    %1529 = vmatprep.subr.mxu0 %v140
    %1530 = vmatpush1.msra.mxu0 %v139
    %1531 = vmatprep.subr.mxu0 %v148
    %1532 = vmatpush1.msra.mxu0 %v147
    %1533 = vmatprep.subr.mxu0 %v156
    %1534 = vmatpush1.msra.mxu0 %v155
    %1535 = vmatprep.subr.mxu0 %v164
    %1536 = vmatpush1.msra.mxu0 %v163
    %1537 = vmatprep.subr.mxu0 %v172
    %1538 = vmatpush1.msra.mxu0 %v171
    %1539 = vmatprep.subr.mxu0 %v180
    %1540 = vmatpush1.msra.mxu0 %v179
    %1541 = vmatprep.subr.mxu0 %v188
    %1542 = vmatpush1.msra.mxu0 %v187
    %1543 = vmatprep.subr.mxu0 %v196
    %1544 = vmatpush1.msra.mxu0 %v195
    %1545 = vmatprep.subr.mxu0 %v204
    %1546 = vmatpush1.msra.mxu0 %v203
    %1547 = vmatprep.subr.mxu0 %v212
    %1548 = vmatpush1.msra.mxu0 %v211
    %1549 = vmatprep.subr.mxu0 %v220
    %1550 = vmatpush1.msra.mxu0 %v219
    %1551 = vmatprep.subr.mxu0 %v228
    %1552 = vmatpush1.msra.mxu0 %v227
    %1553 = vmatprep.subr.mxu0 %v236
    %1554 = vmatpush1.msra.mxu0 %v235
    %1555 = vmatprep.subr.mxu0 %v244
    %1556 = vmatpush1.msra.mxu0 %v243
    %1557 = vmatprep.subr.mxu0 %v252
    %1558 = vmatpush1.msra.mxu0 %v251
    %1559 = vmatprep.subr.mxu0 %v260
    %1560 = vmatpush1.msra.mxu0 %v259
    %1561 = vmatprep.subr.mxu0 %v268
    %1562 = vmatpush1.msra.mxu0 %v267
    %1563 = vmatprep.subr.mxu0 %v276
    %1564 = vmatpush1.msra.mxu0 %v275
    %1565 = vmatprep.subr.mxu0 %v284
    %1566 = vmatpush1.msra.mxu0 %v283
    %1567 = vmatprep.subr.mxu0 %v292
    %1568 = vmatpush1.msra.mxu0 %v291
    %1569 = vmatprep.subr.mxu0 %v300
    %1570 = vmatpush1.msra.mxu0 %v299
    %1571 = vmatprep.subr.mxu0 %v308
    %1572 = vmatpush1.msra.mxu0 %v307
    %1573 = vmatprep.mubr.f32.mxu0 %v914
    %1574 = vmatmul.mubr.f32.gmra.mrb[0].mxu0 %v906
    %v1575 = vpop.f32.mrb[0].mxu0
    %v1576 = vadd.f32 %v876, %v1575
    %v1577 = vpop.f32.mrb[0].mxu0
    %v1578 = vadd.f32 %v880, %v1577
    %1579 = vdwg.mxu0
    %1580 = vmatprep.subr.mxu0 %v316
    %1581 = vmatpush1.msra.mxu0 %v315
    %1582 = vmatprep.subr.mxu0 %v324
    %1583 = vmatpush1.msra.mxu0 %v323
    %1584 = vmatprep.subr.mxu0 %v332
    %1585 = vmatpush1.msra.mxu0 %v331
    %1586 = vmatprep.subr.mxu0 %v340
    %1587 = vmatpush1.msra.mxu0 %v339
    %1588 = vmatprep.subr.mxu0 %v348
    %1589 = vmatpush1.msra.mxu0 %v347
    %1590 = vmatprep.subr.mxu0 %v356
    %1591 = vmatpush1.msra.mxu0 %v355
    %1592 = vmatprep.subr.mxu0 %v364
    %1593 = vmatpush1.msra.mxu0 %v363
    %1594 = vmatprep.subr.mxu0 %v372
    %1595 = vmatpush1.msra.mxu0 %v371
    %1596 = vmatprep.subr.mxu0 %v380
    %1597 = vmatpush1.msra.mxu0 %v379
    %1598 = vmatprep.subr.mxu0 %v388
    %1599 = vmatpush1.msra.mxu0 %v387
    %1600 = vmatprep.subr.mxu0 %v396
    %1601 = vmatpush1.msra.mxu0 %v395
    %1602 = vmatprep.subr.mxu0 %v404
    %1603 = vmatpush1.msra.mxu0 %v403
    %1604 = vmatprep.subr.mxu0 %v412
    %1605 = vmatpush1.msra.mxu0 %v411
    %1606 = vmatprep.subr.mxu0 %v420
    %1607 = vmatpush1.msra.mxu0 %v419
    %1608 = vmatprep.subr.mxu0 %v428
    %1609 = vmatpush1.msra.mxu0 %v427
    %1610 = vmatprep.subr.mxu0 %v436
    %1611 = vmatpush1.msra.mxu0 %v435
    %1612 = vmatprep.subr.mxu0 %v444
    %1613 = vmatpush1.msra.mxu0 %v443
    %1614 = vmatprep.subr.mxu0 %v452
    %1615 = vmatpush1.msra.mxu0 %v451
    %1616 = vmatprep.subr.mxu0 %v460
    %1617 = vmatpush1.msra.mxu0 %v459
    %1618 = vmatprep.subr.mxu0 %v468
    %1619 = vmatpush1.msra.mxu0 %v467
    %1620 = vmatprep.subr.mxu0 %v476
    %1621 = vmatpush1.msra.mxu0 %v475
    %1622 = vmatprep.subr.mxu0 %v484
    %1623 = vmatpush1.msra.mxu0 %v483
    %1624 = vmatprep.subr.mxu0 %v492
    %1625 = vmatpush1.msra.mxu0 %v491
    %1626 = vmatprep.subr.mxu0 %v500
    %1627 = vmatpush1.msra.mxu0 %v499
    %1628 = vmatprep.subr.mxu0 %v508
    %1629 = vmatpush1.msra.mxu0 %v507
    %1630 = vmatprep.subr.mxu0 %v516
    %1631 = vmatpush1.msra.mxu0 %v515
    %1632 = vmatprep.subr.mxu0 %v524
    %1633 = vmatpush1.msra.mxu0 %v523
    %1634 = vmatprep.subr.mxu0 %v532
    %1635 = vmatpush1.msra.mxu0 %v531
    %1636 = vmatprep.subr.mxu0 %v540
    %1637 = vmatpush1.msra.mxu0 %v539
    %1638 = vmatprep.subr.mxu0 %v548
    %1639 = vmatpush1.msra.mxu0 %v547
    %1640 = vmatprep.subr.mxu0 %v556
    %1641 = vmatpush1.msra.mxu0 %v555
    %1642 = vmatprep.subr.mxu0 %v564
    %1643 = vmatpush1.msra.mxu0 %v563
    %1644 = vmatprep.mubr.f32.mxu0 %v915
    %1645 = vmatmul.mubr.f32.gmra.mrb[0].mxu0 %v913
    %v1646 = vpop.f32.mrb[0].mxu0
    %v1647 = vadd.f32 %v1576, %v1646
    %v1648 = vpop.f32.mrb[0].mxu0
    %v1649 = vadd.f32 %v1578, %v1648
    %1650 = vdwg.mxu0
    %1651 = vmatprep.subr.mxu0 %v572
    %1652 = vmatpush1.msra.mxu0 %v571
    %1653 = vmatprep.subr.mxu0 %v580
    %1654 = vmatpush1.msra.mxu0 %v579
    %1655 = vmatprep.subr.mxu0 %v588
    %1656 = vmatpush1.msra.mxu0 %v587
    %1657 = vmatprep.subr.mxu0 %v596
    %1658 = vmatpush1.msra.mxu0 %v595
    %1659 = vmatprep.subr.mxu0 %v604
    %1660 = vmatpush1.msra.mxu0 %v603
    %1661 = vmatprep.subr.mxu0 %v612
    %1662 = vmatpush1.msra.mxu0 %v611
    %1663 = vmatprep.subr.mxu0 %v620
    %1664 = vmatpush1.msra.mxu0 %v619
    %1665 = vmatprep.subr.mxu0 %v628
    %1666 = vmatpush1.msra.mxu0 %v627
    %1667 = vmatprep.subr.mxu0 %v636
    %1668 = vmatpush1.msra.mxu0 %v635
    %1669 = vmatprep.subr.mxu0 %v644
    %1670 = vmatpush1.msra.mxu0 %v643
    %1671 = vmatprep.subr.mxu0 %v652
    %1672 = vmatpush1.msra.mxu0 %v651
    %1673 = vmatprep.subr.mxu0 %v660
    %1674 = vmatpush1.msra.mxu0 %v659
    %1675 = vmatprep.subr.mxu0 %v668
    %1676 = vmatpush1.msra.mxu0 %v667
    %1677 = vmatprep.subr.mxu0 %v676
    %1678 = vmatpush1.msra.mxu0 %v675
    %1679 = vmatprep.subr.mxu0 %v684
    %1680 = vmatpush1.msra.mxu0 %v683
    %1681 = vmatprep.subr.mxu0 %v692
    %1682 = vmatpush1.msra.mxu0 %v691
    %1683 = vmatprep.subr.mxu0 %v700
    %1684 = vmatpush1.msra.mxu0 %v699
    %1685 = vmatprep.subr.mxu0 %v708
    %1686 = vmatpush1.msra.mxu0 %v707
    %1687 = vmatprep.subr.mxu0 %v716
    %1688 = vmatpush1.msra.mxu0 %v715
    %1689 = vmatprep.subr.mxu0 %v724
    %1690 = vmatpush1.msra.mxu0 %v723
    %1691 = vmatprep.subr.mxu0 %v732
    %1692 = vmatpush1.msra.mxu0 %v731
    %1693 = vmatprep.subr.mxu0 %v740
    %1694 = vmatpush1.msra.mxu0 %v739
    %1695 = vmatprep.subr.mxu0 %v748
    %1696 = vmatpush1.msra.mxu0 %v747
    %1697 = vmatprep.subr.mxu0 %v756
    %1698 = vmatpush1.msra.mxu0 %v755
    %1699 = vmatprep.subr.mxu0 %v764
    %1700 = vmatpush1.msra.mxu0 %v763
    %1701 = vmatprep.subr.mxu0 %v772
    %1702 = vmatpush1.msra.mxu0 %v771
    %1703 = vmatprep.subr.mxu0 %v780
    %1704 = vmatpush1.msra.mxu0 %v779
    %1705 = vmatprep.subr.mxu0 %v788
    %1706 = vmatpush1.msra.mxu0 %v787
    %1707 = vmatprep.subr.mxu0 %v796
    %1708 = vmatpush1.msra.mxu0 %v795
    %1709 = vmatprep.subr.mxu0 %v804
    %1710 = vmatpush1.msra.mxu0 %v803
    %1711 = vmatprep.subr.mxu0 %v812
    %1712 = vmatpush1.msra.mxu0 %v811
    %1713 = vmatprep.subr.mxu0 %v820
    %1714 = vmatpush1.msra.mxu0 %v819
    %1715 = vmatprep.mubr.f32.mxu0 %v931
    %1716 = vmatmul.mubr.f32.gmra.mrb[0].mxu0 %v923
    %v1717 = vpop.f32.mrb[0].mxu0
    %v1718 = vadd.f32 %v1647, %v1717
    %v1719 = vpop.f32.mrb[0].mxu0
    %v1720 = vadd.f32 %v1649, %v1719
    %1721 = vdwg.mxu0
    %1722 = vmatprep.subr.mxu0 %v828
    %1723 = vmatpush1.msra.mxu0 %v827
    %1724 = vmatprep.subr.mxu0 %v836
    %1725 = vmatpush1.msra.mxu0 %v835
    %1726 = vmatprep.subr.mxu0 %v844
    %1727 = vmatpush1.msra.mxu0 %v843
    %1728 = vmatprep.subr.mxu0 %v852
    %1729 = vmatpush1.msra.mxu0 %v851
    %1730 = vmatprep.subr.mxu0 0.0
    %1731 = vmatpush1.msra.mxu0 0.0
    %1732 = vmatprep.subr.mxu0 0.0
    %1733 = vmatpush1.msra.mxu0 0.0
    %1734 = vmatprep.subr.mxu0 0.0
    %1735 = vmatpush1.msra.mxu0 0.0
    %1736 = vmatprep.subr.mxu0 0.0
    %1737 = vmatpush1.msra.mxu0 0.0
    %1738 = vmatprep.subr.mxu0 0.0
    %1739 = vmatpush1.msra.mxu0 0.0
    %1740 = vmatprep.subr.mxu0 0.0
    %1741 = vmatpush1.msra.mxu0 0.0
    %1742 = vmatprep.subr.mxu0 0.0
    %1743 = vmatpush1.msra.mxu0 0.0
    %1744 = vmatprep.subr.mxu0 0.0
    %1745 = vmatpush1.msra.mxu0 0.0
    %1746 = vmatprep.subr.mxu0 0.0
    %1747 = vmatpush1.msra.mxu0 0.0
    %1748 = vmatprep.subr.mxu0 0.0
    %1749 = vmatpush1.msra.mxu0 0.0
    %1750 = vmatprep.subr.mxu0 0.0
    %1751 = vmatpush1.msra.mxu0 0.0
    %1752 = vmatprep.subr.mxu0 0.0
    %1753 = vmatpush1.msra.mxu0 0.0
    %1754 = vmatprep.subr.mxu0 0.0
    %1755 = vmatpush1.msra.mxu0 0.0
    %1756 = vmatprep.subr.mxu0 0.0
    %1757 = vmatpush1.msra.mxu0 0.0
    %1758 = vmatprep.subr.mxu0 0.0
    %1759 = vmatpush1.msra.mxu0 0.0
    %1760 = vmatprep.subr.mxu0 0.0
    %1761 = vmatpush1.msra.mxu0 0.0
    %1762 = vmatprep.subr.mxu0 0.0
    %1763 = vmatpush1.msra.mxu0 0.0
    %1764 = vmatprep.subr.mxu0 0.0
    %1765 = vmatpush1.msra.mxu0 0.0
    %1766 = vmatprep.subr.mxu0 0.0
    %1767 = vmatpush1.msra.mxu0 0.0
    %1768 = vmatprep.subr.mxu0 0.0
    %1769 = vmatpush1.msra.mxu0 0.0
    %1770 = vmatprep.subr.mxu0 0.0
    %1771 = vmatpush1.msra.mxu0 0.0
    %1772 = vmatprep.subr.mxu0 0.0
    %1773 = vmatpush1.msra.mxu0 0.0
    %1774 = vmatprep.subr.mxu0 0.0
    %1775 = vmatpush1.msra.mxu0 0.0
    %1776 = vmatprep.subr.mxu0 0.0
    %1777 = vmatpush1.msra.mxu0 0.0
    %1778 = vmatprep.subr.mxu0 0.0
    %1779 = vmatpush1.msra.mxu0 0.0
    %1780 = vmatprep.subr.mxu0 0.0
    %1781 = vmatpush1.msra.mxu0 0.0
    %1782 = vmatprep.subr.mxu0 0.0
    %1783 = vmatpush1.msra.mxu0 0.0
    %1784 = vmatprep.subr.mxu0 0.0
    %1785 = vmatpush1.msra.mxu0 0.0
    %1786 = vmatprep.mubr.f32.mxu0 0.0
    %1787 = vmatmul.mubr.f32.gmra.mrb[0].mxu0 %v939
    %v1788 = vpop.f32.mrb[0].mxu0
    %v1789 = vadd.f32 %v1718, %v1788
    %v1790 = vpop.f32.mrb[0].mxu0
    %v1791 = vadd.f32 %v1720, %v1790
    %1792 = vdwg.mxu0
    %1793 = vmatprep.subr.mxu0 %v62
    %1794 = vmatpush1.msra.mxu0 %v61
    %1795 = vmatprep.subr.mxu0 %v70
    %1796 = vmatpush1.msra.mxu0 %v69
    %1797 = vmatprep.subr.mxu0 %v78
    %1798 = vmatpush1.msra.mxu0 %v77
    %1799 = vmatprep.subr.mxu0 %v86
    %1800 = vmatpush1.msra.mxu0 %v85
    %1801 = vmatprep.subr.mxu0 %v94
    %1802 = vmatpush1.msra.mxu0 %v93
    %1803 = vmatprep.subr.mxu0 %v102
    %1804 = vmatpush1.msra.mxu0 %v101
    %1805 = vmatprep.subr.mxu0 %v110
    %1806 = vmatpush1.msra.mxu0 %v109
    %1807 = vmatprep.subr.mxu0 %v118
    %1808 = vmatpush1.msra.mxu0 %v117
    %1809 = vmatprep.subr.mxu0 %v126
    %1810 = vmatpush1.msra.mxu0 %v125
    %1811 = vmatprep.subr.mxu0 %v134
    %1812 = vmatpush1.msra.mxu0 %v133
    %1813 = vmatprep.subr.mxu0 %v142
    %1814 = vmatpush1.msra.mxu0 %v141
    %1815 = vmatprep.subr.mxu0 %v150
    %1816 = vmatpush1.msra.mxu0 %v149
    %1817 = vmatprep.subr.mxu0 %v158
    %1818 = vmatpush1.msra.mxu0 %v157
    %1819 = vmatprep.subr.mxu0 %v166
    %1820 = vmatpush1.msra.mxu0 %v165
    %1821 = vmatprep.subr.mxu0 %v174
    %1822 = vmatpush1.msra.mxu0 %v173
    %1823 = vmatprep.subr.mxu0 %v182
    %1824 = vmatpush1.msra.mxu0 %v181
    %1825 = vmatprep.subr.mxu0 %v190
    %1826 = vmatpush1.msra.mxu0 %v189
    %1827 = vmatprep.subr.mxu0 %v198
    %1828 = vmatpush1.msra.mxu0 %v197
    %1829 = vmatprep.subr.mxu0 %v206
    %1830 = vmatpush1.msra.mxu0 %v205
    %1831 = vmatprep.subr.mxu0 %v214
    %1832 = vmatpush1.msra.mxu0 %v213
    %1833 = vmatprep.subr.mxu0 %v222
    %1834 = vmatpush1.msra.mxu0 %v221
    %1835 = vmatprep.subr.mxu0 %v230
    %1836 = vmatpush1.msra.mxu0 %v229
    %1837 = vmatprep.subr.mxu0 %v238
    %1838 = vmatpush1.msra.mxu0 %v237
    %1839 = vmatprep.subr.mxu0 %v246
    %1840 = vmatpush1.msra.mxu0 %v245
    %1841 = vmatprep.subr.mxu0 %v254
    %1842 = vmatpush1.msra.mxu0 %v253
    %1843 = vmatprep.subr.mxu0 %v262
    %1844 = vmatpush1.msra.mxu0 %v261
    %1845 = vmatprep.subr.mxu0 %v270
    %1846 = vmatpush1.msra.mxu0 %v269
    %1847 = vmatprep.subr.mxu0 %v278
    %1848 = vmatpush1.msra.mxu0 %v277
    %1849 = vmatprep.subr.mxu0 %v286
    %1850 = vmatpush1.msra.mxu0 %v285
    %1851 = vmatprep.subr.mxu0 %v294
    %1852 = vmatpush1.msra.mxu0 %v293
    %1853 = vmatprep.subr.mxu0 %v302
    %1854 = vmatpush1.msra.mxu0 %v301
    %1855 = vmatprep.subr.mxu0 %v310
    %1856 = vmatpush1.msra.mxu0 %v309
    %1857 = vmatprep.mubr.f32.mxu0 %v914
    %1858 = vmatmul.mubr.f32.gmra.mrb[0].mxu0 %v906
    %v1859 = vpop.f32.mrb[0].mxu0
    %v1860 = vadd.f32 %v884, %v1859
    %v1861 = vpop.f32.mrb[0].mxu0
    %v1862 = vadd.f32 %v888, %v1861
    %1863 = vdwg.mxu0
    %1864 = vmatprep.subr.mxu0 %v318
    %1865 = vmatpush1.msra.mxu0 %v317
    %1866 = vmatprep.subr.mxu0 %v326
    %1867 = vmatpush1.msra.mxu0 %v325
    %1868 = vmatprep.subr.mxu0 %v334
    %1869 = vmatpush1.msra.mxu0 %v333
    %1870 = vmatprep.subr.mxu0 %v342
    %1871 = vmatpush1.msra.mxu0 %v341
    %1872 = vmatprep.subr.mxu0 %v350
    %1873 = vmatpush1.msra.mxu0 %v349
    %1874 = vmatprep.subr.mxu0 %v358
    %1875 = vmatpush1.msra.mxu0 %v357
    %1876 = vmatprep.subr.mxu0 %v366
    %1877 = vmatpush1.msra.mxu0 %v365
    %1878 = vmatprep.subr.mxu0 %v374
    %1879 = vmatpush1.msra.mxu0 %v373
    %1880 = vmatprep.subr.mxu0 %v382
    %1881 = vmatpush1.msra.mxu0 %v381
    %1882 = vmatprep.subr.mxu0 %v390
    %1883 = vmatpush1.msra.mxu0 %v389
    %1884 = vmatprep.subr.mxu0 %v398
    %1885 = vmatpush1.msra.mxu0 %v397
    %1886 = vmatprep.subr.mxu0 %v406
    %1887 = vmatpush1.msra.mxu0 %v405
    %1888 = vmatprep.subr.mxu0 %v414
    %1889 = vmatpush1.msra.mxu0 %v413
    %1890 = vmatprep.subr.mxu0 %v422
    %1891 = vmatpush1.msra.mxu0 %v421
    %1892 = vmatprep.subr.mxu0 %v430
    %1893 = vmatpush1.msra.mxu0 %v429
    %1894 = vmatprep.subr.mxu0 %v438
    %1895 = vmatpush1.msra.mxu0 %v437
    %1896 = vmatprep.subr.mxu0 %v446
    %1897 = vmatpush1.msra.mxu0 %v445
    %1898 = vmatprep.subr.mxu0 %v454
    %1899 = vmatpush1.msra.mxu0 %v453
    %1900 = vmatprep.subr.mxu0 %v462
    %1901 = vmatpush1.msra.mxu0 %v461
    %1902 = vmatprep.subr.mxu0 %v470
    %1903 = vmatpush1.msra.mxu0 %v469
    %1904 = vmatprep.subr.mxu0 %v478
    %1905 = vmatpush1.msra.mxu0 %v477
    %1906 = vmatprep.subr.mxu0 %v486
    %1907 = vmatpush1.msra.mxu0 %v485
    %1908 = vmatprep.subr.mxu0 %v494
    %1909 = vmatpush1.msra.mxu0 %v493
    %1910 = vmatprep.subr.mxu0 %v502
    %1911 = vmatpush1.msra.mxu0 %v501
    %1912 = vmatprep.subr.mxu0 %v510
    %1913 = vmatpush1.msra.mxu0 %v509
    %1914 = vmatprep.subr.mxu0 %v518
    %1915 = vmatpush1.msra.mxu0 %v517
    %1916 = vmatprep.subr.mxu0 %v526
    %1917 = vmatpush1.msra.mxu0 %v525
    %1918 = vmatprep.subr.mxu0 %v534
    %1919 = vmatpush1.msra.mxu0 %v533
    %1920 = vmatprep.subr.mxu0 %v542
    %1921 = vmatpush1.msra.mxu0 %v541
    %1922 = vmatprep.subr.mxu0 %v550
    %1923 = vmatpush1.msra.mxu0 %v549
    %1924 = vmatprep.subr.mxu0 %v558
    %1925 = vmatpush1.msra.mxu0 %v557
    %1926 = vmatprep.subr.mxu0 %v566
    %1927 = vmatpush1.msra.mxu0 %v565
    %1928 = vmatprep.mubr.f32.mxu0 %v915
    %1929 = vmatmul.mubr.f32.gmra.mrb[0].mxu0 %v913
    %v1930 = vpop.f32.mrb[0].mxu0
    %v1931 = vadd.f32 %v1860, %v1930
    %v1932 = vpop.f32.mrb[0].mxu0
    %v1933 = vadd.f32 %v1862, %v1932
    %1934 = vdwg.mxu0
    %1935 = vmatprep.subr.mxu0 %v574
    %1936 = vmatpush1.msra.mxu0 %v573
    %1937 = vmatprep.subr.mxu0 %v582
    %1938 = vmatpush1.msra.mxu0 %v581
    %1939 = vmatprep.subr.mxu0 %v590
    %1940 = vmatpush1.msra.mxu0 %v589
    %1941 = vmatprep.subr.mxu0 %v598
    %1942 = vmatpush1.msra.mxu0 %v597
    %1943 = vmatprep.subr.mxu0 %v606
    %1944 = vmatpush1.msra.mxu0 %v605
    %1945 = vmatprep.subr.mxu0 %v614
    %1946 = vmatpush1.msra.mxu0 %v613
    %1947 = vmatprep.subr.mxu0 %v622
    %1948 = vmatpush1.msra.mxu0 %v621
    %1949 = vmatprep.subr.mxu0 %v630
    %1950 = vmatpush1.msra.mxu0 %v629
    %1951 = vmatprep.subr.mxu0 %v638
    %1952 = vmatpush1.msra.mxu0 %v637
    %1953 = vmatprep.subr.mxu0 %v646
    %1954 = vmatpush1.msra.mxu0 %v645
    %1955 = vmatprep.subr.mxu0 %v654
    %1956 = vmatpush1.msra.mxu0 %v653
    %1957 = vmatprep.subr.mxu0 %v662
    %1958 = vmatpush1.msra.mxu0 %v661
    %1959 = vmatprep.subr.mxu0 %v670
    %1960 = vmatpush1.msra.mxu0 %v669
    %1961 = vmatprep.subr.mxu0 %v678
    %1962 = vmatpush1.msra.mxu0 %v677
    %1963 = vmatprep.subr.mxu0 %v686
    %1964 = vmatpush1.msra.mxu0 %v685
    %1965 = vmatprep.subr.mxu0 %v694
    %1966 = vmatpush1.msra.mxu0 %v693
    %1967 = vmatprep.subr.mxu0 %v702
    %1968 = vmatpush1.msra.mxu0 %v701
    %1969 = vmatprep.subr.mxu0 %v710
    %1970 = vmatpush1.msra.mxu0 %v709
    %1971 = vmatprep.subr.mxu0 %v718
    %1972 = vmatpush1.msra.mxu0 %v717
    %1973 = vmatprep.subr.mxu0 %v726
    %1974 = vmatpush1.msra.mxu0 %v725
    %1975 = vmatprep.subr.mxu0 %v734
    %1976 = vmatpush1.msra.mxu0 %v733
    %1977 = vmatprep.subr.mxu0 %v742
    %1978 = vmatpush1.msra.mxu0 %v741
    %1979 = vmatprep.subr.mxu0 %v750
    %1980 = vmatpush1.msra.mxu0 %v749
    %1981 = vmatprep.subr.mxu0 %v758
    %1982 = vmatpush1.msra.mxu0 %v757
    %1983 = vmatprep.subr.mxu0 %v766
    %1984 = vmatpush1.msra.mxu0 %v765
    %1985 = vmatprep.subr.mxu0 %v774
    %1986 = vmatpush1.msra.mxu0 %v773
    %1987 = vmatprep.subr.mxu0 %v782
    %1988 = vmatpush1.msra.mxu0 %v781
    %1989 = vmatprep.subr.mxu0 %v790
    %1990 = vmatpush1.msra.mxu0 %v789
    %1991 = vmatprep.subr.mxu0 %v798
    %1992 = vmatpush1.msra.mxu0 %v797
    %1993 = vmatprep.subr.mxu0 %v806
    %1994 = vmatpush1.msra.mxu0 %v805
    %1995 = vmatprep.subr.mxu0 %v814
    %1996 = vmatpush1.msra.mxu0 %v813
    %1997 = vmatprep.subr.mxu0 %v822
    %1998 = vmatpush1.msra.mxu0 %v821
    %1999 = vmatprep.mubr.f32.mxu0 %v931
    %2000 = vmatmul.mubr.f32.gmra.mrb[0].mxu0 %v923
    %v2001 = vpop.f32.mrb[0].mxu0
    %v2002 = vadd.f32 %v1931, %v2001
    %v2003 = vpop.f32.mrb[0].mxu0
    %v2004 = vadd.f32 %v1933, %v2003
    %2005 = vdwg.mxu0
    %2006 = vmatprep.subr.mxu0 %v830
    %2007 = vmatpush1.msra.mxu0 %v829
    %2008 = vmatprep.subr.mxu0 %v838
    %2009 = vmatpush1.msra.mxu0 %v837
    %2010 = vmatprep.subr.mxu0 %v846
    %2011 = vmatpush1.msra.mxu0 %v845
    %2012 = vmatprep.subr.mxu0 %v854
    %2013 = vmatpush1.msra.mxu0 %v853
    %2014 = vmatprep.subr.mxu0 0.0
    %2015 = vmatpush1.msra.mxu0 0.0
    %2016 = vmatprep.subr.mxu0 0.0
    %2017 = vmatpush1.msra.mxu0 0.0
    %2018 = vmatprep.subr.mxu0 0.0
    %2019 = vmatpush1.msra.mxu0 0.0
    %2020 = vmatprep.subr.mxu0 0.0
    %2021 = vmatpush1.msra.mxu0 0.0
    %2022 = vmatprep.subr.mxu0 0.0
    %2023 = vmatpush1.msra.mxu0 0.0
    %2024 = vmatprep.subr.mxu0 0.0
    %2025 = vmatpush1.msra.mxu0 0.0
    %2026 = vmatprep.subr.mxu0 0.0
    %2027 = vmatpush1.msra.mxu0 0.0
    %2028 = vmatprep.subr.mxu0 0.0
    %2029 = vmatpush1.msra.mxu0 0.0
    %2030 = vmatprep.subr.mxu0 0.0
    %2031 = vmatpush1.msra.mxu0 0.0
    %2032 = vmatprep.subr.mxu0 0.0
    %2033 = vmatpush1.msra.mxu0 0.0
    %2034 = vmatprep.subr.mxu0 0.0
    %2035 = vmatpush1.msra.mxu0 0.0
    %2036 = vmatprep.subr.mxu0 0.0
    %2037 = vmatpush1.msra.mxu0 0.0
    %2038 = vmatprep.subr.mxu0 0.0
    %2039 = vmatpush1.msra.mxu0 0.0
    %2040 = vmatprep.subr.mxu0 0.0
    %2041 = vmatpush1.msra.mxu0 0.0
    %2042 = vmatprep.subr.mxu0 0.0
    %2043 = vmatpush1.msra.mxu0 0.0
    %2044 = vmatprep.subr.mxu0 0.0
    %2045 = vmatpush1.msra.mxu0 0.0
    %2046 = vmatprep.subr.mxu0 0.0
    %2047 = vmatpush1.msra.mxu0 0.0
    %2048 = vmatprep.subr.mxu0 0.0
    %2049 = vmatpush1.msra.mxu0 0.0
    %2050 = vmatprep.subr.mxu0 0.0
    %2051 = vmatpush1.msra.mxu0 0.0
    %2052 = vmatprep.subr.mxu0 0.0
    %2053 = vmatpush1.msra.mxu0 0.0
    %2054 = vmatprep.subr.mxu0 0.0
    %2055 = vmatpush1.msra.mxu0 0.0
    %2056 = vmatprep.subr.mxu0 0.0
    %2057 = vmatpush1.msra.mxu0 0.0
    %2058 = vmatprep.subr.mxu0 0.0
    %2059 = vmatpush1.msra.mxu0 0.0
    %2060 = vmatprep.subr.mxu0 0.0
    %2061 = vmatpush1.msra.mxu0 0.0
    %2062 = vmatprep.subr.mxu0 0.0
    %2063 = vmatpush1.msra.mxu0 0.0
    %2064 = vmatprep.subr.mxu0 0.0
    %2065 = vmatpush1.msra.mxu0 0.0
    %2066 = vmatprep.subr.mxu0 0.0
    %2067 = vmatpush1.msra.mxu0 0.0
    %2068 = vmatprep.subr.mxu0 0.0
    %2069 = vmatpush1.msra.mxu0 0.0
    %2070 = vmatprep.mubr.f32.mxu0 0.0
    %2071 = vmatmul.mubr.f32.gmra.mrb[0].mxu0 %v939
    %v2072 = vpop.f32.mrb[0].mxu0
    %v2073 = vadd.f32 %v2002, %v2072
    %v2074 = vpop.f32.mrb[0].mxu0
    %v2075 = vadd.f32 %v2004, %v2074
    %2076 = vdwg.mxu0
    %v2077 = vmax.f32 %v1221, 0.0
    %v2078 = vmax.f32 %v1223, 0.0
    %v2079 = vmax.f32 %v1505, 0.0
    %v2080 = vmax.f32 %v1507, 0.0
    %v2081 = vmax.f32 %v1789, 0.0
    %v2082 = vmax.f32 %v1791, 0.0
    %v2083 = vmax.f32 %v2073, 0.0
    %v2084 = vmax.f32 %v2075, 0.0
    %v2085 = vld [vmem:[%s3] sm:$0xff]
    %v2086 = vld [vmem:[%s3 + $0x8] sm:$0xff]
    %v2087 = vld [vmem:[%s3 + $0x10] sm:$0xff]
    %v2088 = vld [vmem:[%s3 + $0x18] sm:$0xff]
    %v2089 = vld [vmem:[%s3 + $0x20] sm:$0xff]
    %v2090 = vld [vmem:[%s3 + $0x28] sm:$0xff]
    %v2091 = vld [vmem:[%s3 + $0x30] sm:$0xff]
    %v2092 = vld [vmem:[%s3 + $0x38] sm:$0xff]
    %v2093 = vld [vmem:[%s3 + $0x40] sm:$0xff]
    %v2094 = vld [vmem:[%s3 + $0x48] sm:$0xff]
    %v2095 = vld [vmem:[%s3 + $0x50] sm:$0xff]
    %v2096 = vld [vmem:[%s3 + $0x58] sm:$0xff]
    %v2097 = vld [vmem:[%s3 + $0x60] sm:$0xff]
    %v2098 = vld [vmem:[%s3 + $0x68] sm:$0xff]
    %v2099 = vld [vmem:[%s3 + $0x70] sm:$0xff]
    %v2100 = vld [vmem:[%s3 + $0x78] sm:$0xff]
    %v2101 = vld [vmem:[%s3 + $0x80] sm:$0xff]
    %v2102 = vld [vmem:[%s3 + $0x88] sm:$0xff]
    %v2103 = vld [vmem:[%s3 + $0x90] sm:$0xff]
    %v2104 = vld [vmem:[%s3 + $0x98] sm:$0xff]
    %v2105 = vld [vmem:[%s3 + $0xa0] sm:$0xff]
    %v2106 = vld [vmem:[%s3 + $0xa8] sm:$0xff]
    %v2107 = vld [vmem:[%s3 + $0xb0] sm:$0xff]
    %v2108 = vld [vmem:[%s3 + $0xb8] sm:$0xff]
    %v2109 = vld [vmem:[%s3 + $0xc0] sm:$0xff]
    %v2110 = vld [vmem:[%s3 + $0xc8] sm:$0xff]
    %v2111 = vld [vmem:[%s3 + $0xd0] sm:$0xff]
    %v2112 = vld [vmem:[%s3 + $0xd8] sm:$0xff]
    %v2113 = vld [vmem:[%s3 + $0xe0] sm:$0xff]
    %v2114 = vld [vmem:[%s3 + $0xe8] sm:$0xff]
    %v2115 = vld [vmem:[%s3 + $0xf0] sm:$0xff]
    %v2116 = vld [vmem:[%s3 + $0xf8] sm:$0xff]
    %v2117 = vld [vmem:[%s3 + $0x100] sm:$0xff]
    %v2118 = vld [vmem:[%s3 + $0x108] sm:$0xff]
    %v2119 = vld [vmem:[%s3 + $0x110] sm:$0xff]
    %v2120 = vld [vmem:[%s3 + $0x118] sm:$0xff]
    %v2121 = vld [vmem:[%s3 + $0x120] sm:$0xff]
    %v2122 = vld [vmem:[%s3 + $0x128] sm:$0xff]
    %v2123 = vld [vmem:[%s3 + $0x130] sm:$0xff]
    %v2124 = vld [vmem:[%s3 + $0x138] sm:$0xff]
    %v2125 = vld [vmem:[%s3 + $0x140] sm:$0xff]
    %v2126 = vld [vmem:[%s3 + $0x148] sm:$0xff]
    %v2127 = vld [vmem:[%s3 + $0x150] sm:$0xff]
    %v2128 = vld [vmem:[%s3 + $0x158] sm:$0xff]
    %v2129 = vld [vmem:[%s3 + $0x160] sm:$0xff]
    %v2130 = vld [vmem:[%s3 + $0x168] sm:$0xff]
    %v2131 = vld [vmem:[%s3 + $0x170] sm:$0xff]
    %v2132 = vld [vmem:[%s3 + $0x178] sm:$0xff]
    %v2133 = vld [vmem:[%s3 + $0x180] sm:$0xff]
    %v2134 = vld [vmem:[%s3 + $0x188] sm:$0xff]
    %v2135 = vld [vmem:[%s3 + $0x190] sm:$0xff]
    %v2136 = vld [vmem:[%s3 + $0x198] sm:$0xff]
    %v2137 = vld [vmem:[%s3 + $0x1a0] sm:$0xff]
    %v2138 = vld [vmem:[%s3 + $0x1a8] sm:$0xff]
    %v2139 = vld [vmem:[%s3 + $0x1b0] sm:$0xff]
    %v2140 = vld [vmem:[%s3 + $0x1b8] sm:$0xff]
    %v2141 = vld [vmem:[%s3 + $0x1c0] sm:$0xff]
    %v2142 = vld [vmem:[%s3 + $0x1c8] sm:$0xff]
    %v2143 = vld [vmem:[%s3 + $0x1d0] sm:$0xff]
    %v2144 = vld [vmem:[%s3 + $0x1d8] sm:$0xff]
    %v2145 = vld [vmem:[%s3 + $0x1e0] sm:$0xff]
    %v2146 = vld [vmem:[%s3 + $0x1e8] sm:$0xff]
    %v2147 = vld [vmem:[%s3 + $0x1f0] sm:$0xff]
    %v2148 = vld [vmem:[%s3 + $0x1f8] sm:$0xff]
    %v2149 = vld [vmem:[%s3 + $0x200] sm:$0xff]
    %v2150 = vld [vmem:[%s3 + $0x208] sm:$0xff]
    %v2151 = vld [vmem:[%s3 + $0x210] sm:$0xff]
    %v2152 = vld [vmem:[%s3 + $0x218] sm:$0xff]
    %v2153 = vld [vmem:[%s3 + $0x220] sm:$0xff]
    %v2154 = vld [vmem:[%s3 + $0x228] sm:$0xff]
    %v2155 = vld [vmem:[%s3 + $0x230] sm:$0xff]
    %v2156 = vld [vmem:[%s3 + $0x238] sm:$0xff]
    %v2157 = vld [vmem:[%s3 + $0x240] sm:$0xff]
    %v2158 = vld [vmem:[%s3 + $0x248] sm:$0xff]
    %v2159 = vld [vmem:[%s3 + $0x250] sm:$0xff]
    %v2160 = vld [vmem:[%s3 + $0x258] sm:$0xff]
    %v2161 = vld [vmem:[%s3 + $0x260] sm:$0xff]
    %v2162 = vld [vmem:[%s3 + $0x268] sm:$0xff]
    %v2163 = vld [vmem:[%s3 + $0x270] sm:$0xff]
    %v2164 = vld [vmem:[%s3 + $0x278] sm:$0xff]
    %v2165 = vld [vmem:[%s3 + $0x280] sm:$0xff]
    %v2166 = vld [vmem:[%s3 + $0x288] sm:$0xff]
    %v2167 = vld [vmem:[%s3 + $0x290] sm:$0xff]
    %v2168 = vld [vmem:[%s3 + $0x298] sm:$0xff]
    %v2169 = vld [vmem:[%s3 + $0x2a0] sm:$0xff]
    %v2170 = vld [vmem:[%s3 + $0x2a8] sm:$0xff]
    %v2171 = vld [vmem:[%s3 + $0x2b0] sm:$0xff]
    %v2172 = vld [vmem:[%s3 + $0x2b8] sm:$0xff]
    %v2173 = vld [vmem:[%s3 + $0x2c0] sm:$0xff]
    %v2174 = vld [vmem:[%s3 + $0x2c8] sm:$0xff]
    %v2175 = vld [vmem:[%s3 + $0x2d0] sm:$0xff]
    %v2176 = vld [vmem:[%s3 + $0x2d8] sm:$0xff]
    %v2177 = vld [vmem:[%s3 + $0x2e0] sm:$0xff]
    %v2178 = vld [vmem:[%s3 + $0x2e8] sm:$0xff]
    %v2179 = vld [vmem:[%s3 + $0x2f0] sm:$0xff]
    %v2180 = vld [vmem:[%s3 + $0x2f8] sm:$0xff]
    %v2181 = vld [vmem:[%s3 + $0x300] sm:$0xff]
    %v2182 = vld [vmem:[%s3 + $0x308] sm:$0xff]
    %v2183 = vld [vmem:[%s3 + $0x310] sm:$0xff]
    %v2184 = vld [vmem:[%s3 + $0x318] sm:$0xff]
    %v2185 = vld [vmem:[%s3 + $0x320] sm:$0xff]
    %v2186 = vld [vmem:[%s3 + $0x328] sm:$0xff]
    %v2187 = vld [vmem:[%s3 + $0x330] sm:$0xff]
    %v2188 = vld [vmem:[%s3 + $0x338] sm:$0xff]
    %v2189 = vld [vmem:[%s3 + $0x340] sm:$0xff]
    %v2190 = vld [vmem:[%s3 + $0x348] sm:$0xff]
    %v2191 = vld [vmem:[%s3 + $0x350] sm:$0xff]
    %v2192 = vld [vmem:[%s3 + $0x358] sm:$0xff]
    %v2193 = vld [vmem:[%s3 + $0x360] sm:$0xff]
    %v2194 = vld [vmem:[%s3 + $0x368] sm:$0xff]
    %v2195 = vld [vmem:[%s3 + $0x370] sm:$0xff]
    %v2196 = vld [vmem:[%s3 + $0x378] sm:$0xff]
    %v2197 = vld [vmem:[%s3 + $0x380] sm:$0xff]
    %v2198 = vld [vmem:[%s3 + $0x388] sm:$0xff]
    %v2199 = vld [vmem:[%s3 + $0x390] sm:$0xff]
    %v2200 = vld [vmem:[%s3 + $0x398] sm:$0xff]
    %v2201 = vld [vmem:[%s3 + $0x3a0] sm:$0xff]
    %v2202 = vld [vmem:[%s3 + $0x3a8] sm:$0xff]
    %v2203 = vld [vmem:[%s3 + $0x3b0] sm:$0xff]
    %v2204 = vld [vmem:[%s3 + $0x3b8] sm:$0xff]
    %v2205 = vld [vmem:[%s3 + $0x3c0] sm:$0xff]
    %v2206 = vld [vmem:[%s3 + $0x3c8] sm:$0xff]
    %v2207 = vld [vmem:[%s3 + $0x3d0] sm:$0xff]
    %v2208 = vld [vmem:[%s3 + $0x3d8] sm:$0xff]
    %v2209 = vld [vmem:[%s3 + $0x3e0] sm:$0xff]
    %v2210 = vld [vmem:[%s3 + $0x3e8] sm:$0xff]
    %v2211 = vld [vmem:[%s3 + $0x3f0] sm:$0xff]
    %v2212 = vld [vmem:[%s3 + $0x3f8] sm:$0xff]
    %v2213 = vld [vmem:[%s3 + $0x400] sm:$0xff]
    %v2214 = vld [vmem:[%s3 + $0x408] sm:$0xff]
    %v2215 = vld [vmem:[%s3 + $0x410] sm:$0xff]
    %v2216 = vld [vmem:[%s3 + $0x418] sm:$0xff]
    %v2217 = vld [vmem:[%s3 + $0x420] sm:$0xff]
    %v2218 = vld [vmem:[%s3 + $0x428] sm:$0xff]
    %v2219 = vld [vmem:[%s3 + $0x430] sm:$0xff]
    %v2220 = vld [vmem:[%s3 + $0x438] sm:$0xff]
    %v2221 = vld [vmem:[%s3 + $0x440] sm:$0xff]
    %v2222 = vld [vmem:[%s3 + $0x448] sm:$0xff]
    %v2223 = vld [vmem:[%s3 + $0x450] sm:$0xff]
    %v2224 = vld [vmem:[%s3 + $0x458] sm:$0xff]
    %v2225 = vld [vmem:[%s3 + $0x460] sm:$0xff]
    %v2226 = vld [vmem:[%s3 + $0x468] sm:$0xff]
    %v2227 = vld [vmem:[%s3 + $0x470] sm:$0xff]
    %v2228 = vld [vmem:[%s3 + $0x478] sm:$0xff]
    %v2229 = vld [vmem:[%s3 + $0x480] sm:$0xff]
    %v2230 = vld [vmem:[%s3 + $0x488] sm:$0xff]
    %v2231 = vld [vmem:[%s3 + $0x490] sm:$0xff]
    %v2232 = vld [vmem:[%s3 + $0x498] sm:$0xff]
    %v2233 = vld [vmem:[%s3 + $0x4a0] sm:$0xff]
    %v2234 = vld [vmem:[%s3 + $0x4a8] sm:$0xff]
    %v2235 = vld [vmem:[%s3 + $0x4b0] sm:$0xff]
    %v2236 = vld [vmem:[%s3 + $0x4b8] sm:$0xff]
    %v2237 = vld [vmem:[%s3 + $0x4c0] sm:$0xff]
    %v2238 = vld [vmem:[%s3 + $0x4c8] sm:$0xff]
    %v2239 = vld [vmem:[%s3 + $0x4d0] sm:$0xff]
    %v2240 = vld [vmem:[%s3 + $0x4d8] sm:$0xff]
    %v2241 = vld [vmem:[%s3 + $0x4e0] sm:$0xff]
    %v2242 = vld [vmem:[%s3 + $0x4e8] sm:$0xff]
    %v2243 = vld [vmem:[%s3 + $0x4f0] sm:$0xff]
    %v2244 = vld [vmem:[%s3 + $0x4f8] sm:$0xff]
    %v2245 = vld [vmem:[%s3 + $0x500] sm:$0xff]
    %v2246 = vld [vmem:[%s3 + $0x508] sm:$0xff]
    %v2247 = vld [vmem:[%s3 + $0x510] sm:$0xff]
    %v2248 = vld [vmem:[%s3 + $0x518] sm:$0xff]
    %v2249 = vld [vmem:[%s3 + $0x520] sm:$0xff]
    %v2250 = vld [vmem:[%s3 + $0x528] sm:$0xff]
    %v2251 = vld [vmem:[%s3 + $0x530] sm:$0xff]
    %v2252 = vld [vmem:[%s3 + $0x538] sm:$0xff]
    %v2253 = vld [vmem:[%s3 + $0x540] sm:$0xff]
    %v2254 = vld [vmem:[%s3 + $0x548] sm:$0xff]
    %v2255 = vld [vmem:[%s3 + $0x550] sm:$0xff]
    %v2256 = vld [vmem:[%s3 + $0x558] sm:$0xff]
    %v2257 = vld [vmem:[%s3 + $0x560] sm:$0xff]
    %v2258 = vld [vmem:[%s3 + $0x568] sm:$0xff]
    %v2259 = vld [vmem:[%s3 + $0x570] sm:$0xff]
    %v2260 = vld [vmem:[%s3 + $0x578] sm:$0xff]
    %v2261 = vld [vmem:[%s3 + $0x580] sm:$0xff]
    %v2262 = vld [vmem:[%s3 + $0x588] sm:$0xff]
    %v2263 = vld [vmem:[%s3 + $0x590] sm:$0xff]
    %v2264 = vld [vmem:[%s3 + $0x598] sm:$0xff]
    %v2265 = vld [vmem:[%s3 + $0x5a0] sm:$0xff]
    %v2266 = vld [vmem:[%s3 + $0x5a8] sm:$0xff]
    %v2267 = vld [vmem:[%s3 + $0x5b0] sm:$0xff]
    %v2268 = vld [vmem:[%s3 + $0x5b8] sm:$0xff]
    %v2269 = vld [vmem:[%s3 + $0x5c0] sm:$0xff]
    %v2270 = vld [vmem:[%s3 + $0x5c8] sm:$0xff]
    %v2271 = vld [vmem:[%s3 + $0x5d0] sm:$0xff]
    %v2272 = vld [vmem:[%s3 + $0x5d8] sm:$0xff]
    %v2273 = vld [vmem:[%s3 + $0x5e0] sm:$0xff]
    %v2274 = vld [vmem:[%s3 + $0x5e8] sm:$0xff]
    %v2275 = vld [vmem:[%s3 + $0x5f0] sm:$0xff]
    %v2276 = vld [vmem:[%s3 + $0x5f8] sm:$0xff]
    %v2277 = vld [vmem:[%s3 + $0x600] sm:$0xff]
    %v2278 = vld [vmem:[%s3 + $0x608] sm:$0xff]
    %v2279 = vld [vmem:[%s3 + $0x610] sm:$0xff]
    %v2280 = vld [vmem:[%s3 + $0x618] sm:$0xff]
    %v2281 = vld [vmem:[%s3 + $0x620] sm:$0xff]
    %v2282 = vld [vmem:[%s3 + $0x628] sm:$0xff]
    %v2283 = vld [vmem:[%s3 + $0x630] sm:$0xff]
    %v2284 = vld [vmem:[%s3 + $0x638] sm:$0xff]
    %v2285 = vld [vmem:[%s3 + $0x640] sm:$0xff]
    %v2286 = vld [vmem:[%s3 + $0x648] sm:$0xff]
    %v2287 = vld [vmem:[%s3 + $0x650] sm:$0xff]
    %v2288 = vld [vmem:[%s3 + $0x658] sm:$0xff]
    %v2289 = vld [vmem:[%s3 + $0x660] sm:$0xff]
    %v2290 = vld [vmem:[%s3 + $0x668] sm:$0xff]
    %v2291 = vld [vmem:[%s3 + $0x670] sm:$0xff]
    %v2292 = vld [vmem:[%s3 + $0x678] sm:$0xff]
    %v2293 = vld [vmem:[%s3 + $0x680] sm:$0xff]
    %v2294 = vld [vmem:[%s3 + $0x688] sm:$0xff]
    %v2295 = vld [vmem:[%s3 + $0x690] sm:$0xff]
    %v2296 = vld [vmem:[%s3 + $0x698] sm:$0xff]
    %v2297 = vld [vmem:[%s3 + $0x6a0] sm:$0xff]
    %v2298 = vld [vmem:[%s3 + $0x6a8] sm:$0xff]
    %v2299 = vld [vmem:[%s3 + $0x6b0] sm:$0xff]
    %v2300 = vld [vmem:[%s3 + $0x6b8] sm:$0xff]
    %v2301 = vld [vmem:[%s3 + $0x6c0] sm:$0xff]
    %v2302 = vld [vmem:[%s3 + $0x6c8] sm:$0xff]
    %v2303 = vld [vmem:[%s3 + $0x6d0] sm:$0xff]
    %v2304 = vld [vmem:[%s3 + $0x6d8] sm:$0xff]
    %v2305 = vld [vmem:[%s3 + $0x6e0] sm:$0xff]
    %v2306 = vld [vmem:[%s3 + $0x6e8] sm:$0xff]
    %v2307 = vld [vmem:[%s3 + $0x6f0] sm:$0xff]
    %v2308 = vld [vmem:[%s3 + $0x6f8] sm:$0xff]
    %v2309 = vld [vmem:[%s3 + $0x700] sm:$0xff]
    %v2310 = vld [vmem:[%s3 + $0x708] sm:$0xff]
    %v2311 = vld [vmem:[%s3 + $0x710] sm:$0xff]
    %v2312 = vld [vmem:[%s3 + $0x718] sm:$0xff]
    %v2313 = vld [vmem:[%s3 + $0x720] sm:$0xff]
    %v2314 = vld [vmem:[%s3 + $0x728] sm:$0xff]
    %v2315 = vld [vmem:[%s3 + $0x730] sm:$0xff]
    %v2316 = vld [vmem:[%s3 + $0x738] sm:$0xff]
    %v2317 = vld [vmem:[%s3 + $0x740] sm:$0xff]
    %v2318 = vld [vmem:[%s3 + $0x748] sm:$0xff]
    %v2319 = vld [vmem:[%s3 + $0x750] sm:$0xff]
    %v2320 = vld [vmem:[%s3 + $0x758] sm:$0xff]
    %v2321 = vld [vmem:[%s3 + $0x760] sm:$0xff]
    %v2322 = vld [vmem:[%s3 + $0x768] sm:$0xff]
    %v2323 = vld [vmem:[%s3 + $0x770] sm:$0xff]
    %v2324 = vld [vmem:[%s3 + $0x778] sm:$0xff]
    %v2325 = vld [vmem:[%s3 + $0x780] sm:$0xff]
    %v2326 = vld [vmem:[%s3 + $0x788] sm:$0xff]
    %v2327 = vld [vmem:[%s3 + $0x790] sm:$0xff]
    %v2328 = vld [vmem:[%s3 + $0x798] sm:$0xff]
    %v2329 = vld [vmem:[%s3 + $0x7a0] sm:$0xff]
    %v2330 = vld [vmem:[%s3 + $0x7a8] sm:$0xff]
    %v2331 = vld [vmem:[%s3 + $0x7b0] sm:$0xff]
    %v2332 = vld [vmem:[%s3 + $0x7b8] sm:$0xff]
    %v2333 = vld [vmem:[%s3 + $0x7c0] sm:$0xff]
    %v2334 = vld [vmem:[%s3 + $0x7c8] sm:$0xff]
    %v2335 = vld [vmem:[%s3 + $0x7d0] sm:$0xff]
    %v2336 = vld [vmem:[%s3 + $0x7d8] sm:$0xff]
    %v2337 = vld [vmem:[%s3 + $0x7e0] sm:$0xff]
    %v2338 = vld [vmem:[%s3 + $0x7e8] sm:$0xff]
    %v2339 = vld [vmem:[%s3 + $0x7f0] sm:$0xff]
    %v2340 = vld [vmem:[%s3 + $0x7f8] sm:$0xff]
    %v2341 = vld [vmem:[%s3 + $0x800] sm:$0xff]
    %v2342 = vld [vmem:[%s3 + $0x808] sm:$0xff]
    %v2343 = vld [vmem:[%s3 + $0x810] sm:$0xff]
    %v2344 = vld [vmem:[%s3 + $0x818] sm:$0xff]
    %v2345 = vld [vmem:[%s3 + $0x820] sm:$0xff]
    %v2346 = vld [vmem:[%s3 + $0x828] sm:$0xff]
    %v2347 = vld [vmem:[%s3 + $0x830] sm:$0xff]
    %v2348 = vld [vmem:[%s3 + $0x838] sm:$0xff]
    %v2349 = vld [vmem:[%s3 + $0x840] sm:$0xff]
    %v2350 = vld [vmem:[%s3 + $0x848] sm:$0xff]
    %v2351 = vld [vmem:[%s3 + $0x850] sm:$0xff]
    %v2352 = vld [vmem:[%s3 + $0x858] sm:$0xff]
    %v2353 = vld [vmem:[%s3 + $0x860] sm:$0xff]
    %v2354 = vld [vmem:[%s3 + $0x868] sm:$0xff]
    %v2355 = vld [vmem:[%s3 + $0x870] sm:$0xff]
    %v2356 = vld [vmem:[%s3 + $0x878] sm:$0xff]
    %v2357 = vld [vmem:[%s3 + $0x880] sm:$0xff]
    %v2358 = vld [vmem:[%s3 + $0x888] sm:$0xff]
    %v2359 = vld [vmem:[%s3 + $0x890] sm:$0xff]
    %v2360 = vld [vmem:[%s3 + $0x898] sm:$0xff]
    %v2361 = vld [vmem:[%s3 + $0x8a0] sm:$0xff]
    %v2362 = vld [vmem:[%s3 + $0x8a8] sm:$0xff]
    %v2363 = vld [vmem:[%s3 + $0x8b0] sm:$0xff]
    %v2364 = vld [vmem:[%s3 + $0x8b8] sm:$0xff]
    %v2365 = vld [vmem:[%s3 + $0x8c0] sm:$0xff]
    %v2366 = vld [vmem:[%s3 + $0x8c8] sm:$0xff]
    %v2367 = vld [vmem:[%s3 + $0x8d0] sm:$0xff]
    %v2368 = vld [vmem:[%s3 + $0x8d8] sm:$0xff]
    %v2369 = vld [vmem:[%s3 + $0x8e0] sm:$0xff]
    %v2370 = vld [vmem:[%s3 + $0x8e8] sm:$0xff]
    %v2371 = vld [vmem:[%s3 + $0x8f0] sm:$0xff]
    %v2372 = vld [vmem:[%s3 + $0x8f8] sm:$0xff]
    %v2373 = vld [vmem:[%s3 + $0x900] sm:$0xff]
    %v2374 = vld [vmem:[%s3 + $0x908] sm:$0xff]
    %v2375 = vld [vmem:[%s3 + $0x910] sm:$0xff]
    %v2376 = vld [vmem:[%s3 + $0x918] sm:$0xff]
    %v2377 = vld [vmem:[%s3 + $0x920] sm:$0xff]
    %v2378 = vld [vmem:[%s3 + $0x928] sm:$0xff]
    %v2379 = vld [vmem:[%s3 + $0x930] sm:$0xff]
    %v2380 = vld [vmem:[%s3 + $0x938] sm:$0xff]
    %v2381 = vld [vmem:[%s3 + $0x940] sm:$0xff]
    %v2382 = vld [vmem:[%s3 + $0x948] sm:$0xff]
    %v2383 = vld [vmem:[%s3 + $0x950] sm:$0xff]
    %v2384 = vld [vmem:[%s3 + $0x958] sm:$0xff]
    %v2385 = vld [vmem:[%s3 + $0x960] sm:$0xff]
    %v2386 = vld [vmem:[%s3 + $0x968] sm:$0xff]
    %v2387 = vld [vmem:[%s3 + $0x970] sm:$0xff]
    %v2388 = vld [vmem:[%s3 + $0x978] sm:$0xff]
    %v2389 = vld [vmem:[%s3 + $0x980] sm:$0xff]
    %v2390 = vld [vmem:[%s3 + $0x988] sm:$0xff]
    %v2391 = vld [vmem:[%s3 + $0x990] sm:$0xff]
    %v2392 = vld [vmem:[%s3 + $0x998] sm:$0xff]
    %v2393 = vld [vmem:[%s3 + $0x9a0] sm:$0xff]
    %v2394 = vld [vmem:[%s3 + $0x9a8] sm:$0xff]
    %v2395 = vld [vmem:[%s3 + $0x9b0] sm:$0xff]
    %v2396 = vld [vmem:[%s3 + $0x9b8] sm:$0xff]
    %v2397 = vld [vmem:[%s3 + $0x9c0] sm:$0xff]
    %v2398 = vld [vmem:[%s3 + $0x9c8] sm:$0xff]
    %v2399 = vld [vmem:[%s3 + $0x9d0] sm:$0xff]
    %v2400 = vld [vmem:[%s3 + $0x9d8] sm:$0xff]
    %v2401 = vld [vmem:[%s3 + $0x9e0] sm:$0xff]
    %v2402 = vld [vmem:[%s3 + $0x9e8] sm:$0xff]
    %v2403 = vld [vmem:[%s3 + $0x9f0] sm:$0xff]
    %v2404 = vld [vmem:[%s3 + $0x9f8] sm:$0xff]
    %v2405 = vld [vmem:[%s3 + $0xa00] sm:$0xff]
    %v2406 = vld [vmem:[%s3 + $0xa08] sm:$0xff]
    %v2407 = vld [vmem:[%s3 + $0xa10] sm:$0xff]
    %v2408 = vld [vmem:[%s3 + $0xa18] sm:$0xff]
    %v2409 = vld [vmem:[%s3 + $0xa20] sm:$0xff]
    %v2410 = vld [vmem:[%s3 + $0xa28] sm:$0xff]
    %v2411 = vld [vmem:[%s3 + $0xa30] sm:$0xff]
    %v2412 = vld [vmem:[%s3 + $0xa38] sm:$0xff]
    %v2413 = vld [vmem:[%s3 + $0xa40] sm:$0xff]
    %v2414 = vld [vmem:[%s3 + $0xa48] sm:$0xff]
    %v2415 = vld [vmem:[%s3 + $0xa50] sm:$0xff]
    %v2416 = vld [vmem:[%s3 + $0xa58] sm:$0xff]
    %v2417 = vld [vmem:[%s3 + $0xa60] sm:$0xff]
    %v2418 = vld [vmem:[%s3 + $0xa68] sm:$0xff]
    %v2419 = vld [vmem:[%s3 + $0xa70] sm:$0xff]
    %v2420 = vld [vmem:[%s3 + $0xa78] sm:$0xff]
    %v2421 = vld [vmem:[%s3 + $0xa80] sm:$0xff]
    %v2422 = vld [vmem:[%s3 + $0xa88] sm:$0xff]
    %v2423 = vld [vmem:[%s3 + $0xa90] sm:$0xff]
    %v2424 = vld [vmem:[%s3 + $0xa98] sm:$0xff]
    %v2425 = vld [vmem:[%s3 + $0xaa0] sm:$0xff]
    %v2426 = vld [vmem:[%s3 + $0xaa8] sm:$0xff]
    %v2427 = vld [vmem:[%s3 + $0xab0] sm:$0xff]
    %v2428 = vld [vmem:[%s3 + $0xab8] sm:$0xff]
    %v2429 = vld [vmem:[%s3 + $0xac0] sm:$0xff]
    %v2430 = vld [vmem:[%s3 + $0xac8] sm:$0xff]
    %v2431 = vld [vmem:[%s3 + $0xad0] sm:$0xff]
    %v2432 = vld [vmem:[%s3 + $0xad8] sm:$0xff]
    %v2433 = vld [vmem:[%s3 + $0xae0] sm:$0xff]
    %v2434 = vld [vmem:[%s3 + $0xae8] sm:$0xff]
    %v2435 = vld [vmem:[%s3 + $0xaf0] sm:$0xff]
    %v2436 = vld [vmem:[%s3 + $0xaf8] sm:$0xff]
    %v2437 = vld [vmem:[%s3 + $0xb00] sm:$0xff]
    %v2438 = vld [vmem:[%s3 + $0xb08] sm:$0xff]
    %v2439 = vld [vmem:[%s3 + $0xb10] sm:$0xff]
    %v2440 = vld [vmem:[%s3 + $0xb18] sm:$0xff]
    %v2441 = vld [vmem:[%s3 + $0xb20] sm:$0xff]
    %v2442 = vld [vmem:[%s3 + $0xb28] sm:$0xff]
    %v2443 = vld [vmem:[%s3 + $0xb30] sm:$0xff]
    %v2444 = vld [vmem:[%s3 + $0xb38] sm:$0xff]
    %v2445 = vld [vmem:[%s3 + $0xb40] sm:$0xff]
    %v2446 = vld [vmem:[%s3 + $0xb48] sm:$0xff]
    %v2447 = vld [vmem:[%s3 + $0xb50] sm:$0xff]
    %v2448 = vld [vmem:[%s3 + $0xb58] sm:$0xff]
    %v2449 = vld [vmem:[%s3 + $0xb60] sm:$0xff]
    %v2450 = vld [vmem:[%s3 + $0xb68] sm:$0xff]
    %v2451 = vld [vmem:[%s3 + $0xb70] sm:$0xff]
    %v2452 = vld [vmem:[%s3 + $0xb78] sm:$0xff]
    %v2453 = vld [vmem:[%s3 + $0xb80] sm:$0xff]
    %v2454 = vld [vmem:[%s3 + $0xb88] sm:$0xff]
    %v2455 = vld [vmem:[%s3 + $0xb90] sm:$0xff]
    %v2456 = vld [vmem:[%s3 + $0xb98] sm:$0xff]
    %v2457 = vld [vmem:[%s3 + $0xba0] sm:$0xff]
    %v2458 = vld [vmem:[%s3 + $0xba8] sm:$0xff]
    %v2459 = vld [vmem:[%s3 + $0xbb0] sm:$0xff]
    %v2460 = vld [vmem:[%s3 + $0xbb8] sm:$0xff]
    %v2461 = vld [vmem:[%s3 + $0xbc0] sm:$0xff]
    %v2462 = vld [vmem:[%s3 + $0xbc8] sm:$0xff]
    %v2463 = vld [vmem:[%s3 + $0xbd0] sm:$0xff]
    %v2464 = vld [vmem:[%s3 + $0xbd8] sm:$0xff]
    %v2465 = vld [vmem:[%s3 + $0xbe0] sm:$0xff]
    %v2466 = vld [vmem:[%s3 + $0xbe8] sm:$0xff]
    %v2467 = vld [vmem:[%s3 + $0xbf0] sm:$0xff]
    %v2468 = vld [vmem:[%s3 + $0xbf8] sm:$0xff]
    %v2469 = vld [vmem:[%s3 + $0xc00] sm:$0xff]
    %v2470 = vld [vmem:[%s3 + $0xc08] sm:$0xff]
    %v2471 = vld [vmem:[%s3 + $0xc10] sm:$0xff]
    %v2472 = vld [vmem:[%s3 + $0xc18] sm:$0xff]
    %v2473 = vld [vmem:[%s3 + $0xc20] sm:$0xff]
    %v2474 = vld [vmem:[%s3 + $0xc28] sm:$0xff]
    %v2475 = vld [vmem:[%s3 + $0xc30] sm:$0xff]
    %v2476 = vld [vmem:[%s3 + $0xc38] sm:$0xff]
    %v2477 = vld [vmem:[%s3 + $0xc40] sm:$0xff]
    %v2478 = vld [vmem:[%s3 + $0xc48] sm:$0xff]
    %v2479 = vld [vmem:[%s3 + $0xc50] sm:$0xff]
    %v2480 = vld [vmem:[%s3 + $0xc58] sm:$0xff]
    %v2481 = vld [vmem:[%s3 + $0xc60] sm:$0xff]
    %v2482 = vld [vmem:[%s3 + $0xc68] sm:$0xff]
    %v2483 = vld [vmem:[%s3 + $0xc70] sm:$0xff]
    %v2484 = vld [vmem:[%s3 + $0xc78] sm:$0xff]
    %v2485 = vld [vmem:[%s3 + $0xc80] sm:$0xff]
    %v2486 = vld [vmem:[%s3 + $0xc88] sm:$0xff]
    %v2487 = vld [vmem:[%s3 + $0xc90] sm:$0xff]
    %v2488 = vld [vmem:[%s3 + $0xc98] sm:$0xff]
    %v2489 = vld [vmem:[%s3 + $0xca0] sm:$0xff]
    %v2490 = vld [vmem:[%s3 + $0xca8] sm:$0xff]
    %v2491 = vld [vmem:[%s3 + $0xcb0] sm:$0xff]
    %v2492 = vld [vmem:[%s3 + $0xcb8] sm:$0xff]
    %v2493 = vld [vmem:[%s3 + $0xcc0] sm:$0xff]
    %v2494 = vld [vmem:[%s3 + $0xcc8] sm:$0xff]
    %v2495 = vld [vmem:[%s3 + $0xcd0] sm:$0xff]
    %v2496 = vld [vmem:[%s3 + $0xcd8] sm:$0xff]
    %v2497 = vld [vmem:[%s3 + $0xce0] sm:$0xff]
    %v2498 = vld [vmem:[%s3 + $0xce8] sm:$0xff]
    %v2499 = vld [vmem:[%s3 + $0xcf0] sm:$0xff]
    %v2500 = vld [vmem:[%s3 + $0xcf8] sm:$0xff]
    %v2501 = vld [vmem:[%s3 + $0xd00] sm:$0xff]
    %v2502 = vld [vmem:[%s3 + $0xd08] sm:$0xff]
    %v2503 = vld [vmem:[%s3 + $0xd10] sm:$0xff]
    %v2504 = vld [vmem:[%s3 + $0xd18] sm:$0xff]
    %v2505 = vld [vmem:[%s3 + $0xd20] sm:$0xff]
    %v2506 = vld [vmem:[%s3 + $0xd28] sm:$0xff]
    %v2507 = vld [vmem:[%s3 + $0xd30] sm:$0xff]
    %v2508 = vld [vmem:[%s3 + $0xd38] sm:$0xff]
    %v2509 = vld [vmem:[%s3 + $0xd40] sm:$0xff]
    %v2510 = vld [vmem:[%s3 + $0xd48] sm:$0xff]
    %v2511 = vld [vmem:[%s3 + $0xd50] sm:$0xff]
    %v2512 = vld [vmem:[%s3 + $0xd58] sm:$0xff]
    %v2513 = vld [vmem:[%s3 + $0xd60] sm:$0xff]
    %v2514 = vld [vmem:[%s3 + $0xd68] sm:$0xff]
    %v2515 = vld [vmem:[%s3 + $0xd70] sm:$0xff]
    %v2516 = vld [vmem:[%s3 + $0xd78] sm:$0xff]
    %v2517 = vld [vmem:[%s3 + $0xd80] sm:$0xff]
    %v2518 = vld [vmem:[%s3 + $0xd88] sm:$0xff]
    %v2519 = vld [vmem:[%s3 + $0xd90] sm:$0xff]
    %v2520 = vld [vmem:[%s3 + $0xd98] sm:$0xff]
    %v2521 = vld [vmem:[%s3 + $0xda0] sm:$0xff]
    %v2522 = vld [vmem:[%s3 + $0xda8] sm:$0xff]
    %v2523 = vld [vmem:[%s3 + $0xdb0] sm:$0xff]
    %v2524 = vld [vmem:[%s3 + $0xdb8] sm:$0xff]
    %v2525 = vld [vmem:[%s3 + $0xdc0] sm:$0xff]
    %v2526 = vld [vmem:[%s3 + $0xdc8] sm:$0xff]
    %v2527 = vld [vmem:[%s3 + $0xdd0] sm:$0xff]
    %v2528 = vld [vmem:[%s3 + $0xdd8] sm:$0xff]
    %v2529 = vld [vmem:[%s3 + $0xde0] sm:$0xff]
    %v2530 = vld [vmem:[%s3 + $0xde8] sm:$0xff]
    %v2531 = vld [vmem:[%s3 + $0xdf0] sm:$0xff]
    %v2532 = vld [vmem:[%s3 + $0xdf8] sm:$0xff]
    %v2533 = vld [vmem:[%s3 + $0xe00] sm:$0xff]
    %v2534 = vld [vmem:[%s3 + $0xe08] sm:$0xff]
    %v2535 = vld [vmem:[%s3 + $0xe10] sm:$0xff]
    %v2536 = vld [vmem:[%s3 + $0xe18] sm:$0xff]
    %v2537 = vld [vmem:[%s3 + $0xe20] sm:$0xff]
    %v2538 = vld [vmem:[%s3 + $0xe28] sm:$0xff]
    %v2539 = vld [vmem:[%s3 + $0xe30] sm:$0xff]
    %v2540 = vld [vmem:[%s3 + $0xe38] sm:$0xff]
    %v2541 = vld [vmem:[%s3 + $0xe40] sm:$0xff]
    %v2542 = vld [vmem:[%s3 + $0xe48] sm:$0xff]
    %v2543 = vld [vmem:[%s3 + $0xe50] sm:$0xff]
    %v2544 = vld [vmem:[%s3 + $0xe58] sm:$0xff]
    %v2545 = vld [vmem:[%s3 + $0xe60] sm:$0xff]
    %v2546 = vld [vmem:[%s3 + $0xe68] sm:$0xff]
    %v2547 = vld [vmem:[%s3 + $0xe70] sm:$0xff]
    %v2548 = vld [vmem:[%s3 + $0xe78] sm:$0xff]
    %v2549 = vld [vmem:[%s3 + $0xe80] sm:$0xff]
    %v2550 = vld [vmem:[%s3 + $0xe88] sm:$0xff]
    %v2551 = vld [vmem:[%s3 + $0xe90] sm:$0xff]
    %v2552 = vld [vmem:[%s3 + $0xe98] sm:$0xff]
    %v2553 = vld [vmem:[%s3 + $0xea0] sm:$0xff]
    %v2554 = vld [vmem:[%s3 + $0xea8] sm:$0xff]
    %v2555 = vld [vmem:[%s3 + $0xeb0] sm:$0xff]
    %v2556 = vld [vmem:[%s3 + $0xeb8] sm:$0xff]
    %v2557 = vld [vmem:[%s3 + $0xec0] sm:$0xff]
    %v2558 = vld [vmem:[%s3 + $0xec8] sm:$0xff]
    %v2559 = vld [vmem:[%s3 + $0xed0] sm:$0xff]
    %v2560 = vld [vmem:[%s3 + $0xed8] sm:$0xff]
    %v2561 = vld [vmem:[%s3 + $0xee0] sm:$0xff]
    %v2562 = vld [vmem:[%s3 + $0xee8] sm:$0xff]
    %v2563 = vld [vmem:[%s3 + $0xef0] sm:$0xff]
    %v2564 = vld [vmem:[%s3 + $0xef8] sm:$0xff]
    %v2565 = vld [vmem:[%s3 + $0xf00] sm:$0xff]
    %v2566 = vld [vmem:[%s3 + $0xf08] sm:$0xff]
    %v2567 = vld [vmem:[%s3 + $0xf10] sm:$0xff]
    %v2568 = vld [vmem:[%s3 + $0xf18] sm:$0xff]
    %v2569 = vld [vmem:[%s3 + $0xf20] sm:$0xff]
    %v2570 = vld [vmem:[%s3 + $0xf28] sm:$0xff]
    %v2571 = vld [vmem:[%s3 + $0xf30] sm:$0xff]
    %v2572 = vld [vmem:[%s3 + $0xf38] sm:$0xff]
    %v2573 = vld [vmem:[%s3 + $0xf40] sm:$0xff]
    %v2574 = vld [vmem:[%s3 + $0xf48] sm:$0xff]
    %v2575 = vld [vmem:[%s3 + $0xf50] sm:$0xff]
    %v2576 = vld [vmem:[%s3 + $0xf58] sm:$0xff]
    %v2577 = vld [vmem:[%s3 + $0xf60] sm:$0xff]
    %v2578 = vld [vmem:[%s3 + $0xf68] sm:$0xff]
    %v2579 = vld [vmem:[%s3 + $0xf70] sm:$0xff]
    %v2580 = vld [vmem:[%s3 + $0xf78] sm:$0xff]
    %v2581 = vld [vmem:[%s3 + $0xf80] sm:$0xff]
    %v2582 = vld [vmem:[%s3 + $0xf88] sm:$0xff]
    %v2583 = vld [vmem:[%s3 + $0xf90] sm:$0xff]
    %v2584 = vld [vmem:[%s3 + $0xf98] sm:$0xff]
    %v2585 = vld [vmem:[%s3 + $0xfa0] sm:$0xff]
    %v2586 = vld [vmem:[%s3 + $0xfa8] sm:$0xff]
    %v2587 = vld [vmem:[%s3 + $0xfb0] sm:$0xff]
    %v2588 = vld [vmem:[%s3 + $0xfb8] sm:$0xff]
    %v2589 = vld [vmem:[%s3 + $0xfc0] sm:$0xff]
    %v2590 = vld [vmem:[%s3 + $0xfc8] sm:$0xff]
    %v2591 = vld [vmem:[%s3 + $0xfd0] sm:$0xff]
    %v2592 = vld [vmem:[%s3 + $0xfd8] sm:$0xff]
    %v2593 = vld [vmem:[%s3 + $0xfe0] sm:$0xff]
    %v2594 = vld [vmem:[%s3 + $0xfe8] sm:$0xff]
    %v2595 = vld [vmem:[%s3 + $0xff0] sm:$0xff]
    %v2596 = vld [vmem:[%s3 + $0xff8] sm:$0xff]
    %v2597 = vld [vmem:[%s4] sm:$0xf]
    %v2599 = vlaneseq
    %v2600 = vshrl.u32 %v2599, 7
    %v2601 = vsub.s32 0, %v2600
    %v2602 = vrot.slane %v2597, %v2601
    %v2603 = vlaneseq
    %v2604 = vshrl.u32 %v2603, 7
    %v2605 = vsub.s32 1, %v2604
    %v2606 = vrot.slane %v2597, %v2605
    %v2607 = vlaneseq
    %v2608 = vshrl.u32 %v2607, 7
    %v2609 = vsub.s32 2, %v2608
    %v2610 = vrot.slane %v2597, %v2609
    %v2611 = vlaneseq
    %v2612 = vshrl.u32 %v2611, 7
    %v2613 = vsub.s32 3, %v2612
    %v2614 = vrot.slane %v2597, %v2613
    %2619 = vmatprep.subr.mxu0 %v2086
    %2620 = vmatpush1.msra.mxu0 %v2085
    %2621 = vmatprep.subr.mxu0 %v2090
    %2622 = vmatpush1.msra.mxu0 %v2089
    %2623 = vmatprep.subr.mxu0 %v2094
    %2624 = vmatpush1.msra.mxu0 %v2093
    %2625 = vmatprep.subr.mxu0 %v2098
    %2626 = vmatpush1.msra.mxu0 %v2097
    %2627 = vmatprep.subr.mxu0 %v2102
    %2628 = vmatpush1.msra.mxu0 %v2101
    %2629 = vmatprep.subr.mxu0 %v2106
    %2630 = vmatpush1.msra.mxu0 %v2105
    %2631 = vmatprep.subr.mxu0 %v2110
    %2632 = vmatpush1.msra.mxu0 %v2109
    %2633 = vmatprep.subr.mxu0 %v2114
    %2634 = vmatpush1.msra.mxu0 %v2113
    %2635 = vmatprep.subr.mxu0 %v2118
    %2636 = vmatpush1.msra.mxu0 %v2117
    %2637 = vmatprep.subr.mxu0 %v2122
    %2638 = vmatpush1.msra.mxu0 %v2121
    %2639 = vmatprep.subr.mxu0 %v2126
    %2640 = vmatpush1.msra.mxu0 %v2125
    %2641 = vmatprep.subr.mxu0 %v2130
    %2642 = vmatpush1.msra.mxu0 %v2129
    %2643 = vmatprep.subr.mxu0 %v2134
    %2644 = vmatpush1.msra.mxu0 %v2133
    %2645 = vmatprep.subr.mxu0 %v2138
    %2646 = vmatpush1.msra.mxu0 %v2137
    %2647 = vmatprep.subr.mxu0 %v2142
    %2648 = vmatpush1.msra.mxu0 %v2141
    %2649 = vmatprep.subr.mxu0 %v2146
    %2650 = vmatpush1.msra.mxu0 %v2145
    %2651 = vmatprep.subr.mxu0 %v2150
    %2652 = vmatpush1.msra.mxu0 %v2149
    %2653 = vmatprep.subr.mxu0 %v2154
    %2654 = vmatpush1.msra.mxu0 %v2153
    %2655 = vmatprep.subr.mxu0 %v2158
    %2656 = vmatpush1.msra.mxu0 %v2157
    %2657 = vmatprep.subr.mxu0 %v2162
    %2658 = vmatpush1.msra.mxu0 %v2161
    %2659 = vmatprep.subr.mxu0 %v2166
    %2660 = vmatpush1.msra.mxu0 %v2165
    %2661 = vmatprep.subr.mxu0 %v2170
    %2662 = vmatpush1.msra.mxu0 %v2169
    %2663 = vmatprep.subr.mxu0 %v2174
    %2664 = vmatpush1.msra.mxu0 %v2173
    %2665 = vmatprep.subr.mxu0 %v2178
    %2666 = vmatpush1.msra.mxu0 %v2177
    %2667 = vmatprep.subr.mxu0 %v2182
    %2668 = vmatpush1.msra.mxu0 %v2181
    %2669 = vmatprep.subr.mxu0 %v2186
    %2670 = vmatpush1.msra.mxu0 %v2185
    %2671 = vmatprep.subr.mxu0 %v2190
    %2672 = vmatpush1.msra.mxu0 %v2189
    %2673 = vmatprep.subr.mxu0 %v2194
    %2674 = vmatpush1.msra.mxu0 %v2193
    %2675 = vmatprep.subr.mxu0 %v2198
    %2676 = vmatpush1.msra.mxu0 %v2197
    %2677 = vmatprep.subr.mxu0 %v2202
    %2678 = vmatpush1.msra.mxu0 %v2201
    %2679 = vmatprep.subr.mxu0 %v2206
    %2680 = vmatpush1.msra.mxu0 %v2205
    %2681 = vmatprep.subr.mxu0 %v2210
    %2682 = vmatpush1.msra.mxu0 %v2209
    %2683 = vmatprep.mubr.f32.mxu0 %v2078
    %2684 = vmatmul.mubr.f32.gmra.mrb[0].mxu0 %v2077
    %v2685 = vpop.f32.mrb[0].mxu0
    %v2686 = vadd.f32 %v2602, %v2685
    %v2687 = vpop.f32.mrb[0].mxu0
    %v2688 = vadd.f32 %v2606, %v2687
    %2689 = vdwg.mxu0
    %2690 = vmatprep.subr.mxu0 %v2214
    %2691 = vmatpush1.msra.mxu0 %v2213
    %2692 = vmatprep.subr.mxu0 %v2218
    %2693 = vmatpush1.msra.mxu0 %v2217
    %2694 = vmatprep.subr.mxu0 %v2222
    %2695 = vmatpush1.msra.mxu0 %v2221
    %2696 = vmatprep.subr.mxu0 %v2226
    %2697 = vmatpush1.msra.mxu0 %v2225
    %2698 = vmatprep.subr.mxu0 %v2230
    %2699 = vmatpush1.msra.mxu0 %v2229
    %2700 = vmatprep.subr.mxu0 %v2234
    %2701 = vmatpush1.msra.mxu0 %v2233
    %2702 = vmatprep.subr.mxu0 %v2238
    %2703 = vmatpush1.msra.mxu0 %v2237
    %2704 = vmatprep.subr.mxu0 %v2242
    %2705 = vmatpush1.msra.mxu0 %v2241
    %2706 = vmatprep.subr.mxu0 %v2246
    %2707 = vmatpush1.msra.mxu0 %v2245
    %2708 = vmatprep.subr.mxu0 %v2250
    %2709 = vmatpush1.msra.mxu0 %v2249
    %2710 = vmatprep.subr.mxu0 %v2254
    %2711 = vmatpush1.msra.mxu0 %v2253
    %2712 = vmatprep.subr.mxu0 %v2258
    %2713 = vmatpush1.msra.mxu0 %v2257
    %2714 = vmatprep.subr.mxu0 %v2262
    %2715 = vmatpush1.msra.mxu0 %v2261
    %2716 = vmatprep.subr.mxu0 %v2266
    %2717 = vmatpush1.msra.mxu0 %v2265
    %2718 = vmatprep.subr.mxu0 %v2270
    %2719 = vmatpush1.msra.mxu0 %v2269
    %2720 = vmatprep.subr.mxu0 %v2274
    %2721 = vmatpush1.msra.mxu0 %v2273
    %2722 = vmatprep.subr.mxu0 %v2278
    %2723 = vmatpush1.msra.mxu0 %v2277
    %2724 = vmatprep.subr.mxu0 %v2282
    %2725 = vmatpush1.msra.mxu0 %v2281
    %2726 = vmatprep.subr.mxu0 %v2286
    %2727 = vmatpush1.msra.mxu0 %v2285
    %2728 = vmatprep.subr.mxu0 %v2290
    %2729 = vmatpush1.msra.mxu0 %v2289
    %2730 = vmatprep.subr.mxu0 %v2294
    %2731 = vmatpush1.msra.mxu0 %v2293
    %2732 = vmatprep.subr.mxu0 %v2298
    %2733 = vmatpush1.msra.mxu0 %v2297
    %2734 = vmatprep.subr.mxu0 %v2302
    %2735 = vmatpush1.msra.mxu0 %v2301
    %2736 = vmatprep.subr.mxu0 %v2306
    %2737 = vmatpush1.msra.mxu0 %v2305
    %2738 = vmatprep.subr.mxu0 %v2310
    %2739 = vmatpush1.msra.mxu0 %v2309
    %2740 = vmatprep.subr.mxu0 %v2314
    %2741 = vmatpush1.msra.mxu0 %v2313
    %2742 = vmatprep.subr.mxu0 %v2318
    %2743 = vmatpush1.msra.mxu0 %v2317
    %2744 = vmatprep.subr.mxu0 %v2322
    %2745 = vmatpush1.msra.mxu0 %v2321
    %2746 = vmatprep.subr.mxu0 %v2326
    %2747 = vmatpush1.msra.mxu0 %v2325
    %2748 = vmatprep.subr.mxu0 %v2330
    %2749 = vmatpush1.msra.mxu0 %v2329
    %2750 = vmatprep.subr.mxu0 %v2334
    %2751 = vmatpush1.msra.mxu0 %v2333
    %2752 = vmatprep.subr.mxu0 %v2338
    %2753 = vmatpush1.msra.mxu0 %v2337
    %2754 = vmatprep.mubr.f32.mxu0 %v2080
    %2755 = vmatmul.mubr.f32.gmra.mrb[0].mxu0 %v2079
    %v2756 = vpop.f32.mrb[0].mxu0
    %v2757 = vadd.f32 %v2686, %v2756
    %v2758 = vpop.f32.mrb[0].mxu0
    %v2759 = vadd.f32 %v2688, %v2758
    %2760 = vdwg.mxu0
    %2761 = vmatprep.subr.mxu0 %v2342
    %2762 = vmatpush1.msra.mxu0 %v2341
    %2763 = vmatprep.subr.mxu0 %v2346
    %2764 = vmatpush1.msra.mxu0 %v2345
    %2765 = vmatprep.subr.mxu0 %v2350
    %2766 = vmatpush1.msra.mxu0 %v2349
    %2767 = vmatprep.subr.mxu0 %v2354
    %2768 = vmatpush1.msra.mxu0 %v2353
    %2769 = vmatprep.subr.mxu0 %v2358
    %2770 = vmatpush1.msra.mxu0 %v2357
    %2771 = vmatprep.subr.mxu0 %v2362
    %2772 = vmatpush1.msra.mxu0 %v2361
    %2773 = vmatprep.subr.mxu0 %v2366
    %2774 = vmatpush1.msra.mxu0 %v2365
    %2775 = vmatprep.subr.mxu0 %v2370
    %2776 = vmatpush1.msra.mxu0 %v2369
    %2777 = vmatprep.subr.mxu0 %v2374
    %2778 = vmatpush1.msra.mxu0 %v2373
    %2779 = vmatprep.subr.mxu0 %v2378
    %2780 = vmatpush1.msra.mxu0 %v2377
    %2781 = vmatprep.subr.mxu0 %v2382
    %2782 = vmatpush1.msra.mxu0 %v2381
    %2783 = vmatprep.subr.mxu0 %v2386
    %2784 = vmatpush1.msra.mxu0 %v2385
    %2785 = vmatprep.subr.mxu0 %v2390
    %2786 = vmatpush1.msra.mxu0 %v2389
    %2787 = vmatprep.subr.mxu0 %v2394
    %2788 = vmatpush1.msra.mxu0 %v2393
    %2789 = vmatprep.subr.mxu0 %v2398
    %2790 = vmatpush1.msra.mxu0 %v2397
    %2791 = vmatprep.subr.mxu0 %v2402
    %2792 = vmatpush1.msra.mxu0 %v2401
    %2793 = vmatprep.subr.mxu0 %v2406
    %2794 = vmatpush1.msra.mxu0 %v2405
    %2795 = vmatprep.subr.mxu0 %v2410
    %2796 = vmatpush1.msra.mxu0 %v2409
    %2797 = vmatprep.subr.mxu0 %v2414
    %2798 = vmatpush1.msra.mxu0 %v2413
    %2799 = vmatprep.subr.mxu0 %v2418
    %2800 = vmatpush1.msra.mxu0 %v2417
    %2801 = vmatprep.subr.mxu0 %v2422
    %2802 = vmatpush1.msra.mxu0 %v2421
    %2803 = vmatprep.subr.mxu0 %v2426
    %2804 = vmatpush1.msra.mxu0 %v2425
    %2805 = vmatprep.subr.mxu0 %v2430
    %2806 = vmatpush1.msra.mxu0 %v2429
    %2807 = vmatprep.subr.mxu0 %v2434
    %2808 = vmatpush1.msra.mxu0 %v2433
    %2809 = vmatprep.subr.mxu0 %v2438
    %2810 = vmatpush1.msra.mxu0 %v2437
    %2811 = vmatprep.subr.mxu0 %v2442
    %2812 = vmatpush1.msra.mxu0 %v2441
    %2813 = vmatprep.subr.mxu0 %v2446
    %2814 = vmatpush1.msra.mxu0 %v2445
    %2815 = vmatprep.subr.mxu0 %v2450
    %2816 = vmatpush1.msra.mxu0 %v2449
    %2817 = vmatprep.subr.mxu0 %v2454
    %2818 = vmatpush1.msra.mxu0 %v2453
    %2819 = vmatprep.subr.mxu0 %v2458
    %2820 = vmatpush1.msra.mxu0 %v2457
    %2821 = vmatprep.subr.mxu0 %v2462
    %2822 = vmatpush1.msra.mxu0 %v2461
    %2823 = vmatprep.subr.mxu0 %v2466
    %2824 = vmatpush1.msra.mxu0 %v2465
    %2825 = vmatprep.mubr.f32.mxu0 %v2082
    %2826 = vmatmul.mubr.f32.gmra.mrb[0].mxu0 %v2081
    %v2827 = vpop.f32.mrb[0].mxu0
    %v2828 = vadd.f32 %v2757, %v2827
    %v2829 = vpop.f32.mrb[0].mxu0
    %v2830 = vadd.f32 %v2759, %v2829
    %2831 = vdwg.mxu0
    %2832 = vmatprep.subr.mxu0 %v2470
    %2833 = vmatpush1.msra.mxu0 %v2469
    %2834 = vmatprep.subr.mxu0 %v2474
    %2835 = vmatpush1.msra.mxu0 %v2473
    %2836 = vmatprep.subr.mxu0 %v2478
    %2837 = vmatpush1.msra.mxu0 %v2477
    %2838 = vmatprep.subr.mxu0 %v2482
    %2839 = vmatpush1.msra.mxu0 %v2481
    %2840 = vmatprep.subr.mxu0 %v2486
    %2841 = vmatpush1.msra.mxu0 %v2485
    %2842 = vmatprep.subr.mxu0 %v2490
    %2843 = vmatpush1.msra.mxu0 %v2489
    %2844 = vmatprep.subr.mxu0 %v2494
    %2845 = vmatpush1.msra.mxu0 %v2493
    %2846 = vmatprep.subr.mxu0 %v2498
    %2847 = vmatpush1.msra.mxu0 %v2497
    %2848 = vmatprep.subr.mxu0 %v2502
    %2849 = vmatpush1.msra.mxu0 %v2501
    %2850 = vmatprep.subr.mxu0 %v2506
    %2851 = vmatpush1.msra.mxu0 %v2505
    %2852 = vmatprep.subr.mxu0 %v2510
    %2853 = vmatpush1.msra.mxu0 %v2509
    %2854 = vmatprep.subr.mxu0 %v2514
    %2855 = vmatpush1.msra.mxu0 %v2513
    %2856 = vmatprep.subr.mxu0 %v2518
    %2857 = vmatpush1.msra.mxu0 %v2517
    %2858 = vmatprep.subr.mxu0 %v2522
    %2859 = vmatpush1.msra.mxu0 %v2521
    %2860 = vmatprep.subr.mxu0 %v2526
    %2861 = vmatpush1.msra.mxu0 %v2525
    %2862 = vmatprep.subr.mxu0 %v2530
    %2863 = vmatpush1.msra.mxu0 %v2529
    %2864 = vmatprep.subr.mxu0 %v2534
    %2865 = vmatpush1.msra.mxu0 %v2533
    %2866 = vmatprep.subr.mxu0 %v2538
    %2867 = vmatpush1.msra.mxu0 %v2537
    %2868 = vmatprep.subr.mxu0 %v2542
    %2869 = vmatpush1.msra.mxu0 %v2541
    %2870 = vmatprep.subr.mxu0 %v2546
    %2871 = vmatpush1.msra.mxu0 %v2545
    %2872 = vmatprep.subr.mxu0 %v2550
    %2873 = vmatpush1.msra.mxu0 %v2549
    %2874 = vmatprep.subr.mxu0 %v2554
    %2875 = vmatpush1.msra.mxu0 %v2553
    %2876 = vmatprep.subr.mxu0 %v2558
    %2877 = vmatpush1.msra.mxu0 %v2557
    %2878 = vmatprep.subr.mxu0 %v2562
    %2879 = vmatpush1.msra.mxu0 %v2561
    %2880 = vmatprep.subr.mxu0 %v2566
    %2881 = vmatpush1.msra.mxu0 %v2565
    %2882 = vmatprep.subr.mxu0 %v2570
    %2883 = vmatpush1.msra.mxu0 %v2569
    %2884 = vmatprep.subr.mxu0 %v2574
    %2885 = vmatpush1.msra.mxu0 %v2573
    %2886 = vmatprep.subr.mxu0 %v2578
    %2887 = vmatpush1.msra.mxu0 %v2577
    %2888 = vmatprep.subr.mxu0 %v2582
    %2889 = vmatpush1.msra.mxu0 %v2581
    %2890 = vmatprep.subr.mxu0 %v2586
    %2891 = vmatpush1.msra.mxu0 %v2585
    %2892 = vmatprep.subr.mxu0 %v2590
    %2893 = vmatpush1.msra.mxu0 %v2589
    %2894 = vmatprep.subr.mxu0 %v2594
    %2895 = vmatpush1.msra.mxu0 %v2593
    %2896 = vmatprep.mubr.f32.mxu0 %v2084
    %2897 = vmatmul.mubr.f32.gmra.mrb[0].mxu0 %v2083
    %v2898 = vpop.f32.mrb[0].mxu0
    %v2899 = vadd.f32 %v2828, %v2898
    %v2900 = vpop.f32.mrb[0].mxu0
    %v2901 = vadd.f32 %v2830, %v2900
    %2902 = vdwg.mxu0
    %2903 = vmatprep.subr.mxu0 %v2088
    %2904 = vmatpush1.msra.mxu0 %v2087
    %2905 = vmatprep.subr.mxu0 %v2092
    %2906 = vmatpush1.msra.mxu0 %v2091
    %2907 = vmatprep.subr.mxu0 %v2096
    %2908 = vmatpush1.msra.mxu0 %v2095
    %2909 = vmatprep.subr.mxu0 %v2100
    %2910 = vmatpush1.msra.mxu0 %v2099
    %2911 = vmatprep.subr.mxu0 %v2104
    %2912 = vmatpush1.msra.mxu0 %v2103
    %2913 = vmatprep.subr.mxu0 %v2108
    %2914 = vmatpush1.msra.mxu0 %v2107
    %2915 = vmatprep.subr.mxu0 %v2112
    %2916 = vmatpush1.msra.mxu0 %v2111
    %2917 = vmatprep.subr.mxu0 %v2116
    %2918 = vmatpush1.msra.mxu0 %v2115
    %2919 = vmatprep.subr.mxu0 %v2120
    %2920 = vmatpush1.msra.mxu0 %v2119
    %2921 = vmatprep.subr.mxu0 %v2124
    %2922 = vmatpush1.msra.mxu0 %v2123
    %2923 = vmatprep.subr.mxu0 %v2128
    %2924 = vmatpush1.msra.mxu0 %v2127
    %2925 = vmatprep.subr.mxu0 %v2132
    %2926 = vmatpush1.msra.mxu0 %v2131
    %2927 = vmatprep.subr.mxu0 %v2136
    %2928 = vmatpush1.msra.mxu0 %v2135
    %2929 = vmatprep.subr.mxu0 %v2140
    %2930 = vmatpush1.msra.mxu0 %v2139
    %2931 = vmatprep.subr.mxu0 %v2144
    %2932 = vmatpush1.msra.mxu0 %v2143
    %2933 = vmatprep.subr.mxu0 %v2148
    %2934 = vmatpush1.msra.mxu0 %v2147
    %2935 = vmatprep.subr.mxu0 %v2152
    %2936 = vmatpush1.msra.mxu0 %v2151
    %2937 = vmatprep.subr.mxu0 %v2156
    %2938 = vmatpush1.msra.mxu0 %v2155
    %2939 = vmatprep.subr.mxu0 %v2160
    %2940 = vmatpush1.msra.mxu0 %v2159
    %2941 = vmatprep.subr.mxu0 %v2164
    %2942 = vmatpush1.msra.mxu0 %v2163
    %2943 = vmatprep.subr.mxu0 %v2168
    %2944 = vmatpush1.msra.mxu0 %v2167
    %2945 = vmatprep.subr.mxu0 %v2172
    %2946 = vmatpush1.msra.mxu0 %v2171
    %2947 = vmatprep.subr.mxu0 %v2176
    %2948 = vmatpush1.msra.mxu0 %v2175
    %2949 = vmatprep.subr.mxu0 %v2180
    %2950 = vmatpush1.msra.mxu0 %v2179
    %2951 = vmatprep.subr.mxu0 %v2184
    %2952 = vmatpush1.msra.mxu0 %v2183
    %2953 = vmatprep.subr.mxu0 %v2188
    %2954 = vmatpush1.msra.mxu0 %v2187
    %2955 = vmatprep.subr.mxu0 %v2192
    %2956 = vmatpush1.msra.mxu0 %v2191
    %2957 = vmatprep.subr.mxu0 %v2196
    %2958 = vmatpush1.msra.mxu0 %v2195
    %2959 = vmatprep.subr.mxu0 %v2200
    %2960 = vmatpush1.msra.mxu0 %v2199
    %2961 = vmatprep.subr.mxu0 %v2204
    %2962 = vmatpush1.msra.mxu0 %v2203
    %2963 = vmatprep.subr.mxu0 %v2208
    %2964 = vmatpush1.msra.mxu0 %v2207
    %2965 = vmatprep.subr.mxu0 %v2212
    %2966 = vmatpush1.msra.mxu0 %v2211
    %2967 = vmatprep.mubr.f32.mxu0 %v2078
    %2968 = vmatmul.mubr.f32.gmra.mrb[0].mxu0 %v2077
    %v2969 = vpop.f32.mrb[0].mxu0
    %v2970 = vadd.f32 %v2610, %v2969
    %v2971 = vpop.f32.mrb[0].mxu0
    %v2972 = vadd.f32 %v2614, %v2971
    %2973 = vdwg.mxu0
    %2974 = vmatprep.subr.mxu0 %v2216
    %2975 = vmatpush1.msra.mxu0 %v2215
    %2976 = vmatprep.subr.mxu0 %v2220
    %2977 = vmatpush1.msra.mxu0 %v2219
    %2978 = vmatprep.subr.mxu0 %v2224
    %2979 = vmatpush1.msra.mxu0 %v2223
    %2980 = vmatprep.subr.mxu0 %v2228
    %2981 = vmatpush1.msra.mxu0 %v2227
    %2982 = vmatprep.subr.mxu0 %v2232
    %2983 = vmatpush1.msra.mxu0 %v2231
    %2984 = vmatprep.subr.mxu0 %v2236
    %2985 = vmatpush1.msra.mxu0 %v2235
    %2986 = vmatprep.subr.mxu0 %v2240
    %2987 = vmatpush1.msra.mxu0 %v2239
    %2988 = vmatprep.subr.mxu0 %v2244
    %2989 = vmatpush1.msra.mxu0 %v2243
    %2990 = vmatprep.subr.mxu0 %v2248
    %2991 = vmatpush1.msra.mxu0 %v2247
    %2992 = vmatprep.subr.mxu0 %v2252
    %2993 = vmatpush1.msra.mxu0 %v2251
    %2994 = vmatprep.subr.mxu0 %v2256
    %2995 = vmatpush1.msra.mxu0 %v2255
    %2996 = vmatprep.subr.mxu0 %v2260
    %2997 = vmatpush1.msra.mxu0 %v2259
    %2998 = vmatprep.subr.mxu0 %v2264
    %2999 = vmatpush1.msra.mxu0 %v2263
    %3000 = vmatprep.subr.mxu0 %v2268
    %3001 = vmatpush1.msra.mxu0 %v2267
    %3002 = vmatprep.subr.mxu0 %v2272
    %3003 = vmatpush1.msra.mxu0 %v2271
    %3004 = vmatprep.subr.mxu0 %v2276
    %3005 = vmatpush1.msra.mxu0 %v2275
    %3006 = vmatprep.subr.mxu0 %v2280
    %3007 = vmatpush1.msra.mxu0 %v2279
    %3008 = vmatprep.subr.mxu0 %v2284
    %3009 = vmatpush1.msra.mxu0 %v2283
    %3010 = vmatprep.subr.mxu0 %v2288
    %3011 = vmatpush1.msra.mxu0 %v2287
    %3012 = vmatprep.subr.mxu0 %v2292
    %3013 = vmatpush1.msra.mxu0 %v2291
    %3014 = vmatprep.subr.mxu0 %v2296
    %3015 = vmatpush1.msra.mxu0 %v2295
    %3016 = vmatprep.subr.mxu0 %v2300
    %3017 = vmatpush1.msra.mxu0 %v2299
    %3018 = vmatprep.subr.mxu0 %v2304
    %3019 = vmatpush1.msra.mxu0 %v2303
    %3020 = vmatprep.subr.mxu0 %v2308
    %3021 = vmatpush1.msra.mxu0 %v2307
    %3022 = vmatprep.subr.mxu0 %v2312
    %3023 = vmatpush1.msra.mxu0 %v2311
    %3024 = vmatprep.subr.mxu0 %v2316
    %3025 = vmatpush1.msra.mxu0 %v2315
    %3026 = vmatprep.subr.mxu0 %v2320
    %3027 = vmatpush1.msra.mxu0 %v2319
    %3028 = vmatprep.subr.mxu0 %v2324
    %3029 = vmatpush1.msra.mxu0 %v2323
    %3030 = vmatprep.subr.mxu0 %v2328
    %3031 = vmatpush1.msra.mxu0 %v2327
    %3032 = vmatprep.subr.mxu0 %v2332
    %3033 = vmatpush1.msra.mxu0 %v2331
    %3034 = vmatprep.subr.mxu0 %v2336
    %3035 = vmatpush1.msra.mxu0 %v2335
    %3036 = vmatprep.subr.mxu0 %v2340
    %3037 = vmatpush1.msra.mxu0 %v2339
    %3038 = vmatprep.mubr.f32.mxu0 %v2080
    %3039 = vmatmul.mubr.f32.gmra.mrb[0].mxu0 %v2079
    %v3040 = vpop.f32.mrb[0].mxu0
    %v3041 = vadd.f32 %v2970, %v3040
    %v3042 = vpop.f32.mrb[0].mxu0
    %v3043 = vadd.f32 %v2972, %v3042
    %3044 = vdwg.mxu0
    %3045 = vmatprep.subr.mxu0 %v2344
    %3046 = vmatpush1.msra.mxu0 %v2343
    %3047 = vmatprep.subr.mxu0 %v2348
    %3048 = vmatpush1.msra.mxu0 %v2347
    %3049 = vmatprep.subr.mxu0 %v2352
    %3050 = vmatpush1.msra.mxu0 %v2351
    %3051 = vmatprep.subr.mxu0 %v2356
    %3052 = vmatpush1.msra.mxu0 %v2355
    %3053 = vmatprep.subr.mxu0 %v2360
    %3054 = vmatpush1.msra.mxu0 %v2359
    %3055 = vmatprep.subr.mxu0 %v2364
    %3056 = vmatpush1.msra.mxu0 %v2363
    %3057 = vmatprep.subr.mxu0 %v2368
    %3058 = vmatpush1.msra.mxu0 %v2367
    %3059 = vmatprep.subr.mxu0 %v2372
    %3060 = vmatpush1.msra.mxu0 %v2371
    %3061 = vmatprep.subr.mxu0 %v2376
    %3062 = vmatpush1.msra.mxu0 %v2375
    %3063 = vmatprep.subr.mxu0 %v2380
    %3064 = vmatpush1.msra.mxu0 %v2379
    %3065 = vmatprep.subr.mxu0 %v2384
    %3066 = vmatpush1.msra.mxu0 %v2383
    %3067 = vmatprep.subr.mxu0 %v2388
    %3068 = vmatpush1.msra.mxu0 %v2387
    %3069 = vmatprep.subr.mxu0 %v2392
    %3070 = vmatpush1.msra.mxu0 %v2391
    %3071 = vmatprep.subr.mxu0 %v2396
    %3072 = vmatpush1.msra.mxu0 %v2395
    %3073 = vmatprep.subr.mxu0 %v2400
    %3074 = vmatpush1.msra.mxu0 %v2399
    %3075 = vmatprep.subr.mxu0 %v2404
    %3076 = vmatpush1.msra.mxu0 %v2403
    %3077 = vmatprep.subr.mxu0 %v2408
    %3078 = vmatpush1.msra.mxu0 %v2407
    %3079 = vmatprep.subr.mxu0 %v2412
    %3080 = vmatpush1.msra.mxu0 %v2411
    %3081 = vmatprep.subr.mxu0 %v2416
    %3082 = vmatpush1.msra.mxu0 %v2415
    %3083 = vmatprep.subr.mxu0 %v2420
    %3084 = vmatpush1.msra.mxu0 %v2419
    %3085 = vmatprep.subr.mxu0 %v2424
    %3086 = vmatpush1.msra.mxu0 %v2423
    %3087 = vmatprep.subr.mxu0 %v2428
    %3088 = vmatpush1.msra.mxu0 %v2427
    %3089 = vmatprep.subr.mxu0 %v2432
    %3090 = vmatpush1.msra.mxu0 %v2431
    %3091 = vmatprep.subr.mxu0 %v2436
    %3092 = vmatpush1.msra.mxu0 %v2435
    %3093 = vmatprep.subr.mxu0 %v2440
    %3094 = vmatpush1.msra.mxu0 %v2439
    %3095 = vmatprep.subr.mxu0 %v2444
    %3096 = vmatpush1.msra.mxu0 %v2443
    %3097 = vmatprep.subr.mxu0 %v2448
    %3098 = vmatpush1.msra.mxu0 %v2447
    %3099 = vmatprep.subr.mxu0 %v2452
    %3100 = vmatpush1.msra.mxu0 %v2451
    %3101 = vmatprep.subr.mxu0 %v2456
    %3102 = vmatpush1.msra.mxu0 %v2455
    %3103 = vmatprep.subr.mxu0 %v2460
    %3104 = vmatpush1.msra.mxu0 %v2459
    %3105 = vmatprep.subr.mxu0 %v2464
    %3106 = vmatpush1.msra.mxu0 %v2463
    %3107 = vmatprep.subr.mxu0 %v2468
    %3108 = vmatpush1.msra.mxu0 %v2467
    %3109 = vmatprep.mubr.f32.mxu0 %v2082
    %3110 = vmatmul.mubr.f32.gmra.mrb[0].mxu0 %v2081
    %v3111 = vpop.f32.mrb[0].mxu0
    %v3112 = vadd.f32 %v3041, %v3111
    %v3113 = vpop.f32.mrb[0].mxu0
    %v3114 = vadd.f32 %v3043, %v3113
    %3115 = vdwg.mxu0
    %3116 = vmatprep.subr.mxu0 %v2472
    %3117 = vmatpush1.msra.mxu0 %v2471
    %3118 = vmatprep.subr.mxu0 %v2476
    %3119 = vmatpush1.msra.mxu0 %v2475
    %3120 = vmatprep.subr.mxu0 %v2480
    %3121 = vmatpush1.msra.mxu0 %v2479
    %3122 = vmatprep.subr.mxu0 %v2484
    %3123 = vmatpush1.msra.mxu0 %v2483
    %3124 = vmatprep.subr.mxu0 %v2488
    %3125 = vmatpush1.msra.mxu0 %v2487
    %3126 = vmatprep.subr.mxu0 %v2492
    %3127 = vmatpush1.msra.mxu0 %v2491
    %3128 = vmatprep.subr.mxu0 %v2496
    %3129 = vmatpush1.msra.mxu0 %v2495
    %3130 = vmatprep.subr.mxu0 %v2500
    %3131 = vmatpush1.msra.mxu0 %v2499
    %3132 = vmatprep.subr.mxu0 %v2504
    %3133 = vmatpush1.msra.mxu0 %v2503
    %3134 = vmatprep.subr.mxu0 %v2508
    %3135 = vmatpush1.msra.mxu0 %v2507
    %3136 = vmatprep.subr.mxu0 %v2512
    %3137 = vmatpush1.msra.mxu0 %v2511
    %3138 = vmatprep.subr.mxu0 %v2516
    %3139 = vmatpush1.msra.mxu0 %v2515
    %3140 = vmatprep.subr.mxu0 %v2520
    %3141 = vmatpush1.msra.mxu0 %v2519
    %3142 = vmatprep.subr.mxu0 %v2524
    %3143 = vmatpush1.msra.mxu0 %v2523
    %3144 = vmatprep.subr.mxu0 %v2528
    %3145 = vmatpush1.msra.mxu0 %v2527
    %3146 = vmatprep.subr.mxu0 %v2532
    %3147 = vmatpush1.msra.mxu0 %v2531
    %3148 = vmatprep.subr.mxu0 %v2536
    %3149 = vmatpush1.msra.mxu0 %v2535
    %3150 = vmatprep.subr.mxu0 %v2540
    %3151 = vmatpush1.msra.mxu0 %v2539
    %3152 = vmatprep.subr.mxu0 %v2544
    %3153 = vmatpush1.msra.mxu0 %v2543
    %3154 = vmatprep.subr.mxu0 %v2548
    %3155 = vmatpush1.msra.mxu0 %v2547
    %3156 = vmatprep.subr.mxu0 %v2552
    %3157 = vmatpush1.msra.mxu0 %v2551
    %3158 = vmatprep.subr.mxu0 %v2556
    %3159 = vmatpush1.msra.mxu0 %v2555
    %3160 = vmatprep.subr.mxu0 %v2560
    %3161 = vmatpush1.msra.mxu0 %v2559
    %3162 = vmatprep.subr.mxu0 %v2564
    %3163 = vmatpush1.msra.mxu0 %v2563
    %3164 = vmatprep.subr.mxu0 %v2568
    %3165 = vmatpush1.msra.mxu0 %v2567
    %3166 = vmatprep.subr.mxu0 %v2572
    %3167 = vmatpush1.msra.mxu0 %v2571
    %3168 = vmatprep.subr.mxu0 %v2576
    %3169 = vmatpush1.msra.mxu0 %v2575
    %3170 = vmatprep.subr.mxu0 %v2580
    %3171 = vmatpush1.msra.mxu0 %v2579
    %3172 = vmatprep.subr.mxu0 %v2584
    %3173 = vmatpush1.msra.mxu0 %v2583
    %3174 = vmatprep.subr.mxu0 %v2588
    %3175 = vmatpush1.msra.mxu0 %v2587
    %3176 = vmatprep.subr.mxu0 %v2592
    %3177 = vmatpush1.msra.mxu0 %v2591
    %3178 = vmatprep.subr.mxu0 %v2596
    %3179 = vmatpush1.msra.mxu0 %v2595
    %3180 = vmatprep.mubr.f32.mxu0 %v2084
    %3181 = vmatmul.mubr.f32.gmra.mrb[0].mxu0 %v2083
    %v3182 = vpop.f32.mrb[0].mxu0
    %v3183 = vadd.f32 %v3112, %v3182
    %v3184 = vpop.f32.mrb[0].mxu0
    %v3185 = vadd.f32 %v3114, %v3184
    %3186 = vdwg.mxu0
    %v3187 = vmax.f32 %v2899, 0.0
    %v3188 = vmax.f32 %v2901, 0.0
    %v3189 = vmax.f32 %v3183, 0.0
    %v3190 = vmax.f32 %v3185, 0.0
    %v3191 = vld [vmem:[#allocation2] sm:$0xff]
    %v3192 = vld [vmem:[#allocation2 + $0x8] sm:$0xff]
    %v3193 = vld [vmem:[#allocation2 + $0x10] sm:$0xff]
    %v3194 = vld [vmem:[#allocation2 + $0x18] sm:$0xff]
    %v3195 = vld [vmem:[#allocation2 + $0x20] sm:$0xff]
    %v3196 = vld [vmem:[#allocation2 + $0x28] sm:$0xff]
    %v3197 = vld [vmem:[#allocation2 + $0x30] sm:$0xff]
    %v3198 = vld [vmem:[#allocation2 + $0x38] sm:$0xff]
    %v3199 = vld [vmem:[#allocation2 + $0x40] sm:$0xff]
    %v3200 = vld [vmem:[#allocation2 + $0x48] sm:$0xff]
    %v3201 = vld [vmem:[#allocation2 + $0x50] sm:$0xff]
    %v3202 = vld [vmem:[#allocation2 + $0x58] sm:$0xff]
    %v3203 = vld [vmem:[#allocation2 + $0x60] sm:$0xff]
    %v3204 = vld [vmem:[#allocation2 + $0x68] sm:$0xff]
    %v3205 = vld [vmem:[#allocation2 + $0x70] sm:$0xff]
    %v3206 = vld [vmem:[#allocation2 + $0x78] sm:$0xff]
    %v3207 = vld [vmem:[#allocation2 + $0x80] sm:$0xff]
    %v3208 = vld [vmem:[#allocation2 + $0x88] sm:$0xff]
    %v3209 = vld [vmem:[#allocation2 + $0x90] sm:$0xff]
    %v3210 = vld [vmem:[#allocation2 + $0x98] sm:$0xff]
    %v3211 = vld [vmem:[#allocation2 + $0xa0] sm:$0xff]
    %v3212 = vld [vmem:[#allocation2 + $0xa8] sm:$0xff]
    %v3213 = vld [vmem:[#allocation2 + $0xb0] sm:$0xff]
    %v3214 = vld [vmem:[#allocation2 + $0xb8] sm:$0xff]
    %v3215 = vld [vmem:[#allocation2 + $0xc0] sm:$0xff]
    %v3216 = vld [vmem:[#allocation2 + $0xc8] sm:$0xff]
    %v3217 = vld [vmem:[#allocation2 + $0xd0] sm:$0xff]
    %v3218 = vld [vmem:[#allocation2 + $0xd8] sm:$0xff]
    %v3219 = vld [vmem:[#allocation2 + $0xe0] sm:$0xff]
    %v3220 = vld [vmem:[#allocation2 + $0xe8] sm:$0xff]
    %v3221 = vld [vmem:[#allocation2 + $0xf0] sm:$0xff]
    %v3222 = vld [vmem:[#allocation2 + $0xf8] sm:$0xff]
    %v3223 = vld [vmem:[#allocation2 + $0x100] sm:$0xff]
    %v3224 = vld [vmem:[#allocation2 + $0x108] sm:$0xff]
    %v3225 = vld [vmem:[#allocation2 + $0x110] sm:$0xff]
    %v3226 = vld [vmem:[#allocation2 + $0x118] sm:$0xff]
    %v3227 = vld [vmem:[#allocation2 + $0x120] sm:$0xff]
    %v3228 = vld [vmem:[#allocation2 + $0x128] sm:$0xff]
    %v3229 = vld [vmem:[#allocation2 + $0x130] sm:$0xff]
    %v3230 = vld [vmem:[#allocation2 + $0x138] sm:$0xff]
    %v3231 = vld [vmem:[#allocation2 + $0x140] sm:$0xff]
    %v3232 = vld [vmem:[#allocation2 + $0x148] sm:$0xff]
    %v3233 = vld [vmem:[#allocation2 + $0x150] sm:$0xff]
    %v3234 = vld [vmem:[#allocation2 + $0x158] sm:$0xff]
    %v3235 = vld [vmem:[#allocation2 + $0x160] sm:$0xff]
    %v3236 = vld [vmem:[#allocation2 + $0x168] sm:$0xff]
    %v3237 = vld [vmem:[#allocation2 + $0x170] sm:$0xff]
    %v3238 = vld [vmem:[#allocation2 + $0x178] sm:$0xff]
    %v3239 = vld [vmem:[#allocation2 + $0x180] sm:$0xff]
    %v3240 = vld [vmem:[#allocation2 + $0x188] sm:$0xff]
    %v3241 = vld [vmem:[#allocation2 + $0x190] sm:$0xff]
    %v3242 = vld [vmem:[#allocation2 + $0x198] sm:$0xff]
    %v3243 = vld [vmem:[#allocation2 + $0x1a0] sm:$0xff]
    %v3244 = vld [vmem:[#allocation2 + $0x1a8] sm:$0xff]
    %v3245 = vld [vmem:[#allocation2 + $0x1b0] sm:$0xff]
    %v3246 = vld [vmem:[#allocation2 + $0x1b8] sm:$0xff]
    %v3247 = vld [vmem:[#allocation2 + $0x1c0] sm:$0xff]
    %v3248 = vld [vmem:[#allocation2 + $0x1c8] sm:$0xff]
    %v3249 = vld [vmem:[#allocation2 + $0x1d0] sm:$0xff]
    %v3250 = vld [vmem:[#allocation2 + $0x1d8] sm:$0xff]
    %v3251 = vld [vmem:[#allocation2 + $0x1e0] sm:$0xff]
    %v3252 = vld [vmem:[#allocation2 + $0x1e8] sm:$0xff]
    %v3253 = vld [vmem:[#allocation2 + $0x1f0] sm:$0xff]
    %v3254 = vld [vmem:[#allocation2 + $0x1f8] sm:$0xff]
    %v3255 = vld [vmem:[#allocation2 + $0x200] sm:$0xff]
    %v3256 = vld [vmem:[#allocation2 + $0x208] sm:$0xff]
    %v3257 = vld [vmem:[#allocation2 + $0x210] sm:$0xff]
    %v3258 = vld [vmem:[#allocation2 + $0x218] sm:$0xff]
    %v3259 = vld [vmem:[#allocation2 + $0x220] sm:$0xff]
    %v3260 = vld [vmem:[#allocation2 + $0x228] sm:$0xff]
    %v3261 = vld [vmem:[#allocation2 + $0x230] sm:$0xff]
    %v3262 = vld [vmem:[#allocation2 + $0x238] sm:$0xff]
    %v3263 = vld [vmem:[#allocation2 + $0x240] sm:$0xff]
    %v3264 = vld [vmem:[#allocation2 + $0x248] sm:$0xff]
    %v3265 = vld [vmem:[#allocation2 + $0x250] sm:$0xff]
    %v3266 = vld [vmem:[#allocation2 + $0x258] sm:$0xff]
    %v3267 = vld [vmem:[#allocation2 + $0x260] sm:$0xff]
    %v3268 = vld [vmem:[#allocation2 + $0x268] sm:$0xff]
    %v3269 = vld [vmem:[#allocation2 + $0x270] sm:$0xff]
    %v3270 = vld [vmem:[#allocation2 + $0x278] sm:$0xff]
    %v3271 = vld [vmem:[#allocation2 + $0x280] sm:$0xff]
    %v3272 = vld [vmem:[#allocation2 + $0x288] sm:$0xff]
    %v3273 = vld [vmem:[#allocation2 + $0x290] sm:$0xff]
    %v3274 = vld [vmem:[#allocation2 + $0x298] sm:$0xff]
    %v3275 = vld [vmem:[#allocation2 + $0x2a0] sm:$0xff]
    %v3276 = vld [vmem:[#allocation2 + $0x2a8] sm:$0xff]
    %v3277 = vld [vmem:[#allocation2 + $0x2b0] sm:$0xff]
    %v3278 = vld [vmem:[#allocation2 + $0x2b8] sm:$0xff]
    %v3279 = vld [vmem:[#allocation2 + $0x2c0] sm:$0xff]
    %v3280 = vld [vmem:[#allocation2 + $0x2c8] sm:$0xff]
    %v3281 = vld [vmem:[#allocation2 + $0x2d0] sm:$0xff]
    %v3282 = vld [vmem:[#allocation2 + $0x2d8] sm:$0xff]
    %v3283 = vld [vmem:[#allocation2 + $0x2e0] sm:$0xff]
    %v3284 = vld [vmem:[#allocation2 + $0x2e8] sm:$0xff]
    %v3285 = vld [vmem:[#allocation2 + $0x2f0] sm:$0xff]
    %v3286 = vld [vmem:[#allocation2 + $0x2f8] sm:$0xff]
    %v3287 = vld [vmem:[#allocation2 + $0x300] sm:$0xff]
    %v3288 = vld [vmem:[#allocation2 + $0x308] sm:$0xff]
    %v3289 = vld [vmem:[#allocation2 + $0x310] sm:$0xff]
    %v3290 = vld [vmem:[#allocation2 + $0x318] sm:$0xff]
    %v3291 = vld [vmem:[#allocation2 + $0x320] sm:$0xff]
    %v3292 = vld [vmem:[#allocation2 + $0x328] sm:$0xff]
    %v3293 = vld [vmem:[#allocation2 + $0x330] sm:$0xff]
    %v3294 = vld [vmem:[#allocation2 + $0x338] sm:$0xff]
    %v3295 = vld [vmem:[#allocation2 + $0x340] sm:$0xff]
    %v3296 = vld [vmem:[#allocation2 + $0x348] sm:$0xff]
    %v3297 = vld [vmem:[#allocation2 + $0x350] sm:$0xff]
    %v3298 = vld [vmem:[#allocation2 + $0x358] sm:$0xff]
    %v3299 = vld [vmem:[#allocation2 + $0x360] sm:$0xff]
    %v3300 = vld [vmem:[#allocation2 + $0x368] sm:$0xff]
    %v3301 = vld [vmem:[#allocation2 + $0x370] sm:$0xff]
    %v3302 = vld [vmem:[#allocation2 + $0x378] sm:$0xff]
    %v3303 = vld [vmem:[#allocation2 + $0x380] sm:$0xff]
    %v3304 = vld [vmem:[#allocation2 + $0x388] sm:$0xff]
    %v3305 = vld [vmem:[#allocation2 + $0x390] sm:$0xff]
    %v3306 = vld [vmem:[#allocation2 + $0x398] sm:$0xff]
    %v3307 = vld [vmem:[#allocation2 + $0x3a0] sm:$0xff]
    %v3308 = vld [vmem:[#allocation2 + $0x3a8] sm:$0xff]
    %v3309 = vld [vmem:[#allocation2 + $0x3b0] sm:$0xff]
    %v3310 = vld [vmem:[#allocation2 + $0x3b8] sm:$0xff]
    %v3311 = vld [vmem:[#allocation2 + $0x3c0] sm:$0xff]
    %v3312 = vld [vmem:[#allocation2 + $0x3c8] sm:$0xff]
    %v3313 = vld [vmem:[#allocation2 + $0x3d0] sm:$0xff]
    %v3314 = vld [vmem:[#allocation2 + $0x3d8] sm:$0xff]
    %v3315 = vld [vmem:[#allocation2 + $0x3e0] sm:$0xff]
    %v3316 = vld [vmem:[#allocation2 + $0x3e8] sm:$0xff]
    %v3317 = vld [vmem:[#allocation2 + $0x3f0] sm:$0xff]
    %v3318 = vld [vmem:[#allocation2 + $0x3f8] sm:$0xff]
    %v3319 = vld [vmem:[%s6] sm:$0x3]
    %v3321 = vlaneseq
    %v3322 = vshrl.u32 %v3321, 7
    %v3323 = vsub.s32 0, %v3322
    %v3324 = vrot.slane %v3319, %v3323
    %v3325 = vlaneseq
    %v3326 = vshrl.u32 %v3325, 7
    %v3327 = vsub.s32 1, %v3326
    %v3328 = vrot.slane %v3319, %v3327
    %3331 = vmatprep.subr.mxu0 %v3192
    %3332 = vmatpush1.msra.mxu0 %v3191
    %3333 = vmatprep.subr.mxu0 %v3194
    %3334 = vmatpush1.msra.mxu0 %v3193
    %3335 = vmatprep.subr.mxu0 %v3196
    %3336 = vmatpush1.msra.mxu0 %v3195
    %3337 = vmatprep.subr.mxu0 %v3198
    %3338 = vmatpush1.msra.mxu0 %v3197
    %3339 = vmatprep.subr.mxu0 %v3200
    %3340 = vmatpush1.msra.mxu0 %v3199
    %3341 = vmatprep.subr.mxu0 %v3202
    %3342 = vmatpush1.msra.mxu0 %v3201
    %3343 = vmatprep.subr.mxu0 %v3204
    %3344 = vmatpush1.msra.mxu0 %v3203
    %3345 = vmatprep.subr.mxu0 %v3206
    %3346 = vmatpush1.msra.mxu0 %v3205
    %3347 = vmatprep.subr.mxu0 %v3208
    %3348 = vmatpush1.msra.mxu0 %v3207
    %3349 = vmatprep.subr.mxu0 %v3210
    %3350 = vmatpush1.msra.mxu0 %v3209
    %3351 = vmatprep.subr.mxu0 %v3212
    %3352 = vmatpush1.msra.mxu0 %v3211
    %3353 = vmatprep.subr.mxu0 %v3214
    %3354 = vmatpush1.msra.mxu0 %v3213
    %3355 = vmatprep.subr.mxu0 %v3216
    %3356 = vmatpush1.msra.mxu0 %v3215
    %3357 = vmatprep.subr.mxu0 %v3218
    %3358 = vmatpush1.msra.mxu0 %v3217
    %3359 = vmatprep.subr.mxu0 %v3220
    %3360 = vmatpush1.msra.mxu0 %v3219
    %3361 = vmatprep.subr.mxu0 %v3222
    %3362 = vmatpush1.msra.mxu0 %v3221
    %3363 = vmatprep.subr.mxu0 %v3224
    %3364 = vmatpush1.msra.mxu0 %v3223
    %3365 = vmatprep.subr.mxu0 %v3226
    %3366 = vmatpush1.msra.mxu0 %v3225
    %3367 = vmatprep.subr.mxu0 %v3228
    %3368 = vmatpush1.msra.mxu0 %v3227
    %3369 = vmatprep.subr.mxu0 %v3230
    %3370 = vmatpush1.msra.mxu0 %v3229
    %3371 = vmatprep.subr.mxu0 %v3232
    %3372 = vmatpush1.msra.mxu0 %v3231
    %3373 = vmatprep.subr.mxu0 %v3234
    %3374 = vmatpush1.msra.mxu0 %v3233
    %3375 = vmatprep.subr.mxu0 %v3236
    %3376 = vmatpush1.msra.mxu0 %v3235
    %3377 = vmatprep.subr.mxu0 %v3238
    %3378 = vmatpush1.msra.mxu0 %v3237
    %3379 = vmatprep.subr.mxu0 %v3240
    %3380 = vmatpush1.msra.mxu0 %v3239
    %3381 = vmatprep.subr.mxu0 %v3242
    %3382 = vmatpush1.msra.mxu0 %v3241
    %3383 = vmatprep.subr.mxu0 %v3244
    %3384 = vmatpush1.msra.mxu0 %v3243
    %3385 = vmatprep.subr.mxu0 %v3246
    %3386 = vmatpush1.msra.mxu0 %v3245
    %3387 = vmatprep.subr.mxu0 %v3248
    %3388 = vmatpush1.msra.mxu0 %v3247
    %3389 = vmatprep.subr.mxu0 %v3250
    %3390 = vmatpush1.msra.mxu0 %v3249
    %3391 = vmatprep.subr.mxu0 %v3252
    %3392 = vmatpush1.msra.mxu0 %v3251
    %3393 = vmatprep.subr.mxu0 %v3254
    %3394 = vmatpush1.msra.mxu0 %v3253
    %3395 = vmatprep.mubr.f32.mxu0 %v3188
    %3396 = vmatmul.mubr.f32.gmra.mrb[0].mxu0 %v3187
    %v3397 = vpop.f32.mrb[0].mxu0
    %v3398 = vadd.f32 %v3324, %v3397
    %v3399 = vpop.f32.mrb[0].mxu0
    %v3400 = vadd.f32 %v3328, %v3399
    %3401 = vdwg.mxu0
    %3402 = vmatprep.subr.mxu0 %v3256
    %3403 = vmatpush1.msra.mxu0 %v3255
    %3404 = vmatprep.subr.mxu0 %v3258
    %3405 = vmatpush1.msra.mxu0 %v3257
    %3406 = vmatprep.subr.mxu0 %v3260
    %3407 = vmatpush1.msra.mxu0 %v3259
    %3408 = vmatprep.subr.mxu0 %v3262
    %3409 = vmatpush1.msra.mxu0 %v3261
    %3410 = vmatprep.subr.mxu0 %v3264
    %3411 = vmatpush1.msra.mxu0 %v3263
    %3412 = vmatprep.subr.mxu0 %v3266
    %3413 = vmatpush1.msra.mxu0 %v3265
    %3414 = vmatprep.subr.mxu0 %v3268
    %3415 = vmatpush1.msra.mxu0 %v3267
    %3416 = vmatprep.subr.mxu0 %v3270
    %3417 = vmatpush1.msra.mxu0 %v3269
    %3418 = vmatprep.subr.mxu0 %v3272
    %3419 = vmatpush1.msra.mxu0 %v3271
    %3420 = vmatprep.subr.mxu0 %v3274
    %3421 = vmatpush1.msra.mxu0 %v3273
    %3422 = vmatprep.subr.mxu0 %v3276
    %3423 = vmatpush1.msra.mxu0 %v3275
    %3424 = vmatprep.subr.mxu0 %v3278
    %3425 = vmatpush1.msra.mxu0 %v3277
    %3426 = vmatprep.subr.mxu0 %v3280
    %3427 = vmatpush1.msra.mxu0 %v3279
    %3428 = vmatprep.subr.mxu0 %v3282
    %3429 = vmatpush1.msra.mxu0 %v3281
    %3430 = vmatprep.subr.mxu0 %v3284
    %3431 = vmatpush1.msra.mxu0 %v3283
    %3432 = vmatprep.subr.mxu0 %v3286
    %3433 = vmatpush1.msra.mxu0 %v3285
    %3434 = vmatprep.subr.mxu0 %v3288
    %3435 = vmatpush1.msra.mxu0 %v3287
    %3436 = vmatprep.subr.mxu0 %v3290
    %3437 = vmatpush1.msra.mxu0 %v3289
    %3438 = vmatprep.subr.mxu0 %v3292
    %3439 = vmatpush1.msra.mxu0 %v3291
    %3440 = vmatprep.subr.mxu0 %v3294
    %3441 = vmatpush1.msra.mxu0 %v3293
    %3442 = vmatprep.subr.mxu0 %v3296
    %3443 = vmatpush1.msra.mxu0 %v3295
    %3444 = vmatprep.subr.mxu0 %v3298
    %3445 = vmatpush1.msra.mxu0 %v3297
    %3446 = vmatprep.subr.mxu0 %v3300
    %3447 = vmatpush1.msra.mxu0 %v3299
    %3448 = vmatprep.subr.mxu0 %v3302
    %3449 = vmatpush1.msra.mxu0 %v3301
    %3450 = vmatprep.subr.mxu0 %v3304
    %3451 = vmatpush1.msra.mxu0 %v3303
    %3452 = vmatprep.subr.mxu0 %v3306
    %3453 = vmatpush1.msra.mxu0 %v3305
    %3454 = vmatprep.subr.mxu0 %v3308
    %3455 = vmatpush1.msra.mxu0 %v3307
    %3456 = vmatprep.subr.mxu0 %v3310
    %3457 = vmatpush1.msra.mxu0 %v3309
    %3458 = vmatprep.subr.mxu0 %v3312
    %3459 = vmatpush1.msra.mxu0 %v3311
    %3460 = vmatprep.subr.mxu0 %v3314
    %3461 = vmatpush1.msra.mxu0 %v3313
    %3462 = vmatprep.subr.mxu0 %v3316
    %3463 = vmatpush1.msra.mxu0 %v3315
    %3464 = vmatprep.subr.mxu0 %v3318
    %3465 = vmatpush1.msra.mxu0 %v3317
    %3466 = vmatprep.mubr.f32.mxu0 %v3190
    %3467 = vmatmul.mubr.f32.gmra.mrb[0].mxu0 %v3189
    %v3468 = vpop.f32.mrb[0].mxu0
    %v3469 = vadd.f32 %v3398, %v3468
    %v3470 = vpop.f32.mrb[0].mxu0
    %v3471 = vadd.f32 %v3400, %v3470
    %3472 = vdwg.mxu0
    %v3473 = vmax.f32 %v3469, 0.0
    %v3474 = vmax.f32 %v3471, 0.0
    %v3475 = vld [vmem:[%s7] sm:$0xff]
    %v3476 = vld [vmem:[%s7 + $0x8] sm:$0xff]
    %v3477 = vld [vmem:[%s7 + $0x10] sm:$0xff]
    %v3478 = vld [vmem:[%s7 + $0x18] sm:$0xff]
    %v3479 = vld [vmem:[%s7 + $0x20] sm:$0xff]
    %v3480 = vld [vmem:[%s7 + $0x28] sm:$0xff]
    %v3481 = vld [vmem:[%s7 + $0x30] sm:$0xff]
    %v3482 = vld [vmem:[%s7 + $0x38] sm:$0xff]
    %v3483 = vld [vmem:[%s7 + $0x40] sm:$0xff]
    %v3484 = vld [vmem:[%s7 + $0x48] sm:$0xff]
    %v3485 = vld [vmem:[%s7 + $0x50] sm:$0xff]
    %v3486 = vld [vmem:[%s7 + $0x58] sm:$0xff]
    %v3487 = vld [vmem:[%s7 + $0x60] sm:$0xff]
    %v3488 = vld [vmem:[%s7 + $0x68] sm:$0xff]
    %v3489 = vld [vmem:[%s7 + $0x70] sm:$0xff]
    %v3490 = vld [vmem:[%s7 + $0x78] sm:$0xff]
    %v3491 = vld [vmem:[%s7 + $0x80] sm:$0xff]
    %v3492 = vld [vmem:[%s7 + $0x88] sm:$0xff]
    %v3493 = vld [vmem:[%s7 + $0x90] sm:$0xff]
    %v3494 = vld [vmem:[%s7 + $0x98] sm:$0xff]
    %v3495 = vld [vmem:[%s7 + $0xa0] sm:$0xff]
    %v3496 = vld [vmem:[%s7 + $0xa8] sm:$0xff]
    %v3497 = vld [vmem:[%s7 + $0xb0] sm:$0xff]
    %v3498 = vld [vmem:[%s7 + $0xb8] sm:$0xff]
    %v3499 = vld [vmem:[%s7 + $0xc0] sm:$0xff]
    %v3500 = vld [vmem:[%s7 + $0xc8] sm:$0xff]
    %v3501 = vld [vmem:[%s7 + $0xd0] sm:$0xff]
    %v3502 = vld [vmem:[%s7 + $0xd8] sm:$0xff]
    %v3503 = vld [vmem:[%s7 + $0xe0] sm:$0xff]
    %v3504 = vld [vmem:[%s7 + $0xe8] sm:$0xff]
    %v3505 = vld [vmem:[%s7 + $0xf0] sm:$0xff]
    %v3506 = vld [vmem:[%s7 + $0xf8] sm:$0xff]
    %v3507 = vld [vmem:[%s8] sm:$0x1]
    %v3509 = vlaneseq
    %v3510 = vshrl.u32 %v3509, 7
    %v3511 = vsub.s32 0, %v3510
    %v3512 = vrot.slane %v3507, %v3511
    %3514 = vmatprep.subr.mxu0 0.0
    %3515 = vmatpush1.msra.mxu0 %v3475
    %3516 = vmatprep.subr.mxu0 0.0
    %3517 = vmatpush1.msra.mxu0 %v3476
    %3518 = vmatprep.subr.mxu0 0.0
    %3519 = vmatpush1.msra.mxu0 %v3477
    %3520 = vmatprep.subr.mxu0 0.0
    %3521 = vmatpush1.msra.mxu0 %v3478
    %3522 = vmatprep.subr.mxu0 0.0
    %3523 = vmatpush1.msra.mxu0 %v3479
    %3524 = vmatprep.subr.mxu0 0.0
    %3525 = vmatpush1.msra.mxu0 %v3480
    %3526 = vmatprep.subr.mxu0 0.0
    %3527 = vmatpush1.msra.mxu0 %v3481
    %3528 = vmatprep.subr.mxu0 0.0
    %3529 = vmatpush1.msra.mxu0 %v3482
    %3530 = vmatprep.subr.mxu0 0.0
    %3531 = vmatpush1.msra.mxu0 %v3483
    %3532 = vmatprep.subr.mxu0 0.0
    %3533 = vmatpush1.msra.mxu0 %v3484
    %3534 = vmatprep.subr.mxu0 0.0
    %3535 = vmatpush1.msra.mxu0 %v3485
    %3536 = vmatprep.subr.mxu0 0.0
    %3537 = vmatpush1.msra.mxu0 %v3486
    %3538 = vmatprep.subr.mxu0 0.0
    %3539 = vmatpush1.msra.mxu0 %v3487
    %3540 = vmatprep.subr.mxu0 0.0
    %3541 = vmatpush1.msra.mxu0 %v3488
    %3542 = vmatprep.subr.mxu0 0.0
    %3543 = vmatpush1.msra.mxu0 %v3489
    %3544 = vmatprep.subr.mxu0 0.0
    %3545 = vmatpush1.msra.mxu0 %v3490
    %3546 = vmatprep.subr.mxu0 0.0
    %3547 = vmatpush1.msra.mxu0 %v3491
    %3548 = vmatprep.subr.mxu0 0.0
    %3549 = vmatpush1.msra.mxu0 %v3492
    %3550 = vmatprep.subr.mxu0 0.0
    %3551 = vmatpush1.msra.mxu0 %v3493
    %3552 = vmatprep.subr.mxu0 0.0
    %3553 = vmatpush1.msra.mxu0 %v3494
    %3554 = vmatprep.subr.mxu0 0.0
    %3555 = vmatpush1.msra.mxu0 %v3495
    %3556 = vmatprep.subr.mxu0 0.0
    %3557 = vmatpush1.msra.mxu0 %v3496
    %3558 = vmatprep.subr.mxu0 0.0
    %3559 = vmatpush1.msra.mxu0 %v3497
    %3560 = vmatprep.subr.mxu0 0.0
    %3561 = vmatpush1.msra.mxu0 %v3498
    %3562 = vmatprep.subr.mxu0 0.0
    %3563 = vmatpush1.msra.mxu0 %v3499
    %3564 = vmatprep.subr.mxu0 0.0
    %3565 = vmatpush1.msra.mxu0 %v3500
    %3566 = vmatprep.subr.mxu0 0.0
    %3567 = vmatpush1.msra.mxu0 %v3501
    %3568 = vmatprep.subr.mxu0 0.0
    %3569 = vmatpush1.msra.mxu0 %v3502
    %3570 = vmatprep.subr.mxu0 0.0
    %3571 = vmatpush1.msra.mxu0 %v3503
    %3572 = vmatprep.subr.mxu0 0.0
    %3573 = vmatpush1.msra.mxu0 %v3504
    %3574 = vmatprep.subr.mxu0 0.0
    %3575 = vmatpush1.msra.mxu0 %v3505
    %3576 = vmatprep.subr.mxu0 0.0
    %3577 = vmatpush1.msra.mxu0 %v3506
    %3578 = vmatprep.mubr.f32.mxu0 %v3474
    %3579 = vmatmul.mubr.f32.gmra.mrb[0].mxu0 %v3473
    %v3580 = vpop.f32.mrb[0].mxu0
    %v3581 = vadd.f32 %v3512, %v3580
    %v3582 = vpop.f32.mrb[0].mxu0
    %3583 = vdwg.mxu0
    %v3584 = vmax.f32 %v3581, 0.0
    %v3585 = vld [vmem:[%s9] sm:$0xff]
    %v3586 = vld [vmem:[%s9 + $0x8] sm:$0xff]
    %v3587 = vld [vmem:[%s9 + $0x10] sm:$0xff]
    %v3588 = vld [vmem:[%s9 + $0x18] sm:$0xff]
    %v3589 = vld [vmem:[%s9 + $0x20] sm:$0xff]
    %v3590 = vld [vmem:[%s9 + $0x28] sm:$0xff]
    %v3591 = vld [vmem:[%s9 + $0x30] sm:$0xff]
    %v3592 = vld [vmem:[%s9 + $0x38] sm:$0xff]
    %v3593 = vld [vmem:[%s9 + $0x40] sm:$0xff]
    %v3594 = vld [vmem:[%s9 + $0x48] sm:$0xff]
    %v3595 = vld [vmem:[%s9 + $0x50] sm:$0xff]
    %v3596 = vld [vmem:[%s9 + $0x58] sm:$0xff]
    %v3597 = vld [vmem:[%s9 + $0x60] sm:$0xff]
    %v3598 = vld [vmem:[%s9 + $0x68] sm:$0xff]
    %v3599 = vld [vmem:[%s9 + $0x70] sm:$0xff]
    %v3600 = vld [vmem:[%s9 + $0x78] sm:$0xff]
    %v3601 = vld [vmem:[%s10] sm:$0x1]
    %v3603 = vlaneseq
    %v3604 = vshrl.u32 %v3603, 7
    %v3605 = vsub.s32 0, %v3604
    %v3606 = vrot.slane %v3601, %v3605
    %3608 = vmatprep.subr.mxu0 0.0
    %3609 = vmatpush1.msra.mxu0 %v3585
    %3610 = vmatprep.subr.mxu0 0.0
    %3611 = vmatpush1.msra.mxu0 %v3586
    %3612 = vmatprep.subr.mxu0 0.0
    %3613 = vmatpush1.msra.mxu0 %v3587
    %3614 = vmatprep.subr.mxu0 0.0
    %3615 = vmatpush1.msra.mxu0 %v3588
    %3616 = vmatprep.subr.mxu0 0.0
    %3617 = vmatpush1.msra.mxu0 %v3589
    %3618 = vmatprep.subr.mxu0 0.0
    %3619 = vmatpush1.msra.mxu0 %v3590
    %3620 = vmatprep.subr.mxu0 0.0
    %3621 = vmatpush1.msra.mxu0 %v3591
    %3622 = vmatprep.subr.mxu0 0.0
    %3623 = vmatpush1.msra.mxu0 %v3592
    %3624 = vmatprep.subr.mxu0 0.0
    %3625 = vmatpush1.msra.mxu0 %v3593
    %3626 = vmatprep.subr.mxu0 0.0
    %3627 = vmatpush1.msra.mxu0 %v3594
    %3628 = vmatprep.subr.mxu0 0.0
    %3629 = vmatpush1.msra.mxu0 %v3595
    %3630 = vmatprep.subr.mxu0 0.0
    %3631 = vmatpush1.msra.mxu0 %v3596
    %3632 = vmatprep.subr.mxu0 0.0
    %3633 = vmatpush1.msra.mxu0 %v3597
    %3634 = vmatprep.subr.mxu0 0.0
    %3635 = vmatpush1.msra.mxu0 %v3598
    %3636 = vmatprep.subr.mxu0 0.0
    %3637 = vmatpush1.msra.mxu0 %v3599
    %3638 = vmatprep.subr.mxu0 0.0
    %3639 = vmatpush1.msra.mxu0 %v3600
    %3640 = vmatprep.subr.mxu0 0.0
    %3641 = vmatpush1.msra.mxu0 0.0
    %3642 = vmatprep.subr.mxu0 0.0
    %3643 = vmatpush1.msra.mxu0 0.0
    %3644 = vmatprep.subr.mxu0 0.0
    %3645 = vmatpush1.msra.mxu0 0.0
    %3646 = vmatprep.subr.mxu0 0.0
    %3647 = vmatpush1.msra.mxu0 0.0
    %3648 = vmatprep.subr.mxu0 0.0
    %3649 = vmatpush1.msra.mxu0 0.0
    %3650 = vmatprep.subr.mxu0 0.0
    %3651 = vmatpush1.msra.mxu0 0.0
    %3652 = vmatprep.subr.mxu0 0.0
    %3653 = vmatpush1.msra.mxu0 0.0
    %3654 = vmatprep.subr.mxu0 0.0
    %3655 = vmatpush1.msra.mxu0 0.0
    %3656 = vmatprep.subr.mxu0 0.0
    %3657 = vmatpush1.msra.mxu0 0.0
    %3658 = vmatprep.subr.mxu0 0.0
    %3659 = vmatpush1.msra.mxu0 0.0
    %3660 = vmatprep.subr.mxu0 0.0
    %3661 = vmatpush1.msra.mxu0 0.0
    %3662 = vmatprep.subr.mxu0 0.0
    %3663 = vmatpush1.msra.mxu0 0.0
    %3664 = vmatprep.subr.mxu0 0.0
    %3665 = vmatpush1.msra.mxu0 0.0
    %3666 = vmatprep.subr.mxu0 0.0
    %3667 = vmatpush1.msra.mxu0 0.0
    %3668 = vmatprep.subr.mxu0 0.0
    %3669 = vmatpush1.msra.mxu0 0.0
    %3670 = vmatprep.subr.mxu0 0.0
    %3671 = vmatpush1.msra.mxu0 0.0
    %3672 = vmatprep.mubr.f32.mxu0 0.0
    %3673 = vmatmul.mubr.f32.gmra.mrb[0].mxu0 %v3584
    %v3674 = vpop.f32.mrb[0].mxu0
    %v3675 = vadd.f32 %v3606, %v3674
    %v3676 = vpop.f32.mrb[0].mxu0
    %3677 = vdwg.mxu0
    %v3678 = vtanh.pop %v3675
    %vm3679 = vcmask 812032
    %3680 = vst.msk [vmem:[#allocation5] sm:$0x3] %vm3679, %v3678
    // Predicated region
    $region50: #{encoder6_forward.3} parent=1 // pred_check
      _
    $region51: #{encoder6_forward.3} parent=1 // pred_check_branch
      %3682 = sbr.rel (0) target = $region53
    $region52: #{encoder6_forward.3} parent=1 // pred_region
      %s3684 = ssub.s32 32, 32
      %3685 = vsyncadd [#allocation4], %s3684
      %s3687 = sshll.u32 [#allocation5], 4
      %s3688 = int_to_ptr.vmem [resolvable:$true] %s3687
      %3690 = dma.vmem_to_hbm [thread:$0]  %s3688, 32, %s11, [#allocation4]
    $region53: #{encoder6_forward.3} parent=1 // pred_fallthru
      _
    // Predicated region
    $region54: #{encoder6_forward.3} parent=1 // pred_check
      _
    $region55: #{encoder6_forward.3} parent=1 // pred_check_branch
      %3692 = sbr.rel (0) target = $region57
    $region56: #{encoder6_forward.3} parent=1 // pred_region
      %3693 = dma.done [#allocation4], 32
    $region57: #{encoder6_forward.3} parent=1 // pred_fallthru
      _
    %3694 = vsyncpa [#allocation3], 1
    %3695 = vsyncpa [#allocation4], 1

</llo_original>
